<compile_context>
chip_gen: v7x
topology: tpu7x:2x2x1
jax: 0.10.0
libtpu: 0.0.40
codegen_flags: <defaults>
</compile_context>

<pallas_src>
import math
import functools
import numpy as np
import jax
import jax.numpy as jnp
from jax.experimental import pallas as pl
from jax.experimental.pallas import tpu as pltpu

F32 = jnp.float32
NEG_INF = -1e9
LN_EPS = 1e-5
DEF_TM = 512                      # row tile cap for row-wise kernels
VMEM_LIMIT = 32 * 1024 * 1024     # safe scoped-VMEM budget on v5e/v6e/v7x

_BUFFERED1 = False                # set by _probe_buffered1() in __main__


def _cparams(n_axes=1):
    return pltpu.CompilerParams(
        dimension_semantics=("parallel",) * n_axes,
        vmem_limit_bytes=VMEM_LIMIT)


def _round_up(x, m):
    return ((x + m - 1) // m) * m


def _pick_tm(M, cap=DEF_TM):
    """Largest row tile (multiple of 8, <= cap) that divides M; keep >= 2 grid
    steps when possible so both v7x TensorCores get work."""
    best = 8
    for t in range(8, min(cap, M) + 1, 8):
        if M % t == 0:
            best = t
    if best == M and M >= 16 and (M // 2) % 8 == 0:
        best = M // 2
    return best


def _wspec(shape):
    """BlockSpec for a grid-resident (constant index_map) weight block;
    single-buffered when supported (halves resident-weight VMEM)."""
    imap = lambda *i: (0,) * len(shape)
    if _BUFFERED1:
        return pl.BlockSpec(shape, imap, pipeline_mode=pl.Buffered(1))
    return pl.BlockSpec(shape, imap)


def _probe_buffered1():
    """Check once whether pipeline_mode=pl.Buffered(1) lowers on this Pallas."""
    try:
        def k(x_ref, o_ref):
            o_ref[...] = x_ref[...] + 1.0
        fn = pl.pallas_call(
            k,
            out_shape=jax.ShapeDtypeStruct((16, 128), F32),
            grid=(2,),
            in_specs=[pl.BlockSpec((8, 128), lambda i: (0, 0),
                                   pipeline_mode=pl.Buffered(1))],
            out_specs=pl.BlockSpec((8, 128), lambda i: (i, 0)),
            compiler_params=_cparams(1),
        )
        jax.block_until_ready(fn(jnp.zeros((8, 128), F32)))
        return True
    except Exception:
        return False


def _layernorm(y, g, b):
    mu = jnp.mean(y, axis=-1, keepdims=True)
    var = jnp.mean((y - mu) ** 2, axis=-1, keepdims=True)
    return (y - mu) * jax.lax.rsqrt(var + LN_EPS) * g + b


# --------------------------------- linear ----------------------------------

def _linear_kernel(x_ref, w_ref, b_ref, o_ref):
    o_ref[...] = (jnp.dot(x_ref[...], w_ref[...], preferred_element_type=F32)
                  + b_ref[...]).astype(o_ref.dtype)


def linear(x2d, w, b):
    """y = x @ w + b. Row-tiled, weight resident. Rows must be a multiple of 8."""
    M, K = x2d.shape
    N = w.shape[1]
    tm = _pick_tm(M)
    return pl.pallas_call(
        _linear_kernel,
        out_shape=jax.ShapeDtypeStruct((M, N), F32),
        grid=(M // tm,),
        in_specs=[pl.BlockSpec((tm, K), lambda i: (i, 0)),
                  _wspec((K, N)), _wspec((1, N))],
        out_specs=pl.BlockSpec((tm, N), lambda i: (i, 0)),
        compiler_params=_cparams(),
    )(x2d, w, b)


# ------------------------------- attention ---------------------------------

def _heads(x, n, off, d):
    # lane-packed (L, ...) -> head-batched (n, L, d); no HBM transpose needed.
    return jnp.stack([x[:, off + i * d: off + (i + 1) * d] for i in range(n)], 0)


def _attn_core(q, k, v, mask_add, scale):
    # q: (h, Lq, d_k), k: (h, Lk, d_k), v: (h, Lk, d_v), mask_add: (Lm, Lk)
    s = jnp.einsum('hqd,hkd->hqk', q, k, preferred_element_type=F32) * scale
    s = s + mask_add[None]
    s = s - jnp.max(s, axis=-1, keepdims=True)
    p = jnp.exp(s)
    p = p * pl.reciprocal(jnp.sum(p, axis=-1, keepdims=True), approx=True)
    return jnp.einsum('hqk,hkd->hqd', p, v, preferred_element_type=F32)


def _self_attn_kernel(qkv_ref, m_ref, o_ref, *, h, d_k, d_v, scale):
    nqk = h * d_k
    qkv = qkv_ref[0]                                    # (L, 2*nqk + h*d_v)
    q = _heads(qkv, h, 0, d_k)
    k = _heads(qkv, h, nqk, d_k)
    v = _heads(qkv, h, 2 * nqk, d_v)
    o = _attn_core(q, k, v, m_ref[0], scale)            # (h, L, d_v)
    # lane-dense merged output -> _merge_heads outside is a free reshape
    o_ref[0] = jnp.concatenate([o[i] for i in range(h)], axis=-1)


def _cross_attn_kernel(q_ref, kv_ref, m_ref, o_ref, *, h, d_k, d_v, scale):
    nqk = h * d_k
    q = _heads(q_ref[0], h, 0, d_k)
    kv = kv_ref[0]                                      # (R, nqk + h*d_v)
    k = _heads(kv, h, 0, d_k)
    v = _heads(kv, h, nqk, d_v)
    o = _attn_core(q, k, v, m_ref[0], scale)
    o_ref[0] = jnp.concatenate([o[i] for i in range(h)], axis=-1)


def self_mha(qkv3, mask_add, h, d_k, d_v):
    """qkv3: (B, Lp, 2*h*d_k + h*d_v) packed; mask_add: (B, Lp, Lp)."""
    B, Lp, W = qkv3.shape
    ndv = h * d_v
    scale = 1.0 / math.sqrt(d_k)
    return pl.pallas_call(
        functools.partial(_self_attn_kernel, h=h, d_k=d_k, d_v=d_v, scale=scale),
        out_shape=jax.ShapeDtypeStruct((B, Lp, ndv), F32),
        grid=(B,),
        in_specs=[pl.BlockSpec((1, Lp, W), lambda i: (i, 0, 0)),
                  pl.BlockSpec((1, Lp, Lp), lambda i: (i, 0, 0))],
        out_specs=pl.BlockSpec((1, Lp, ndv), lambda i: (i, 0, 0)),
        compiler_params=_cparams(),
    )(qkv3, mask_add)


def cross_mha(q3, kv3, mask_add, h, d_k, d_v):
    """q3: (B, Lp, h*d_k); kv3: (N*B, Rp, h*d_k + h*d_v) with levels outermost;
    mask_add: (B, 1, Rp).  Q and mask blocks are reused across the N mesh levels
    via the index_map (no HBM replication)."""
    B, Lp, nqk = q3.shape
    G, Rp, W = kv3.shape
    ndv = h * d_v
    scale = 1.0 / math.sqrt(d_k)
    qmap = lambda i: (i % B, 0, 0)
    return pl.pallas_call(
        functools.partial(_cross_attn_kernel, h=h, d_k=d_k, d_v=d_v, scale=scale),
        out_shape=jax.ShapeDtypeStruct((G, Lp, ndv), F32),
        grid=(G,),
        in_specs=[pl.BlockSpec((1, Lp, nqk), qmap),
                  pl.BlockSpec((1, Rp, W), lambda i: (i, 0, 0)),
                  pl.BlockSpec((1, 1, Rp), qmap)],
        out_specs=pl.BlockSpec((1, Lp, ndv), lambda i: (i, 0, 0)),
        compiler_params=_cparams(),
    )(q3, kv3, mask_add)


# --------------------- fc_o + residual + LN + mask (self) -------------------

def _proj_res_ln_kernel(a_ref, r_ref, w_ref, b_ref, g_ref, be_ref, m_ref, o_ref):
    y = (jnp.dot(a_ref[...], w_ref[...], preferred_element_type=F32)
         + b_ref[...] + r_ref[...])
    o_ref[...] = (_layernorm(y, g_ref[...], be_ref[...]) * m_ref[...]).astype(o_ref.dtype)


def proj_res_ln_mask(att2d, res2d, w, b, gamma, beta, mask2d):
    M, Dv = att2d.shape
    D = w.shape[1]
    tm = _pick_tm(M)
    row = lambda c: pl.BlockSpec((tm, c), lambda i: (i, 0))
    return pl.pallas_call(
        _proj_res_ln_kernel,
        out_shape=jax.ShapeDtypeStruct((M, D), F32),
        grid=(M // tm,),
        in_specs=[row(Dv), row(D), _wspec((Dv, D)), _wspec((1, D)),
                  _wspec((1, D)), _wspec((1, D)), row(1)],
        out_specs=row(D),
        compiler_params=_cparams(),
    )(att2d, res2d, w, b, gamma, beta, mask2d)


# ------- all N mesh levels: fc_o + residual + LN + mask + sigmoid gate -------

def _enc_gate_kernel(att_ref, sa_ref, wo_ref, bo_ref, g_ref, be_ref,
                     ws_ref, we_ref, ab_ref, m_ref, o_ref, *, n_levels):
    sa = sa_ref[...]                                        # (tm, D)
    mask = m_ref[...]                                       # (tm, 1)
    D = sa.shape[-1]
    # self-att half of all N gate projections in ONE matmul: (tm, D) x (D, N*D)
    sa_gate = jnp.dot(sa, ws_ref[...], preferred_element_type=F32)
    acc = jnp.zeros_like(sa)
    for n in range(n_levels):                               # N is small (3/5/7)
        y = (jnp.dot(att_ref[n], wo_ref[...], preferred_element_type=F32)
             + bo_ref[...] + sa)
        e = _layernorm(y, g_ref[...], be_ref[...]) * mask    # enc_att_n * mask_pad
        alpha = jax.nn.sigmoid(sa_gate[:, n * D:(n + 1) * D]
                               + jnp.dot(e, we_ref[n], preferred_element_type=F32)
                               + ab_ref[n])
        acc = acc + e * alpha
    o_ref[...] = (acc * (1.0 / math.sqrt(n_levels)) * mask).astype(o_ref.dtype)


def enc_gate(att3, sa2d, p_enc, alpha_ws, alpha_we, alpha_b, mask2d):
    """att3: (N, M, h*d_v) per-level attention outputs (lane-packed heads);
    sa2d: (M, D) masked self-attention output (residual + gate input)."""
    N, M, ndv = att3.shape
    D = sa2d.shape[1]
    tm = _pick_tm(M)
    row = lambda c: pl.BlockSpec((tm, c), lambda i: (i, 0))
    return pl.pallas_call(
        functools.partial(_enc_gate_kernel, n_levels=N),
        out_shape=jax.ShapeDtypeStruct((M, D), F32),
        grid=(M // tm,),
        in_specs=[pl.BlockSpec((N, tm, ndv), lambda i: (0, i, 0)),
                  row(D),
                  _wspec((ndv, D)), _wspec((1, D)), _wspec((1, D)), _wspec((1, D)),
                  _wspec((D, N * D)), _wspec((N, D, D)), _wspec((N, 1, D)),
                  row(1)],
        out_specs=row(D),
        compiler_params=_cparams(),
    )(att3, sa2d, p_enc['wo'], p_enc['bo'], p_enc['ln_g'], p_enc['ln_b'],
      alpha_ws, alpha_we, alpha_b, mask2d)


# ------------------------- position-wise feed-forward -----------------------

def _pwff_kernel(x_ref, w1_ref, b1_ref, w2_ref, b2_ref, g_ref, be_ref, m_ref, o_ref):
    x = x_ref[...]
    hdn = jnp.maximum(jnp.dot(x, w1_ref[...], preferred_element_type=F32)
                      + b1_ref[...], 0.0)
    y = jnp.dot(hdn, w2_ref[...], preferred_element_type=F32) + b2_ref[...] + x
    o_ref[...] = (_layernorm(y, g_ref[...], be_ref[...]) * m_ref[...]).astype(o_ref.dtype)


def pwff(x2d, p, mask2d):
    M, D = x2d.shape
    Dff = p['w1'].shape[1]
    tm = _pick_tm(M)
    row = lambda c: pl.BlockSpec((tm, c), lambda i: (i, 0))
    return pl.pallas_call(
        _pwff_kernel,
        out_shape=jax.ShapeDtypeStruct((M, D), F32),
        grid=(M // tm,),
        in_specs=[row(D), _wspec((D, Dff)), _wspec((1, Dff)),
                  _wspec((Dff, D)), _wspec((1, D)), _wspec((1, D)), _wspec((1, D)),
                  row(1)],
        out_specs=row(D),
        compiler_params=_cparams(),
    )(x2d, p['w1'], p['b1'], p['w2'], p['b2'], p['ln_g'], p['ln_b'], mask2d)


# --------------------- vocab projection + log_softmax -----------------------

def _logits_lsm_kernel(x_ref, w_ref, o_ref):
    logits = jnp.dot(x_ref[...], w_ref[...], preferred_element_type=F32)
    mx = jnp.max(logits, axis=-1, keepdims=True)
    s = logits - mx
    lse = jnp.log(jnp.sum(jnp.exp(s), axis=-1, keepdims=True))
    o_ref[...] = (s - lse).astype(o_ref.dtype)


def logits_log_softmax(x2d, w):
    """log_softmax(x @ w) fused — logits never hit HBM before normalization.
    TODO(synk): V-tile (128-multiples) with an online logsumexp for large vocab."""
    M, D = x2d.shape
    V = w.shape[1]
    tm = _pick_tm(M)
    return pl.pallas_call(
        _logits_lsm_kernel,
        out_shape=jax.ShapeDtypeStruct((M, V), F32),
        grid=(M // tm,),
        in_specs=[pl.BlockSpec((tm, D), lambda i: (i, 0)), _wspec((D, V))],
        out_specs=pl.BlockSpec((tm, V), lambda i: (i, 0)),
        compiler_params=_cparams(),
    )(x2d, w)


# --------------------------- model glue (plain JAX) ------------------------

def sinusoid_encoding_table(n_position, d_model, padding_idx=None):
    pos = np.arange(n_position)[:, None].astype(np.float64)
    i = np.arange(d_model)[None, :]
    angle = pos / np.power(10000.0, 2 * (i // 2) / d_model)
    table = np.zeros((n_position, d_model), dtype=np.float64)
    table[:, 0::2] = np.sin(angle[:, 0::2])
    table[:, 1::2] = np.cos(angle[:, 1::2])
    if padding_idx is not None:
        table[padding_idx] = 0.0
    return jnp.asarray(table, F32)


def decoder_layer(p, x2d, enc_flat, mask2d, self_mask_add, enc_mask_add, dims):
    B, Lp, N = dims['B'], dims['Lp'], dims['N']
    h, d_k, d_v = dims['h'], dims['d_k'], dims['d_v']
    nqk, ndv = h * d_k, h * d_v
    M, D = x2d.shape
    Rp = enc_flat.shape[0] // (N * B)

    # ---- self attention: fused QKV matmul; heads stay lane-packed ----
    sp = p['self_att']
    qkv = linear(x2d, sp['wqkv'], sp['bqkv'])                             # (M, 2nqk+ndv)
    att = self_mha(qkv.reshape(B, Lp, -1), self_mask_add, h, d_k, d_v)    # (B, Lp, ndv)
    sa2d = proj_res_ln_mask(att.reshape(M, ndv), x2d, sp['wo'], sp['bo'],
                            sp['ln_g'], sp['ln_b'], mask2d)               # masked

    # ---- enc attention over all N mesh levels + fused fc_o/LN/mask + gate ----
    ep = p['enc_att']
    q = linear(sa2d, ep['wq'], ep['bq'])                                  # (M, nqk)
    kv = linear(enc_flat, ep['wkv'], ep['bkv'])                           # (N*B*Rp, nqk+ndv)
    att_l = cross_mha(q.reshape(B, Lp, nqk),
                      kv.reshape(N * B, Rp, nqk + ndv),
                      enc_mask_add, h, d_k, d_v)                          # (N*B, Lp, ndv)
    gated = enc_gate(att_l.reshape(N, M, ndv), sa2d, ep,
                     p['alpha_ws'], p['alpha_we'], p['alpha_b'], mask2d)

    # ---- position-wise FFN (ReLU MLP + residual + LN + pad mask, fused) ----
    return pwff(gated, p['pwff'], mask2d)


def meshed_decoder_forward(params, tokens, encoder_output, mask_encoder, cfg):
    B, L = tokens.shape
    D, V, pad = cfg['d_model'], cfg['vocab_size'], cfg['padding_idx']
    N, h, d_k, d_v = cfg['N'], cfg['h'], cfg['d_k'], cfg['d_v']

    # Pad sequence / region axes ONCE so every row kernel tiles cleanly
    # (no per-call jnp.pad / out[:M] HBM copies). Extra positions act as pad tokens.
    Lp = _round_up(max(L, 8), 8)
    if Lp != L:
        tokens = jnp.pad(tokens, ((0, 0), (0, Lp - L)), constant_values=pad)
    M = B * Lp

    R = encoder_output.shape[2]
    Rp = _round_up(max(R, 8), 8)
    # (B, N, R, D) -> (N, B, Rp, D) once per forward (shared by all layers) so the
    # per-level attention outputs reshape to (N, B*Lp, h*d_v) for free.
    enc_nbr = jnp.transpose(encoder_output, (1, 0, 2, 3))
    if Rp != R:
        enc_nbr = jnp.pad(enc_nbr, ((0, 0), (0, 0), (0, Rp - R), (0, 0)))
    enc_flat = enc_nbr.reshape(N * B * Rp, D)

    mask2d = (tokens != pad).astype(F32).reshape(M, 1)                       # (M, 1)
    triu = jnp.triu(jnp.ones((Lp, Lp), jnp.int32), k=1)[None]                # (1, Lp, Lp)
    pad_keys = (tokens == pad)[:, None, :].astype(jnp.int32)                 # (B, 1, Lp)
    self_mask_add = jnp.where((triu + pad_keys) > 0, NEG_INF, 0.0).astype(F32)
    enc_mask_add = jnp.where(mask_encoder[:, 0], NEG_INF, 0.0).astype(F32)   # (B, 1, R)
    if Rp != R:
        enc_mask_add = jnp.pad(enc_mask_add, ((0, 0), (0, 0), (0, Rp - R)),
                               constant_values=NEG_INF)

    seq = jnp.broadcast_to(jnp.arange(1, Lp + 1, dtype=jnp.int32)[None, :], (B, Lp))
    seq = jnp.where(tokens == pad, 0, seq)
    x2d = (params['word_emb'][tokens] + params['pos_table'][seq]).reshape(M, D)

    dims = dict(B=B, Lp=Lp, N=N, h=h, d_k=d_k, d_v=d_v)
    for lp_ in params['layers']:
        x2d = decoder_layer(lp_, x2d, enc_flat, mask2d, self_mask_add,
                            enc_mask_add, dims)

    logp = logits_log_softmax(x2d, params['fc_w'])                            # (M, V)
    return logp.reshape(B, Lp, V)[:, :L]


def init_params(key, cfg):
    V, max_len, N = cfg['vocab_size'], cfg['max_len'], cfg['N']
    D, d_k, d_v, h, d_ff, pad = (cfg['d_model'], cfg['d_k'], cfg['d_v'],
                                 cfg['h'], cfg['d_ff'], cfg['padding_idx'])
    keys = iter(jax.random.split(key, 1024))

    def dense(shape):
        fan_in, fan_out = shape[-2], shape[-1]
        std = math.sqrt(2.0 / (fan_in + fan_out))
        return jax.random.normal(next(keys), shape, F32) * std

    def mha_params(self_att):
        wq, wk, wv = dense((D, h * d_k)), dense((D, h * d_k)), dense((D, h * d_v))
        bq = jnp.zeros((1, h * d_k), F32)
        bk = jnp.zeros((1, h * d_k), F32)
        bv = jnp.zeros((1, h * d_v), F32)
        base = dict(wo=dense((h * d_v, D)), bo=jnp.zeros((1, D), F32),
                    ln_g=jnp.ones((1, D), F32), ln_b=jnp.zeros((1, D), F32))
        if self_att:   # fused QKV projection
            base.update(wqkv=jnp.concatenate([wq, wk, wv], axis=1),
                        bqkv=jnp.concatenate([bq, bk, bv], axis=1))
        else:          # Q from decoder state; fused K/V from encoder levels
            base.update(wq=wq, bq=bq,
                        wkv=jnp.concatenate([wk, wv], axis=1),
                        bkv=jnp.concatenate([bk, bv], axis=1))
        return base

    layers = []
    for _ in range(N):
        layers.append(dict(
            self_att=mha_params(True),
            enc_att=mha_params(False),
            pwff=dict(w1=dense((D, d_ff)), b1=jnp.zeros((1, d_ff), F32),
                      w2=dense((d_ff, D)), b2=jnp.zeros((1, D), F32),
                      ln_g=jnp.ones((1, D), F32), ln_b=jnp.zeros((1, D), F32)),
            # fc_alpha_n (2D -> D): self-att half packed as (D, N*D) for one matmul,
            # enc-att half kept per level as (N, D, D)
            alpha_ws=jnp.concatenate([dense((D, D)) for _ in range(N)], axis=1),
            alpha_we=jnp.stack([dense((D, D)) for _ in range(N)], axis=0),
            alpha_b=jnp.zeros((N, 1, D), F32),
        ))

    word_emb = jax.random.normal(next(keys), (V, D), F32) * 0.02
    word_emb = word_emb.at[pad].set(0.0)
    pos_table = sinusoid_encoding_table(max_len + 1, D, padding_idx=0)
    fc_w = dense((D, V))  # final projection, no bias
    return dict(layers=layers, word_emb=word_emb, pos_table=pos_table, fc_w=fc_w)


if __name__ == "__main__":
    _BUFFERED1 = _probe_buffered1()   # single-buffer resident weights if supported

    cfg = dict(vocab_size=50, max_len=20, N=3, padding_idx=0,
               d_model=32, d_k=8, d_v=8, h=4, d_ff=64)
    key = jax.random.PRNGKey(0)
    pkey, tkey, ekey = jax.random.split(key, 3)
    params = init_params(pkey, cfg)

    B, L, R = 2, 8, 10
    tokens = jax.random.randint(tkey, (B, L), 1, cfg['vocab_size'], dtype=jnp.int32)
    tokens = tokens.at[1, 6:].set(cfg['padding_idx'])          # trailing padding
    encoder_output = jax.random.normal(ekey, (B, cfg['N'], R, cfg['d_model']), F32)
    mask_encoder = jnp.zeros((B, 1, 1, R), bool).at[1, 0, 0, 8:].set(True)

    forward = jax.jit(functools.partial(meshed_decoder_forward, cfg=cfg))
    out = forward(params, tokens, encoder_output, mask_encoder)
    out = jax.block_until_ready(out)
    assert out.shape == (B, L, cfg['vocab_size']), out.shape
    assert bool(jnp.all(jnp.isfinite(out)))
    print("KERNEL_OK")
</pallas_src>

<mosaic_0001>
module attributes {stable_mosaic.version = 11 : i64} {
  func.func @k(%arg0: i32, %arg1: memref<8x128xf32, #tpu.memory_space<vmem>>, %arg2: memref<8x128xf32, #tpu.memory_space<vmem>>) attributes {dimension_semantics = [#tpu.dimension_semantics<parallel>], iteration_bounds = array<i64: 2>, scalar_prefetch = 0 : i64, scratch_operands = 0 : i64, tpu.core_type = #tpu.core_type<tc>, window_params = [{pipeline_mode = #tpu.pipeline_mode<synchronous>, transform_indices = @transform_0, window_bounds = array<i64: 8, 128>}, {transform_indices = @transform_1, window_bounds = array<i64: 8, 128>}]} {
    %c0 = arith.constant 0 : index
    %c0_0 = arith.constant 0 : index
    %0 = vector.load %arg1[%c0, %c0_0] : memref<8x128xf32, #tpu.memory_space<vmem>>, vector<8x128xf32>
    %cst = arith.constant 1.000000e+00 : f32
    %1 = vector.broadcast %cst : f32 to vector<8x128xf32>
    %2 = arith.addf %0, %1 : vector<8x128xf32>
    %c0_1 = arith.constant 0 : index
    %c0_2 = arith.constant 0 : index
    %3 = vector.load %arg2[%c0_1, %c0_2] : memref<8x128xf32, #tpu.memory_space<vmem>>, vector<8x128xf32>
    tpu.vector_store %arg2[%c0_1, %c0_2], %2 {strides = array<i32>} : memref<8x128xf32, #tpu.memory_space<vmem>>, vector<8x128xf32>,
    return
  }
  func.func @transform_0(%arg0: i32) -> (i32, i32) {
    %c0_i32 = arith.constant 0 : i32
    %c0_i32_0 = arith.constant 0 : i32
    %c0_i32_1 = arith.constant 0 : i32
    return %c0_i32, %c0_i32_0 : i32, i32
  }
  func.func @transform_1(%arg0: i32) -> (i32, i32) {
    %c0_i32 = arith.constant 0 : i32
    %c0_i32_0 = arith.constant 0 : i32
    return %arg0, %c0_i32 : i32, i32
  }
}

module attributes {stable_mosaic.version = 11 : i64} {
  func.func @_self_attn_kernel(%arg0: i32, %arg1: memref<1x8x96xf32, #tpu.memory_space<vmem>>, %arg2: memref<1x8x8xf32, #tpu.memory_space<vmem>>, %arg3: memref<1x8x32xf32, #tpu.memory_space<vmem>>) attributes {dimension_semantics = [#tpu.dimension_semantics<parallel>], iteration_bounds = array<i64: 2>, scalar_prefetch = 0 : i64, scratch_operands = 0 : i64, tpu.core_type = #tpu.core_type<tc>, window_params = [{transform_indices = @transform_0, window_bounds = array<i64: 1, 8, 96>}, {transform_indices = @transform_1, window_bounds = array<i64: 1, 8, 8>}, {transform_indices = @transform_2, window_bounds = array<i64: 1, 8, 32>}]} {
    %c0 = arith.constant 0 : index
    %c0_0 = arith.constant 0 : index
    %c0_1 = arith.constant 0 : index
    %0 = vector.load %arg1[%c0, %c0_0, %c0_1] : memref<1x8x96xf32, #tpu.memory_space<vmem>>, vector<1x8x96xf32>
    %1 = vector.shape_cast %0 : vector<1x8x96xf32> to vector<8x96xf32>
    %2 = vector.extract_strided_slice %1 {offsets = [0, 0], sizes = [8, 8], strides = [1, 1]} : vector<8x96xf32> to vector<8x8xf32>
    %3 = vector.extract_strided_slice %1 {offsets = [0, 8], sizes = [8, 8], strides = [1, 1]} : vector<8x96xf32> to vector<8x8xf32>
    %4 = vector.extract_strided_slice %1 {offsets = [0, 16], sizes = [8, 8], strides = [1, 1]} : vector<8x96xf32> to vector<8x8xf32>
    %5 = vector.extract_strided_slice %1 {offsets = [0, 24], sizes = [8, 8], strides = [1, 1]} : vector<8x96xf32> to vector<8x8xf32>
    %6 = vector.shape_cast %2 : vector<8x8xf32> to vector<1x8x8xf32>
    %7 = vector.shape_cast %3 : vector<8x8xf32> to vector<1x8x8xf32>
    %8 = vector.shape_cast %4 : vector<8x8xf32> to vector<1x8x8xf32>
    %9 = vector.shape_cast %5 : vector<8x8xf32> to vector<1x8x8xf32>
    %10 = tpu.concatenate %6, %7, %8, %9 in 0 : vector<1x8x8xf32>, vector<1x8x8xf32>, vector<1x8x8xf32>, vector<1x8x8xf32> -> vector<4x8x8xf32>
    %11 = vector.extract_strided_slice %1 {offsets = [0, 32], sizes = [8, 8], strides = [1, 1]} : vector<8x96xf32> to vector<8x8xf32>
    %12 = vector.extract_strided_slice %1 {offsets = [0, 40], sizes = [8, 8], strides = [1, 1]} : vector<8x96xf32> to vector<8x8xf32>
    %13 = vector.extract_strided_slice %1 {offsets = [0, 48], sizes = [8, 8], strides = [1, 1]} : vector<8x96xf32> to vector<8x8xf32>
    %14 = vector.extract_strided_slice %1 {offsets = [0, 56], sizes = [8, 8], strides = [1, 1]} : vector<8x96xf32> to vector<8x8xf32>
    %15 = vector.shape_cast %11 : vector<8x8xf32> to vector<1x8x8xf32>
    %16 = vector.shape_cast %12 : vector<8x8xf32> to vector<1x8x8xf32>
    %17 = vector.shape_cast %13 : vector<8x8xf32> to vector<1x8x8xf32>
    %18 = vector.shape_cast %14 : vector<8x8xf32> to vector<1x8x8xf32>
    %19 = tpu.concatenate %15, %16, %17, %18 in 0 : vector<1x8x8xf32>, vector<1x8x8xf32>, vector<1x8x8xf32>, vector<1x8x8xf32> -> vector<4x8x8xf32>
    %20 = vector.extract_strided_slice %1 {offsets = [0, 64], sizes = [8, 8], strides = [1, 1]} : vector<8x96xf32> to vector<8x8xf32>
    %21 = vector.extract_strided_slice %1 {offsets = [0, 72], sizes = [8, 8], strides = [1, 1]} : vector<8x96xf32> to vector<8x8xf32>
    %22 = vector.extract_strided_slice %1 {offsets = [0, 80], sizes = [8, 8], strides = [1, 1]} : vector<8x96xf32> to vector<8x8xf32>
    %23 = vector.extract_strided_slice %1 {offsets = [0, 88], sizes = [8, 8], strides = [1, 1]} : vector<8x96xf32> to vector<8x8xf32>
    %24 = vector.shape_cast %20 : vector<8x8xf32> to vector<1x8x8xf32>
    %25 = vector.shape_cast %21 : vector<8x8xf32> to vector<1x8x8xf32>
    %26 = vector.shape_cast %22 : vector<8x8xf32> to vector<1x8x8xf32>
    %27 = vector.shape_cast %23 : vector<8x8xf32> to vector<1x8x8xf32>
    %28 = tpu.concatenate %24, %25, %26, %27 in 0 : vector<1x8x8xf32>, vector<1x8x8xf32>, vector<1x8x8xf32>, vector<1x8x8xf32> -> vector<4x8x8xf32>
    %c0_2 = arith.constant 0 : index
    %c0_3 = arith.constant 0 : index
    %c0_4 = arith.constant 0 : index
    %29 = vector.load %arg2[%c0_2, %c0_3, %c0_4] : memref<1x8x8xf32, #tpu.memory_space<vmem>>, vector<1x8x8xf32>
    %30 = vector.shape_cast %29 : vector<1x8x8xf32> to vector<8x8xf32>
    "tpu.trace_start"() <{level = 10 : i32, message = "hqd,hkd->hqk"}> : () -> ()
    %cst = arith.constant dense<0.000000e+00> : vector<4x8x8xf32>
    %31 = tpu.matmul %10, %19, %cst {dimension_numbers = #tpu.dot_dimension_numbers<[2], [2], [1], [1], [0, 0, 0, 1, 1, 1], [0], [0]>} : vector<4x8x8xf32>, vector<4x8x8xf32>, vector<4x8x8xf32> -> vector<4x8x8xf32>
    "tpu.trace_stop"() : () -> ()
    %cst_5 = arith.constant 0.353553385 : f32
    %32 = vector.broadcast %cst_5 : f32 to vector<4x8x8xf32>
    %33 = arith.mulf %31, %32 : vector<4x8x8xf32>
    %34 = vector.shape_cast %30 : vector<8x8xf32> to vector<1x8x8xf32>
    %35 = vector.broadcast %34 : vector<1x8x8xf32> to vector<4x8x8xf32>
    %36 = arith.addf %33, %35 : vector<4x8x8xf32>
    %cst_6 = arith.constant dense<0xFF800000> : vector<4x8xf32>
    %37 = vector.multi_reduction <maximumf>, %36, %cst_6 [2] : vector<4x8x8xf32> to vector<4x8xf32>
    %38 = vector.shape_cast %37 : vector<4x8xf32> to vector<4x8x1xf32>
    %39 = vector.broadcast %38 : vector<4x8x1xf32> to vector<4x8x8xf32>
    %40 = arith.subf %36, %39 : vector<4x8x8xf32>
    %41 = math.exp %40 : vector<4x8x8xf32>
    %cst_7 = arith.constant dense<0.000000e+00> : vector<4x8xf32>
    %42 = vector.multi_reduction <add>, %41, %cst_7 [2] : vector<4x8x8xf32> to vector<4x8xf32>
    %43 = vector.shape_cast %42 : vector<4x8xf32> to vector<4x8x1xf32>
    %44 = tpu.reciprocal %43 {approx = true} : vector<4x8x1xf32> -> vector<4x8x1xf32>
    %45 = vector.broadcast %44 : vector<4x8x1xf32> to vector<4x8x8xf32>
    %46 = arith.mulf %41, %45 : vector<4x8x8xf32>
    "tpu.trace_start"() <{level = 10 : i32, message = "hqk,hkd->hqd"}> : () -> ()
    %cst_8 = arith.constant dense<0.000000e+00> : vector<4x8x8xf32>
    %47 = tpu.matmul %46, %28, %cst_8 {dimension_numbers = #tpu.dot_dimension_numbers<[2], [1], [1], [2], [0, 0, 0, 1, 1, 2], [0], [0]>} : vector<4x8x8xf32>, vector<4x8x8xf32>, vector<4x8x8xf32> -> vector<4x8x8xf32>
    "tpu.trace_stop"() : () -> ()
    %48 = vector.extract_strided_slice %47 {offsets = [0, 0, 0], sizes = [1, 8, 8], strides = [1, 1, 1]} : vector<4x8x8xf32> to vector<1x8x8xf32>
    %49 = vector.shape_cast %48 : vector<1x8x8xf32> to vector<8x8xf32>
    %50 = vector.extract_strided_slice %47 {offsets = [1, 0, 0], sizes = [1, 8, 8], strides = [1, 1, 1]} : vector<4x8x8xf32> to vector<1x8x8xf32>
    %51 = vector.shape_cast %50 : vector<1x8x8xf32> to vector<8x8xf32>
    %52 = vector.extract_strided_slice %47 {offsets = [2, 0, 0], sizes = [1, 8, 8], strides = [1, 1, 1]} : vector<4x8x8xf32> to vector<1x8x8xf32>
    %53 = vector.shape_cast %52 : vector<1x8x8xf32> to vector<8x8xf32>
    %54 = vector.extract_strided_slice %47 {offsets = [3, 0, 0], sizes = [1, 8, 8], strides = [1, 1, 1]} : vector<4x8x8xf32> to vector<1x8x8xf32>
    %55 = vector.shape_cast %54 : vector<1x8x8xf32> to vector<8x8xf32>
    %56 = tpu.concatenate %49, %51, %53, %55 in 1 : vector<8x8xf32>, vector<8x8xf32>, vector<8x8xf32>, vector<8x8xf32> -> vector<8x32xf32>
    %c0_9 = arith.constant 0 : index
    %c0_10 = arith.constant 0 : index
    %c0_11 = arith.constant 0 : index
    %57 = vector.load %arg3[%c0_9, %c0_10, %c0_11] : memref<1x8x32xf32, #tpu.memory_space<vmem>>, vector<1x8x32xf32>
    %58 = vector.shape_cast %57 : vector<1x8x32xf32> to vector<8x32xf32>
    %59 = vector.shape_cast %56 : vector<8x32xf32> to vector<1x8x32xf32>
    tpu.vector_store %arg3[%c0_9, %c0_10, %c0_11], %59 {strides = array<i32>} : memref<1x8x32xf32, #tpu.memory_space<vmem>>, vector<1x8x32xf32>,
    return
  }
  func.func @transform_0(%arg0: i32) -> (i32, i32, i32) {
    %c0_i32 = arith.constant 0 : i32
    %c0_i32_0 = arith.constant 0 : i32
    %c0_i32_1 = arith.constant 0 : i32
    return %arg0, %c0_i32, %c0_i32_0 : i32, i32, i32
  }
  func.func @transform_1(%arg0: i32) -> (i32, i32, i32) {
    %c0_i32 = arith.constant 0 : i32
    %c0_i32_0 = arith.constant 0 : i32
    %c0_i32_1 = arith.constant 0 : i32
    return %arg0, %c0_i32, %c0_i32_0 : i32, i32, i32
  }
  func.func @transform_2(%arg0: i32) -> (i32, i32, i32) {
    %c0_i32 = arith.constant 0 : i32
    %c0_i32_0 = arith.constant 0 : i32
    %c0_i32_1 = arith.constant 0 : i32
    return %arg0, %c0_i32, %c0_i32_0 : i32, i32, i32
  }
}

module attributes {stable_mosaic.version = 11 : i64} {
  func.func @_linear_kernel(%arg0: i32, %arg1: memref<8x32xf32, #tpu.memory_space<vmem>>, %arg2: memref<32x96xf32, #tpu.memory_space<vmem>>, %arg3: memref<1x96xf32, #tpu.memory_space<vmem>>, %arg4: memref<8x96xf32, #tpu.memory_space<vmem>>) attributes {dimension_semantics = [#tpu.dimension_semantics<parallel>], iteration_bounds = array<i64: 2>, scalar_prefetch = 0 : i64, scratch_operands = 0 : i64, tpu.core_type = #tpu.core_type<tc>, window_params = [{transform_indices = @transform_0, window_bounds = array<i64: 8, 32>}, {pipeline_mode = #tpu.pipeline_mode<synchronous>, transform_indices = @transform_1, window_bounds = array<i64: 32, 96>}, {pipeline_mode = #tpu.pipeline_mode<synchronous>, transform_indices = @transform_2, window_bounds = array<i64: 1, 96>}, {transform_indices = @transform_3, window_bounds = array<i64: 8, 96>}]} {
    %c0 = arith.constant 0 : index
    %c0_0 = arith.constant 0 : index
    %0 = vector.load %arg1[%c0, %c0_0] : memref<8x32xf32, #tpu.memory_space<vmem>>, vector<8x32xf32>
    %c0_1 = arith.constant 0 : index
    %c0_2 = arith.constant 0 : index
    %1 = vector.load %arg2[%c0_1, %c0_2] : memref<32x96xf32, #tpu.memory_space<vmem>>, vector<32x96xf32>
    %cst = arith.constant dense<0.000000e+00> : vector<8x96xf32>
    %2 = tpu.matmul %0, %1, %cst {dimension_numbers = #tpu.dot_dimension_numbers<[1], [0], [0], [1], [0, 0, 1, 1], [], []>} : vector<8x32xf32>, vector<32x96xf32>, vector<8x96xf32> -> vector<8x96xf32>
    %c0_3 = arith.constant 0 : index
    %c0_4 = arith.constant 0 : index
    %3 = vector.load %arg3[%c0_3, %c0_4] : memref<1x96xf32, #tpu.memory_space<vmem>>, vector<1x96xf32>
    %4 = vector.broadcast %3 : vector<1x96xf32> to vector<8x96xf32>
    %5 = arith.addf %2, %4 : vector<8x96xf32>
    %c0_5 = arith.constant 0 : index
    %c0_6 = arith.constant 0 : index
    %6 = vector.load %arg4[%c0_5, %c0_6] : memref<8x96xf32, #tpu.memory_space<vmem>>, vector<8x96xf32>
    tpu.vector_store %arg4[%c0_5, %c0_6], %5 {strides = array<i32>} : memref<8x96xf32, #tpu.memory_space<vmem>>, vector<8x96xf32>,
    return
  }
  func.func @transform_0(%arg0: i32) -> (i32, i32) {
    %c0_i32 = arith.constant 0 : i32
    %c0_i32_0 = arith.constant 0 : i32
    return %arg0, %c0_i32 : i32, i32
  }
  func.func @transform_1(%arg0: i32) -> (i32, i32) {
    %c0_i32 = arith.constant 0 : i32
    %c0_i32_0 = arith.constant 0 : i32
    %c0_i32_1 = arith.constant 0 : i32
    return %c0_i32, %c0_i32_0 : i32, i32
  }
  func.func @transform_2(%arg0: i32) -> (i32, i32) {
    %c0_i32 = arith.constant 0 : i32
    %c0_i32_0 = arith.constant 0 : i32
    %c0_i32_1 = arith.constant 0 : i32
    return %c0_i32, %c0_i32_0 : i32, i32
  }
  func.func @transform_3(%arg0: i32) -> (i32, i32) {
    %c0_i32 = arith.constant 0 : i32
    %c0_i32_0 = arith.constant 0 : i32
    return %arg0, %c0_i32 : i32, i32
  }
}

module attributes {stable_mosaic.version = 11 : i64} {
  func.func @_linear_kernel(%arg0: i32, %arg1: memref<8x32xf32, #tpu.memory_space<vmem>>, %arg2: memref<32x32xf32, #tpu.memory_space<vmem>>, %arg3: memref<1x32xf32, #tpu.memory_space<vmem>>, %arg4: memref<8x32xf32, #tpu.memory_space<vmem>>) attributes {dimension_semantics = [#tpu.dimension_semantics<parallel>], iteration_bounds = array<i64: 2>, scalar_prefetch = 0 : i64, scratch_operands = 0 : i64, tpu.core_type = #tpu.core_type<tc>, window_params = [{transform_indices = @transform_0, window_bounds = array<i64: 8, 32>}, {pipeline_mode = #tpu.pipeline_mode<synchronous>, transform_indices = @transform_1, window_bounds = array<i64: 32, 32>}, {pipeline_mode = #tpu.pipeline_mode<synchronous>, transform_indices = @transform_2, window_bounds = array<i64: 1, 32>}, {transform_indices = @transform_3, window_bounds = array<i64: 8, 32>}]} {
    %c0 = arith.constant 0 : index
    %c0_0 = arith.constant 0 : index
    %0 = vector.load %arg1[%c0, %c0_0] : memref<8x32xf32, #tpu.memory_space<vmem>>, vector<8x32xf32>
    %c0_1 = arith.constant 0 : index
    %c0_2 = arith.constant 0 : index
    %1 = vector.load %arg2[%c0_1, %c0_2] : memref<32x32xf32, #tpu.memory_space<vmem>>, vector<32x32xf32>
    %cst = arith.constant dense<0.000000e+00> : vector<8x32xf32>
    %2 = tpu.matmul %0, %1, %cst {dimension_numbers = #tpu.dot_dimension_numbers<[1], [0], [0], [1], [0, 0, 1, 1], [], []>} : vector<8x32xf32>, vector<32x32xf32>, vector<8x32xf32> -> vector<8x32xf32>
    %c0_3 = arith.constant 0 : index
    %c0_4 = arith.constant 0 : index
    %3 = vector.load %arg3[%c0_3, %c0_4] : memref<1x32xf32, #tpu.memory_space<vmem>>, vector<1x32xf32>
    %4 = vector.broadcast %3 : vector<1x32xf32> to vector<8x32xf32>
    %5 = arith.addf %2, %4 : vector<8x32xf32>
    %c0_5 = arith.constant 0 : index
    %c0_6 = arith.constant 0 : index
    %6 = vector.load %arg4[%c0_5, %c0_6] : memref<8x32xf32, #tpu.memory_space<vmem>>, vector<8x32xf32>
    tpu.vector_store %arg4[%c0_5, %c0_6], %5 {strides = array<i32>} : memref<8x32xf32, #tpu.memory_space<vmem>>, vector<8x32xf32>,
    return
  }
  func.func @transform_0(%arg0: i32) -> (i32, i32) {
    %c0_i32 = arith.constant 0 : i32
    %c0_i32_0 = arith.constant 0 : i32
    return %arg0, %c0_i32 : i32, i32
  }
  func.func @transform_1(%arg0: i32) -> (i32, i32) {
    %c0_i32 = arith.constant 0 : i32
    %c0_i32_0 = arith.constant 0 : i32
    %c0_i32_1 = arith.constant 0 : i32
    return %c0_i32, %c0_i32_0 : i32, i32
  }
  func.func @transform_2(%arg0: i32) -> (i32, i32) {
    %c0_i32 = arith.constant 0 : i32
    %c0_i32_0 = arith.constant 0 : i32
    %c0_i32_1 = arith.constant 0 : i32
    return %c0_i32, %c0_i32_0 : i32, i32
  }
  func.func @transform_3(%arg0: i32) -> (i32, i32) {
    %c0_i32 = arith.constant 0 : i32
    %c0_i32_0 = arith.constant 0 : i32
    return %arg0, %c0_i32 : i32, i32
  }
}

module attributes {stable_mosaic.version = 11 : i64} {
  func.func @_proj_res_ln_kernel(%arg0: i32, %arg1: memref<8x32xf32, #tpu.memory_space<vmem>>, %arg2: memref<8x32xf32, #tpu.memory_space<vmem>>, %arg3: memref<32x32xf32, #tpu.memory_space<vmem>>, %arg4: memref<1x32xf32, #tpu.memory_space<vmem>>, %arg5: memref<1x32xf32, #tpu.memory_space<vmem>>, %arg6: memref<1x32xf32, #tpu.memory_space<vmem>>, %arg7: memref<8x1xf32, #tpu.memory_space<vmem>>, %arg8: memref<8x32xf32, #tpu.memory_space<vmem>>) attributes {dimension_semantics = [#tpu.dimension_semantics<parallel>], iteration_bounds = array<i64: 2>, scalar_prefetch = 0 : i64, scratch_operands = 0 : i64, tpu.core_type = #tpu.core_type<tc>, window_params = [{transform_indices = @transform_0, window_bounds = array<i64: 8, 32>}, {transform_indices = @transform_1, window_bounds = array<i64: 8, 32>}, {pipeline_mode = #tpu.pipeline_mode<synchronous>, transform_indices = @transform_2, window_bounds = array<i64: 32, 32>}, {pipeline_mode = #tpu.pipeline_mode<synchronous>, transform_indices = @transform_3, window_bounds = array<i64: 1, 32>}, {pipeline_mode = #tpu.pipeline_mode<synchronous>, transform_indices = @transform_4, window_bounds = array<i64: 1, 32>}, {pipeline_mode = #tpu.pipeline_mode<synchronous>, transform_indices = @transform_5, window_bounds = array<i64: 1, 32>}, {transform_indices = @transform_6, window_bounds = array<i64: 8, 1>}, {transform_indices = @transform_7, window_bounds = array<i64: 8, 32>}]} {
    %c0 = arith.constant 0 : index
    %c0_0 = arith.constant 0 : index
    %0 = vector.load %arg1[%c0, %c0_0] : memref<8x32xf32, #tpu.memory_space<vmem>>, vector<8x32xf32>
    %c0_1 = arith.constant 0 : index
    %c0_2 = arith.constant 0 : index
    %1 = vector.load %arg3[%c0_1, %c0_2] : memref<32x32xf32, #tpu.memory_space<vmem>>, vector<32x32xf32>
    %cst = arith.constant dense<0.000000e+00> : vector<8x32xf32>
    %2 = tpu.matmul %0, %1, %cst {dimension_numbers = #tpu.dot_dimension_numbers<[1], [0], [0], [1], [0, 0, 1, 1], [], []>} : vector<8x32xf32>, vector<32x32xf32>, vector<8x32xf32> -> vector<8x32xf32>
    %c0_3 = arith.constant 0 : index
    %c0_4 = arith.constant 0 : index
    %3 = vector.load %arg4[%c0_3, %c0_4] : memref<1x32xf32, #tpu.memory_space<vmem>>, vector<1x32xf32>
    %4 = vector.broadcast %3 : vector<1x32xf32> to vector<8x32xf32>
    %5 = arith.addf %2, %4 : vector<8x32xf32>
    %c0_5 = arith.constant 0 : index
    %c0_6 = arith.constant 0 : index
    %6 = vector.load %arg2[%c0_5, %c0_6] : memref<8x32xf32, #tpu.memory_space<vmem>>, vector<8x32xf32>
    %7 = arith.addf %5, %6 : vector<8x32xf32>
    %c0_7 = arith.constant 0 : index
    %c0_8 = arith.constant 0 : index
    %8 = vector.load %arg5[%c0_7, %c0_8] : memref<1x32xf32, #tpu.memory_space<vmem>>, vector<1x32xf32>
    %c0_9 = arith.constant 0 : index
    %c0_10 = arith.constant 0 : index
    %9 = vector.load %arg6[%c0_9, %c0_10] : memref<1x32xf32, #tpu.memory_space<vmem>>, vector<1x32xf32>
    %cst_11 = arith.constant dense<0.000000e+00> : vector<8xf32>
    %10 = vector.multi_reduction <add>, %7, %cst_11 [1] : vector<8x32xf32> to vector<8xf32>
    %11 = vector.shape_cast %10 : vector<8xf32> to vector<8x1xf32>
    %cst_12 = arith.constant 3.200000e+01 : f32
    %12 = vector.broadcast %cst_12 : f32 to vector<8x1xf32>
    %13 = arith.divf %11, %12 : vector<8x1xf32>
    %14 = vector.broadcast %13 : vector<8x1xf32> to vector<8x32xf32>
    %15 = arith.subf %7, %14 : vector<8x32xf32>
    %16 = arith.mulf %15, %15 : vector<8x32xf32>
    %cst_13 = arith.constant dense<0.000000e+00> : vector<8xf32>
    %17 = vector.multi_reduction <add>, %16, %cst_13 [1] : vector<8x32xf32> to vector<8xf32>
    %18 = vector.shape_cast %17 : vector<8xf32> to vector<8x1xf32>
    %cst_14 = arith.constant 3.200000e+01 : f32
    %19 = vector.broadcast %cst_14 : f32 to vector<8x1xf32>
    %20 = arith.divf %18, %19 : vector<8x1xf32>
    %21 = vector.broadcast %13 : vector<8x1xf32> to vector<8x32xf32>
    %22 = arith.subf %7, %21 : vector<8x32xf32>
    %cst_15 = arith.constant 9.99999974E-6 : f32
    %23 = vector.broadcast %cst_15 : f32 to vector<8x1xf32>
    %24 = arith.addf %20, %23 : vector<8x1xf32>
    %25 = math.rsqrt %24 : vector<8x1xf32>
    %26 = vector.broadcast %25 : vector<8x1xf32> to vector<8x32xf32>
    %27 = arith.mulf %22, %26 : vector<8x32xf32>
    %28 = vector.broadcast %8 : vector<1x32xf32> to vector<8x32xf32>
    %29 = arith.mulf %27, %28 : vector<8x32xf32>
    %30 = vector.broadcast %9 : vector<1x32xf32> to vector<8x32xf32>
    %31 = arith.addf %29, %30 : vector<8x32xf32>
    %c0_16 = arith.constant 0 : index
    %c0_17 = arith.constant 0 : index
    %32 = vector.load %arg7[%c0_16, %c0_17] : memref<8x1xf32, #tpu.memory_space<vmem>>, vector<8x1xf32>
    %33 = vector.broadcast %32 : vector<8x1xf32> to vector<8x32xf32>
    %34 = arith.mulf %31, %33 : vector<8x32xf32>
    %c0_18 = arith.constant 0 : index
    %c0_19 = arith.constant 0 : index
    %35 = vector.load %arg8[%c0_18, %c0_19] : memref<8x32xf32, #tpu.memory_space<vmem>>, vector<8x32xf32>
    tpu.vector_store %arg8[%c0_18, %c0_19], %34 {strides = array<i32>} : memref<8x32xf32, #tpu.memory_space<vmem>>, vector<8x32xf32>,
    return
  }
  func.func @transform_0(%arg0: i32) -> (i32, i32) {
    %c0_i32 = arith.constant 0 : i32
    %c0_i32_0 = arith.constant 0 : i32
    return %arg0, %c0_i32 : i32, i32
  }
  func.func @transform_1(%arg0: i32) -> (i32, i32) {
    %c0_i32 = arith.constant 0 : i32
    %c0_i32_0 = arith.constant 0 : i32
    return %arg0, %c0_i32 : i32, i32
  }
  func.func @transform_2(%arg0: i32) -> (i32, i32) {
    %c0_i32 = arith.constant 0 : i32
    %c0_i32_0 = arith.constant 0 : i32
    %c0_i32_1 = arith.constant 0 : i32
    return %c0_i32, %c0_i32_0 : i32, i32
  }
  func.func @transform_3(%arg0: i32) -> (i32, i32) {
    %c0_i32 = arith.constant 0 : i32
    %c0_i32_0 = arith.constant 0 : i32
    %c0_i32_1 = arith.constant 0 : i32
    return %c0_i32, %c0_i32_0 : i32, i32
  }
  func.func @transform_4(%arg0: i32) -> (i32, i32) {
    %c0_i32 = arith.constant 0 : i32
    %c0_i32_0 = arith.constant 0 : i32
    %c0_i32_1 = arith.constant 0 : i32
    return %c0_i32, %c0_i32_0 : i32, i32
  }
  func.func @transform_5(%arg0: i32) -> (i32, i32) {
    %c0_i32 = arith.constant 0 : i32
    %c0_i32_0 = arith.constant 0 : i32
    %c0_i32_1 = arith.constant 0 : i32
    return %c0_i32, %c0_i32_0 : i32, i32
  }
  func.func @transform_6(%arg0: i32) -> (i32, i32) {
    %c0_i32 = arith.constant 0 : i32
    %c0_i32_0 = arith.constant 0 : i32
    return %arg0, %c0_i32 : i32, i32
  }
  func.func @transform_7(%arg0: i32) -> (i32, i32) {
    %c0_i32 = arith.constant 0 : i32
    %c0_i32_0 = arith.constant 0 : i32
    return %arg0, %c0_i32 : i32, i32
  }
}

module attributes {stable_mosaic.version = 11 : i64} {
  func.func @_enc_gate_kernel(%arg0: i32, %arg1: memref<3x8x32xf32, #tpu.memory_space<vmem>>, %arg2: memref<8x32xf32, #tpu.memory_space<vmem>>, %arg3: memref<32x32xf32, #tpu.memory_space<vmem>>, %arg4: memref<1x32xf32, #tpu.memory_space<vmem>>, %arg5: memref<1x32xf32, #tpu.memory_space<vmem>>, %arg6: memref<1x32xf32, #tpu.memory_space<vmem>>, %arg7: memref<32x96xf32, #tpu.memory_space<vmem>>, %arg8: memref<3x32x32xf32, #tpu.memory_space<vmem>>, %arg9: memref<3x1x32xf32, #tpu.memory_space<vmem>>, %arg10: memref<8x1xf32, #tpu.memory_space<vmem>>, %arg11: memref<8x32xf32, #tpu.memory_space<vmem>>) attributes {dimension_semantics = [#tpu.dimension_semantics<parallel>], iteration_bounds = array<i64: 2>, scalar_prefetch = 0 : i64, scratch_operands = 0 : i64, tpu.core_type = #tpu.core_type<tc>, window_params = [{transform_indices = @transform_0, window_bounds = array<i64: 3, 8, 32>}, {transform_indices = @transform_1, window_bounds = array<i64: 8, 32>}, {pipeline_mode = #tpu.pipeline_mode<synchronous>, transform_indices = @transform_2, window_bounds = array<i64: 32, 32>}, {pipeline_mode = #tpu.pipeline_mode<synchronous>, transform_indices = @transform_3, window_bounds = array<i64: 1, 32>}, {pipeline_mode = #tpu.pipeline_mode<synchronous>, transform_indices = @transform_4, window_bounds = array<i64: 1, 32>}, {pipeline_mode = #tpu.pipeline_mode<synchronous>, transform_indices = @transform_5, window_bounds = array<i64: 1, 32>}, {pipeline_mode = #tpu.pipeline_mode<synchronous>, transform_indices = @transform_6, window_bounds = array<i64: 32, 96>}, {pipeline_mode = #tpu.pipeline_mode<synchronous>, transform_indices = @transform_7, window_bounds = array<i64: 3, 32, 32>}, {pipeline_mode = #tpu.pipeline_mode<synchronous>, transform_indices = @transform_8, window_bounds = array<i64: 3, 1, 32>}, {transform_indices = @transform_9, window_bounds = array<i64: 8, 1>}, {transform_indices = @transform_10, window_bounds = array<i64: 8, 32>}]} {
    %c0 = arith.constant 0 : index
    %c0_0 = arith.constant 0 : index
    %0 = vector.load %arg2[%c0, %c0_0] : memref<8x32xf32, #tpu.memory_space<vmem>>, vector<8x32xf32>
    %c0_1 = arith.constant 0 : index
    %c0_2 = arith.constant 0 : index
    %1 = vector.load %arg10[%c0_1, %c0_2] : memref<8x1xf32, #tpu.memory_space<vmem>>, vector<8x1xf32>
    %c0_3 = arith.constant 0 : index
    %c0_4 = arith.constant 0 : index
    %2 = vector.load %arg7[%c0_3, %c0_4] : memref<32x96xf32, #tpu.memory_space<vmem>>, vector<32x96xf32>
    %cst = arith.constant dense<0.000000e+00> : vector<8x96xf32>
    %3 = tpu.matmul %0, %2, %cst {dimension_numbers = #tpu.dot_dimension_numbers<[1], [0], [0], [1], [0, 0, 1, 1], [], []>} : vector<8x32xf32>, vector<32x96xf32>, vector<8x96xf32> -> vector<8x96xf32>
    %cst_5 = arith.constant 0.000000e+00 : f32
    %4 = vector.broadcast %cst_5 : f32 to vector<8x32xf32>
    %c0_6 = arith.constant 0 : index
    %c0_7 = arith.constant 0 : index
    %c0_8 = arith.constant 0 : index
    %5 = vector.load %arg1[%c0_6, %c0_7, %c0_8] : memref<3x8x32xf32, #tpu.memory_space<vmem>>, vector<1x8x32xf32>
    %6 = vector.shape_cast %5 : vector<1x8x32xf32> to vector<8x32xf32>
    %c0_9 = arith.constant 0 : index
    %c0_10 = arith.constant 0 : index
    %7 = vector.load %arg3[%c0_9, %c0_10] : memref<32x32xf32, #tpu.memory_space<vmem>>, vector<32x32xf32>
    %cst_11 = arith.constant dense<0.000000e+00> : vector<8x32xf32>
    %8 = tpu.matmul %6, %7, %cst_11 {dimension_numbers = #tpu.dot_dimension_numbers<[1], [0], [0], [1], [0, 0, 1, 1], [], []>} : vector<8x32xf32>, vector<32x32xf32>, vector<8x32xf32> -> vector<8x32xf32>
    %c0_12 = arith.constant 0 : index
    %c0_13 = arith.constant 0 : index
    %9 = vector.load %arg4[%c0_12, %c0_13] : memref<1x32xf32, #tpu.memory_space<vmem>>, vector<1x32xf32>
    %10 = vector.broadcast %9 : vector<1x32xf32> to vector<8x32xf32>
    %11 = arith.addf %8, %10 : vector<8x32xf32>
    %12 = arith.addf %11, %0 : vector<8x32xf32>
    %c0_14 = arith.constant 0 : index
    %c0_15 = arith.constant 0 : index
    %13 = vector.load %arg5[%c0_14, %c0_15] : memref<1x32xf32, #tpu.memory_space<vmem>>, vector<1x32xf32>
    %c0_16 = arith.constant 0 : index
    %c0_17 = arith.constant 0 : index
    %14 = vector.load %arg6[%c0_16, %c0_17] : memref<1x32xf32, #tpu.memory_space<vmem>>, vector<1x32xf32>
    %cst_18 = arith.constant dense<0.000000e+00> : vector<8xf32>
    %15 = vector.multi_reduction <add>, %12, %cst_18 [1] : vector<8x32xf32> to vector<8xf32>
    %16 = vector.shape_cast %15 : vector<8xf32> to vector<8x1xf32>
    %cst_19 = arith.constant 3.200000e+01 : f32
    %17 = vector.broadcast %cst_19 : f32 to vector<8x1xf32>
    %18 = arith.divf %16, %17 : vector<8x1xf32>
    %19 = vector.broadcast %18 : vector<8x1xf32> to vector<8x32xf32>
    %20 = arith.subf %12, %19 : vector<8x32xf32>
    %21 = arith.mulf %20, %20 : vector<8x32xf32>
    %cst_20 = arith.constant dense<0.000000e+00> : vector<8xf32>
    %22 = vector.multi_reduction <add>, %21, %cst_20 [1] : vector<8x32xf32> to vector<8xf32>
    %23 = vector.shape_cast %22 : vector<8xf32> to vector<8x1xf32>
    %cst_21 = arith.constant 3.200000e+01 : f32
    %24 = vector.broadcast %cst_21 : f32 to vector<8x1xf32>
    %25 = arith.divf %23, %24 : vector<8x1xf32>
    %26 = vector.broadcast %18 : vector<8x1xf32> to vector<8x32xf32>
    %27 = arith.subf %12, %26 : vector<8x32xf32>
    %cst_22 = arith.constant 9.99999974E-6 : f32
    %28 = vector.broadcast %cst_22 : f32 to vector<8x1xf32>
    %29 = arith.addf %25, %28 : vector<8x1xf32>
    %30 = math.rsqrt %29 : vector<8x1xf32>
    %31 = vector.broadcast %30 : vector<8x1xf32> to vector<8x32xf32>
    %32 = arith.mulf %27, %31 : vector<8x32xf32>
    %33 = vector.broadcast %13 : vector<1x32xf32> to vector<8x32xf32>
    %34 = arith.mulf %32, %33 : vector<8x32xf32>
    %35 = vector.broadcast %14 : vector<1x32xf32> to vector<8x32xf32>
    %36 = arith.addf %34, %35 : vector<8x32xf32>
    %37 = vector.broadcast %1 : vector<8x1xf32> to vector<8x32xf32>
    %38 = arith.mulf %36, %37 : vector<8x32xf32>
    %39 = vector.extract_strided_slice %3 {offsets = [0, 0], sizes = [8, 32], strides = [1, 1]} : vector<8x96xf32> to vector<8x32xf32>
    %c0_23 = arith.constant 0 : index
    %c0_24 = arith.constant 0 : index
    %c0_25 = arith.constant 0 : index
    %40 = vector.load %arg8[%c0_23, %c0_24, %c0_25] : memref<3x32x32xf32, #tpu.memory_space<vmem>>, vector<1x32x32xf32>
    %41 = vector.shape_cast %40 : vector<1x32x32xf32> to vector<32x32xf32>
    %cst_26 = arith.constant dense<0.000000e+00> : vector<8x32xf32>
    %42 = tpu.matmul %38, %41, %cst_26 {dimension_numbers = #tpu.dot_dimension_numbers<[1], [0], [0], [1], [0, 0, 1, 1], [], []>} : vector<8x32xf32>, vector<32x32xf32>, vector<8x32xf32> -> vector<8x32xf32>
    %43 = arith.addf %39, %42 : vector<8x32xf32>
    %c0_27 = arith.constant 0 : index
    %c0_28 = arith.constant 0 : index
    %c0_29 = arith.constant 0 : index
    %44 = vector.load %arg9[%c0_27, %c0_28, %c0_29] : memref<3x1x32xf32, #tpu.memory_space<vmem>>, vector<1x1x32xf32>
    %45 = vector.shape_cast %44 : vector<1x1x32xf32> to vector<1x32xf32>
    %46 = vector.broadcast %45 : vector<1x32xf32> to vector<8x32xf32>
    %47 = arith.addf %43, %46 : vector<8x32xf32>
    %48 = arith.negf %47 : vector<8x32xf32>
    %49 = math.exp %48 : vector<8x32xf32>
    %cst_30 = arith.constant 1.000000e+00 : f32
    %50 = vector.broadcast %cst_30 : f32 to vector<8x32xf32>
    %51 = arith.addf %50, %49 : vector<8x32xf32>
    %52 = arith.divf %50, %51 : vector<8x32xf32>
    %53 = arith.mulf %38, %52 : vector<8x32xf32>
    %54 = arith.addf %4, %53 : vector<8x32xf32>
    %c1 = arith.constant 1 : index
    %c0_31 = arith.constant 0 : index
    %c0_32 = arith.constant 0 : index
    %55 = vector.load %arg1[%c1, %c0_31, %c0_32] : memref<3x8x32xf32, #tpu.memory_space<vmem>>, vector<1x8x32xf32>
    %56 = vector.shape_cast %55 : vector<1x8x32xf32> to vector<8x32xf32>
    %c0_33 = arith.constant 0 : index
    %c0_34 = arith.constant 0 : index
    %57 = vector.load %arg3[%c0_33, %c0_34] : memref<32x32xf32, #tpu.memory_space<vmem>>, vector<32x32xf32>
    %cst_35 = arith.constant dense<0.000000e+00> : vector<8x32xf32>
    %58 = tpu.matmul %56, %57, %cst_35 {dimension_numbers = #tpu.dot_dimension_numbers<[1], [0], [0], [1], [0, 0, 1, 1], [], []>} : vector<8x32xf32>, vector<32x32xf32>, vector<8x32xf32> -> vector<8x32xf32>
    %c0_36 = arith.constant 0 : index
    %c0_37 = arith.constant 0 : index
    %59 = vector.load %arg4[%c0_36, %c0_37] : memref<1x32xf32, #tpu.memory_space<vmem>>, vector<1x32xf32>
    %60 = vector.broadcast %59 : vector<1x32xf32> to vector<8x32xf32>
    %61 = arith.addf %58, %60 : vector<8x32xf32>
    %62 = arith.addf %61, %0 : vector<8x32xf32>
    %c0_38 = arith.constant 0 : index
    %c0_39 = arith.constant 0 : index
    %63 = vector.load %arg5[%c0_38, %c0_39] : memref<1x32xf32, #tpu.memory_space<vmem>>, vector<1x32xf32>
    %c0_40 = arith.constant 0 : index
    %c0_41 = arith.constant 0 : index
    %64 = vector.load %arg6[%c0_40, %c0_41] : memref<1x32xf32, #tpu.memory_space<vmem>>, vector<1x32xf32>
    %cst_42 = arith.constant dense<0.000000e+00> : vector<8xf32>
    %65 = vector.multi_reduction <add>, %62, %cst_42 [1] : vector<8x32xf32> to vector<8xf32>
    %66 = vector.shape_cast %65 : vector<8xf32> to vector<8x1xf32>
    %cst_43 = arith.constant 3.200000e+01 : f32
    %67 = vector.broadcast %cst_43 : f32 to vector<8x1xf32>
    %68 = arith.divf %66, %67 : vector<8x1xf32>
    %69 = vector.broadcast %68 : vector<8x1xf32> to vector<8x32xf32>
    %70 = arith.subf %62, %69 : vector<8x32xf32>
    %71 = arith.mulf %70, %70 : vector<8x32xf32>
    %cst_44 = arith.constant dense<0.000000e+00> : vector<8xf32>
    %72 = vector.multi_reduction <add>, %71, %cst_44 [1] : vector<8x32xf32> to vector<8xf32>
    %73 = vector.shape_cast %72 : vector<8xf32> to vector<8x1xf32>
    %cst_45 = arith.constant 3.200000e+01 : f32
    %74 = vector.broadcast %cst_45 : f32 to vector<8x1xf32>
    %75 = arith.divf %73, %74 : vector<8x1xf32>
    %76 = vector.broadcast %68 : vector<8x1xf32> to vector<8x32xf32>
    %77 = arith.subf %62, %76 : vector<8x32xf32>
    %cst_46 = arith.constant 9.99999974E-6 : f32
    %78 = vector.broadcast %cst_46 : f32 to vector<8x1xf32>
    %79 = arith.addf %75, %78 : vector<8x1xf32>
    %80 = math.rsqrt %79 : vector<8x1xf32>
    %81 = vector.broadcast %80 : vector<8x1xf32> to vector<8x32xf32>
    %82 = arith.mulf %77, %81 : vector<8x32xf32>
    %83 = vector.broadcast %63 : vector<1x32xf32> to vector<8x32xf32>
    %84 = arith.mulf %82, %83 : vector<8x32xf32>
    %85 = vector.broadcast %64 : vector<1x32xf32> to vector<8x32xf32>
    %86 = arith.addf %84, %85 : vector<8x32xf32>
    %87 = vector.broadcast %1 : vector<8x1xf32> to vector<8x32xf32>
    %88 = arith.mulf %86, %87 : vector<8x32xf32>
    %89 = vector.extract_strided_slice %3 {offsets = [0, 32], sizes = [8, 32], strides = [1, 1]} : vector<8x96xf32> to vector<8x32xf32>
    %c1_47 = arith.constant 1 : index
    %c0_48 = arith.constant 0 : index
    %c0_49 = arith.constant 0 : index
    %90 = vector.load %arg8[%c1_47, %c0_48, %c0_49] : memref<3x32x32xf32, #tpu.memory_space<vmem>>, vector<1x32x32xf32>
    %91 = vector.shape_cast %90 : vector<1x32x32xf32> to vector<32x32xf32>
    %cst_50 = arith.constant dense<0.000000e+00> : vector<8x32xf32>
    %92 = tpu.matmul %88, %91, %cst_50 {dimension_numbers = #tpu.dot_dimension_numbers<[1], [0], [0], [1], [0, 0, 1, 1], [], []>} : vector<8x32xf32>, vector<32x32xf32>, vector<8x32xf32> -> vector<8x32xf32>
    %93 = arith.addf %89, %92 : vector<8x32xf32>
    %c1_51 = arith.constant 1 : index
    %c0_52 = arith.constant 0 : index
    %c0_53 = arith.constant 0 : index
    %94 = vector.load %arg9[%c1_51, %c0_52, %c0_53] : memref<3x1x32xf32, #tpu.memory_space<vmem>>, vector<1x1x32xf32>
    %95 = vector.shape_cast %94 : vector<1x1x32xf32> to vector<1x32xf32>
    %96 = vector.broadcast %95 : vector<1x32xf32> to vector<8x32xf32>
    %97 = arith.addf %93, %96 : vector<8x32xf32>
    %98 = arith.negf %97 : vector<8x32xf32>
    %99 = math.exp %98 : vector<8x32xf32>
    %cst_54 = arith.constant 1.000000e+00 : f32
    %100 = vector.broadcast %cst_54 : f32 to vector<8x32xf32>
    %101 = arith.addf %100, %99 : vector<8x32xf32>
    %102 = arith.divf %100, %101 : vector<8x32xf32>
    %103 = arith.mulf %88, %102 : vector<8x32xf32>
    %104 = arith.addf %54, %103 : vector<8x32xf32>
    %c2 = arith.constant 2 : index
    %c0_55 = arith.constant 0 : index
    %c0_56 = arith.constant 0 : index
    %105 = vector.load %arg1[%c2, %c0_55, %c0_56] : memref<3x8x32xf32, #tpu.memory_space<vmem>>, vector<1x8x32xf32>
    %106 = vector.shape_cast %105 : vector<1x8x32xf32> to vector<8x32xf32>
    %c0_57 = arith.constant 0 : index
    %c0_58 = arith.constant 0 : index
    %107 = vector.load %arg3[%c0_57, %c0_58] : memref<32x32xf32, #tpu.memory_space<vmem>>, vector<32x32xf32>
    %cst_59 = arith.constant dense<0.000000e+00> : vector<8x32xf32>
    %108 = tpu.matmul %106, %107, %cst_59 {dimension_numbers = #tpu.dot_dimension_numbers<[1], [0], [0], [1], [0, 0, 1, 1], [], []>} : vector<8x32xf32>, vector<32x32xf32>, vector<8x32xf32> -> vector<8x32xf32>
    %c0_60 = arith.constant 0 : index
    %c0_61 = arith.constant 0 : index
    %109 = vector.load %arg4[%c0_60, %c0_61] : memref<1x32xf32, #tpu.memory_space<vmem>>, vector<1x32xf32>
    %110 = vector.broadcast %109 : vector<1x32xf32> to vector<8x32xf32>
    %111 = arith.addf %108, %110 : vector<8x32xf32>
    %112 = arith.addf %111, %0 : vector<8x32xf32>
    %c0_62 = arith.constant 0 : index
    %c0_63 = arith.constant 0 : index
    %113 = vector.load %arg5[%c0_62, %c0_63] : memref<1x32xf32, #tpu.memory_space<vmem>>, vector<1x32xf32>
    %c0_64 = arith.constant 0 : index
    %c0_65 = arith.constant 0 : index
    %114 = vector.load %arg6[%c0_64, %c0_65] : memref<1x32xf32, #tpu.memory_space<vmem>>, vector<1x32xf32>
    %cst_66 = arith.constant dense<0.000000e+00> : vector<8xf32>
    %115 = vector.multi_reduction <add>, %112, %cst_66 [1] : vector<8x32xf32> to vector<8xf32>
    %116 = vector.shape_cast %115 : vector<8xf32> to vector<8x1xf32>
    %cst_67 = arith.constant 3.200000e+01 : f32
    %117 = vector.broadcast %cst_67 : f32 to vector<8x1xf32>
    %118 = arith.divf %116, %117 : vector<8x1xf32>
    %119 = vector.broadcast %118 : vector<8x1xf32> to vector<8x32xf32>
    %120 = arith.subf %112, %119 : vector<8x32xf32>
    %121 = arith.mulf %120, %120 : vector<8x32xf32>
    %cst_68 = arith.constant dense<0.000000e+00> : vector<8xf32>
    %122 = vector.multi_reduction <add>, %121, %cst_68 [1] : vector<8x32xf32> to vector<8xf32>
    %123 = vector.shape_cast %122 : vector<8xf32> to vector<8x1xf32>
    %cst_69 = arith.constant 3.200000e+01 : f32
    %124 = vector.broadcast %cst_69 : f32 to vector<8x1xf32>
    %125 = arith.divf %123, %124 : vector<8x1xf32>
    %126 = vector.broadcast %118 : vector<8x1xf32> to vector<8x32xf32>
    %127 = arith.subf %112, %126 : vector<8x32xf32>
    %cst_70 = arith.constant 9.99999974E-6 : f32
    %128 = vector.broadcast %cst_70 : f32 to vector<8x1xf32>
    %129 = arith.addf %125, %128 : vector<8x1xf32>
    %130 = math.rsqrt %129 : vector<8x1xf32>
    %131 = vector.broadcast %130 : vector<8x1xf32> to vector<8x32xf32>
    %132 = arith.mulf %127, %131 : vector<8x32xf32>
    %133 = vector.broadcast %113 : vector<1x32xf32> to vector<8x32xf32>
    %134 = arith.mulf %132, %133 : vector<8x32xf32>
    %135 = vector.broadcast %114 : vector<1x32xf32> to vector<8x32xf32>
    %136 = arith.addf %134, %135 : vector<8x32xf32>
    %137 = vector.broadcast %1 : vector<8x1xf32> to vector<8x32xf32>
    %138 = arith.mulf %136, %137 : vector<8x32xf32>
    %139 = vector.extract_strided_slice %3 {offsets = [0, 64], sizes = [8, 32], strides = [1, 1]} : vector<8x96xf32> to vector<8x32xf32>
    %c2_71 = arith.constant 2 : index
    %c0_72 = arith.constant 0 : index
    %c0_73 = arith.constant 0 : index
    %140 = vector.load %arg8[%c2_71, %c0_72, %c0_73] : memref<3x32x32xf32, #tpu.memory_space<vmem>>, vector<1x32x32xf32>
    %141 = vector.shape_cast %140 : vector<1x32x32xf32> to vector<32x32xf32>
    %cst_74 = arith.constant dense<0.000000e+00> : vector<8x32xf32>
    %142 = tpu.matmul %138, %141, %cst_74 {dimension_numbers = #tpu.dot_dimension_numbers<[1], [0], [0], [1], [0, 0, 1, 1], [], []>} : vector<8x32xf32>, vector<32x32xf32>, vector<8x32xf32> -> vector<8x32xf32>
    %143 = arith.addf %139, %142 : vector<8x32xf32>
    %c2_75 = arith.constant 2 : index
    %c0_76 = arith.constant 0 : index
    %c0_77 = arith.constant 0 : index
    %144 = vector.load %arg9[%c2_75, %c0_76, %c0_77] : memref<3x1x32xf32, #tpu.memory_space<vmem>>, vector<1x1x32xf32>
    %145 = vector.shape_cast %144 : vector<1x1x32xf32> to vector<1x32xf32>
    %146 = vector.broadcast %145 : vector<1x32xf32> to vector<8x32xf32>
    %147 = arith.addf %143, %146 : vector<8x32xf32>
    %148 = arith.negf %147 : vector<8x32xf32>
    %149 = math.exp %148 : vector<8x32xf32>
    %cst_78 = arith.constant 1.000000e+00 : f32
    %150 = vector.broadcast %cst_78 : f32 to vector<8x32xf32>
    %151 = arith.addf %150, %149 : vector<8x32xf32>
    %152 = arith.divf %150, %151 : vector<8x32xf32>
    %153 = arith.mulf %138, %152 : vector<8x32xf32>
    %154 = arith.addf %104, %153 : vector<8x32xf32>
    %cst_79 = arith.constant 0.577350259 : f32
    %155 = vector.broadcast %cst_79 : f32 to vector<8x32xf32>
    %156 = arith.mulf %154, %155 : vector<8x32xf32>
    %157 = vector.broadcast %1 : vector<8x1xf32> to vector<8x32xf32>
    %158 = arith.mulf %156, %157 : vector<8x32xf32>
    %c0_80 = arith.constant 0 : index
    %c0_81 = arith.constant 0 : index
    %159 = vector.load %arg11[%c0_80, %c0_81] : memref<8x32xf32, #tpu.memory_space<vmem>>, vector<8x32xf32>
    tpu.vector_store %arg11[%c0_80, %c0_81], %158 {strides = array<i32>} : memref<8x32xf32, #tpu.memory_space<vmem>>, vector<8x32xf32>,
    return
  }
  func.func @transform_0(%arg0: i32) -> (i32, i32, i32) {
    %c0_i32 = arith.constant 0 : i32
    %c0_i32_0 = arith.constant 0 : i32
    %c0_i32_1 = arith.constant 0 : i32
    return %c0_i32, %arg0, %c0_i32_0 : i32, i32, i32
  }
  func.func @transform_1(%arg0: i32) -> (i32, i32) {
    %c0_i32 = arith.constant 0 : i32
    %c0_i32_0 = arith.constant 0 : i32
    return %arg0, %c0_i32 : i32, i32
  }
  func.func @transform_2(%arg0: i32) -> (i32, i32) {
    %c0_i32 = arith.constant 0 : i32
    %c0_i32_0 = arith.constant 0 : i32
    %c0_i32_1 = arith.constant 0 : i32
    return %c0_i32, %c0_i32_0 : i32, i32
  }
  func.func @transform_3(%arg0: i32) -> (i32, i32) {
    %c0_i32 = arith.constant 0 : i32
    %c0_i32_0 = arith.constant 0 : i32
    %c0_i32_1 = arith.constant 0 : i32
    return %c0_i32, %c0_i32_0 : i32, i32
  }
  func.func @transform_4(%arg0: i32) -> (i32, i32) {
    %c0_i32 = arith.constant 0 : i32
    %c0_i32_0 = arith.constant 0 : i32
    %c0_i32_1 = arith.constant 0 : i32
    return %c0_i32, %c0_i32_0 : i32, i32
  }
  func.func @transform_5(%arg0: i32) -> (i32, i32) {
    %c0_i32 = arith.constant 0 : i32
    %c0_i32_0 = arith.constant 0 : i32
    %c0_i32_1 = arith.constant 0 : i32
    return %c0_i32, %c0_i32_0 : i32, i32
  }
  func.func @transform_6(%arg0: i32) -> (i32, i32) {
    %c0_i32 = arith.constant 0 : i32
    %c0_i32_0 = arith.constant 0 : i32
    %c0_i32_1 = arith.constant 0 : i32
    return %c0_i32, %c0_i32_0 : i32, i32
  }
  func.func @transform_7(%arg0: i32) -> (i32, i32, i32) {
    %c0_i32 = arith.constant 0 : i32
    %c0_i32_0 = arith.constant 0 : i32
    %c0_i32_1 = arith.constant 0 : i32
    %c0_i32_2 = arith.constant 0 : i32
    return %c0_i32, %c0_i32_0, %c0_i32_1 : i32, i32, i32
  }
  func.func @transform_8(%arg0: i32) -> (i32, i32, i32) {
    %c0_i32 = arith.constant 0 : i32
    %c0_i32_0 = arith.constant 0 : i32
    %c0_i32_1 = arith.constant 0 : i32
    %c0_i32_2 = arith.constant 0 : i32
    return %c0_i32, %c0_i32_0, %c0_i32_1 : i32, i32, i32
  }
  func.func @transform_9(%arg0: i32) -> (i32, i32) {
    %c0_i32 = arith.constant 0 : i32
    %c0_i32_0 = arith.constant 0 : i32
    return %arg0, %c0_i32 : i32, i32
  }
  func.func @transform_10(%arg0: i32) -> (i32, i32) {
    %c0_i32 = arith.constant 0 : i32
    %c0_i32_0 = arith.constant 0 : i32
    return %arg0, %c0_i32 : i32, i32
  }
}

module attributes {stable_mosaic.version = 11 : i64} {
  func.func @_cross_attn_kernel(%arg0: i32, %arg1: memref<1x8x32xf32, #tpu.memory_space<vmem>>, %arg2: memref<1x16x64xf32, #tpu.memory_space<vmem>>, %arg3: memref<1x1x16xf32, #tpu.memory_space<vmem>>, %arg4: memref<1x8x32xf32, #tpu.memory_space<vmem>>) attributes {dimension_semantics = [#tpu.dimension_semantics<parallel>], iteration_bounds = array<i64: 6>, scalar_prefetch = 0 : i64, scratch_operands = 0 : i64, tpu.core_type = #tpu.core_type<tc>, window_params = [{transform_indices = @transform_0, window_bounds = array<i64: 1, 8, 32>}, {transform_indices = @transform_1, window_bounds = array<i64: 1, 16, 64>}, {transform_indices = @transform_2, window_bounds = array<i64: 1, 1, 16>}, {transform_indices = @transform_3, window_bounds = array<i64: 1, 8, 32>}]} {
    %c0 = arith.constant 0 : index
    %c0_0 = arith.constant 0 : index
    %c0_1 = arith.constant 0 : index
    %0 = vector.load %arg1[%c0, %c0_0, %c0_1] : memref<1x8x32xf32, #tpu.memory_space<vmem>>, vector<1x8x32xf32>
    %1 = vector.shape_cast %0 : vector<1x8x32xf32> to vector<8x32xf32>
    %2 = vector.extract_strided_slice %1 {offsets = [0, 0], sizes = [8, 8], strides = [1, 1]} : vector<8x32xf32> to vector<8x8xf32>
    %3 = vector.extract_strided_slice %1 {offsets = [0, 8], sizes = [8, 8], strides = [1, 1]} : vector<8x32xf32> to vector<8x8xf32>
    %4 = vector.extract_strided_slice %1 {offsets = [0, 16], sizes = [8, 8], strides = [1, 1]} : vector<8x32xf32> to vector<8x8xf32>
    %5 = vector.extract_strided_slice %1 {offsets = [0, 24], sizes = [8, 8], strides = [1, 1]} : vector<8x32xf32> to vector<8x8xf32>
    %6 = vector.shape_cast %2 : vector<8x8xf32> to vector<1x8x8xf32>
    %7 = vector.shape_cast %3 : vector<8x8xf32> to vector<1x8x8xf32>
    %8 = vector.shape_cast %4 : vector<8x8xf32> to vector<1x8x8xf32>
    %9 = vector.shape_cast %5 : vector<8x8xf32> to vector<1x8x8xf32>
    %10 = tpu.concatenate %6, %7, %8, %9 in 0 : vector<1x8x8xf32>, vector<1x8x8xf32>, vector<1x8x8xf32>, vector<1x8x8xf32> -> vector<4x8x8xf32>
    %c0_2 = arith.constant 0 : index
    %c0_3 = arith.constant 0 : index
    %c0_4 = arith.constant 0 : index
    %11 = vector.load %arg2[%c0_2, %c0_3, %c0_4] : memref<1x16x64xf32, #tpu.memory_space<vmem>>, vector<1x16x64xf32>
    %12 = vector.shape_cast %11 : vector<1x16x64xf32> to vector<16x64xf32>
    %13 = vector.extract_strided_slice %12 {offsets = [0, 0], sizes = [16, 8], strides = [1, 1]} : vector<16x64xf32> to vector<16x8xf32>
    %14 = vector.extract_strided_slice %12 {offsets = [0, 8], sizes = [16, 8], strides = [1, 1]} : vector<16x64xf32> to vector<16x8xf32>
    %15 = vector.extract_strided_slice %12 {offsets = [0, 16], sizes = [16, 8], strides = [1, 1]} : vector<16x64xf32> to vector<16x8xf32>
    %16 = vector.extract_strided_slice %12 {offsets = [0, 24], sizes = [16, 8], strides = [1, 1]} : vector<16x64xf32> to vector<16x8xf32>
    %17 = vector.shape_cast %13 : vector<16x8xf32> to vector<1x16x8xf32>
    %18 = vector.shape_cast %14 : vector<16x8xf32> to vector<1x16x8xf32>
    %19 = vector.shape_cast %15 : vector<16x8xf32> to vector<1x16x8xf32>
    %20 = vector.shape_cast %16 : vector<16x8xf32> to vector<1x16x8xf32>
    %21 = tpu.concatenate %17, %18, %19, %20 in 0 : vector<1x16x8xf32>, vector<1x16x8xf32>, vector<1x16x8xf32>, vector<1x16x8xf32> -> vector<4x16x8xf32>
    %22 = vector.extract_strided_slice %12 {offsets = [0, 32], sizes = [16, 8], strides = [1, 1]} : vector<16x64xf32> to vector<16x8xf32>
    %23 = vector.extract_strided_slice %12 {offsets = [0, 40], sizes = [16, 8], strides = [1, 1]} : vector<16x64xf32> to vector<16x8xf32>
    %24 = vector.extract_strided_slice %12 {offsets = [0, 48], sizes = [16, 8], strides = [1, 1]} : vector<16x64xf32> to vector<16x8xf32>
    %25 = vector.extract_strided_slice %12 {offsets = [0, 56], sizes = [16, 8], strides = [1, 1]} : vector<16x64xf32> to vector<16x8xf32>
    %26 = vector.shape_cast %22 : vector<16x8xf32> to vector<1x16x8xf32>
    %27 = vector.shape_cast %23 : vector<16x8xf32> to vector<1x16x8xf32>
    %28 = vector.shape_cast %24 : vector<16x8xf32> to vector<1x16x8xf32>
    %29 = vector.shape_cast %25 : vector<16x8xf32> to vector<1x16x8xf32>
    %30 = tpu.concatenate %26, %27, %28, %29 in 0 : vector<1x16x8xf32>, vector<1x16x8xf32>, vector<1x16x8xf32>, vector<1x16x8xf32> -> vector<4x16x8xf32>
    %c0_5 = arith.constant 0 : index
    %c0_6 = arith.constant 0 : index
    %c0_7 = arith.constant 0 : index
    %31 = vector.load %arg3[%c0_5, %c0_6, %c0_7] : memref<1x1x16xf32, #tpu.memory_space<vmem>>, vector<1x1x16xf32>
    %32 = vector.shape_cast %31 : vector<1x1x16xf32> to vector<1x16xf32>
    "tpu.trace_start"() <{level = 10 : i32, message = "hqd,hkd->hqk"}> : () -> ()
    %cst = arith.constant dense<0.000000e+00> : vector<4x8x16xf32>
    %33 = tpu.matmul %10, %21, %cst {dimension_numbers = #tpu.dot_dimension_numbers<[2], [2], [1], [1], [0, 0, 0, 1, 1, 1], [0], [0]>} : vector<4x8x8xf32>, vector<4x16x8xf32>, vector<4x8x16xf32> -> vector<4x8x16xf32>
    "tpu.trace_stop"() : () -> ()
    %cst_8 = arith.constant 0.353553385 : f32
    %34 = vector.broadcast %cst_8 : f32 to vector<4x8x16xf32>
    %35 = arith.mulf %33, %34 : vector<4x8x16xf32>
    %36 = vector.shape_cast %32 : vector<1x16xf32> to vector<1x1x16xf32>
    %37 = vector.broadcast %36 : vector<1x1x16xf32> to vector<4x8x16xf32>
    %38 = arith.addf %35, %37 : vector<4x8x16xf32>
    %cst_9 = arith.constant dense<0xFF800000> : vector<4x8xf32>
    %39 = vector.multi_reduction <maximumf>, %38, %cst_9 [2] : vector<4x8x16xf32> to vector<4x8xf32>
    %40 = vector.shape_cast %39 : vector<4x8xf32> to vector<4x8x1xf32>
    %41 = vector.broadcast %40 : vector<4x8x1xf32> to vector<4x8x16xf32>
    %42 = arith.subf %38, %41 : vector<4x8x16xf32>
    %43 = math.exp %42 : vector<4x8x16xf32>
    %cst_10 = arith.constant dense<0.000000e+00> : vector<4x8xf32>
    %44 = vector.multi_reduction <add>, %43, %cst_10 [2] : vector<4x8x16xf32> to vector<4x8xf32>
    %45 = vector.shape_cast %44 : vector<4x8xf32> to vector<4x8x1xf32>
    %46 = tpu.reciprocal %45 {approx = true} : vector<4x8x1xf32> -> vector<4x8x1xf32>
    %47 = vector.broadcast %46 : vector<4x8x1xf32> to vector<4x8x16xf32>
    %48 = arith.mulf %43, %47 : vector<4x8x16xf32>
    "tpu.trace_start"() <{level = 10 : i32, message = "hqk,hkd->hqd"}> : () -> ()
    %cst_11 = arith.constant dense<0.000000e+00> : vector<4x8x8xf32>
    %49 = tpu.matmul %48, %30, %cst_11 {dimension_numbers = #tpu.dot_dimension_numbers<[2], [1], [1], [2], [0, 0, 0, 1, 1, 2], [0], [0]>} : vector<4x8x16xf32>, vector<4x16x8xf32>, vector<4x8x8xf32> -> vector<4x8x8xf32>
    "tpu.trace_stop"() : () -> ()
    %50 = vector.extract_strided_slice %49 {offsets = [0, 0, 0], sizes = [1, 8, 8], strides = [1, 1, 1]} : vector<4x8x8xf32> to vector<1x8x8xf32>
    %51 = vector.shape_cast %50 : vector<1x8x8xf32> to vector<8x8xf32>
    %52 = vector.extract_strided_slice %49 {offsets = [1, 0, 0], sizes = [1, 8, 8], strides = [1, 1, 1]} : vector<4x8x8xf32> to vector<1x8x8xf32>
    %53 = vector.shape_cast %52 : vector<1x8x8xf32> to vector<8x8xf32>
    %54 = vector.extract_strided_slice %49 {offsets = [2, 0, 0], sizes = [1, 8, 8], strides = [1, 1, 1]} : vector<4x8x8xf32> to vector<1x8x8xf32>
    %55 = vector.shape_cast %54 : vector<1x8x8xf32> to vector<8x8xf32>
    %56 = vector.extract_strided_slice %49 {offsets = [3, 0, 0], sizes = [1, 8, 8], strides = [1, 1, 1]} : vector<4x8x8xf32> to vector<1x8x8xf32>
    %57 = vector.shape_cast %56 : vector<1x8x8xf32> to vector<8x8xf32>
    %58 = tpu.concatenate %51, %53, %55, %57 in 1 : vector<8x8xf32>, vector<8x8xf32>, vector<8x8xf32>, vector<8x8xf32> -> vector<8x32xf32>
    %c0_12 = arith.constant 0 : index
    %c0_13 = arith.constant 0 : index
    %c0_14 = arith.constant 0 : index
    %59 = vector.load %arg4[%c0_12, %c0_13, %c0_14] : memref<1x8x32xf32, #tpu.memory_space<vmem>>, vector<1x8x32xf32>
    %60 = vector.shape_cast %59 : vector<1x8x32xf32> to vector<8x32xf32>
    %61 = vector.shape_cast %58 : vector<8x32xf32> to vector<1x8x32xf32>
    tpu.vector_store %arg4[%c0_12, %c0_13, %c0_14], %61 {strides = array<i32>} : memref<1x8x32xf32, #tpu.memory_space<vmem>>, vector<1x8x32xf32>,
    return
  }
  func.func @transform_0(%arg0: i32) -> (i32, i32, i32) {
    %c2_i32 = arith.constant 2 : i32
    %c0_i32 = arith.constant 0 : i32
    %0 = arith.cmpi eq, %c2_i32, %c0_i32 : i32
    %c1_i32 = arith.constant 1 : i32
    %1 = arith.select %0, %c1_i32, %c2_i32 : i32
    %2 = arith.remsi %arg0, %1 : i32
    %c0_i32_0 = arith.constant 0 : i32
    %3 = arith.cmpi ne, %2, %c0_i32_0 : i32
    %c0_i32_1 = arith.constant 0 : i32
    %4 = arith.cmpi slt, %2, %c0_i32_1 : i32
    %c0_i32_2 = arith.constant 0 : i32
    %5 = arith.cmpi slt, %1, %c0_i32_2 : i32
    %6 = arith.xori %4, %5 : i1
    %7 = arith.andi %6, %3 : i1
    %8 = arith.addi %2, %1 : i32
    %9 = arith.select %7, %8, %2 : i32
    %c0_i32_3 = arith.constant 0 : i32
    %c0_i32_4 = arith.constant 0 : i32
    %c0_i32_5 = arith.constant 0 : i32
    return %9, %c0_i32_3, %c0_i32_4 : i32, i32, i32
  }
  func.func @transform_1(%arg0: i32) -> (i32, i32, i32) {
    %c0_i32 = arith.constant 0 : i32
    %c0_i32_0 = arith.constant 0 : i32
    %c0_i32_1 = arith.constant 0 : i32
    return %arg0, %c0_i32, %c0_i32_0 : i32, i32, i32
  }
  func.func @transform_2(%arg0: i32) -> (i32, i32, i32) {
    %c2_i32 = arith.constant 2 : i32
    %c0_i32 = arith.constant 0 : i32
    %0 = arith.cmpi eq, %c2_i32, %c0_i32 : i32
    %c1_i32 = arith.constant 1 : i32
    %1 = arith.select %0, %c1_i32, %c2_i32 : i32
    %2 = arith.remsi %arg0, %1 : i32
    %c0_i32_0 = arith.constant 0 : i32
    %3 = arith.cmpi ne, %2, %c0_i32_0 : i32
    %c0_i32_1 = arith.constant 0 : i32
    %4 = arith.cmpi slt, %2, %c0_i32_1 : i32
    %c0_i32_2 = arith.constant 0 : i32
    %5 = arith.cmpi slt, %1, %c0_i32_2 : i32
    %6 = arith.xori %4, %5 : i1
    %7 = arith.andi %6, %3 : i1
    %8 = arith.addi %2, %1 : i32
    %9 = arith.select %7, %8, %2 : i32
    %c0_i32_3 = arith.constant 0 : i32
    %c0_i32_4 = arith.constant 0 : i32
    %c0_i32_5 = arith.constant 0 : i32
    return %9, %c0_i32_3, %c0_i32_4 : i32, i32, i32
  }
  func.func @transform_3(%arg0: i32) -> (i32, i32, i32) {
    %c0_i32 = arith.constant 0 : i32
    %c0_i32_0 = arith.constant 0 : i32
    %c0_i32_1 = arith.constant 0 : i32
    return %arg0, %c0_i32, %c0_i32_0 : i32, i32, i32
  }
}

module attributes {stable_mosaic.version = 11 : i64} {
  func.func @_pwff_kernel(%arg0: i32, %arg1: memref<8x32xf32, #tpu.memory_space<vmem>>, %arg2: memref<32x64xf32, #tpu.memory_space<vmem>>, %arg3: memref<1x64xf32, #tpu.memory_space<vmem>>, %arg4: memref<64x32xf32, #tpu.memory_space<vmem>>, %arg5: memref<1x32xf32, #tpu.memory_space<vmem>>, %arg6: memref<1x32xf32, #tpu.memory_space<vmem>>, %arg7: memref<1x32xf32, #tpu.memory_space<vmem>>, %arg8: memref<8x1xf32, #tpu.memory_space<vmem>>, %arg9: memref<8x32xf32, #tpu.memory_space<vmem>>) attributes {dimension_semantics = [#tpu.dimension_semantics<parallel>], iteration_bounds = array<i64: 2>, scalar_prefetch = 0 : i64, scratch_operands = 0 : i64, tpu.core_type = #tpu.core_type<tc>, window_params = [{transform_indices = @transform_0, window_bounds = array<i64: 8, 32>}, {pipeline_mode = #tpu.pipeline_mode<synchronous>, transform_indices = @transform_1, window_bounds = array<i64: 32, 64>}, {pipeline_mode = #tpu.pipeline_mode<synchronous>, transform_indices = @transform_2, window_bounds = array<i64: 1, 64>}, {pipeline_mode = #tpu.pipeline_mode<synchronous>, transform_indices = @transform_3, window_bounds = array<i64: 64, 32>}, {pipeline_mode = #tpu.pipeline_mode<synchronous>, transform_indices = @transform_4, window_bounds = array<i64: 1, 32>}, {pipeline_mode = #tpu.pipeline_mode<synchronous>, transform_indices = @transform_5, window_bounds = array<i64: 1, 32>}, {pipeline_mode = #tpu.pipeline_mode<synchronous>, transform_indices = @transform_6, window_bounds = array<i64: 1, 32>}, {transform_indices = @transform_7, window_bounds = array<i64: 8, 1>}, {transform_indices = @transform_8, window_bounds = array<i64: 8, 32>}]} {
    %c0 = arith.constant 0 : index
    %c0_0 = arith.constant 0 : index
    %0 = vector.load %arg1[%c0, %c0_0] : memref<8x32xf32, #tpu.memory_space<vmem>>, vector<8x32xf32>
    %c0_1 = arith.constant 0 : index
    %c0_2 = arith.constant 0 : index
    %1 = vector.load %arg2[%c0_1, %c0_2] : memref<32x64xf32, #tpu.memory_space<vmem>>, vector<32x64xf32>
    %cst = arith.constant dense<0.000000e+00> : vector<8x64xf32>
    %2 = tpu.matmul %0, %1, %cst {dimension_numbers = #tpu.dot_dimension_numbers<[1], [0], [0], [1], [0, 0, 1, 1], [], []>} : vector<8x32xf32>, vector<32x64xf32>, vector<8x64xf32> -> vector<8x64xf32>
    %c0_3 = arith.constant 0 : index
    %c0_4 = arith.constant 0 : index
    %3 = vector.load %arg3[%c0_3, %c0_4] : memref<1x64xf32, #tpu.memory_space<vmem>>, vector<1x64xf32>
    %4 = vector.broadcast %3 : vector<1x64xf32> to vector<8x64xf32>
    %5 = arith.addf %2, %4 : vector<8x64xf32>
    %cst_5 = arith.constant 0.000000e+00 : f32
    %6 = vector.broadcast %cst_5 : f32 to vector<8x64xf32>
    %7 = arith.maximumf %5, %6 : vector<8x64xf32>
    %c0_6 = arith.constant 0 : index
    %c0_7 = arith.constant 0 : index
    %8 = vector.load %arg4[%c0_6, %c0_7] : memref<64x32xf32, #tpu.memory_space<vmem>>, vector<64x32xf32>
    %cst_8 = arith.constant dense<0.000000e+00> : vector<8x32xf32>
    %9 = tpu.matmul %7, %8, %cst_8 {dimension_numbers = #tpu.dot_dimension_numbers<[1], [0], [0], [1], [0, 0, 1, 1], [], []>} : vector<8x64xf32>, vector<64x32xf32>, vector<8x32xf32> -> vector<8x32xf32>
    %c0_9 = arith.constant 0 : index
    %c0_10 = arith.constant 0 : index
    %10 = vector.load %arg5[%c0_9, %c0_10] : memref<1x32xf32, #tpu.memory_space<vmem>>, vector<1x32xf32>
    %11 = vector.broadcast %10 : vector<1x32xf32> to vector<8x32xf32>
    %12 = arith.addf %9, %11 : vector<8x32xf32>
    %13 = arith.addf %12, %0 : vector<8x32xf32>
    %c0_11 = arith.constant 0 : index
    %c0_12 = arith.constant 0 : index
    %14 = vector.load %arg6[%c0_11, %c0_12] : memref<1x32xf32, #tpu.memory_space<vmem>>, vector<1x32xf32>
    %c0_13 = arith.constant 0 : index
    %c0_14 = arith.constant 0 : index
    %15 = vector.load %arg7[%c0_13, %c0_14] : memref<1x32xf32, #tpu.memory_space<vmem>>, vector<1x32xf32>
    %cst_15 = arith.constant dense<0.000000e+00> : vector<8xf32>
    %16 = vector.multi_reduction <add>, %13, %cst_15 [1] : vector<8x32xf32> to vector<8xf32>
    %17 = vector.shape_cast %16 : vector<8xf32> to vector<8x1xf32>
    %cst_16 = arith.constant 3.200000e+01 : f32
    %18 = vector.broadcast %cst_16 : f32 to vector<8x1xf32>
    %19 = arith.divf %17, %18 : vector<8x1xf32>
    %20 = vector.broadcast %19 : vector<8x1xf32> to vector<8x32xf32>
    %21 = arith.subf %13, %20 : vector<8x32xf32>
    %22 = arith.mulf %21, %21 : vector<8x32xf32>
    %cst_17 = arith.constant dense<0.000000e+00> : vector<8xf32>
    %23 = vector.multi_reduction <add>, %22, %cst_17 [1] : vector<8x32xf32> to vector<8xf32>
    %24 = vector.shape_cast %23 : vector<8xf32> to vector<8x1xf32>
    %cst_18 = arith.constant 3.200000e+01 : f32
    %25 = vector.broadcast %cst_18 : f32 to vector<8x1xf32>
    %26 = arith.divf %24, %25 : vector<8x1xf32>
    %27 = vector.broadcast %19 : vector<8x1xf32> to vector<8x32xf32>
    %28 = arith.subf %13, %27 : vector<8x32xf32>
    %cst_19 = arith.constant 9.99999974E-6 : f32
    %29 = vector.broadcast %cst_19 : f32 to vector<8x1xf32>
    %30 = arith.addf %26, %29 : vector<8x1xf32>
    %31 = math.rsqrt %30 : vector<8x1xf32>
    %32 = vector.broadcast %31 : vector<8x1xf32> to vector<8x32xf32>
    %33 = arith.mulf %28, %32 : vector<8x32xf32>
    %34 = vector.broadcast %14 : vector<1x32xf32> to vector<8x32xf32>
    %35 = arith.mulf %33, %34 : vector<8x32xf32>
    %36 = vector.broadcast %15 : vector<1x32xf32> to vector<8x32xf32>
    %37 = arith.addf %35, %36 : vector<8x32xf32>
    %c0_20 = arith.constant 0 : index
    %c0_21 = arith.constant 0 : index
    %38 = vector.load %arg8[%c0_20, %c0_21] : memref<8x1xf32, #tpu.memory_space<vmem>>, vector<8x1xf32>
    %39 = vector.broadcast %38 : vector<8x1xf32> to vector<8x32xf32>
    %40 = arith.mulf %37, %39 : vector<8x32xf32>
    %c0_22 = arith.constant 0 : index
    %c0_23 = arith.constant 0 : index
    %41 = vector.load %arg9[%c0_22, %c0_23] : memref<8x32xf32, #tpu.memory_space<vmem>>, vector<8x32xf32>
    tpu.vector_store %arg9[%c0_22, %c0_23], %40 {strides = array<i32>} : memref<8x32xf32, #tpu.memory_space<vmem>>, vector<8x32xf32>,
    return
  }
  func.func @transform_0(%arg0: i32) -> (i32, i32) {
    %c0_i32 = arith.constant 0 : i32
    %c0_i32_0 = arith.constant 0 : i32
    return %arg0, %c0_i32 : i32, i32
  }
  func.func @transform_1(%arg0: i32) -> (i32, i32) {
    %c0_i32 = arith.constant 0 : i32
    %c0_i32_0 = arith.constant 0 : i32
    %c0_i32_1 = arith.constant 0 : i32
    return %c0_i32, %c0_i32_0 : i32, i32
  }
  func.func @transform_2(%arg0: i32) -> (i32, i32) {
    %c0_i32 = arith.constant 0 : i32
    %c0_i32_0 = arith.constant 0 : i32
    %c0_i32_1 = arith.constant 0 : i32
    return %c0_i32, %c0_i32_0 : i32, i32
  }
  func.func @transform_3(%arg0: i32) -> (i32, i32) {
    %c0_i32 = arith.constant 0 : i32
    %c0_i32_0 = arith.constant 0 : i32
    %c0_i32_1 = arith.constant 0 : i32
    return %c0_i32, %c0_i32_0 : i32, i32
  }
  func.func @transform_4(%arg0: i32) -> (i32, i32) {
    %c0_i32 = arith.constant 0 : i32
    %c0_i32_0 = arith.constant 0 : i32
    %c0_i32_1 = arith.constant 0 : i32
    return %c0_i32, %c0_i32_0 : i32, i32
  }
  func.func @transform_5(%arg0: i32) -> (i32, i32) {
    %c0_i32 = arith.constant 0 : i32
    %c0_i32_0 = arith.constant 0 : i32
    %c0_i32_1 = arith.constant 0 : i32
    return %c0_i32, %c0_i32_0 : i32, i32
  }
  func.func @transform_6(%arg0: i32) -> (i32, i32) {
    %c0_i32 = arith.constant 0 : i32
    %c0_i32_0 = arith.constant 0 : i32
    %c0_i32_1 = arith.constant 0 : i32
    return %c0_i32, %c0_i32_0 : i32, i32
  }
  func.func @transform_7(%arg0: i32) -> (i32, i32) {
    %c0_i32 = arith.constant 0 : i32
    %c0_i32_0 = arith.constant 0 : i32
    return %arg0, %c0_i32 : i32, i32
  }
  func.func @transform_8(%arg0: i32) -> (i32, i32) {
    %c0_i32 = arith.constant 0 : i32
    %c0_i32_0 = arith.constant 0 : i32
    return %arg0, %c0_i32 : i32, i32
  }
}

module attributes {stable_mosaic.version = 11 : i64} {
  func.func @_linear_kernel(%arg0: i32, %arg1: memref<48x32xf32, #tpu.memory_space<vmem>>, %arg2: memref<32x64xf32, #tpu.memory_space<vmem>>, %arg3: memref<1x64xf32, #tpu.memory_space<vmem>>, %arg4: memref<48x64xf32, #tpu.memory_space<vmem>>) attributes {dimension_semantics = [#tpu.dimension_semantics<parallel>], iteration_bounds = array<i64: 2>, scalar_prefetch = 0 : i64, scratch_operands = 0 : i64, tpu.core_type = #tpu.core_type<tc>, window_params = [{transform_indices = @transform_0, window_bounds = array<i64: 48, 32>}, {pipeline_mode = #tpu.pipeline_mode<synchronous>, transform_indices = @transform_1, window_bounds = array<i64: 32, 64>}, {pipeline_mode = #tpu.pipeline_mode<synchronous>, transform_indices = @transform_2, window_bounds = array<i64: 1, 64>}, {transform_indices = @transform_3, window_bounds = array<i64: 48, 64>}]} {
    %c0 = arith.constant 0 : index
    %c0_0 = arith.constant 0 : index
    %0 = vector.load %arg1[%c0, %c0_0] : memref<48x32xf32, #tpu.memory_space<vmem>>, vector<48x32xf32>
    %c0_1 = arith.constant 0 : index
    %c0_2 = arith.constant 0 : index
    %1 = vector.load %arg2[%c0_1, %c0_2] : memref<32x64xf32, #tpu.memory_space<vmem>>, vector<32x64xf32>
    %cst = arith.constant dense<0.000000e+00> : vector<48x64xf32>
    %2 = tpu.matmul %0, %1, %cst {dimension_numbers = #tpu.dot_dimension_numbers<[1], [0], [0], [1], [0, 0, 1, 1], [], []>} : vector<48x32xf32>, vector<32x64xf32>, vector<48x64xf32> -> vector<48x64xf32>
    %c0_3 = arith.constant 0 : index
    %c0_4 = arith.constant 0 : index
    %3 = vector.load %arg3[%c0_3, %c0_4] : memref<1x64xf32, #tpu.memory_space<vmem>>, vector<1x64xf32>
    %4 = vector.broadcast %3 : vector<1x64xf32> to vector<48x64xf32>
    %5 = arith.addf %2, %4 : vector<48x64xf32>
    %c0_5 = arith.constant 0 : index
    %c0_6 = arith.constant 0 : index
    %6 = vector.load %arg4[%c0_5, %c0_6] : memref<48x64xf32, #tpu.memory_space<vmem>>, vector<48x64xf32>
    tpu.vector_store %arg4[%c0_5, %c0_6], %5 {strides = array<i32>} : memref<48x64xf32, #tpu.memory_space<vmem>>, vector<48x64xf32>,
    return
  }
  func.func @transform_0(%arg0: i32) -> (i32, i32) {
    %c0_i32 = arith.constant 0 : i32
    %c0_i32_0 = arith.constant 0 : i32
    return %arg0, %c0_i32 : i32, i32
  }
  func.func @transform_1(%arg0: i32) -> (i32, i32) {
    %c0_i32 = arith.constant 0 : i32
    %c0_i32_0 = arith.constant 0 : i32
    %c0_i32_1 = arith.constant 0 : i32
    return %c0_i32, %c0_i32_0 : i32, i32
  }
  func.func @transform_2(%arg0: i32) -> (i32, i32) {
    %c0_i32 = arith.constant 0 : i32
    %c0_i32_0 = arith.constant 0 : i32
    %c0_i32_1 = arith.constant 0 : i32
    return %c0_i32, %c0_i32_0 : i32, i32
  }
  func.func @transform_3(%arg0: i32) -> (i32, i32) {
    %c0_i32 = arith.constant 0 : i32
    %c0_i32_0 = arith.constant 0 : i32
    return %arg0, %c0_i32 : i32, i32
  }
}

module attributes {stable_mosaic.version = 11 : i64} {
  func.func @_logits_lsm_kernel(%arg0: i32, %arg1: memref<8x32xf32, #tpu.memory_space<vmem>>, %arg2: memref<32x50xf32, #tpu.memory_space<vmem>>, %arg3: memref<8x50xf32, #tpu.memory_space<vmem>>) attributes {dimension_semantics = [#tpu.dimension_semantics<parallel>], iteration_bounds = array<i64: 2>, scalar_prefetch = 0 : i64, scratch_operands = 0 : i64, tpu.core_type = #tpu.core_type<tc>, window_params = [{transform_indices = @transform_0, window_bounds = array<i64: 8, 32>}, {pipeline_mode = #tpu.pipeline_mode<synchronous>, transform_indices = @transform_1, window_bounds = array<i64: 32, 50>}, {transform_indices = @transform_2, window_bounds = array<i64: 8, 50>}]} {
    %c0 = arith.constant 0 : index
    %c0_0 = arith.constant 0 : index
    %0 = vector.load %arg1[%c0, %c0_0] : memref<8x32xf32, #tpu.memory_space<vmem>>, vector<8x32xf32>
    %c0_1 = arith.constant 0 : index
    %c0_2 = arith.constant 0 : index
    %1 = vector.load %arg2[%c0_1, %c0_2] : memref<32x50xf32, #tpu.memory_space<vmem>>, vector<32x50xf32>
    %cst = arith.constant dense<0.000000e+00> : vector<8x50xf32>
    %2 = tpu.matmul %0, %1, %cst {dimension_numbers = #tpu.dot_dimension_numbers<[1], [0], [0], [1], [0, 0, 1, 1], [], []>} : vector<8x32xf32>, vector<32x50xf32>, vector<8x50xf32> -> vector<8x50xf32>
    %cst_3 = arith.constant dense<0xFF800000> : vector<8xf32>
    %3 = vector.multi_reduction <maximumf>, %2, %cst_3 [1] : vector<8x50xf32> to vector<8xf32>
    %4 = vector.shape_cast %3 : vector<8xf32> to vector<8x1xf32>
    %5 = vector.broadcast %4 : vector<8x1xf32> to vector<8x50xf32>
    %6 = arith.subf %2, %5 : vector<8x50xf32>
    %7 = math.exp %6 : vector<8x50xf32>
    %cst_4 = arith.constant dense<0.000000e+00> : vector<8xf32>
    %8 = vector.multi_reduction <add>, %7, %cst_4 [1] : vector<8x50xf32> to vector<8xf32>
    %9 = vector.shape_cast %8 : vector<8xf32> to vector<8x1xf32>
    %10 = math.log %9 : vector<8x1xf32>
    %11 = vector.broadcast %10 : vector<8x1xf32> to vector<8x50xf32>
    %12 = arith.subf %6, %11 : vector<8x50xf32>
    %c0_5 = arith.constant 0 : index
    %c0_6 = arith.constant 0 : index
    %13 = vector.load %arg3[%c0_5, %c0_6] : memref<8x50xf32, #tpu.memory_space<vmem>>, vector<8x50xf32>
    tpu.vector_store %arg3[%c0_5, %c0_6], %12 {strides = array<i32>} : memref<8x50xf32, #tpu.memory_space<vmem>>, vector<8x50xf32>,
    return
  }
  func.func @transform_0(%arg0: i32) -> (i32, i32) {
    %c0_i32 = arith.constant 0 : i32
    %c0_i32_0 = arith.constant 0 : i32
    return %arg0, %c0_i32 : i32, i32
  }
  func.func @transform_1(%arg0: i32) -> (i32, i32) {
    %c0_i32 = arith.constant 0 : i32
    %c0_i32_0 = arith.constant 0 : i32
    %c0_i32_1 = arith.constant 0 : i32
    return %c0_i32, %c0_i32_0 : i32, i32
  }
  func.func @transform_2(%arg0: i32) -> (i32, i32) {
    %c0_i32 = arith.constant 0 : i32
    %c0_i32_0 = arith.constant 0 : i32
    return %arg0, %c0_i32 : i32, i32
  }
}

</mosaic_0001>

<llo_original>
// kernel: tpu_custom_call.1
$region0: #{tpu_custom_call.1}
  #allocation0 [shape = 'u32[]', space=smem, size = 0x4, offset = 0x4, fixed_abs, tag = 'smem constant byte address 0x4 - core index']
  #allocation1 [shape = 'u32[144,128]{1,0:T(1,128)}', space=vmem, size = 0x12000, scoped, tag = 'internal scratch']
  %s0 = inlined_call_operand.hbm [shape: f32[8,128], index: 0, kind: input, shape index: {}]
  %s1 = inlined_call_operand.hbm [shape: f32[16,128], index: 1, kind: output, shape index: {}]
  %s2 = sld [smem:[#allocation0]]
  $region41: #{tpu_custom_call.1} parent=0
    _
  %s4 = ssub.s32 1, %s2
  %s5 = scalar_select 0, %s4, %s2
  $region1: #{tpu_custom_call.1} parent=0
    #allocation2 [shape = 'u8[4096]{0}', space=vmem, size = 0x1000, scoped, tag = 'input window, operand 0, single buffered']
    #allocation3 [shape = 's32[2]{0}', space=sflag, size = 0x8, scoped, tag = 'scoped memory for tpu_custom_call.1']
    #allocation4 [shape = 's32[2]{0}', space=sflag, size = 0x8, scoped, tag = 'scoped memory for tpu_custom_call.1']
    #allocation5 [shape = 'u8[8192]{0}', space=vmem, size = 0x2000, scoped, tag = 'output window, operand 0']
    %6 = vsyncpa [#allocation3], 0
    %7 = vsyncpa [#allocation4], 0
    %s8 = scalar_lea.sflag [#allocation4], 1
    %9 = vsyncpa %s8, 0
    loop: start=0, step=1, limit=4
    $region2: #{tpu_custom_call.1} parent=1 // loop_pre_header
      _
    $region3: #{tpu_custom_call.1} parent=1 // loop_header
      %s11 = sphi 0, %s15
      %p12 = scmp.ge.s32.totalorder %s11, 4
      %s19 = sphi 0, %s19
      %s21 = sphi 0, %s19
      %s22 = sphi 0, %s21
      %s36 = sphi 0, %s22
      %s42 = sphi 0, %s44
      %s45 = sphi 0, %s42
      %s46 = sphi 0, %s45
      %s62 = sphi 0, %s46
    $region4: #{tpu_custom_call.1} parent=1 // loop_header_branch
      %14 = sbr.rel (%p12) target = $region8
    $region5: #{tpu_custom_call.1} parent=1 // loop_body
      %s16 = ssub.s32 %s11, 1
      %s17 = ssub.s32 %s11, 2
      %s18 = sadd.s32 %s11, 1
      %s20 = sadd.s32 %s19, 1
      %p23 = scmp.eq.s32.totalorder %s11, 1
      %p24 = scmp.ne.s32.totalorder %s19, %s21
      %p25 = scmp.eq.s32.totalorder %s11, 0
      %p26 = por %p24, %p25
      %p27 = scmp.ne.s32.totalorder %s19, %s21
      %p28 = scmp.eq.s32.totalorder %s16, 1
      %p29 = por %p27, %p28
      %p30 = scmp.ne.s32.totalorder %s21, %s22
      %p31 = scmp.eq.s32.totalorder %s16, 0
      %p32 = por %p30, %p31
      %p33 = scmp.ne.s32.totalorder %s21, %s22
      %p34 = scmp.eq.s32.totalorder %s17, 1
      %p35 = por %p33, %p34
      %p37 = scmp.ne.s32.totalorder %s22, %s36
      %p38 = scmp.eq.s32.totalorder %s17, 0
      %p39 = por %p37, %p38
      %s40 = ssub.s32 %s11, %s18
      %p41 = scmp.eq.s32.totalorder %s40, 0
      %s43 = sadd.s32 %s42, 1
      %s44 = scalar_select %p41, %s42, %s43
      %p47 = pneg %p41
      %p48 = scmp.eq.s32.totalorder %s11, 1
      %p49 = por %p47, %p48
      %p50 = scmp.ne.s32.totalorder %s42, %s45
      %p51 = scmp.eq.s32.totalorder %s11, 0
      %p52 = por %p50, %p51
      %p53 = scmp.ne.s32.totalorder %s42, %s45
      %p54 = scmp.eq.s32.totalorder %s16, 1
      %p55 = por %p53, %p54
      %p56 = scmp.ne.s32.totalorder %s45, %s46
      %p57 = scmp.eq.s32.totalorder %s16, 0
      %p58 = por %p56, %p57
      %p59 = scmp.ne.s32.totalorder %s45, %s46
      %p60 = scmp.eq.s32.totalorder %s17, 1
      %p61 = por %p59, %p60
      %p63 = scmp.ne.s32.totalorder %s46, %s62
      %p64 = scmp.eq.s32.totalorder %s17, 0
      %p65 = por %p63, %p64
      %p66 = scmp.le.s32.totalorder 1, %s11
      %p67 = scmp.lt.s32.totalorder %s11, 3
      %p68 = pnand %p66, %p67
      %p69 = pneg %p68
      // Predicated region
      $region9: #{tpu_custom_call.1} parent=5 // pred_check
        _
      $region10: #{tpu_custom_call.1} parent=5 // pred_check_branch
        %71 = sbr.rel (%p68) target = $region12
      $region11: #{tpu_custom_call.1} parent=5 // pred_region
        %s72 = ssub.s32 %s11, 1
        // Predicated region
        $region13: #{tpu_custom_call.1} parent=11 // pred_check
          %p73 = pneg %p32
        $region14: #{tpu_custom_call.1} parent=11 // pred_check_branch
          %75 = sbr.rel (%p73) target = $region16
        $region15: #{tpu_custom_call.1} parent=11 // pred_region
          %s77 = ssub.s32 128, 128
          %78 = vsyncadd [#allocation3], %s77
          %s80 = sshll.u32 [#allocation2], 4
          %s81 = int_to_ptr.vmem [resolvable:$true] %s80
          %83 = dma.hbm_to_vmem [thread:$0]  %s0, 128, %s81, [#allocation3]
        $region16: #{tpu_custom_call.1} parent=11 // pred_fallthru
          _
      $region12: #{tpu_custom_call.1} parent=5 // pred_fallthru
        _
      %p84 = scmp.lt.s32.totalorder %s11, 2
      // Predicated region
      $region17: #{tpu_custom_call.1} parent=5 // pred_check
        %p85 = pneg %p84
      $region18: #{tpu_custom_call.1} parent=5 // pred_check_branch
        %87 = sbr.rel (%p85) target = $region20
      $region19: #{tpu_custom_call.1} parent=5 // pred_region
        _
      $region20: #{tpu_custom_call.1} parent=5 // pred_fallthru
        _
      %p88 = scmp.le.s32.totalorder 1, %s11
      %p89 = scmp.lt.s32.totalorder %s11, 3
      %p90 = pnand %p88, %p89
      %p91 = pneg %p90
      // Predicated region
      $region21: #{tpu_custom_call.1} parent=5 // pred_check
        _
      $region22: #{tpu_custom_call.1} parent=5 // pred_check_branch
        %93 = sbr.rel (%p90) target = $region24
      $region23: #{tpu_custom_call.1} parent=5 // pred_region
        %s94 = ssub.s32 %s11, 1
        // Predicated region
        $region25: #{tpu_custom_call.1} parent=23 // pred_check
          %p95 = pneg %p32
        $region26: #{tpu_custom_call.1} parent=23 // pred_check_branch
          %97 = sbr.rel (%p95) target = $region28
        $region27: #{tpu_custom_call.1} parent=23 // pred_region
          %98 = dma.done [#allocation3], 128
        $region28: #{tpu_custom_call.1} parent=23 // pred_fallthru
          _
        %p99 = pneg %p32
        %p100 = pneg %p29
        %p101 = pneg %p58
        %p102 = pneg %p55
        %s103 = sand.u32 %s45, 1
        %s104 = scalar_lea.sflag [#allocation4], %s103
        %s105 = sand.u32 %s45, 1
        %s106 = smul.addr %s105, 8
        %s107 = scalar_lea.vmem [#allocation5], %s106
        %v108 = vld [vmem:[#allocation2] sm:$0xff]
        %v109 = vadd.f32 %v108, 1.0
        %110 = vst [vmem:[%s107] sm:$0xff] %v109
        %s111 = sand.u32 %s45, 1
        %s112 = scalar_lea.sflag [#allocation4], %s111
        %s113 = sand.u32 %s45, 1
        %s114 = smul.addr %s113, 8
        %s115 = scalar_lea.vmem [#allocation5], %s114
        // Predicated region
        $region29: #{tpu_custom_call.1} parent=23 // pred_check
          %p116 = pneg %p55
        $region30: #{tpu_custom_call.1} parent=23 // pred_check_branch
          %118 = sbr.rel (%p116) target = $region32
        $region31: #{tpu_custom_call.1} parent=23 // pred_region
          %s120 = ssub.s32 128, 128
          %121 = vsyncadd %s112, %s120
          %s122 = smul.addr %s16, 128
          %s123 = scalar_lea.hbm %s1, %s122
          %s125 = sshll.u32 %s115, 4
          %s126 = int_to_ptr.vmem [resolvable:$true] %s125
          %128 = dma.vmem_to_hbm [thread:$0]  %s126, 128, %s123, %s112
        $region32: #{tpu_custom_call.1} parent=23 // pred_fallthru
          _
      $region24: #{tpu_custom_call.1} parent=5 // pred_fallthru
        _
      %p129 = scmp.le.s32.totalorder 2, %s11
      // Predicated region
      $region33: #{tpu_custom_call.1} parent=5 // pred_check
        %p130 = pneg %p129
      $region34: #{tpu_custom_call.1} parent=5 // pred_check_branch
        %132 = sbr.rel (%p130) target = $region36
      $region35: #{tpu_custom_call.1} parent=5 // pred_region
        %s133 = ssub.s32 %s11, 2
        // Predicated region
        $region37: #{tpu_custom_call.1} parent=35 // pred_check
          %p134 = pneg %p61
        $region38: #{tpu_custom_call.1} parent=35 // pred_check_branch
          %136 = sbr.rel (%p134) target = $region40
        $region39: #{tpu_custom_call.1} parent=35 // pred_region
          %s137 = sand.u32 %s46, 1
          %s138 = scalar_lea.sflag [#allocation4], %s137
          %s139 = sand.u32 %s46, 1
          %s140 = smul.addr %s139, 8
          %s141 = scalar_lea.vmem [#allocation5], %s140
          %142 = dma.done %s138, 128
        $region40: #{tpu_custom_call.1} parent=35 // pred_fallthru
          _
      $region36: #{tpu_custom_call.1} parent=5 // pred_fallthru
        _
    $region6: #{tpu_custom_call.1} parent=1 // loop_footer
      %s15 = sadd.s32 1, %s11
    $region7: #{tpu_custom_call.1} parent=1 // loop_footer_branch
      %10 = sbr.rel target = $region3
    $region8: #{tpu_custom_call.1} parent=1 // loop_exit
      _
    %143 = vsyncpa [#allocation3], 1
    %s144 = scalar_lea.sflag [#allocation3], 1
    %145 = vsyncpa %s144, 1
    %146 = vsyncpa [#allocation4], 1
    %s147 = scalar_lea.sflag [#allocation4], 1
    %148 = vsyncpa %s147, 1

// kernel: meshed_decoder_forward.25
$region0: #{meshed_decoder_forward.25}
  #allocation0 [shape = 'u32[]', space=smem, size = 0x4, offset = 0x4, fixed_abs, tag = 'smem constant byte address 0x4 - core index']
  #allocation1 [shape = 'u32[144,128]{1,0:T(1,128)}', space=vmem, size = 0x12000, scoped, tag = 'internal scratch']
  %s0 = inlined_call_operand.vmem [shape: f32[16,32], index: 0, kind: input, shape index: {}]
  %s1 = inlined_call_operand.vmem [shape: f32[32,96], index: 1, kind: input, shape index: {}]
  %s2 = inlined_call_operand.vmem [shape: f32[1,96], index: 2, kind: input, shape index: {}]
  %s3 = inlined_call_operand.vmem [shape: f32[16,96], index: 3, kind: output, shape index: {}]
  %s4 = sld [smem:[#allocation0]]
  $region45: #{meshed_decoder_forward.25} parent=0
    _
  %s6 = ssub.s32 1, %s4
  %s7 = scalar_select 0, %s6, %s4
  loop: start=0, step=1, limit=4
  $region2: #{meshed_decoder_forward.25} parent=0 // loop_pre_header
    _
  $region3: #{meshed_decoder_forward.25} parent=0 // loop_header
    %s9 = sphi 0, %s13
    %p10 = scmp.ge.s32.totalorder %s9, 4
    %s19 = sphi 0, %s21
    %s22 = sphi 0, %s19
    %s23 = sphi 0, %s22
    %s39 = sphi 0, %s23
    %s43 = sphi 0, %s43
    %s45 = sphi 0, %s43
    %s46 = sphi 0, %s45
    %s60 = sphi 0, %s46
    %s64 = sphi 0, %s64
    %s66 = sphi 0, %s64
    %s67 = sphi 0, %s66
    %s81 = sphi 0, %s67
    %s87 = sphi 0, %s89
    %s90 = sphi 0, %s87
    %s91 = sphi 0, %s90
    %s107 = sphi 0, %s91
  $region4: #{meshed_decoder_forward.25} parent=0 // loop_header_branch
    %12 = sbr.rel (%p10) target = $region8
  $region5: #{meshed_decoder_forward.25} parent=0 // loop_body
    %s14 = ssub.s32 %s9, 1
    %s15 = ssub.s32 %s9, 2
    %s16 = sadd.s32 %s9, 1
    %s17 = ssub.s32 %s9, %s16
    %p18 = scmp.eq.s32.totalorder %s17, 0
    %s20 = sadd.s32 %s19, 1
    %s21 = scalar_select %p18, %s19, %s20
    %p24 = pneg %p18
    %p25 = scmp.eq.s32.totalorder %s9, 1
    %p26 = por %p24, %p25
    %p27 = scmp.ne.s32.totalorder %s19, %s22
    %p28 = scmp.eq.s32.totalorder %s9, 0
    %p29 = por %p27, %p28
    %p30 = scmp.ne.s32.totalorder %s19, %s22
    %p31 = scmp.eq.s32.totalorder %s14, 1
    %p32 = por %p30, %p31
    %p33 = scmp.ne.s32.totalorder %s22, %s23
    %p34 = scmp.eq.s32.totalorder %s14, 0
    %p35 = por %p33, %p34
    %p36 = scmp.ne.s32.totalorder %s22, %s23
    %p37 = scmp.eq.s32.totalorder %s15, 1
    %p38 = por %p36, %p37
    %p40 = scmp.ne.s32.totalorder %s23, %s39
    %p41 = scmp.eq.s32.totalorder %s15, 0
    %p42 = por %p40, %p41
    %s44 = sadd.s32 %s43, 1
    %p47 = scmp.eq.s32.totalorder %s9, 1
    %p48 = scmp.ne.s32.totalorder %s43, %s45
    %p49 = scmp.eq.s32.totalorder %s9, 0
    %p50 = por %p48, %p49
    %p51 = scmp.ne.s32.totalorder %s43, %s45
    %p52 = scmp.eq.s32.totalorder %s14, 1
    %p53 = por %p51, %p52
    %p54 = scmp.ne.s32.totalorder %s45, %s46
    %p55 = scmp.eq.s32.totalorder %s14, 0
    %p56 = por %p54, %p55
    %p57 = scmp.ne.s32.totalorder %s45, %s46
    %p58 = scmp.eq.s32.totalorder %s15, 1
    %p59 = por %p57, %p58
    %p61 = scmp.ne.s32.totalorder %s46, %s60
    %p62 = scmp.eq.s32.totalorder %s15, 0
    %p63 = por %p61, %p62
    %s65 = sadd.s32 %s64, 1
    %p68 = scmp.eq.s32.totalorder %s9, 1
    %p69 = scmp.ne.s32.totalorder %s64, %s66
    %p70 = scmp.eq.s32.totalorder %s9, 0
    %p71 = por %p69, %p70
    %p72 = scmp.ne.s32.totalorder %s64, %s66
    %p73 = scmp.eq.s32.totalorder %s14, 1
    %p74 = por %p72, %p73
    %p75 = scmp.ne.s32.totalorder %s66, %s67
    %p76 = scmp.eq.s32.totalorder %s14, 0
    %p77 = por %p75, %p76
    %p78 = scmp.ne.s32.totalorder %s66, %s67
    %p79 = scmp.eq.s32.totalorder %s15, 1
    %p80 = por %p78, %p79
    %p82 = scmp.ne.s32.totalorder %s67, %s81
    %p83 = scmp.eq.s32.totalorder %s15, 0
    %p84 = por %p82, %p83
    %s85 = ssub.s32 %s9, %s16
    %p86 = scmp.eq.s32.totalorder %s85, 0
    %s88 = sadd.s32 %s87, 1
    %s89 = scalar_select %p86, %s87, %s88
    %p92 = pneg %p86
    %p93 = scmp.eq.s32.totalorder %s9, 1
    %p94 = por %p92, %p93
    %p95 = scmp.ne.s32.totalorder %s87, %s90
    %p96 = scmp.eq.s32.totalorder %s9, 0
    %p97 = por %p95, %p96
    %p98 = scmp.ne.s32.totalorder %s87, %s90
    %p99 = scmp.eq.s32.totalorder %s14, 1
    %p100 = por %p98, %p99
    %p101 = scmp.ne.s32.totalorder %s90, %s91
    %p102 = scmp.eq.s32.totalorder %s14, 0
    %p103 = por %p101, %p102
    %p104 = scmp.ne.s32.totalorder %s90, %s91
    %p105 = scmp.eq.s32.totalorder %s15, 1
    %p106 = por %p104, %p105
    %p108 = scmp.ne.s32.totalorder %s91, %s107
    %p109 = scmp.eq.s32.totalorder %s15, 0
    %p110 = por %p108, %p109
    %p111 = scmp.le.s32.totalorder 1, %s9
    %p112 = scmp.lt.s32.totalorder %s9, 3
    %p113 = pnand %p111, %p112
    %p114 = pneg %p113
    // Predicated region
    $region9: #{meshed_decoder_forward.25} parent=5 // pred_check
      _
    $region10: #{meshed_decoder_forward.25} parent=5 // pred_check_branch
      %116 = sbr.rel (%p113) target = $region12
    $region11: #{meshed_decoder_forward.25} parent=5 // pred_region
      %s117 = ssub.s32 %s9, 1
      // Predicated region
      $region13: #{meshed_decoder_forward.25} parent=11 // pred_check
        %p118 = pneg %p56
      $region14: #{meshed_decoder_forward.25} parent=11 // pred_check_branch
        %120 = sbr.rel (%p118) target = $region16
      $region15: #{meshed_decoder_forward.25} parent=11 // pred_region
        _
      $region16: #{meshed_decoder_forward.25} parent=11 // pred_fallthru
        _
      // Predicated region
      $region17: #{meshed_decoder_forward.25} parent=11 // pred_check
        %p121 = pneg %p77
      $region18: #{meshed_decoder_forward.25} parent=11 // pred_check_branch
        %123 = sbr.rel (%p121) target = $region20
      $region19: #{meshed_decoder_forward.25} parent=11 // pred_region
        _
      $region20: #{meshed_decoder_forward.25} parent=11 // pred_fallthru
        _
    $region12: #{meshed_decoder_forward.25} parent=5 // pred_fallthru
      _
    %p124 = scmp.lt.s32.totalorder %s9, 2
    // Predicated region
    $region21: #{meshed_decoder_forward.25} parent=5 // pred_check
      %p125 = pneg %p124
    $region22: #{meshed_decoder_forward.25} parent=5 // pred_check_branch
      %127 = sbr.rel (%p125) target = $region24
    $region23: #{meshed_decoder_forward.25} parent=5 // pred_region
      // Predicated region
      $region25: #{meshed_decoder_forward.25} parent=23 // pred_check
        %p128 = pneg %p29
      $region26: #{meshed_decoder_forward.25} parent=23 // pred_check_branch
        %130 = sbr.rel (%p128) target = $region28
      $region27: #{meshed_decoder_forward.25} parent=23 // pred_region
        %p131 = scmp.lt.s32.totalorder %s9, 1
        %s132 = scalar_select %p131, %s9, 1
        %s133 = smul.addr %s132, 8
        %s134 = scalar_lea.vmem %s0, %s133
      $region28: #{meshed_decoder_forward.25} parent=23 // pred_fallthru
        _
    $region24: #{meshed_decoder_forward.25} parent=5 // pred_fallthru
      _
    %p135 = scmp.le.s32.totalorder 1, %s9
    %p136 = scmp.lt.s32.totalorder %s9, 3
    %p137 = pnand %p135, %p136
    %p138 = pneg %p137
    // Predicated region
    $region29: #{meshed_decoder_forward.25} parent=5 // pred_check
      _
    $region30: #{meshed_decoder_forward.25} parent=5 // pred_check_branch
      %140 = sbr.rel (%p137) target = $region32
    $region31: #{meshed_decoder_forward.25} parent=5 // pred_region
      %s141 = ssub.s32 %s9, 1
      %p142 = scmp.lt.s32.totalorder %s14, 1
      %s143 = scalar_select %p142, %s14, 1
      %s144 = smul.addr %s143, 8
      %s145 = scalar_lea.vmem %s0, %s144
      %p146 = pneg %p35
      %p147 = pneg %p32
      %p148 = pneg %p56
      %p149 = pneg %p53
      %p150 = pneg %p77
      %p151 = pneg %p74
      %p152 = pneg %p103
      %p153 = pneg %p100
      %p154 = scmp.lt.s32.totalorder %s14, 1
      %s155 = scalar_select %p154, %s14, 1
      %s156 = smul.addr %s155, 8
      %s157 = scalar_lea.vmem %s3, %s156
      %p158 = scmp.lt.s32.totalorder %s14, 1
      %s159 = scalar_select %p158, %s14, 1
      %s160 = smul.addr %s159, 8
      %s161 = scalar_lea.vmem %s0, %s160
      %p162 = scmp.lt.s32.totalorder %s14, 1
      %s163 = scalar_select %p162, %s14, 1
      %s164 = smul.addr %s163, 8
      %s165 = scalar_lea.vmem %s3, %s164
      %v166 = vld [vmem:[%s161] sm:$0xff]
      %v167 = vld [vmem:[%s1] sm:$0xff]
      %v168 = vld [vmem:[%s1 + $0x8] sm:$0xff]
      %v169 = vld [vmem:[%s1 + $0x10] sm:$0xff]
      %v170 = vld [vmem:[%s1 + $0x18] sm:$0xff]
      %v171 = vld [vmem:[%s2] sm:$0x1]
      %v173 = vlaneseq
      %v174 = vshrl.u32 %v173, 7
      %v175 = vsub.s32 0, %v174
      %v176 = vrot.slane %v171, %v175
      %vm178 = vcmask 261120
      %v180 = vsel %vm178, %v166, 0
      %182 = vmatprep.subr.mxu0 0.0
      %183 = vmatpush1.msra.mxu0 %v167
      %184 = vmatprep.subr.mxu0 0.0
      %185 = vmatpush1.msra.mxu0 %v168
      %186 = vmatprep.subr.mxu0 0.0
      %187 = vmatpush1.msra.mxu0 %v169
      %188 = vmatprep.subr.mxu0 0.0
      %189 = vmatpush1.msra.mxu0 %v170
      %190 = vmatprep.subr.mxu0 0.0
      %191 = vmatpush1.msra.mxu0 0.0
      %192 = vmatprep.subr.mxu0 0.0
      %193 = vmatpush1.msra.mxu0 0.0
      %194 = vmatprep.subr.mxu0 0.0
      %195 = vmatpush1.msra.mxu0 0.0
      %196 = vmatprep.subr.mxu0 0.0
      %197 = vmatpush1.msra.mxu0 0.0
      %198 = vmatprep.subr.mxu0 0.0
      %199 = vmatpush1.msra.mxu0 0.0
      %200 = vmatprep.subr.mxu0 0.0
      %201 = vmatpush1.msra.mxu0 0.0
      %202 = vmatprep.subr.mxu0 0.0
      %203 = vmatpush1.msra.mxu0 0.0
      %204 = vmatprep.subr.mxu0 0.0
      %205 = vmatpush1.msra.mxu0 0.0
      %206 = vmatprep.subr.mxu0 0.0
      %207 = vmatpush1.msra.mxu0 0.0
      %208 = vmatprep.subr.mxu0 0.0
      %209 = vmatpush1.msra.mxu0 0.0
      %210 = vmatprep.subr.mxu0 0.0
      %211 = vmatpush1.msra.mxu0 0.0
      %212 = vmatprep.subr.mxu0 0.0
      %213 = vmatpush1.msra.mxu0 0.0
      %214 = vmatprep.subr.mxu0 0.0
      %215 = vmatpush1.msra.mxu0 0.0
      %216 = vmatprep.subr.mxu0 0.0
      %217 = vmatpush1.msra.mxu0 0.0
      %218 = vmatprep.subr.mxu0 0.0
      %219 = vmatpush1.msra.mxu0 0.0
      %220 = vmatprep.subr.mxu0 0.0
      %221 = vmatpush1.msra.mxu0 0.0
      %222 = vmatprep.subr.mxu0 0.0
      %223 = vmatpush1.msra.mxu0 0.0
      %224 = vmatprep.subr.mxu0 0.0
      %225 = vmatpush1.msra.mxu0 0.0
      %226 = vmatprep.subr.mxu0 0.0
      %227 = vmatpush1.msra.mxu0 0.0
      %228 = vmatprep.subr.mxu0 0.0
      %229 = vmatpush1.msra.mxu0 0.0
      %230 = vmatprep.subr.mxu0 0.0
      %231 = vmatpush1.msra.mxu0 0.0
      %232 = vmatprep.subr.mxu0 0.0
      %233 = vmatpush1.msra.mxu0 0.0
      %234 = vmatprep.subr.mxu0 0.0
      %235 = vmatpush1.msra.mxu0 0.0
      %236 = vmatprep.subr.mxu0 0.0
      %237 = vmatpush1.msra.mxu0 0.0
      %238 = vmatprep.subr.mxu0 0.0
      %239 = vmatpush1.msra.mxu0 0.0
      %240 = vmatprep.subr.mxu0 0.0
      %241 = vmatpush1.msra.mxu0 0.0
      %242 = vmatprep.subr.mxu0 0.0
      %243 = vmatpush1.msra.mxu0 0.0
      %244 = vmatprep.subr.mxu0 0.0
      %245 = vmatpush1.msra.mxu0 0.0
      %246 = vmatprep.mubr.f32.mxu0 0.0
      %247 = vmatmul.mubr.f32.gmra.mrb[0].mxu0 %v180
      %v248 = vpop.f32.mrb[0].mxu0
      %v249 = vadd.f32 %v176, %v248
      %v250 = vpop.f32.mrb[0].mxu0
      %251 = vdwg.mxu0
      %vm252 = vcmask 785408
      %253 = vst.msk [vmem:[%s165] sm:$0xff] %vm252, %v249
      %p254 = scmp.lt.s32.totalorder %s14, 1
      %s255 = scalar_select %p254, %s14, 1
      %s256 = smul.addr %s255, 8
      %s257 = scalar_lea.vmem %s3, %s256
      // Predicated region
      $region33: #{meshed_decoder_forward.25} parent=31 // pred_check
        %p258 = pneg %p100
      $region34: #{meshed_decoder_forward.25} parent=31 // pred_check_branch
        %260 = sbr.rel (%p258) target = $region36
      $region35: #{meshed_decoder_forward.25} parent=31 // pred_region
        _
      $region36: #{meshed_decoder_forward.25} parent=31 // pred_fallthru
        _
    $region32: #{meshed_decoder_forward.25} parent=5 // pred_fallthru
      _
    %p261 = scmp.le.s32.totalorder 2, %s9
    // Predicated region
    $region37: #{meshed_decoder_forward.25} parent=5 // pred_check
      %p262 = pneg %p261
    $region38: #{meshed_decoder_forward.25} parent=5 // pred_check_branch
      %264 = sbr.rel (%p262) target = $region40
    $region39: #{meshed_decoder_forward.25} parent=5 // pred_region
      %s265 = ssub.s32 %s9, 2
      // Predicated region
      $region41: #{meshed_decoder_forward.25} parent=39 // pred_check
        %p266 = pneg %p106
      $region42: #{meshed_decoder_forward.25} parent=39 // pred_check_branch
        %268 = sbr.rel (%p266) target = $region44
      $region43: #{meshed_decoder_forward.25} parent=39 // pred_region
        %p269 = scmp.lt.s32.totalorder %s15, 1
        %s270 = scalar_select %p269, %s15, 1
        %s271 = smul.addr %s270, 8
        %s272 = scalar_lea.vmem %s3, %s271
      $region44: #{meshed_decoder_forward.25} parent=39 // pred_fallthru
        _
    $region40: #{meshed_decoder_forward.25} parent=5 // pred_fallthru
      _
  $region6: #{meshed_decoder_forward.25} parent=0 // loop_footer
    %s13 = sadd.s32 1, %s9
  $region7: #{meshed_decoder_forward.25} parent=0 // loop_footer_branch
    %8 = sbr.rel target = $region3
  $region8: #{meshed_decoder_forward.25} parent=0 // loop_exit
    _

// kernel: meshed_decoder_forward.26
$region0: #{meshed_decoder_forward.26}
  #allocation0 [shape = 'u32[]', space=smem, size = 0x4, offset = 0x4, fixed_abs, tag = 'smem constant byte address 0x4 - core index']
  #allocation1 [shape = 'u32[144,128]{1,0:T(1,128)}', space=vmem, size = 0x12000, scoped, tag = 'internal scratch']
  %s0 = inlined_call_operand.vmem [shape: f32[2,8,96], index: 0, kind: input, shape index: {}]
  %s1 = inlined_call_operand.vmem [shape: f32[2,8,8], index: 1, kind: input, shape index: {}]
  %s2 = inlined_call_operand.vmem [shape: f32[2,8,32], index: 2, kind: output, shape index: {}]
  %s3 = sld [smem:[#allocation0]]
  $region41: #{meshed_decoder_forward.26} parent=0
    _
  %s5 = ssub.s32 1, %s3
  %s6 = scalar_select 0, %s5, %s3
  loop: start=0, step=1, limit=4
  $region2: #{meshed_decoder_forward.26} parent=0 // loop_pre_header
    _
  $region3: #{meshed_decoder_forward.26} parent=0 // loop_header
    %s8 = sphi 0, %s12
    %p9 = scmp.ge.s32.totalorder %s8, 4
    %s18 = sphi 0, %s20
    %s21 = sphi 0, %s18
    %s22 = sphi 0, %s21
    %s38 = sphi 0, %s22
    %s44 = sphi 0, %s46
    %s47 = sphi 0, %s44
    %s48 = sphi 0, %s47
    %s64 = sphi 0, %s48
    %s70 = sphi 0, %s72
    %s73 = sphi 0, %s70
    %s74 = sphi 0, %s73
    %s90 = sphi 0, %s74
  $region4: #{meshed_decoder_forward.26} parent=0 // loop_header_branch
    %11 = sbr.rel (%p9) target = $region8
  $region5: #{meshed_decoder_forward.26} parent=0 // loop_body
    %s13 = ssub.s32 %s8, 1
    %s14 = ssub.s32 %s8, 2
    %s15 = sadd.s32 %s8, 1
    %s16 = ssub.s32 %s8, %s15
    %p17 = scmp.eq.s32.totalorder %s16, 0
    %s19 = sadd.s32 %s18, 1
    %s20 = scalar_select %p17, %s18, %s19
    %p23 = pneg %p17
    %p24 = scmp.eq.s32.totalorder %s8, 1
    %p25 = por %p23, %p24
    %p26 = scmp.ne.s32.totalorder %s18, %s21
    %p27 = scmp.eq.s32.totalorder %s8, 0
    %p28 = por %p26, %p27
    %p29 = scmp.ne.s32.totalorder %s18, %s21
    %p30 = scmp.eq.s32.totalorder %s13, 1
    %p31 = por %p29, %p30
    %p32 = scmp.ne.s32.totalorder %s21, %s22
    %p33 = scmp.eq.s32.totalorder %s13, 0
    %p34 = por %p32, %p33
    %p35 = scmp.ne.s32.totalorder %s21, %s22
    %p36 = scmp.eq.s32.totalorder %s14, 1
    %p37 = por %p35, %p36
    %p39 = scmp.ne.s32.totalorder %s22, %s38
    %p40 = scmp.eq.s32.totalorder %s14, 0
    %p41 = por %p39, %p40
    %s42 = ssub.s32 %s8, %s15
    %p43 = scmp.eq.s32.totalorder %s42, 0
    %s45 = sadd.s32 %s44, 1
    %s46 = scalar_select %p43, %s44, %s45
    %p49 = pneg %p43
    %p50 = scmp.eq.s32.totalorder %s8, 1
    %p51 = por %p49, %p50
    %p52 = scmp.ne.s32.totalorder %s44, %s47
    %p53 = scmp.eq.s32.totalorder %s8, 0
    %p54 = por %p52, %p53
    %p55 = scmp.ne.s32.totalorder %s44, %s47
    %p56 = scmp.eq.s32.totalorder %s13, 1
    %p57 = por %p55, %p56
    %p58 = scmp.ne.s32.totalorder %s47, %s48
    %p59 = scmp.eq.s32.totalorder %s13, 0
    %p60 = por %p58, %p59
    %p61 = scmp.ne.s32.totalorder %s47, %s48
    %p62 = scmp.eq.s32.totalorder %s14, 1
    %p63 = por %p61, %p62
    %p65 = scmp.ne.s32.totalorder %s48, %s64
    %p66 = scmp.eq.s32.totalorder %s14, 0
    %p67 = por %p65, %p66
    %s68 = ssub.s32 %s8, %s15
    %p69 = scmp.eq.s32.totalorder %s68, 0
    %s71 = sadd.s32 %s70, 1
    %s72 = scalar_select %p69, %s70, %s71
    %p75 = pneg %p69
    %p76 = scmp.eq.s32.totalorder %s8, 1
    %p77 = por %p75, %p76
    %p78 = scmp.ne.s32.totalorder %s70, %s73
    %p79 = scmp.eq.s32.totalorder %s8, 0
    %p80 = por %p78, %p79
    %p81 = scmp.ne.s32.totalorder %s70, %s73
    %p82 = scmp.eq.s32.totalorder %s13, 1
    %p83 = por %p81, %p82
    %p84 = scmp.ne.s32.totalorder %s73, %s74
    %p85 = scmp.eq.s32.totalorder %s13, 0
    %p86 = por %p84, %p85
    %p87 = scmp.ne.s32.totalorder %s73, %s74
    %p88 = scmp.eq.s32.totalorder %s14, 1
    %p89 = por %p87, %p88
    %p91 = scmp.ne.s32.totalorder %s74, %s90
    %p92 = scmp.eq.s32.totalorder %s14, 0
    %p93 = por %p91, %p92
    %p94 = scmp.le.s32.totalorder 1, %s8
    %p95 = scmp.lt.s32.totalorder %s8, 3
    %p96 = pnand %p94, %p95
    %p97 = pneg %p96
    // Predicated region
    $region9: #{meshed_decoder_forward.26} parent=5 // pred_check
      _
    $region10: #{meshed_decoder_forward.26} parent=5 // pred_check_branch
      %99 = sbr.rel (%p96) target = $region12
    $region11: #{meshed_decoder_forward.26} parent=5 // pred_region
      %s100 = ssub.s32 %s8, 1
    $region12: #{meshed_decoder_forward.26} parent=5 // pred_fallthru
      _
    %p101 = scmp.lt.s32.totalorder %s8, 2
    // Predicated region
    $region13: #{meshed_decoder_forward.26} parent=5 // pred_check
      %p102 = pneg %p101
    $region14: #{meshed_decoder_forward.26} parent=5 // pred_check_branch
      %104 = sbr.rel (%p102) target = $region16
    $region15: #{meshed_decoder_forward.26} parent=5 // pred_region
      // Predicated region
      $region17: #{meshed_decoder_forward.26} parent=15 // pred_check
        %p105 = pneg %p28
      $region18: #{meshed_decoder_forward.26} parent=15 // pred_check_branch
        %107 = sbr.rel (%p105) target = $region20
      $region19: #{meshed_decoder_forward.26} parent=15 // pred_region
        %p108 = scmp.lt.s32.totalorder %s8, 1
        %s109 = scalar_select %p108, %s8, 1
        %s110 = smul.addr %s109, 8
        %s111 = scalar_lea.vmem %s0, %s110
      $region20: #{meshed_decoder_forward.26} parent=15 // pred_fallthru
        _
      // Predicated region
      $region21: #{meshed_decoder_forward.26} parent=15 // pred_check
        %p112 = pneg %p54
      $region22: #{meshed_decoder_forward.26} parent=15 // pred_check_branch
        %114 = sbr.rel (%p112) target = $region24
      $region23: #{meshed_decoder_forward.26} parent=15 // pred_region
        %p115 = scmp.lt.s32.totalorder %s8, 1
        %s116 = scalar_select %p115, %s8, 1
        %s117 = smul.addr %s116, 8
        %s118 = scalar_lea.vmem %s1, %s117
      $region24: #{meshed_decoder_forward.26} parent=15 // pred_fallthru
        _
    $region16: #{meshed_decoder_forward.26} parent=5 // pred_fallthru
      _
    %p119 = scmp.le.s32.totalorder 1, %s8
    %p120 = scmp.lt.s32.totalorder %s8, 3
    %p121 = pnand %p119, %p120
    %p122 = pneg %p121
    // Predicated region
    $region25: #{meshed_decoder_forward.26} parent=5 // pred_check
      _
    $region26: #{meshed_decoder_forward.26} parent=5 // pred_check_branch
      %124 = sbr.rel (%p121) target = $region28
    $region27: #{meshed_decoder_forward.26} parent=5 // pred_region
      %s125 = ssub.s32 %s8, 1
      %p126 = scmp.lt.s32.totalorder %s13, 1
      %s127 = scalar_select %p126, %s13, 1
      %s128 = smul.addr %s127, 8
      %s129 = scalar_lea.vmem %s0, %s128
      %p130 = pneg %p34
      %p131 = pneg %p31
      %p132 = scmp.lt.s32.totalorder %s13, 1
      %s133 = scalar_select %p132, %s13, 1
      %s134 = smul.addr %s133, 8
      %s135 = scalar_lea.vmem %s1, %s134
      %p136 = pneg %p60
      %p137 = pneg %p57
      %p138 = pneg %p86
      %p139 = pneg %p83
      %p140 = scmp.lt.s32.totalorder %s13, 1
      %s141 = scalar_select %p140, %s13, 1
      %s142 = smul.addr %s141, 8
      %s143 = scalar_lea.vmem %s2, %s142
      %p144 = scmp.lt.s32.totalorder %s13, 1
      %s145 = scalar_select %p144, %s13, 1
      %s146 = smul.addr %s145, 8
      %s147 = scalar_lea.vmem %s0, %s146
      %p148 = scmp.lt.s32.totalorder %s13, 1
      %s149 = scalar_select %p148, %s13, 1
      %s150 = smul.addr %s149, 8
      %s151 = scalar_lea.vmem %s1, %s150
      %p152 = scmp.lt.s32.totalorder %s13, 1
      %s153 = scalar_select %p152, %s13, 1
      %s154 = smul.addr %s153, 8
      %s155 = scalar_lea.vmem %s2, %s154
      %v156 = vld [vmem:[%s147] sm:$0xff]
      %158 = vrot.lane.b32.xlu0 %v156, 120
      %v159 = vpop.permute.xlu0 %158
      %160 = vrot.lane.b32.xlu0 %v156, 112
      %v161 = vpop.permute.xlu0 %160
      %162 = vrot.lane.b32.xlu0 %v156, 104
      %v163 = vpop.permute.xlu0 %162
      %v164 = vld [vmem:[%s151] sm:$0xff]
      %165 = vrot.lane.b32.xlu0 %v156, 96
      %v166 = vpop.permute.xlu0 %165
      %vm167 = vcmask 64512
      %v168 = vsel %vm167, %v156, 0
      %v170 = vsel %vm167, %v166, 0
      %172 = vmatprep.subr.mxu0 0.0
      %173 = vmatpush1.xpose.msra.mxu0 %v170
      %174 = vmatprep.subr.mxu0 0.0
      %175 = vmatpush1.xpose.msra.mxu0 0.0
      %176 = vmatprep.subr.mxu0 0.0
      %177 = vmatpush1.xpose.msra.mxu0 0.0
      %178 = vmatprep.subr.mxu0 0.0
      %179 = vmatpush1.xpose.msra.mxu0 0.0
      %180 = vmatprep.subr.mxu0 0.0
      %181 = vmatpush1.xpose.msra.mxu0 0.0
      %182 = vmatprep.subr.mxu0 0.0
      %183 = vmatpush1.xpose.msra.mxu0 0.0
      %184 = vmatprep.subr.mxu0 0.0
      %185 = vmatpush1.xpose.msra.mxu0 0.0
      %186 = vmatprep.subr.mxu0 0.0
      %187 = vmatpush1.xpose.msra.mxu0 0.0
      %188 = vmatprep.subr.mxu0 0.0
      %189 = vmatpush1.xpose.msra.mxu0 0.0
      %190 = vmatprep.subr.mxu0 0.0
      %191 = vmatpush1.xpose.msra.mxu0 0.0
      %192 = vmatprep.subr.mxu0 0.0
      %193 = vmatpush1.xpose.msra.mxu0 0.0
      %194 = vmatprep.subr.mxu0 0.0
      %195 = vmatpush1.xpose.msra.mxu0 0.0
      %196 = vmatprep.subr.mxu0 0.0
      %197 = vmatpush1.xpose.msra.mxu0 0.0
      %198 = vmatprep.subr.mxu0 0.0
      %199 = vmatpush1.xpose.msra.mxu0 0.0
      %200 = vmatprep.subr.mxu0 0.0
      %201 = vmatpush1.xpose.msra.mxu0 0.0
      %202 = vmatprep.subr.mxu0 0.0
      %203 = vmatpush1.xpose.msra.mxu0 0.0
      %204 = vmatprep.subr.mxu0 0.0
      %205 = vmatpush1.xpose.msra.mxu0 0.0
      %206 = vmatprep.subr.mxu0 0.0
      %207 = vmatpush1.xpose.msra.mxu0 0.0
      %208 = vmatprep.subr.mxu0 0.0
      %209 = vmatpush1.xpose.msra.mxu0 0.0
      %210 = vmatprep.subr.mxu0 0.0
      %211 = vmatpush1.xpose.msra.mxu0 0.0
      %212 = vmatprep.subr.mxu0 0.0
      %213 = vmatpush1.xpose.msra.mxu0 0.0
      %214 = vmatprep.subr.mxu0 0.0
      %215 = vmatpush1.xpose.msra.mxu0 0.0
      %216 = vmatprep.subr.mxu0 0.0
      %217 = vmatpush1.xpose.msra.mxu0 0.0
      %218 = vmatprep.subr.mxu0 0.0
      %219 = vmatpush1.xpose.msra.mxu0 0.0
      %220 = vmatprep.subr.mxu0 0.0
      %221 = vmatpush1.xpose.msra.mxu0 0.0
      %222 = vmatprep.subr.mxu0 0.0
      %223 = vmatpush1.xpose.msra.mxu0 0.0
      %224 = vmatprep.subr.mxu0 0.0
      %225 = vmatpush1.xpose.msra.mxu0 0.0
      %226 = vmatprep.subr.mxu0 0.0
      %227 = vmatpush1.xpose.msra.mxu0 0.0
      %228 = vmatprep.subr.mxu0 0.0
      %229 = vmatpush1.xpose.msra.mxu0 0.0
      %230 = vmatprep.subr.mxu0 0.0
      %231 = vmatpush1.xpose.msra.mxu0 0.0
      %232 = vmatprep.subr.mxu0 0.0
      %233 = vmatpush1.xpose.msra.mxu0 0.0
      %234 = vmatprep.subr.mxu0 0.0
      %235 = vmatpush1.xpose.msra.mxu0 0.0
      %236 = vmatprep.mubr.f32.mxu0 0.0
      %237 = vmatmul.mubr.f32.gmra.mrb[0].mxu0 %v168
      %v238 = vpop.f32.mrb[0].mxu0
      %v239 = vadd.f32 0.0, %v238
      %v240 = vpop.f32.mrb[0].mxu0
      %241 = vdwg.mxu0
      %242 = vrot.lane.b32.xlu0 %v159, 96
      %v243 = vpop.permute.xlu0 %242
      %v244 = vsel %vm167, %v159, 0
      %v246 = vsel %vm167, %v243, 0
      %248 = vmatprep.subr.mxu0 0.0
      %249 = vmatpush1.xpose.msra.mxu0 %v246
      %250 = vmatprep.subr.mxu0 0.0
      %251 = vmatpush1.xpose.msra.mxu0 0.0
      %252 = vmatprep.subr.mxu0 0.0
      %253 = vmatpush1.xpose.msra.mxu0 0.0
      %254 = vmatprep.subr.mxu0 0.0
      %255 = vmatpush1.xpose.msra.mxu0 0.0
      %256 = vmatprep.subr.mxu0 0.0
      %257 = vmatpush1.xpose.msra.mxu0 0.0
      %258 = vmatprep.subr.mxu0 0.0
      %259 = vmatpush1.xpose.msra.mxu0 0.0
      %260 = vmatprep.subr.mxu0 0.0
      %261 = vmatpush1.xpose.msra.mxu0 0.0
      %262 = vmatprep.subr.mxu0 0.0
      %263 = vmatpush1.xpose.msra.mxu0 0.0
      %264 = vmatprep.subr.mxu0 0.0
      %265 = vmatpush1.xpose.msra.mxu0 0.0
      %266 = vmatprep.subr.mxu0 0.0
      %267 = vmatpush1.xpose.msra.mxu0 0.0
      %268 = vmatprep.subr.mxu0 0.0
      %269 = vmatpush1.xpose.msra.mxu0 0.0
      %270 = vmatprep.subr.mxu0 0.0
      %271 = vmatpush1.xpose.msra.mxu0 0.0
      %272 = vmatprep.subr.mxu0 0.0
      %273 = vmatpush1.xpose.msra.mxu0 0.0
      %274 = vmatprep.subr.mxu0 0.0
      %275 = vmatpush1.xpose.msra.mxu0 0.0
      %276 = vmatprep.subr.mxu0 0.0
      %277 = vmatpush1.xpose.msra.mxu0 0.0
      %278 = vmatprep.subr.mxu0 0.0
      %279 = vmatpush1.xpose.msra.mxu0 0.0
      %280 = vmatprep.subr.mxu0 0.0
      %281 = vmatpush1.xpose.msra.mxu0 0.0
      %282 = vmatprep.subr.mxu0 0.0
      %283 = vmatpush1.xpose.msra.mxu0 0.0
      %284 = vmatprep.subr.mxu0 0.0
      %285 = vmatpush1.xpose.msra.mxu0 0.0
      %286 = vmatprep.subr.mxu0 0.0
      %287 = vmatpush1.xpose.msra.mxu0 0.0
      %288 = vmatprep.subr.mxu0 0.0
      %289 = vmatpush1.xpose.msra.mxu0 0.0
      %290 = vmatprep.subr.mxu0 0.0
      %291 = vmatpush1.xpose.msra.mxu0 0.0
      %292 = vmatprep.subr.mxu0 0.0
      %293 = vmatpush1.xpose.msra.mxu0 0.0
      %294 = vmatprep.subr.mxu0 0.0
      %295 = vmatpush1.xpose.msra.mxu0 0.0
      %296 = vmatprep.subr.mxu0 0.0
      %297 = vmatpush1.xpose.msra.mxu0 0.0
      %298 = vmatprep.subr.mxu0 0.0
      %299 = vmatpush1.xpose.msra.mxu0 0.0
      %300 = vmatprep.subr.mxu0 0.0
      %301 = vmatpush1.xpose.msra.mxu0 0.0
      %302 = vmatprep.subr.mxu0 0.0
      %303 = vmatpush1.xpose.msra.mxu0 0.0
      %304 = vmatprep.subr.mxu0 0.0
      %305 = vmatpush1.xpose.msra.mxu0 0.0
      %306 = vmatprep.subr.mxu0 0.0
      %307 = vmatpush1.xpose.msra.mxu0 0.0
      %308 = vmatprep.subr.mxu0 0.0
      %309 = vmatpush1.xpose.msra.mxu0 0.0
      %310 = vmatprep.subr.mxu0 0.0
      %311 = vmatpush1.xpose.msra.mxu0 0.0
      %312 = vmatprep.mubr.f32.mxu0 0.0
      %313 = vmatmul.mubr.f32.gmra.mrb[0].mxu0 %v244
      %v314 = vpop.f32.mrb[0].mxu0
      %v315 = vadd.f32 0.0, %v314
      %v316 = vpop.f32.mrb[0].mxu0
      %317 = vdwg.mxu0
      %318 = vrot.lane.b32.xlu0 %v161, 96
      %v319 = vpop.permute.xlu0 %318
      %v320 = vsel %vm167, %v161, 0
      %v322 = vsel %vm167, %v319, 0
      %324 = vmatprep.subr.mxu0 0.0
      %325 = vmatpush1.xpose.msra.mxu0 %v322
      %326 = vmatprep.subr.mxu0 0.0
      %327 = vmatpush1.xpose.msra.mxu0 0.0
      %328 = vmatprep.subr.mxu0 0.0
      %329 = vmatpush1.xpose.msra.mxu0 0.0
      %330 = vmatprep.subr.mxu0 0.0
      %331 = vmatpush1.xpose.msra.mxu0 0.0
      %332 = vmatprep.subr.mxu0 0.0
      %333 = vmatpush1.xpose.msra.mxu0 0.0
      %334 = vmatprep.subr.mxu0 0.0
      %335 = vmatpush1.xpose.msra.mxu0 0.0
      %336 = vmatprep.subr.mxu0 0.0
      %337 = vmatpush1.xpose.msra.mxu0 0.0
      %338 = vmatprep.subr.mxu0 0.0
      %339 = vmatpush1.xpose.msra.mxu0 0.0
      %340 = vmatprep.subr.mxu0 0.0
      %341 = vmatpush1.xpose.msra.mxu0 0.0
      %342 = vmatprep.subr.mxu0 0.0
      %343 = vmatpush1.xpose.msra.mxu0 0.0
      %344 = vmatprep.subr.mxu0 0.0
      %345 = vmatpush1.xpose.msra.mxu0 0.0
      %346 = vmatprep.subr.mxu0 0.0
      %347 = vmatpush1.xpose.msra.mxu0 0.0
      %348 = vmatprep.subr.mxu0 0.0
      %349 = vmatpush1.xpose.msra.mxu0 0.0
      %350 = vmatprep.subr.mxu0 0.0
      %351 = vmatpush1.xpose.msra.mxu0 0.0
      %352 = vmatprep.subr.mxu0 0.0
      %353 = vmatpush1.xpose.msra.mxu0 0.0
      %354 = vmatprep.subr.mxu0 0.0
      %355 = vmatpush1.xpose.msra.mxu0 0.0
      %356 = vmatprep.subr.mxu0 0.0
      %357 = vmatpush1.xpose.msra.mxu0 0.0
      %358 = vmatprep.subr.mxu0 0.0
      %359 = vmatpush1.xpose.msra.mxu0 0.0
      %360 = vmatprep.subr.mxu0 0.0
      %361 = vmatpush1.xpose.msra.mxu0 0.0
      %362 = vmatprep.subr.mxu0 0.0
      %363 = vmatpush1.xpose.msra.mxu0 0.0
      %364 = vmatprep.subr.mxu0 0.0
      %365 = vmatpush1.xpose.msra.mxu0 0.0
      %366 = vmatprep.subr.mxu0 0.0
      %367 = vmatpush1.xpose.msra.mxu0 0.0
      %368 = vmatprep.subr.mxu0 0.0
      %369 = vmatpush1.xpose.msra.mxu0 0.0
      %370 = vmatprep.subr.mxu0 0.0
      %371 = vmatpush1.xpose.msra.mxu0 0.0
      %372 = vmatprep.subr.mxu0 0.0
      %373 = vmatpush1.xpose.msra.mxu0 0.0
      %374 = vmatprep.subr.mxu0 0.0
      %375 = vmatpush1.xpose.msra.mxu0 0.0
      %376 = vmatprep.subr.mxu0 0.0
      %377 = vmatpush1.xpose.msra.mxu0 0.0
      %378 = vmatprep.subr.mxu0 0.0
      %379 = vmatpush1.xpose.msra.mxu0 0.0
      %380 = vmatprep.subr.mxu0 0.0
      %381 = vmatpush1.xpose.msra.mxu0 0.0
      %382 = vmatprep.subr.mxu0 0.0
      %383 = vmatpush1.xpose.msra.mxu0 0.0
      %384 = vmatprep.subr.mxu0 0.0
      %385 = vmatpush1.xpose.msra.mxu0 0.0
      %386 = vmatprep.subr.mxu0 0.0
      %387 = vmatpush1.xpose.msra.mxu0 0.0
      %388 = vmatprep.mubr.f32.mxu0 0.0
      %389 = vmatmul.mubr.f32.gmra.mrb[0].mxu0 %v320
      %v390 = vpop.f32.mrb[0].mxu0
      %v391 = vadd.f32 0.0, %v390
      %v392 = vpop.f32.mrb[0].mxu0
      %393 = vdwg.mxu0
      %394 = vrot.lane.b32.xlu0 %v163, 96
      %v395 = vpop.permute.xlu0 %394
      %v396 = vsel %vm167, %v163, 0
      %v398 = vsel %vm167, %v395, 0
      %400 = vmatprep.subr.mxu0 0.0
      %401 = vmatpush1.xpose.msra.mxu0 %v398
      %402 = vmatprep.subr.mxu0 0.0
      %403 = vmatpush1.xpose.msra.mxu0 0.0
      %404 = vmatprep.subr.mxu0 0.0
      %405 = vmatpush1.xpose.msra.mxu0 0.0
      %406 = vmatprep.subr.mxu0 0.0
      %407 = vmatpush1.xpose.msra.mxu0 0.0
      %408 = vmatprep.subr.mxu0 0.0
      %409 = vmatpush1.xpose.msra.mxu0 0.0
      %410 = vmatprep.subr.mxu0 0.0
      %411 = vmatpush1.xpose.msra.mxu0 0.0
      %412 = vmatprep.subr.mxu0 0.0
      %413 = vmatpush1.xpose.msra.mxu0 0.0
      %414 = vmatprep.subr.mxu0 0.0
      %415 = vmatpush1.xpose.msra.mxu0 0.0
      %416 = vmatprep.subr.mxu0 0.0
      %417 = vmatpush1.xpose.msra.mxu0 0.0
      %418 = vmatprep.subr.mxu0 0.0
      %419 = vmatpush1.xpose.msra.mxu0 0.0
      %420 = vmatprep.subr.mxu0 0.0
      %421 = vmatpush1.xpose.msra.mxu0 0.0
      %422 = vmatprep.subr.mxu0 0.0
      %423 = vmatpush1.xpose.msra.mxu0 0.0
      %424 = vmatprep.subr.mxu0 0.0
      %425 = vmatpush1.xpose.msra.mxu0 0.0
      %426 = vmatprep.subr.mxu0 0.0
      %427 = vmatpush1.xpose.msra.mxu0 0.0
      %428 = vmatprep.subr.mxu0 0.0
      %429 = vmatpush1.xpose.msra.mxu0 0.0
      %430 = vmatprep.subr.mxu0 0.0
      %431 = vmatpush1.xpose.msra.mxu0 0.0
      %432 = vmatprep.subr.mxu0 0.0
      %433 = vmatpush1.xpose.msra.mxu0 0.0
      %434 = vmatprep.subr.mxu0 0.0
      %435 = vmatpush1.xpose.msra.mxu0 0.0
      %436 = vmatprep.subr.mxu0 0.0
      %437 = vmatpush1.xpose.msra.mxu0 0.0
      %438 = vmatprep.subr.mxu0 0.0
      %439 = vmatpush1.xpose.msra.mxu0 0.0
      %440 = vmatprep.subr.mxu0 0.0
      %441 = vmatpush1.xpose.msra.mxu0 0.0
      %442 = vmatprep.subr.mxu0 0.0
      %443 = vmatpush1.xpose.msra.mxu0 0.0
      %444 = vmatprep.subr.mxu0 0.0
      %445 = vmatpush1.xpose.msra.mxu0 0.0
      %446 = vmatprep.subr.mxu0 0.0
      %447 = vmatpush1.xpose.msra.mxu0 0.0
      %448 = vmatprep.subr.mxu0 0.0
      %449 = vmatpush1.xpose.msra.mxu0 0.0
      %450 = vmatprep.subr.mxu0 0.0
      %451 = vmatpush1.xpose.msra.mxu0 0.0
      %452 = vmatprep.subr.mxu0 0.0
      %453 = vmatpush1.xpose.msra.mxu0 0.0
      %454 = vmatprep.subr.mxu0 0.0
      %455 = vmatpush1.xpose.msra.mxu0 0.0
      %456 = vmatprep.subr.mxu0 0.0
      %457 = vmatpush1.xpose.msra.mxu0 0.0
      %458 = vmatprep.subr.mxu0 0.0
      %459 = vmatpush1.xpose.msra.mxu0 0.0
      %460 = vmatprep.subr.mxu0 0.0
      %461 = vmatpush1.xpose.msra.mxu0 0.0
      %462 = vmatprep.subr.mxu0 0.0
      %463 = vmatpush1.xpose.msra.mxu0 0.0
      %464 = vmatprep.mubr.f32.mxu0 0.0
      %465 = vmatmul.mubr.f32.gmra.mrb[0].mxu0 %v396
      %v466 = vpop.f32.mrb[0].mxu0
      %v467 = vadd.f32 0.0, %v466
      %v468 = vpop.f32.mrb[0].mxu0
      %469 = vdwg.mxu0
      %v470 = vmul.f32 %v239, 0.35355338
      %v471 = vmul.f32 %v315, 0.35355338
      %v472 = vmul.f32 %v391, 0.35355338
      %v473 = vmul.f32 %v467, 0.35355338
      %v474 = vadd.f32 %v470, %v164
      %v475 = vadd.f32 %v471, %v164
      %v476 = vadd.f32 %v472, %v164
      %v477 = vadd.f32 %v473, %v164
      %v478 = vsel %vm167, %v474, -inf
      %479 = vmax.xlane.f32.xlu0 %v478
      %v480 = vpop.xlane.xlu0 %479
      %v481 = vsel %vm167, %v475, -inf
      %482 = vmax.xlane.f32.xlu0 %v481
      %v483 = vpop.xlane.xlu0 %482
      %v484 = vsel %vm167, %v476, -inf
      %485 = vmax.xlane.f32.xlu0 %v484
      %v486 = vpop.xlane.xlu0 %485
      %v487 = vsel %vm167, %v477, -inf
      %488 = vmax.xlane.f32.xlu0 %v487
      %v489 = vpop.xlane.xlu0 %488
      %v490 = vsub.f32 %v474, %v480
      %v491 = vsub.f32 %v475, %v483
      %v492 = vsub.f32 %v476, %v486
      %v493 = vsub.f32 %v477, %v489
      %v494 = vmul.f32 %v490, 1.442695
      %v495 = vpow.pop %v494
      %v496 = vmul.f32 %v491, 1.442695
      %v497 = vpow.pop %v496
      %v498 = vmul.f32 %v492, 1.442695
      %v499 = vpow.pop %v498
      %v500 = vmul.f32 %v493, 1.442695
      %v501 = vpow.pop %v500
      %v502 = vsel %vm167, %v495, 0.0
      %503 = vadd.xlane.f32.xlu0 %v502
      %v504 = vpop.xlane.xlu0 %503
      %v505 = vsel %vm167, %v497, 0.0
      %506 = vadd.xlane.f32.xlu0 %v505
      %v507 = vpop.xlane.xlu0 %506
      %v508 = vsel %vm167, %v499, 0.0
      %509 = vadd.xlane.f32.xlu0 %v508
      %v510 = vpop.xlane.xlu0 %509
      %v511 = vsel %vm167, %v501, 0.0
      %512 = vadd.xlane.f32.xlu0 %v511
      %v513 = vpop.xlane.xlu0 %512
      %v514 = vrcp.pop %v504
      %v515 = vrcp.pop %v507
      %v516 = vrcp.pop %v510
      %v517 = vrcp.pop %v513
      %v518 = vmul.f32 %v495, %v514
      %v519 = vmul.f32 %v497, %v515
      %v520 = vmul.f32 %v499, %v516
      %v521 = vmul.f32 %v501, %v517
      %522 = vrot.lane.b32.xlu0 %v156, 64
      %v523 = vpop.permute.xlu0 %522
      %v526 = vsel %vm167, %v518, 0
      %528 = vmatprep.subr.mxu0 0.0
      %529 = vmatpush1.msra.mxu0 %v523
      %530 = vmatprep.subr.mxu0 0.0
      %531 = vmatpush1.msra.mxu0 0.0
      %532 = vmatprep.subr.mxu0 0.0
      %533 = vmatpush1.msra.mxu0 0.0
      %534 = vmatprep.subr.mxu0 0.0
      %535 = vmatpush1.msra.mxu0 0.0
      %536 = vmatprep.subr.mxu0 0.0
      %537 = vmatpush1.msra.mxu0 0.0
      %538 = vmatprep.subr.mxu0 0.0
      %539 = vmatpush1.msra.mxu0 0.0
      %540 = vmatprep.subr.mxu0 0.0
      %541 = vmatpush1.msra.mxu0 0.0
      %542 = vmatprep.subr.mxu0 0.0
      %543 = vmatpush1.msra.mxu0 0.0
      %544 = vmatprep.subr.mxu0 0.0
      %545 = vmatpush1.msra.mxu0 0.0
      %546 = vmatprep.subr.mxu0 0.0
      %547 = vmatpush1.msra.mxu0 0.0
      %548 = vmatprep.subr.mxu0 0.0
      %549 = vmatpush1.msra.mxu0 0.0
      %550 = vmatprep.subr.mxu0 0.0
      %551 = vmatpush1.msra.mxu0 0.0
      %552 = vmatprep.subr.mxu0 0.0
      %553 = vmatpush1.msra.mxu0 0.0
      %554 = vmatprep.subr.mxu0 0.0
      %555 = vmatpush1.msra.mxu0 0.0
      %556 = vmatprep.subr.mxu0 0.0
      %557 = vmatpush1.msra.mxu0 0.0
      %558 = vmatprep.subr.mxu0 0.0
      %559 = vmatpush1.msra.mxu0 0.0
      %560 = vmatprep.subr.mxu0 0.0
      %561 = vmatpush1.msra.mxu0 0.0
      %562 = vmatprep.subr.mxu0 0.0
      %563 = vmatpush1.msra.mxu0 0.0
      %564 = vmatprep.subr.mxu0 0.0
      %565 = vmatpush1.msra.mxu0 0.0
      %566 = vmatprep.subr.mxu0 0.0
      %567 = vmatpush1.msra.mxu0 0.0
      %568 = vmatprep.subr.mxu0 0.0
      %569 = vmatpush1.msra.mxu0 0.0
      %570 = vmatprep.subr.mxu0 0.0
      %571 = vmatpush1.msra.mxu0 0.0
      %572 = vmatprep.subr.mxu0 0.0
      %573 = vmatpush1.msra.mxu0 0.0
      %574 = vmatprep.subr.mxu0 0.0
      %575 = vmatpush1.msra.mxu0 0.0
      %576 = vmatprep.subr.mxu0 0.0
      %577 = vmatpush1.msra.mxu0 0.0
      %578 = vmatprep.subr.mxu0 0.0
      %579 = vmatpush1.msra.mxu0 0.0
      %580 = vmatprep.subr.mxu0 0.0
      %581 = vmatpush1.msra.mxu0 0.0
      %582 = vmatprep.subr.mxu0 0.0
      %583 = vmatpush1.msra.mxu0 0.0
      %584 = vmatprep.subr.mxu0 0.0
      %585 = vmatpush1.msra.mxu0 0.0
      %586 = vmatprep.subr.mxu0 0.0
      %587 = vmatpush1.msra.mxu0 0.0
      %588 = vmatprep.subr.mxu0 0.0
      %589 = vmatpush1.msra.mxu0 0.0
      %590 = vmatprep.subr.mxu0 0.0
      %591 = vmatpush1.msra.mxu0 0.0
      %592 = vmatprep.mubr.f32.mxu0 0.0
      %593 = vmatmul.mubr.f32.gmra.mrb[0].mxu0 %v526
      %v594 = vpop.f32.mrb[0].mxu0
      %v595 = vadd.f32 0.0, %v594
      %v596 = vpop.f32.mrb[0].mxu0
      %597 = vdwg.mxu0
      %598 = vrot.lane.b32.xlu0 %v159, 64
      %v599 = vpop.permute.xlu0 %598
      %v602 = vsel %vm167, %v519, 0
      %604 = vmatprep.subr.mxu0 0.0
      %605 = vmatpush1.msra.mxu0 %v599
      %606 = vmatprep.subr.mxu0 0.0
      %607 = vmatpush1.msra.mxu0 0.0
      %608 = vmatprep.subr.mxu0 0.0
      %609 = vmatpush1.msra.mxu0 0.0
      %610 = vmatprep.subr.mxu0 0.0
      %611 = vmatpush1.msra.mxu0 0.0
      %612 = vmatprep.subr.mxu0 0.0
      %613 = vmatpush1.msra.mxu0 0.0
      %614 = vmatprep.subr.mxu0 0.0
      %615 = vmatpush1.msra.mxu0 0.0
      %616 = vmatprep.subr.mxu0 0.0
      %617 = vmatpush1.msra.mxu0 0.0
      %618 = vmatprep.subr.mxu0 0.0
      %619 = vmatpush1.msra.mxu0 0.0
      %620 = vmatprep.subr.mxu0 0.0
      %621 = vmatpush1.msra.mxu0 0.0
      %622 = vmatprep.subr.mxu0 0.0
      %623 = vmatpush1.msra.mxu0 0.0
      %624 = vmatprep.subr.mxu0 0.0
      %625 = vmatpush1.msra.mxu0 0.0
      %626 = vmatprep.subr.mxu0 0.0
      %627 = vmatpush1.msra.mxu0 0.0
      %628 = vmatprep.subr.mxu0 0.0
      %629 = vmatpush1.msra.mxu0 0.0
      %630 = vmatprep.subr.mxu0 0.0
      %631 = vmatpush1.msra.mxu0 0.0
      %632 = vmatprep.subr.mxu0 0.0
      %633 = vmatpush1.msra.mxu0 0.0
      %634 = vmatprep.subr.mxu0 0.0
      %635 = vmatpush1.msra.mxu0 0.0
      %636 = vmatprep.subr.mxu0 0.0
      %637 = vmatpush1.msra.mxu0 0.0
      %638 = vmatprep.subr.mxu0 0.0
      %639 = vmatpush1.msra.mxu0 0.0
      %640 = vmatprep.subr.mxu0 0.0
      %641 = vmatpush1.msra.mxu0 0.0
      %642 = vmatprep.subr.mxu0 0.0
      %643 = vmatpush1.msra.mxu0 0.0
      %644 = vmatprep.subr.mxu0 0.0
      %645 = vmatpush1.msra.mxu0 0.0
      %646 = vmatprep.subr.mxu0 0.0
      %647 = vmatpush1.msra.mxu0 0.0
      %648 = vmatprep.subr.mxu0 0.0
      %649 = vmatpush1.msra.mxu0 0.0
      %650 = vmatprep.subr.mxu0 0.0
      %651 = vmatpush1.msra.mxu0 0.0
      %652 = vmatprep.subr.mxu0 0.0
      %653 = vmatpush1.msra.mxu0 0.0
      %654 = vmatprep.subr.mxu0 0.0
      %655 = vmatpush1.msra.mxu0 0.0
      %656 = vmatprep.subr.mxu0 0.0
      %657 = vmatpush1.msra.mxu0 0.0
      %658 = vmatprep.subr.mxu0 0.0
      %659 = vmatpush1.msra.mxu0 0.0
      %660 = vmatprep.subr.mxu0 0.0
      %661 = vmatpush1.msra.mxu0 0.0
      %662 = vmatprep.subr.mxu0 0.0
      %663 = vmatpush1.msra.mxu0 0.0
      %664 = vmatprep.subr.mxu0 0.0
      %665 = vmatpush1.msra.mxu0 0.0
      %666 = vmatprep.subr.mxu0 0.0
      %667 = vmatpush1.msra.mxu0 0.0
      %668 = vmatprep.mubr.f32.mxu0 0.0
      %669 = vmatmul.mubr.f32.gmra.mrb[0].mxu0 %v602
      %v670 = vpop.f32.mrb[0].mxu0
      %v671 = vadd.f32 0.0, %v670
      %v672 = vpop.f32.mrb[0].mxu0
      %673 = vdwg.mxu0
      %674 = vrot.lane.b32.xlu0 %v161, 64
      %v675 = vpop.permute.xlu0 %674
      %v678 = vsel %vm167, %v520, 0
      %680 = vmatprep.subr.mxu0 0.0
      %681 = vmatpush1.msra.mxu0 %v675
      %682 = vmatprep.subr.mxu0 0.0
      %683 = vmatpush1.msra.mxu0 0.0
      %684 = vmatprep.subr.mxu0 0.0
      %685 = vmatpush1.msra.mxu0 0.0
      %686 = vmatprep.subr.mxu0 0.0
      %687 = vmatpush1.msra.mxu0 0.0
      %688 = vmatprep.subr.mxu0 0.0
      %689 = vmatpush1.msra.mxu0 0.0
      %690 = vmatprep.subr.mxu0 0.0
      %691 = vmatpush1.msra.mxu0 0.0
      %692 = vmatprep.subr.mxu0 0.0
      %693 = vmatpush1.msra.mxu0 0.0
      %694 = vmatprep.subr.mxu0 0.0
      %695 = vmatpush1.msra.mxu0 0.0
      %696 = vmatprep.subr.mxu0 0.0
      %697 = vmatpush1.msra.mxu0 0.0
      %698 = vmatprep.subr.mxu0 0.0
      %699 = vmatpush1.msra.mxu0 0.0
      %700 = vmatprep.subr.mxu0 0.0
      %701 = vmatpush1.msra.mxu0 0.0
      %702 = vmatprep.subr.mxu0 0.0
      %703 = vmatpush1.msra.mxu0 0.0
      %704 = vmatprep.subr.mxu0 0.0
      %705 = vmatpush1.msra.mxu0 0.0
      %706 = vmatprep.subr.mxu0 0.0
      %707 = vmatpush1.msra.mxu0 0.0
      %708 = vmatprep.subr.mxu0 0.0
      %709 = vmatpush1.msra.mxu0 0.0
      %710 = vmatprep.subr.mxu0 0.0
      %711 = vmatpush1.msra.mxu0 0.0
      %712 = vmatprep.subr.mxu0 0.0
      %713 = vmatpush1.msra.mxu0 0.0
      %714 = vmatprep.subr.mxu0 0.0
      %715 = vmatpush1.msra.mxu0 0.0
      %716 = vmatprep.subr.mxu0 0.0
      %717 = vmatpush1.msra.mxu0 0.0
      %718 = vmatprep.subr.mxu0 0.0
      %719 = vmatpush1.msra.mxu0 0.0
      %720 = vmatprep.subr.mxu0 0.0
      %721 = vmatpush1.msra.mxu0 0.0
      %722 = vmatprep.subr.mxu0 0.0
      %723 = vmatpush1.msra.mxu0 0.0
      %724 = vmatprep.subr.mxu0 0.0
      %725 = vmatpush1.msra.mxu0 0.0
      %726 = vmatprep.subr.mxu0 0.0
      %727 = vmatpush1.msra.mxu0 0.0
      %728 = vmatprep.subr.mxu0 0.0
      %729 = vmatpush1.msra.mxu0 0.0
      %730 = vmatprep.subr.mxu0 0.0
      %731 = vmatpush1.msra.mxu0 0.0
      %732 = vmatprep.subr.mxu0 0.0
      %733 = vmatpush1.msra.mxu0 0.0
      %734 = vmatprep.subr.mxu0 0.0
      %735 = vmatpush1.msra.mxu0 0.0
      %736 = vmatprep.subr.mxu0 0.0
      %737 = vmatpush1.msra.mxu0 0.0
      %738 = vmatprep.subr.mxu0 0.0
      %739 = vmatpush1.msra.mxu0 0.0
      %740 = vmatprep.subr.mxu0 0.0
      %741 = vmatpush1.msra.mxu0 0.0
      %742 = vmatprep.subr.mxu0 0.0
      %743 = vmatpush1.msra.mxu0 0.0
      %744 = vmatprep.mubr.f32.mxu0 0.0
      %745 = vmatmul.mubr.f32.gmra.mrb[0].mxu0 %v678
      %v746 = vpop.f32.mrb[0].mxu0
      %v747 = vadd.f32 0.0, %v746
      %v748 = vpop.f32.mrb[0].mxu0
      %749 = vdwg.mxu0
      %750 = vrot.lane.b32.xlu0 %v163, 64
      %v751 = vpop.permute.xlu0 %750
      %v754 = vsel %vm167, %v521, 0
      %756 = vmatprep.subr.mxu0 0.0
      %757 = vmatpush1.msra.mxu0 %v751
      %758 = vmatprep.subr.mxu0 0.0
      %759 = vmatpush1.msra.mxu0 0.0
      %760 = vmatprep.subr.mxu0 0.0
      %761 = vmatpush1.msra.mxu0 0.0
      %762 = vmatprep.subr.mxu0 0.0
      %763 = vmatpush1.msra.mxu0 0.0
      %764 = vmatprep.subr.mxu0 0.0
      %765 = vmatpush1.msra.mxu0 0.0
      %766 = vmatprep.subr.mxu0 0.0
      %767 = vmatpush1.msra.mxu0 0.0
      %768 = vmatprep.subr.mxu0 0.0
      %769 = vmatpush1.msra.mxu0 0.0
      %770 = vmatprep.subr.mxu0 0.0
      %771 = vmatpush1.msra.mxu0 0.0
      %772 = vmatprep.subr.mxu0 0.0
      %773 = vmatpush1.msra.mxu0 0.0
      %774 = vmatprep.subr.mxu0 0.0
      %775 = vmatpush1.msra.mxu0 0.0
      %776 = vmatprep.subr.mxu0 0.0
      %777 = vmatpush1.msra.mxu0 0.0
      %778 = vmatprep.subr.mxu0 0.0
      %779 = vmatpush1.msra.mxu0 0.0
      %780 = vmatprep.subr.mxu0 0.0
      %781 = vmatpush1.msra.mxu0 0.0
      %782 = vmatprep.subr.mxu0 0.0
      %783 = vmatpush1.msra.mxu0 0.0
      %784 = vmatprep.subr.mxu0 0.0
      %785 = vmatpush1.msra.mxu0 0.0
      %786 = vmatprep.subr.mxu0 0.0
      %787 = vmatpush1.msra.mxu0 0.0
      %788 = vmatprep.subr.mxu0 0.0
      %789 = vmatpush1.msra.mxu0 0.0
      %790 = vmatprep.subr.mxu0 0.0
      %791 = vmatpush1.msra.mxu0 0.0
      %792 = vmatprep.subr.mxu0 0.0
      %793 = vmatpush1.msra.mxu0 0.0
      %794 = vmatprep.subr.mxu0 0.0
      %795 = vmatpush1.msra.mxu0 0.0
      %796 = vmatprep.subr.mxu0 0.0
      %797 = vmatpush1.msra.mxu0 0.0
      %798 = vmatprep.subr.mxu0 0.0
      %799 = vmatpush1.msra.mxu0 0.0
      %800 = vmatprep.subr.mxu0 0.0
      %801 = vmatpush1.msra.mxu0 0.0
      %802 = vmatprep.subr.mxu0 0.0
      %803 = vmatpush1.msra.mxu0 0.0
      %804 = vmatprep.subr.mxu0 0.0
      %805 = vmatpush1.msra.mxu0 0.0
      %806 = vmatprep.subr.mxu0 0.0
      %807 = vmatpush1.msra.mxu0 0.0
      %808 = vmatprep.subr.mxu0 0.0
      %809 = vmatpush1.msra.mxu0 0.0
      %810 = vmatprep.subr.mxu0 0.0
      %811 = vmatpush1.msra.mxu0 0.0
      %812 = vmatprep.subr.mxu0 0.0
      %813 = vmatpush1.msra.mxu0 0.0
      %814 = vmatprep.subr.mxu0 0.0
      %815 = vmatpush1.msra.mxu0 0.0
      %816 = vmatprep.subr.mxu0 0.0
      %817 = vmatpush1.msra.mxu0 0.0
      %818 = vmatprep.subr.mxu0 0.0
      %819 = vmatpush1.msra.mxu0 0.0
      %820 = vmatprep.mubr.f32.mxu0 0.0
      %821 = vmatmul.mubr.f32.gmra.mrb[0].mxu0 %v754
      %v822 = vpop.f32.mrb[0].mxu0
      %v823 = vadd.f32 0.0, %v822
      %v824 = vpop.f32.mrb[0].mxu0
      %825 = vdwg.mxu0
      %827 = vrot.lane.b32.xlu0 %v671, 8
      %v828 = vpop.permute.xlu0 %827
      %831 = vrot.lane.b32.xlu0 %v747, 16
      %v832 = vpop.permute.xlu0 %831
      %835 = vrot.lane.b32.xlu0 %v823, 24
      %v836 = vpop.permute.xlu0 %835
      %v838 = vsel %vm167, %v595, %v828
      %vm839 = vcmask 130048
      %v840 = vsel %vm839, %v838, %v832
      %vm841 = vcmask 195584
      %v842 = vsel %vm841, %v840, %v836
      %vm843 = vcmask 261120
      %844 = vst.msk [vmem:[%s155] sm:$0xff] %vm843, %v842
      %p845 = scmp.lt.s32.totalorder %s13, 1
      %s846 = scalar_select %p845, %s13, 1
      %s847 = smul.addr %s846, 8
      %s848 = scalar_lea.vmem %s2, %s847
      // Predicated region
      $region29: #{meshed_decoder_forward.26} parent=27 // pred_check
        %p849 = pneg %p83
      $region30: #{meshed_decoder_forward.26} parent=27 // pred_check_branch
        %851 = sbr.rel (%p849) target = $region32
      $region31: #{meshed_decoder_forward.26} parent=27 // pred_region
        _
      $region32: #{meshed_decoder_forward.26} parent=27 // pred_fallthru
        _
    $region28: #{meshed_decoder_forward.26} parent=5 // pred_fallthru
      _
    %p852 = scmp.le.s32.totalorder 2, %s8
    // Predicated region
    $region33: #{meshed_decoder_forward.26} parent=5 // pred_check
      %p853 = pneg %p852
    $region34: #{meshed_decoder_forward.26} parent=5 // pred_check_branch
      %855 = sbr.rel (%p853) target = $region36
    $region35: #{meshed_decoder_forward.26} parent=5 // pred_region
      %s856 = ssub.s32 %s8, 2
      // Predicated region
      $region37: #{meshed_decoder_forward.26} parent=35 // pred_check
        %p857 = pneg %p89
      $region38: #{meshed_decoder_forward.26} parent=35 // pred_check_branch
        %859 = sbr.rel (%p857) target = $region40
      $region39: #{meshed_decoder_forward.26} parent=35 // pred_region
        %p860 = scmp.lt.s32.totalorder %s14, 1
        %s861 = scalar_select %p860, %s14, 1
        %s862 = smul.addr %s861, 8
        %s863 = scalar_lea.vmem %s2, %s862
      $region40: #{meshed_decoder_forward.26} parent=35 // pred_fallthru
        _
    $region36: #{meshed_decoder_forward.26} parent=5 // pred_fallthru
      _
  $region6: #{meshed_decoder_forward.26} parent=0 // loop_footer
    %s12 = sadd.s32 1, %s8
  $region7: #{meshed_decoder_forward.26} parent=0 // loop_footer_branch
    %7 = sbr.rel target = $region3
  $region8: #{meshed_decoder_forward.26} parent=0 // loop_exit
    _

// kernel: meshed_decoder_forward.28
$region0: #{meshed_decoder_forward.28}
  #allocation0 [shape = 'u32[]', space=smem, size = 0x4, offset = 0x4, fixed_abs, tag = 'smem constant byte address 0x4 - core index']
  #allocation1 [shape = 'u32[144,128]{1,0:T(1,128)}', space=vmem, size = 0x12000, scoped, tag = 'internal scratch']
  %s0 = inlined_call_operand.vmem [shape: f32[16,32], index: 0, kind: input, shape index: {}]
  %s1 = inlined_call_operand.vmem [shape: f32[32,32], index: 1, kind: input, shape index: {}]
  %s2 = inlined_call_operand.vmem [shape: f32[1,32], index: 2, kind: input, shape index: {}]
  %s3 = inlined_call_operand.vmem [shape: f32[16,32], index: 3, kind: output, shape index: {}]
  %s4 = sld [smem:[#allocation0]]
  $region45: #{meshed_decoder_forward.28} parent=0
    _
  %s6 = ssub.s32 1, %s4
  %s7 = scalar_select 0, %s6, %s4
  loop: start=0, step=1, limit=4
  $region2: #{meshed_decoder_forward.28} parent=0 // loop_pre_header
    _
  $region3: #{meshed_decoder_forward.28} parent=0 // loop_header
    %s9 = sphi 0, %s13
    %p10 = scmp.ge.s32.totalorder %s9, 4
    %s19 = sphi 0, %s21
    %s22 = sphi 0, %s19
    %s23 = sphi 0, %s22
    %s39 = sphi 0, %s23
    %s43 = sphi 0, %s43
    %s45 = sphi 0, %s43
    %s46 = sphi 0, %s45
    %s60 = sphi 0, %s46
    %s64 = sphi 0, %s64
    %s66 = sphi 0, %s64
    %s67 = sphi 0, %s66
    %s81 = sphi 0, %s67
    %s87 = sphi 0, %s89
    %s90 = sphi 0, %s87
    %s91 = sphi 0, %s90
    %s107 = sphi 0, %s91
  $region4: #{meshed_decoder_forward.28} parent=0 // loop_header_branch
    %12 = sbr.rel (%p10) target = $region8
  $region5: #{meshed_decoder_forward.28} parent=0 // loop_body
    %s14 = ssub.s32 %s9, 1
    %s15 = ssub.s32 %s9, 2
    %s16 = sadd.s32 %s9, 1
    %s17 = ssub.s32 %s9, %s16
    %p18 = scmp.eq.s32.totalorder %s17, 0
    %s20 = sadd.s32 %s19, 1
    %s21 = scalar_select %p18, %s19, %s20
    %p24 = pneg %p18
    %p25 = scmp.eq.s32.totalorder %s9, 1
    %p26 = por %p24, %p25
    %p27 = scmp.ne.s32.totalorder %s19, %s22
    %p28 = scmp.eq.s32.totalorder %s9, 0
    %p29 = por %p27, %p28
    %p30 = scmp.ne.s32.totalorder %s19, %s22
    %p31 = scmp.eq.s32.totalorder %s14, 1
    %p32 = por %p30, %p31
    %p33 = scmp.ne.s32.totalorder %s22, %s23
    %p34 = scmp.eq.s32.totalorder %s14, 0
    %p35 = por %p33, %p34
    %p36 = scmp.ne.s32.totalorder %s22, %s23
    %p37 = scmp.eq.s32.totalorder %s15, 1
    %p38 = por %p36, %p37
    %p40 = scmp.ne.s32.totalorder %s23, %s39
    %p41 = scmp.eq.s32.totalorder %s15, 0
    %p42 = por %p40, %p41
    %s44 = sadd.s32 %s43, 1
    %p47 = scmp.eq.s32.totalorder %s9, 1
    %p48 = scmp.ne.s32.totalorder %s43, %s45
    %p49 = scmp.eq.s32.totalorder %s9, 0
    %p50 = por %p48, %p49
    %p51 = scmp.ne.s32.totalorder %s43, %s45
    %p52 = scmp.eq.s32.totalorder %s14, 1
    %p53 = por %p51, %p52
    %p54 = scmp.ne.s32.totalorder %s45, %s46
    %p55 = scmp.eq.s32.totalorder %s14, 0
    %p56 = por %p54, %p55
    %p57 = scmp.ne.s32.totalorder %s45, %s46
    %p58 = scmp.eq.s32.totalorder %s15, 1
    %p59 = por %p57, %p58
    %p61 = scmp.ne.s32.totalorder %s46, %s60
    %p62 = scmp.eq.s32.totalorder %s15, 0
    %p63 = por %p61, %p62
    %s65 = sadd.s32 %s64, 1
    %p68 = scmp.eq.s32.totalorder %s9, 1
    %p69 = scmp.ne.s32.totalorder %s64, %s66
    %p70 = scmp.eq.s32.totalorder %s9, 0
    %p71 = por %p69, %p70
    %p72 = scmp.ne.s32.totalorder %s64, %s66
    %p73 = scmp.eq.s32.totalorder %s14, 1
    %p74 = por %p72, %p73
    %p75 = scmp.ne.s32.totalorder %s66, %s67
    %p76 = scmp.eq.s32.totalorder %s14, 0
    %p77 = por %p75, %p76
    %p78 = scmp.ne.s32.totalorder %s66, %s67
    %p79 = scmp.eq.s32.totalorder %s15, 1
    %p80 = por %p78, %p79
    %p82 = scmp.ne.s32.totalorder %s67, %s81
    %p83 = scmp.eq.s32.totalorder %s15, 0
    %p84 = por %p82, %p83
    %s85 = ssub.s32 %s9, %s16
    %p86 = scmp.eq.s32.totalorder %s85, 0
    %s88 = sadd.s32 %s87, 1
    %s89 = scalar_select %p86, %s87, %s88
    %p92 = pneg %p86
    %p93 = scmp.eq.s32.totalorder %s9, 1
    %p94 = por %p92, %p93
    %p95 = scmp.ne.s32.totalorder %s87, %s90
    %p96 = scmp.eq.s32.totalorder %s9, 0
    %p97 = por %p95, %p96
    %p98 = scmp.ne.s32.totalorder %s87, %s90
    %p99 = scmp.eq.s32.totalorder %s14, 1
    %p100 = por %p98, %p99
    %p101 = scmp.ne.s32.totalorder %s90, %s91
    %p102 = scmp.eq.s32.totalorder %s14, 0
    %p103 = por %p101, %p102
    %p104 = scmp.ne.s32.totalorder %s90, %s91
    %p105 = scmp.eq.s32.totalorder %s15, 1
    %p106 = por %p104, %p105
    %p108 = scmp.ne.s32.totalorder %s91, %s107
    %p109 = scmp.eq.s32.totalorder %s15, 0
    %p110 = por %p108, %p109
    %p111 = scmp.le.s32.totalorder 1, %s9
    %p112 = scmp.lt.s32.totalorder %s9, 3
    %p113 = pnand %p111, %p112
    %p114 = pneg %p113
    // Predicated region
    $region9: #{meshed_decoder_forward.28} parent=5 // pred_check
      _
    $region10: #{meshed_decoder_forward.28} parent=5 // pred_check_branch
      %116 = sbr.rel (%p113) target = $region12
    $region11: #{meshed_decoder_forward.28} parent=5 // pred_region
      %s117 = ssub.s32 %s9, 1
      // Predicated region
      $region13: #{meshed_decoder_forward.28} parent=11 // pred_check
        %p118 = pneg %p56
      $region14: #{meshed_decoder_forward.28} parent=11 // pred_check_branch
        %120 = sbr.rel (%p118) target = $region16
      $region15: #{meshed_decoder_forward.28} parent=11 // pred_region
        _
      $region16: #{meshed_decoder_forward.28} parent=11 // pred_fallthru
        _
      // Predicated region
      $region17: #{meshed_decoder_forward.28} parent=11 // pred_check
        %p121 = pneg %p77
      $region18: #{meshed_decoder_forward.28} parent=11 // pred_check_branch
        %123 = sbr.rel (%p121) target = $region20
      $region19: #{meshed_decoder_forward.28} parent=11 // pred_region
        _
      $region20: #{meshed_decoder_forward.28} parent=11 // pred_fallthru
        _
    $region12: #{meshed_decoder_forward.28} parent=5 // pred_fallthru
      _
    %p124 = scmp.lt.s32.totalorder %s9, 2
    // Predicated region
    $region21: #{meshed_decoder_forward.28} parent=5 // pred_check
      %p125 = pneg %p124
    $region22: #{meshed_decoder_forward.28} parent=5 // pred_check_branch
      %127 = sbr.rel (%p125) target = $region24
    $region23: #{meshed_decoder_forward.28} parent=5 // pred_region
      // Predicated region
      $region25: #{meshed_decoder_forward.28} parent=23 // pred_check
        %p128 = pneg %p29
      $region26: #{meshed_decoder_forward.28} parent=23 // pred_check_branch
        %130 = sbr.rel (%p128) target = $region28
      $region27: #{meshed_decoder_forward.28} parent=23 // pred_region
        %p131 = scmp.lt.s32.totalorder %s9, 1
        %s132 = scalar_select %p131, %s9, 1
        %s133 = smul.addr %s132, 8
        %s134 = scalar_lea.vmem %s0, %s133
      $region28: #{meshed_decoder_forward.28} parent=23 // pred_fallthru
        _
    $region24: #{meshed_decoder_forward.28} parent=5 // pred_fallthru
      _
    %p135 = scmp.le.s32.totalorder 1, %s9
    %p136 = scmp.lt.s32.totalorder %s9, 3
    %p137 = pnand %p135, %p136
    %p138 = pneg %p137
    // Predicated region
    $region29: #{meshed_decoder_forward.28} parent=5 // pred_check
      _
    $region30: #{meshed_decoder_forward.28} parent=5 // pred_check_branch
      %140 = sbr.rel (%p137) target = $region32
    $region31: #{meshed_decoder_forward.28} parent=5 // pred_region
      %s141 = ssub.s32 %s9, 1
      %p142 = scmp.lt.s32.totalorder %s14, 1
      %s143 = scalar_select %p142, %s14, 1
      %s144 = smul.addr %s143, 8
      %s145 = scalar_lea.vmem %s0, %s144
      %p146 = pneg %p35
      %p147 = pneg %p32
      %p148 = pneg %p56
      %p149 = pneg %p53
      %p150 = pneg %p77
      %p151 = pneg %p74
      %p152 = pneg %p103
      %p153 = pneg %p100
      %p154 = scmp.lt.s32.totalorder %s14, 1
      %s155 = scalar_select %p154, %s14, 1
      %s156 = smul.addr %s155, 8
      %s157 = scalar_lea.vmem %s3, %s156
      %p158 = scmp.lt.s32.totalorder %s14, 1
      %s159 = scalar_select %p158, %s14, 1
      %s160 = smul.addr %s159, 8
      %s161 = scalar_lea.vmem %s0, %s160
      %p162 = scmp.lt.s32.totalorder %s14, 1
      %s163 = scalar_select %p162, %s14, 1
      %s164 = smul.addr %s163, 8
      %s165 = scalar_lea.vmem %s3, %s164
      %v166 = vld [vmem:[%s161] sm:$0xff]
      %v167 = vld [vmem:[%s1] sm:$0xff]
      %v168 = vld [vmem:[%s1 + $0x8] sm:$0xff]
      %v169 = vld [vmem:[%s1 + $0x10] sm:$0xff]
      %v170 = vld [vmem:[%s1 + $0x18] sm:$0xff]
      %v171 = vld [vmem:[%s2] sm:$0x1]
      %v173 = vlaneseq
      %v174 = vshrl.u32 %v173, 7
      %v175 = vsub.s32 0, %v174
      %v176 = vrot.slane %v171, %v175
      %vm178 = vcmask 261120
      %v180 = vsel %vm178, %v166, 0
      %182 = vmatprep.subr.mxu0 0.0
      %183 = vmatpush1.msra.mxu0 %v167
      %184 = vmatprep.subr.mxu0 0.0
      %185 = vmatpush1.msra.mxu0 %v168
      %186 = vmatprep.subr.mxu0 0.0
      %187 = vmatpush1.msra.mxu0 %v169
      %188 = vmatprep.subr.mxu0 0.0
      %189 = vmatpush1.msra.mxu0 %v170
      %190 = vmatprep.subr.mxu0 0.0
      %191 = vmatpush1.msra.mxu0 0.0
      %192 = vmatprep.subr.mxu0 0.0
      %193 = vmatpush1.msra.mxu0 0.0
      %194 = vmatprep.subr.mxu0 0.0
      %195 = vmatpush1.msra.mxu0 0.0
      %196 = vmatprep.subr.mxu0 0.0
      %197 = vmatpush1.msra.mxu0 0.0
      %198 = vmatprep.subr.mxu0 0.0
      %199 = vmatpush1.msra.mxu0 0.0
      %200 = vmatprep.subr.mxu0 0.0
      %201 = vmatpush1.msra.mxu0 0.0
      %202 = vmatprep.subr.mxu0 0.0
      %203 = vmatpush1.msra.mxu0 0.0
      %204 = vmatprep.subr.mxu0 0.0
      %205 = vmatpush1.msra.mxu0 0.0
      %206 = vmatprep.subr.mxu0 0.0
      %207 = vmatpush1.msra.mxu0 0.0
      %208 = vmatprep.subr.mxu0 0.0
      %209 = vmatpush1.msra.mxu0 0.0
      %210 = vmatprep.subr.mxu0 0.0
      %211 = vmatpush1.msra.mxu0 0.0
      %212 = vmatprep.subr.mxu0 0.0
      %213 = vmatpush1.msra.mxu0 0.0
      %214 = vmatprep.subr.mxu0 0.0
      %215 = vmatpush1.msra.mxu0 0.0
      %216 = vmatprep.subr.mxu0 0.0
      %217 = vmatpush1.msra.mxu0 0.0
      %218 = vmatprep.subr.mxu0 0.0
      %219 = vmatpush1.msra.mxu0 0.0
      %220 = vmatprep.subr.mxu0 0.0
      %221 = vmatpush1.msra.mxu0 0.0
      %222 = vmatprep.subr.mxu0 0.0
      %223 = vmatpush1.msra.mxu0 0.0
      %224 = vmatprep.subr.mxu0 0.0
      %225 = vmatpush1.msra.mxu0 0.0
      %226 = vmatprep.subr.mxu0 0.0
      %227 = vmatpush1.msra.mxu0 0.0
      %228 = vmatprep.subr.mxu0 0.0
      %229 = vmatpush1.msra.mxu0 0.0
      %230 = vmatprep.subr.mxu0 0.0
      %231 = vmatpush1.msra.mxu0 0.0
      %232 = vmatprep.subr.mxu0 0.0
      %233 = vmatpush1.msra.mxu0 0.0
      %234 = vmatprep.subr.mxu0 0.0
      %235 = vmatpush1.msra.mxu0 0.0
      %236 = vmatprep.subr.mxu0 0.0
      %237 = vmatpush1.msra.mxu0 0.0
      %238 = vmatprep.subr.mxu0 0.0
      %239 = vmatpush1.msra.mxu0 0.0
      %240 = vmatprep.subr.mxu0 0.0
      %241 = vmatpush1.msra.mxu0 0.0
      %242 = vmatprep.subr.mxu0 0.0
      %243 = vmatpush1.msra.mxu0 0.0
      %244 = vmatprep.subr.mxu0 0.0
      %245 = vmatpush1.msra.mxu0 0.0
      %246 = vmatprep.mubr.f32.mxu0 0.0
      %247 = vmatmul.mubr.f32.gmra.mrb[0].mxu0 %v180
      %v248 = vpop.f32.mrb[0].mxu0
      %v249 = vadd.f32 %v176, %v248
      %v250 = vpop.f32.mrb[0].mxu0
      %251 = vdwg.mxu0
      %252 = vst.msk [vmem:[%s165] sm:$0xff] %vm178, %v249
      %p253 = scmp.lt.s32.totalorder %s14, 1
      %s254 = scalar_select %p253, %s14, 1
      %s255 = smul.addr %s254, 8
      %s256 = scalar_lea.vmem %s3, %s255
      // Predicated region
      $region33: #{meshed_decoder_forward.28} parent=31 // pred_check
        %p257 = pneg %p100
      $region34: #{meshed_decoder_forward.28} parent=31 // pred_check_branch
        %259 = sbr.rel (%p257) target = $region36
      $region35: #{meshed_decoder_forward.28} parent=31 // pred_region
        _
      $region36: #{meshed_decoder_forward.28} parent=31 // pred_fallthru
        _
    $region32: #{meshed_decoder_forward.28} parent=5 // pred_fallthru
      _
    %p260 = scmp.le.s32.totalorder 2, %s9
    // Predicated region
    $region37: #{meshed_decoder_forward.28} parent=5 // pred_check
      %p261 = pneg %p260
    $region38: #{meshed_decoder_forward.28} parent=5 // pred_check_branch
      %263 = sbr.rel (%p261) target = $region40
    $region39: #{meshed_decoder_forward.28} parent=5 // pred_region
      %s264 = ssub.s32 %s9, 2
      // Predicated region
      $region41: #{meshed_decoder_forward.28} parent=39 // pred_check
        %p265 = pneg %p106
      $region42: #{meshed_decoder_forward.28} parent=39 // pred_check_branch
        %267 = sbr.rel (%p265) target = $region44
      $region43: #{meshed_decoder_forward.28} parent=39 // pred_region
        %p268 = scmp.lt.s32.totalorder %s15, 1
        %s269 = scalar_select %p268, %s15, 1
        %s270 = smul.addr %s269, 8
        %s271 = scalar_lea.vmem %s3, %s270
      $region44: #{meshed_decoder_forward.28} parent=39 // pred_fallthru
        _
    $region40: #{meshed_decoder_forward.28} parent=5 // pred_fallthru
      _
  $region6: #{meshed_decoder_forward.28} parent=0 // loop_footer
    %s13 = sadd.s32 1, %s9
  $region7: #{meshed_decoder_forward.28} parent=0 // loop_footer_branch
    %8 = sbr.rel target = $region3
  $region8: #{meshed_decoder_forward.28} parent=0 // loop_exit
    _

// kernel: meshed_decoder_forward.27
$region0: #{meshed_decoder_forward.27}
  #allocation0 [shape = 'u32[]', space=smem, size = 0x4, offset = 0x4, fixed_abs, tag = 'smem constant byte address 0x4 - core index']
  #allocation1 [shape = 'u32[144,128]{1,0:T(1,128)}', space=vmem, size = 0x12000, scoped, tag = 'internal scratch']
  %s0 = inlined_call_operand.vmem [shape: f32[16,32], index: 0, kind: input, shape index: {}]
  %s1 = inlined_call_operand.vmem [shape: f32[16,32], index: 1, kind: input, shape index: {}]
  %s2 = inlined_call_operand.vmem [shape: f32[32,32], index: 2, kind: input, shape index: {}]
  %s3 = inlined_call_operand.vmem [shape: f32[1,32], index: 3, kind: input, shape index: {}]
  %s4 = inlined_call_operand.vmem [shape: f32[1,32], index: 4, kind: input, shape index: {}]
  %s5 = inlined_call_operand.vmem [shape: f32[1,32], index: 5, kind: input, shape index: {}]
  %s6 = inlined_call_operand.vmem [shape: f32[16,1], index: 6, kind: input, shape index: {}]
  %s7 = inlined_call_operand.vmem [shape: f32[16,32], index: 7, kind: output, shape index: {}]
  %s8 = sld [smem:[#allocation0]]
  $region61: #{meshed_decoder_forward.27} parent=0
    _
  %s10 = ssub.s32 1, %s8
  %s11 = scalar_select 0, %s10, %s8
  loop: start=0, step=1, limit=4
  $region2: #{meshed_decoder_forward.27} parent=0 // loop_pre_header
    _
  $region3: #{meshed_decoder_forward.27} parent=0 // loop_header
    %s13 = sphi 0, %s17
    %p14 = scmp.ge.s32.totalorder %s13, 4
    %s23 = sphi 0, %s25
    %s26 = sphi 0, %s23
    %s27 = sphi 0, %s26
    %s43 = sphi 0, %s27
    %s49 = sphi 0, %s51
    %s52 = sphi 0, %s49
    %s53 = sphi 0, %s52
    %s69 = sphi 0, %s53
    %s73 = sphi 0, %s73
    %s75 = sphi 0, %s73
    %s76 = sphi 0, %s75
    %s90 = sphi 0, %s76
    %s94 = sphi 0, %s94
    %s96 = sphi 0, %s94
    %s97 = sphi 0, %s96
    %s111 = sphi 0, %s97
    %s115 = sphi 0, %s115
    %s117 = sphi 0, %s115
    %s118 = sphi 0, %s117
    %s132 = sphi 0, %s118
    %s136 = sphi 0, %s136
    %s138 = sphi 0, %s136
    %s139 = sphi 0, %s138
    %s153 = sphi 0, %s139
    %s159 = sphi 0, %s161
    %s162 = sphi 0, %s159
    %s163 = sphi 0, %s162
    %s179 = sphi 0, %s163
    %s185 = sphi 0, %s187
    %s188 = sphi 0, %s185
    %s189 = sphi 0, %s188
    %s205 = sphi 0, %s189
  $region4: #{meshed_decoder_forward.27} parent=0 // loop_header_branch
    %16 = sbr.rel (%p14) target = $region8
  $region5: #{meshed_decoder_forward.27} parent=0 // loop_body
    %s18 = ssub.s32 %s13, 1
    %s19 = ssub.s32 %s13, 2
    %s20 = sadd.s32 %s13, 1
    %s21 = ssub.s32 %s13, %s20
    %p22 = scmp.eq.s32.totalorder %s21, 0
    %s24 = sadd.s32 %s23, 1
    %s25 = scalar_select %p22, %s23, %s24
    %p28 = pneg %p22
    %p29 = scmp.eq.s32.totalorder %s13, 1
    %p30 = por %p28, %p29
    %p31 = scmp.ne.s32.totalorder %s23, %s26
    %p32 = scmp.eq.s32.totalorder %s13, 0
    %p33 = por %p31, %p32
    %p34 = scmp.ne.s32.totalorder %s23, %s26
    %p35 = scmp.eq.s32.totalorder %s18, 1
    %p36 = por %p34, %p35
    %p37 = scmp.ne.s32.totalorder %s26, %s27
    %p38 = scmp.eq.s32.totalorder %s18, 0
    %p39 = por %p37, %p38
    %p40 = scmp.ne.s32.totalorder %s26, %s27
    %p41 = scmp.eq.s32.totalorder %s19, 1
    %p42 = por %p40, %p41
    %p44 = scmp.ne.s32.totalorder %s27, %s43
    %p45 = scmp.eq.s32.totalorder %s19, 0
    %p46 = por %p44, %p45
    %s47 = ssub.s32 %s13, %s20
    %p48 = scmp.eq.s32.totalorder %s47, 0
    %s50 = sadd.s32 %s49, 1
    %s51 = scalar_select %p48, %s49, %s50
    %p54 = pneg %p48
    %p55 = scmp.eq.s32.totalorder %s13, 1
    %p56 = por %p54, %p55
    %p57 = scmp.ne.s32.totalorder %s49, %s52
    %p58 = scmp.eq.s32.totalorder %s13, 0
    %p59 = por %p57, %p58
    %p60 = scmp.ne.s32.totalorder %s49, %s52
    %p61 = scmp.eq.s32.totalorder %s18, 1
    %p62 = por %p60, %p61
    %p63 = scmp.ne.s32.totalorder %s52, %s53
    %p64 = scmp.eq.s32.totalorder %s18, 0
    %p65 = por %p63, %p64
    %p66 = scmp.ne.s32.totalorder %s52, %s53
    %p67 = scmp.eq.s32.totalorder %s19, 1
    %p68 = por %p66, %p67
    %p70 = scmp.ne.s32.totalorder %s53, %s69
    %p71 = scmp.eq.s32.totalorder %s19, 0
    %p72 = por %p70, %p71
    %s74 = sadd.s32 %s73, 1
    %p77 = scmp.eq.s32.totalorder %s13, 1
    %p78 = scmp.ne.s32.totalorder %s73, %s75
    %p79 = scmp.eq.s32.totalorder %s13, 0
    %p80 = por %p78, %p79
    %p81 = scmp.ne.s32.totalorder %s73, %s75
    %p82 = scmp.eq.s32.totalorder %s18, 1
    %p83 = por %p81, %p82
    %p84 = scmp.ne.s32.totalorder %s75, %s76
    %p85 = scmp.eq.s32.totalorder %s18, 0
    %p86 = por %p84, %p85
    %p87 = scmp.ne.s32.totalorder %s75, %s76
    %p88 = scmp.eq.s32.totalorder %s19, 1
    %p89 = por %p87, %p88
    %p91 = scmp.ne.s32.totalorder %s76, %s90
    %p92 = scmp.eq.s32.totalorder %s19, 0
    %p93 = por %p91, %p92
    %s95 = sadd.s32 %s94, 1
    %p98 = scmp.eq.s32.totalorder %s13, 1
    %p99 = scmp.ne.s32.totalorder %s94, %s96
    %p100 = scmp.eq.s32.totalorder %s13, 0
    %p101 = por %p99, %p100
    %p102 = scmp.ne.s32.totalorder %s94, %s96
    %p103 = scmp.eq.s32.totalorder %s18, 1
    %p104 = por %p102, %p103
    %p105 = scmp.ne.s32.totalorder %s96, %s97
    %p106 = scmp.eq.s32.totalorder %s18, 0
    %p107 = por %p105, %p106
    %p108 = scmp.ne.s32.totalorder %s96, %s97
    %p109 = scmp.eq.s32.totalorder %s19, 1
    %p110 = por %p108, %p109
    %p112 = scmp.ne.s32.totalorder %s97, %s111
    %p113 = scmp.eq.s32.totalorder %s19, 0
    %p114 = por %p112, %p113
    %s116 = sadd.s32 %s115, 1
    %p119 = scmp.eq.s32.totalorder %s13, 1
    %p120 = scmp.ne.s32.totalorder %s115, %s117
    %p121 = scmp.eq.s32.totalorder %s13, 0
    %p122 = por %p120, %p121
    %p123 = scmp.ne.s32.totalorder %s115, %s117
    %p124 = scmp.eq.s32.totalorder %s18, 1
    %p125 = por %p123, %p124
    %p126 = scmp.ne.s32.totalorder %s117, %s118
    %p127 = scmp.eq.s32.totalorder %s18, 0
    %p128 = por %p126, %p127
    %p129 = scmp.ne.s32.totalorder %s117, %s118
    %p130 = scmp.eq.s32.totalorder %s19, 1
    %p131 = por %p129, %p130
    %p133 = scmp.ne.s32.totalorder %s118, %s132
    %p134 = scmp.eq.s32.totalorder %s19, 0
    %p135 = por %p133, %p134
    %s137 = sadd.s32 %s136, 1
    %p140 = scmp.eq.s32.totalorder %s13, 1
    %p141 = scmp.ne.s32.totalorder %s136, %s138
    %p142 = scmp.eq.s32.totalorder %s13, 0
    %p143 = por %p141, %p142
    %p144 = scmp.ne.s32.totalorder %s136, %s138
    %p145 = scmp.eq.s32.totalorder %s18, 1
    %p146 = por %p144, %p145
    %p147 = scmp.ne.s32.totalorder %s138, %s139
    %p148 = scmp.eq.s32.totalorder %s18, 0
    %p149 = por %p147, %p148
    %p150 = scmp.ne.s32.totalorder %s138, %s139
    %p151 = scmp.eq.s32.totalorder %s19, 1
    %p152 = por %p150, %p151
    %p154 = scmp.ne.s32.totalorder %s139, %s153
    %p155 = scmp.eq.s32.totalorder %s19, 0
    %p156 = por %p154, %p155
    %s157 = ssub.s32 %s13, %s20
    %p158 = scmp.eq.s32.totalorder %s157, 0
    %s160 = sadd.s32 %s159, 1
    %s161 = scalar_select %p158, %s159, %s160
    %p164 = pneg %p158
    %p165 = scmp.eq.s32.totalorder %s13, 1
    %p166 = por %p164, %p165
    %p167 = scmp.ne.s32.totalorder %s159, %s162
    %p168 = scmp.eq.s32.totalorder %s13, 0
    %p169 = por %p167, %p168
    %p170 = scmp.ne.s32.totalorder %s159, %s162
    %p171 = scmp.eq.s32.totalorder %s18, 1
    %p172 = por %p170, %p171
    %p173 = scmp.ne.s32.totalorder %s162, %s163
    %p174 = scmp.eq.s32.totalorder %s18, 0
    %p175 = por %p173, %p174
    %p176 = scmp.ne.s32.totalorder %s162, %s163
    %p177 = scmp.eq.s32.totalorder %s19, 1
    %p178 = por %p176, %p177
    %p180 = scmp.ne.s32.totalorder %s163, %s179
    %p181 = scmp.eq.s32.totalorder %s19, 0
    %p182 = por %p180, %p181
    %s183 = ssub.s32 %s13, %s20
    %p184 = scmp.eq.s32.totalorder %s183, 0
    %s186 = sadd.s32 %s185, 1
    %s187 = scalar_select %p184, %s185, %s186
    %p190 = pneg %p184
    %p191 = scmp.eq.s32.totalorder %s13, 1
    %p192 = por %p190, %p191
    %p193 = scmp.ne.s32.totalorder %s185, %s188
    %p194 = scmp.eq.s32.totalorder %s13, 0
    %p195 = por %p193, %p194
    %p196 = scmp.ne.s32.totalorder %s185, %s188
    %p197 = scmp.eq.s32.totalorder %s18, 1
    %p198 = por %p196, %p197
    %p199 = scmp.ne.s32.totalorder %s188, %s189
    %p200 = scmp.eq.s32.totalorder %s18, 0
    %p201 = por %p199, %p200
    %p202 = scmp.ne.s32.totalorder %s188, %s189
    %p203 = scmp.eq.s32.totalorder %s19, 1
    %p204 = por %p202, %p203
    %p206 = scmp.ne.s32.totalorder %s189, %s205
    %p207 = scmp.eq.s32.totalorder %s19, 0
    %p208 = por %p206, %p207
    %p209 = scmp.le.s32.totalorder 1, %s13
    %p210 = scmp.lt.s32.totalorder %s13, 3
    %p211 = pnand %p209, %p210
    %p212 = pneg %p211
    // Predicated region
    $region9: #{meshed_decoder_forward.27} parent=5 // pred_check
      _
    $region10: #{meshed_decoder_forward.27} parent=5 // pred_check_branch
      %214 = sbr.rel (%p211) target = $region12
    $region11: #{meshed_decoder_forward.27} parent=5 // pred_region
      %s215 = ssub.s32 %s13, 1
      // Predicated region
      $region13: #{meshed_decoder_forward.27} parent=11 // pred_check
        %p216 = pneg %p86
      $region14: #{meshed_decoder_forward.27} parent=11 // pred_check_branch
        %218 = sbr.rel (%p216) target = $region16
      $region15: #{meshed_decoder_forward.27} parent=11 // pred_region
        _
      $region16: #{meshed_decoder_forward.27} parent=11 // pred_fallthru
        _
      // Predicated region
      $region17: #{meshed_decoder_forward.27} parent=11 // pred_check
        %p219 = pneg %p107
      $region18: #{meshed_decoder_forward.27} parent=11 // pred_check_branch
        %221 = sbr.rel (%p219) target = $region20
      $region19: #{meshed_decoder_forward.27} parent=11 // pred_region
        _
      $region20: #{meshed_decoder_forward.27} parent=11 // pred_fallthru
        _
      // Predicated region
      $region21: #{meshed_decoder_forward.27} parent=11 // pred_check
        %p222 = pneg %p128
      $region22: #{meshed_decoder_forward.27} parent=11 // pred_check_branch
        %224 = sbr.rel (%p222) target = $region24
      $region23: #{meshed_decoder_forward.27} parent=11 // pred_region
        _
      $region24: #{meshed_decoder_forward.27} parent=11 // pred_fallthru
        _
      // Predicated region
      $region25: #{meshed_decoder_forward.27} parent=11 // pred_check
        %p225 = pneg %p149
      $region26: #{meshed_decoder_forward.27} parent=11 // pred_check_branch
        %227 = sbr.rel (%p225) target = $region28
      $region27: #{meshed_decoder_forward.27} parent=11 // pred_region
        _
      $region28: #{meshed_decoder_forward.27} parent=11 // pred_fallthru
        _
    $region12: #{meshed_decoder_forward.27} parent=5 // pred_fallthru
      _
    %p228 = scmp.lt.s32.totalorder %s13, 2
    // Predicated region
    $region29: #{meshed_decoder_forward.27} parent=5 // pred_check
      %p229 = pneg %p228
    $region30: #{meshed_decoder_forward.27} parent=5 // pred_check_branch
      %231 = sbr.rel (%p229) target = $region32
    $region31: #{meshed_decoder_forward.27} parent=5 // pred_region
      // Predicated region
      $region33: #{meshed_decoder_forward.27} parent=31 // pred_check
        %p232 = pneg %p33
      $region34: #{meshed_decoder_forward.27} parent=31 // pred_check_branch
        %234 = sbr.rel (%p232) target = $region36
      $region35: #{meshed_decoder_forward.27} parent=31 // pred_region
        %p235 = scmp.lt.s32.totalorder %s13, 1
        %s236 = scalar_select %p235, %s13, 1
        %s237 = smul.addr %s236, 8
        %s238 = scalar_lea.vmem %s0, %s237
      $region36: #{meshed_decoder_forward.27} parent=31 // pred_fallthru
        _
      // Predicated region
      $region37: #{meshed_decoder_forward.27} parent=31 // pred_check
        %p239 = pneg %p59
      $region38: #{meshed_decoder_forward.27} parent=31 // pred_check_branch
        %241 = sbr.rel (%p239) target = $region40
      $region39: #{meshed_decoder_forward.27} parent=31 // pred_region
        %p242 = scmp.lt.s32.totalorder %s13, 1
        %s243 = scalar_select %p242, %s13, 1
        %s244 = smul.addr %s243, 8
        %s245 = scalar_lea.vmem %s1, %s244
      $region40: #{meshed_decoder_forward.27} parent=31 // pred_fallthru
        _
      // Predicated region
      $region41: #{meshed_decoder_forward.27} parent=31 // pred_check
        %p246 = pneg %p169
      $region42: #{meshed_decoder_forward.27} parent=31 // pred_check_branch
        %248 = sbr.rel (%p246) target = $region44
      $region43: #{meshed_decoder_forward.27} parent=31 // pred_region
        %p249 = scmp.lt.s32.totalorder %s13, 1
        %s250 = scalar_select %p249, %s13, 1
        %s251 = smul.addr %s250, 8
        %s252 = scalar_lea.vmem %s6, %s251
      $region44: #{meshed_decoder_forward.27} parent=31 // pred_fallthru
        _
    $region32: #{meshed_decoder_forward.27} parent=5 // pred_fallthru
      _
    %p253 = scmp.le.s32.totalorder 1, %s13
    %p254 = scmp.lt.s32.totalorder %s13, 3
    %p255 = pnand %p253, %p254
    %p256 = pneg %p255
    // Predicated region
    $region45: #{meshed_decoder_forward.27} parent=5 // pred_check
      _
    $region46: #{meshed_decoder_forward.27} parent=5 // pred_check_branch
      %258 = sbr.rel (%p255) target = $region48
    $region47: #{meshed_decoder_forward.27} parent=5 // pred_region
      %s259 = ssub.s32 %s13, 1
      %p260 = scmp.lt.s32.totalorder %s18, 1
      %s261 = scalar_select %p260, %s18, 1
      %s262 = smul.addr %s261, 8
      %s263 = scalar_lea.vmem %s0, %s262
      %p264 = pneg %p39
      %p265 = pneg %p36
      %p266 = scmp.lt.s32.totalorder %s18, 1
      %s267 = scalar_select %p266, %s18, 1
      %s268 = smul.addr %s267, 8
      %s269 = scalar_lea.vmem %s1, %s268
      %p270 = pneg %p65
      %p271 = pneg %p62
      %p272 = pneg %p86
      %p273 = pneg %p83
      %p274 = pneg %p107
      %p275 = pneg %p104
      %p276 = pneg %p128
      %p277 = pneg %p125
      %p278 = pneg %p149
      %p279 = pneg %p146
      %p280 = scmp.lt.s32.totalorder %s18, 1
      %s281 = scalar_select %p280, %s18, 1
      %s282 = smul.addr %s281, 8
      %s283 = scalar_lea.vmem %s6, %s282
      %p284 = pneg %p175
      %p285 = pneg %p172
      %p286 = pneg %p201
      %p287 = pneg %p198
      %p288 = scmp.lt.s32.totalorder %s18, 1
      %s289 = scalar_select %p288, %s18, 1
      %s290 = smul.addr %s289, 8
      %s291 = scalar_lea.vmem %s7, %s290
      %p292 = scmp.lt.s32.totalorder %s18, 1
      %s293 = scalar_select %p292, %s18, 1
      %s294 = smul.addr %s293, 8
      %s295 = scalar_lea.vmem %s0, %s294
      %p296 = scmp.lt.s32.totalorder %s18, 1
      %s297 = scalar_select %p296, %s18, 1
      %s298 = smul.addr %s297, 8
      %s299 = scalar_lea.vmem %s1, %s298
      %p300 = scmp.lt.s32.totalorder %s18, 1
      %s301 = scalar_select %p300, %s18, 1
      %s302 = smul.addr %s301, 8
      %s303 = scalar_lea.vmem %s6, %s302
      %p304 = scmp.lt.s32.totalorder %s18, 1
      %s305 = scalar_select %p304, %s18, 1
      %s306 = smul.addr %s305, 8
      %s307 = scalar_lea.vmem %s7, %s306
      %v308 = vld [vmem:[%s295] sm:$0xff]
      %v309 = vld [vmem:[%s2] sm:$0xff]
      %v310 = vld [vmem:[%s2 + $0x8] sm:$0xff]
      %v311 = vld [vmem:[%s2 + $0x10] sm:$0xff]
      %v312 = vld [vmem:[%s2 + $0x18] sm:$0xff]
      %v313 = vld [vmem:[%s3] sm:$0x1]
      %v315 = vlaneseq
      %v316 = vshrl.u32 %v315, 7
      %v317 = vsub.s32 0, %v316
      %v318 = vrot.slane %v313, %v317
      %vm320 = vcmask 261120
      %v322 = vsel %vm320, %v308, 0
      %324 = vmatprep.subr.mxu0 0.0
      %325 = vmatpush1.msra.mxu0 %v309
      %326 = vmatprep.subr.mxu0 0.0
      %327 = vmatpush1.msra.mxu0 %v310
      %328 = vmatprep.subr.mxu0 0.0
      %329 = vmatpush1.msra.mxu0 %v311
      %330 = vmatprep.subr.mxu0 0.0
      %331 = vmatpush1.msra.mxu0 %v312
      %332 = vmatprep.subr.mxu0 0.0
      %333 = vmatpush1.msra.mxu0 0.0
      %334 = vmatprep.subr.mxu0 0.0
      %335 = vmatpush1.msra.mxu0 0.0
      %336 = vmatprep.subr.mxu0 0.0
      %337 = vmatpush1.msra.mxu0 0.0
      %338 = vmatprep.subr.mxu0 0.0
      %339 = vmatpush1.msra.mxu0 0.0
      %340 = vmatprep.subr.mxu0 0.0
      %341 = vmatpush1.msra.mxu0 0.0
      %342 = vmatprep.subr.mxu0 0.0
      %343 = vmatpush1.msra.mxu0 0.0
      %344 = vmatprep.subr.mxu0 0.0
      %345 = vmatpush1.msra.mxu0 0.0
      %346 = vmatprep.subr.mxu0 0.0
      %347 = vmatpush1.msra.mxu0 0.0
      %348 = vmatprep.subr.mxu0 0.0
      %349 = vmatpush1.msra.mxu0 0.0
      %350 = vmatprep.subr.mxu0 0.0
      %351 = vmatpush1.msra.mxu0 0.0
      %352 = vmatprep.subr.mxu0 0.0
      %353 = vmatpush1.msra.mxu0 0.0
      %354 = vmatprep.subr.mxu0 0.0
      %355 = vmatpush1.msra.mxu0 0.0
      %356 = vmatprep.subr.mxu0 0.0
      %357 = vmatpush1.msra.mxu0 0.0
      %358 = vmatprep.subr.mxu0 0.0
      %359 = vmatpush1.msra.mxu0 0.0
      %360 = vmatprep.subr.mxu0 0.0
      %361 = vmatpush1.msra.mxu0 0.0
      %362 = vmatprep.subr.mxu0 0.0
      %363 = vmatpush1.msra.mxu0 0.0
      %364 = vmatprep.subr.mxu0 0.0
      %365 = vmatpush1.msra.mxu0 0.0
      %366 = vmatprep.subr.mxu0 0.0
      %367 = vmatpush1.msra.mxu0 0.0
      %368 = vmatprep.subr.mxu0 0.0
      %369 = vmatpush1.msra.mxu0 0.0
      %370 = vmatprep.subr.mxu0 0.0
      %371 = vmatpush1.msra.mxu0 0.0
      %372 = vmatprep.subr.mxu0 0.0
      %373 = vmatpush1.msra.mxu0 0.0
      %374 = vmatprep.subr.mxu0 0.0
      %375 = vmatpush1.msra.mxu0 0.0
      %376 = vmatprep.subr.mxu0 0.0
      %377 = vmatpush1.msra.mxu0 0.0
      %378 = vmatprep.subr.mxu0 0.0
      %379 = vmatpush1.msra.mxu0 0.0
      %380 = vmatprep.subr.mxu0 0.0
      %381 = vmatpush1.msra.mxu0 0.0
      %382 = vmatprep.subr.mxu0 0.0
      %383 = vmatpush1.msra.mxu0 0.0
      %384 = vmatprep.subr.mxu0 0.0
      %385 = vmatpush1.msra.mxu0 0.0
      %386 = vmatprep.subr.mxu0 0.0
      %387 = vmatpush1.msra.mxu0 0.0
      %388 = vmatprep.mubr.f32.mxu0 0.0
      %389 = vmatmul.mubr.f32.gmra.mrb[0].mxu0 %v322
      %v390 = vpop.f32.mrb[0].mxu0
      %v391 = vadd.f32 %v318, %v390
      %v392 = vpop.f32.mrb[0].mxu0
      %393 = vdwg.mxu0
      %v394 = vld [vmem:[%s299] sm:$0xff]
      %v395 = vadd.f32 %v391, %v394
      %v396 = vld [vmem:[%s4] sm:$0x1]
      %v397 = vld [vmem:[%s5] sm:$0x1]
      %v398 = vsel %vm320, %v395, 0.0
      %399 = vadd.xlane.f32.xlu0 %v398
      %v400 = vpop.xlane.xlu0 %399
      %v401 = vrcp.pop 32.0
      %v402 = vmul.f32 %v400, %v401
      %v403 = vsub.f32 %v395, %v402
      %v404 = vmul.f32 %v403, %v403
      %v405 = vsel %vm320, %v404, 0.0
      %406 = vadd.xlane.f32.xlu0 %v405
      %v407 = vpop.xlane.xlu0 %406
      %v408 = vmul.f32 %v407, %v401
      %v409 = vadd.f32 %v408, 1e-05
      %v410 = vrsqrt.pop %v409
      %v411 = vmul.f32 %v403, %v410
      %v413 = vlaneseq
      %v414 = vshrl.u32 %v413, 7
      %v415 = vsub.s32 0, %v414
      %v416 = vrot.slane %v396, %v415
      %v418 = vmul.f32 %v411, %v416
      %v420 = vlaneseq
      %v421 = vshrl.u32 %v420, 7
      %v422 = vsub.s32 0, %v421
      %v423 = vrot.slane %v397, %v422
      %v425 = vadd.f32 %v418, %v423
      %v426 = vld [vmem:[%s303] sm:$0xff]
      %428 = vset.pattern.permute.xlu0 0
      %429 = vperm.xlu0 %428, %v426
      %v430 = vpop.permute.xlu0 %429
      %v432 = vmul.f32 %v425, %v430
      %433 = vst.msk [vmem:[%s307] sm:$0xff] %vm320, %v432
      %p434 = scmp.lt.s32.totalorder %s18, 1
      %s435 = scalar_select %p434, %s18, 1
      %s436 = smul.addr %s435, 8
      %s437 = scalar_lea.vmem %s7, %s436
      // Predicated region
      $region49: #{meshed_decoder_forward.27} parent=47 // pred_check
        %p438 = pneg %p198
      $region50: #{meshed_decoder_forward.27} parent=47 // pred_check_branch
        %440 = sbr.rel (%p438) target = $region52
      $region51: #{meshed_decoder_forward.27} parent=47 // pred_region
        _
      $region52: #{meshed_decoder_forward.27} parent=47 // pred_fallthru
        _
    $region48: #{meshed_decoder_forward.27} parent=5 // pred_fallthru
      _
    %p441 = scmp.le.s32.totalorder 2, %s13
    // Predicated region
    $region53: #{meshed_decoder_forward.27} parent=5 // pred_check
      %p442 = pneg %p441
    $region54: #{meshed_decoder_forward.27} parent=5 // pred_check_branch
      %444 = sbr.rel (%p442) target = $region56
    $region55: #{meshed_decoder_forward.27} parent=5 // pred_region
      %s445 = ssub.s32 %s13, 2
      // Predicated region
      $region57: #{meshed_decoder_forward.27} parent=55 // pred_check
        %p446 = pneg %p204
      $region58: #{meshed_decoder_forward.27} parent=55 // pred_check_branch
        %448 = sbr.rel (%p446) target = $region60
      $region59: #{meshed_decoder_forward.27} parent=55 // pred_region
        %p449 = scmp.lt.s32.totalorder %s19, 1
        %s450 = scalar_select %p449, %s19, 1
        %s451 = smul.addr %s450, 8
        %s452 = scalar_lea.vmem %s7, %s451
      $region60: #{meshed_decoder_forward.27} parent=55 // pred_fallthru
        _
    $region56: #{meshed_decoder_forward.27} parent=5 // pred_fallthru
      _
  $region6: #{meshed_decoder_forward.27} parent=0 // loop_footer
    %s17 = sadd.s32 1, %s13
  $region7: #{meshed_decoder_forward.27} parent=0 // loop_footer_branch
    %12 = sbr.rel target = $region3
  $region8: #{meshed_decoder_forward.27} parent=0 // loop_exit
    _

// kernel: meshed_decoder_forward.29
$region0: #{meshed_decoder_forward.29}
  #allocation0 [shape = 'u32[]', space=smem, size = 0x4, offset = 0x4, fixed_abs, tag = 'smem constant byte address 0x4 - core index']
  #allocation1 [shape = 'u32[144,128]{1,0:T(1,128)}', space=vmem, size = 0x12000, scoped, tag = 'internal scratch']
  %s0 = inlined_call_operand.vmem [shape: f32[96,32], index: 0, kind: input, shape index: {}]
  %s1 = inlined_call_operand.vmem [shape: f32[32,64], index: 1, kind: input, shape index: {}]
  %s2 = inlined_call_operand.vmem [shape: f32[1,64], index: 2, kind: input, shape index: {}]
  %s3 = inlined_call_operand.vmem [shape: f32[96,64], index: 3, kind: output, shape index: {}]
  %s4 = sld [smem:[#allocation0]]
  $region45: #{meshed_decoder_forward.29} parent=0
    _
  %s6 = ssub.s32 1, %s4
  %s7 = scalar_select 0, %s6, %s4
  loop: start=0, step=1, limit=4
  $region2: #{meshed_decoder_forward.29} parent=0 // loop_pre_header
    _
  $region3: #{meshed_decoder_forward.29} parent=0 // loop_header
    %s9 = sphi 0, %s13
    %p10 = scmp.ge.s32.totalorder %s9, 4
    %s19 = sphi 0, %s21
    %s22 = sphi 0, %s19
    %s23 = sphi 0, %s22
    %s39 = sphi 0, %s23
    %s43 = sphi 0, %s43
    %s45 = sphi 0, %s43
    %s46 = sphi 0, %s45
    %s60 = sphi 0, %s46
    %s64 = sphi 0, %s64
    %s66 = sphi 0, %s64
    %s67 = sphi 0, %s66
    %s81 = sphi 0, %s67
    %s87 = sphi 0, %s89
    %s90 = sphi 0, %s87
    %s91 = sphi 0, %s90
    %s107 = sphi 0, %s91
  $region4: #{meshed_decoder_forward.29} parent=0 // loop_header_branch
    %12 = sbr.rel (%p10) target = $region8
  $region5: #{meshed_decoder_forward.29} parent=0 // loop_body
    %s14 = ssub.s32 %s9, 1
    %s15 = ssub.s32 %s9, 2
    %s16 = sadd.s32 %s9, 1
    %s17 = ssub.s32 %s9, %s16
    %p18 = scmp.eq.s32.totalorder %s17, 0
    %s20 = sadd.s32 %s19, 1
    %s21 = scalar_select %p18, %s19, %s20
    %p24 = pneg %p18
    %p25 = scmp.eq.s32.totalorder %s9, 1
    %p26 = por %p24, %p25
    %p27 = scmp.ne.s32.totalorder %s19, %s22
    %p28 = scmp.eq.s32.totalorder %s9, 0
    %p29 = por %p27, %p28
    %p30 = scmp.ne.s32.totalorder %s19, %s22
    %p31 = scmp.eq.s32.totalorder %s14, 1
    %p32 = por %p30, %p31
    %p33 = scmp.ne.s32.totalorder %s22, %s23
    %p34 = scmp.eq.s32.totalorder %s14, 0
    %p35 = por %p33, %p34
    %p36 = scmp.ne.s32.totalorder %s22, %s23
    %p37 = scmp.eq.s32.totalorder %s15, 1
    %p38 = por %p36, %p37
    %p40 = scmp.ne.s32.totalorder %s23, %s39
    %p41 = scmp.eq.s32.totalorder %s15, 0
    %p42 = por %p40, %p41
    %s44 = sadd.s32 %s43, 1
    %p47 = scmp.eq.s32.totalorder %s9, 1
    %p48 = scmp.ne.s32.totalorder %s43, %s45
    %p49 = scmp.eq.s32.totalorder %s9, 0
    %p50 = por %p48, %p49
    %p51 = scmp.ne.s32.totalorder %s43, %s45
    %p52 = scmp.eq.s32.totalorder %s14, 1
    %p53 = por %p51, %p52
    %p54 = scmp.ne.s32.totalorder %s45, %s46
    %p55 = scmp.eq.s32.totalorder %s14, 0
    %p56 = por %p54, %p55
    %p57 = scmp.ne.s32.totalorder %s45, %s46
    %p58 = scmp.eq.s32.totalorder %s15, 1
    %p59 = por %p57, %p58
    %p61 = scmp.ne.s32.totalorder %s46, %s60
    %p62 = scmp.eq.s32.totalorder %s15, 0
    %p63 = por %p61, %p62
    %s65 = sadd.s32 %s64, 1
    %p68 = scmp.eq.s32.totalorder %s9, 1
    %p69 = scmp.ne.s32.totalorder %s64, %s66
    %p70 = scmp.eq.s32.totalorder %s9, 0
    %p71 = por %p69, %p70
    %p72 = scmp.ne.s32.totalorder %s64, %s66
    %p73 = scmp.eq.s32.totalorder %s14, 1
    %p74 = por %p72, %p73
    %p75 = scmp.ne.s32.totalorder %s66, %s67
    %p76 = scmp.eq.s32.totalorder %s14, 0
    %p77 = por %p75, %p76
    %p78 = scmp.ne.s32.totalorder %s66, %s67
    %p79 = scmp.eq.s32.totalorder %s15, 1
    %p80 = por %p78, %p79
    %p82 = scmp.ne.s32.totalorder %s67, %s81
    %p83 = scmp.eq.s32.totalorder %s15, 0
    %p84 = por %p82, %p83
    %s85 = ssub.s32 %s9, %s16
    %p86 = scmp.eq.s32.totalorder %s85, 0
    %s88 = sadd.s32 %s87, 1
    %s89 = scalar_select %p86, %s87, %s88
    %p92 = pneg %p86
    %p93 = scmp.eq.s32.totalorder %s9, 1
    %p94 = por %p92, %p93
    %p95 = scmp.ne.s32.totalorder %s87, %s90
    %p96 = scmp.eq.s32.totalorder %s9, 0
    %p97 = por %p95, %p96
    %p98 = scmp.ne.s32.totalorder %s87, %s90
    %p99 = scmp.eq.s32.totalorder %s14, 1
    %p100 = por %p98, %p99
    %p101 = scmp.ne.s32.totalorder %s90, %s91
    %p102 = scmp.eq.s32.totalorder %s14, 0
    %p103 = por %p101, %p102
    %p104 = scmp.ne.s32.totalorder %s90, %s91
    %p105 = scmp.eq.s32.totalorder %s15, 1
    %p106 = por %p104, %p105
    %p108 = scmp.ne.s32.totalorder %s91, %s107
    %p109 = scmp.eq.s32.totalorder %s15, 0
    %p110 = por %p108, %p109
    %p111 = scmp.le.s32.totalorder 1, %s9
    %p112 = scmp.lt.s32.totalorder %s9, 3
    %p113 = pnand %p111, %p112
    %p114 = pneg %p113
    // Predicated region
    $region9: #{meshed_decoder_forward.29} parent=5 // pred_check
      _
    $region10: #{meshed_decoder_forward.29} parent=5 // pred_check_branch
      %116 = sbr.rel (%p113) target = $region12
    $region11: #{meshed_decoder_forward.29} parent=5 // pred_region
      %s117 = ssub.s32 %s9, 1
      // Predicated region
      $region13: #{meshed_decoder_forward.29} parent=11 // pred_check
        %p118 = pneg %p56
      $region14: #{meshed_decoder_forward.29} parent=11 // pred_check_branch
        %120 = sbr.rel (%p118) target = $region16
      $region15: #{meshed_decoder_forward.29} parent=11 // pred_region
        _
      $region16: #{meshed_decoder_forward.29} parent=11 // pred_fallthru
        _
      // Predicated region
      $region17: #{meshed_decoder_forward.29} parent=11 // pred_check
        %p121 = pneg %p77
      $region18: #{meshed_decoder_forward.29} parent=11 // pred_check_branch
        %123 = sbr.rel (%p121) target = $region20
      $region19: #{meshed_decoder_forward.29} parent=11 // pred_region
        _
      $region20: #{meshed_decoder_forward.29} parent=11 // pred_fallthru
        _
    $region12: #{meshed_decoder_forward.29} parent=5 // pred_fallthru
      _
    %p124 = scmp.lt.s32.totalorder %s9, 2
    // Predicated region
    $region21: #{meshed_decoder_forward.29} parent=5 // pred_check
      %p125 = pneg %p124
    $region22: #{meshed_decoder_forward.29} parent=5 // pred_check_branch
      %127 = sbr.rel (%p125) target = $region24
    $region23: #{meshed_decoder_forward.29} parent=5 // pred_region
      // Predicated region
      $region25: #{meshed_decoder_forward.29} parent=23 // pred_check
        %p128 = pneg %p29
      $region26: #{meshed_decoder_forward.29} parent=23 // pred_check_branch
        %130 = sbr.rel (%p128) target = $region28
      $region27: #{meshed_decoder_forward.29} parent=23 // pred_region
        %s131 = smul.u32 6, %s9
        %p132 = scmp.lt.s32.totalorder %s131, 11
        %s133 = scalar_select %p132, %s131, 11
        %s134 = smul.addr %s133, 8
        %s135 = scalar_lea.vmem %s0, %s134
        %s136 = smul.u32 6, %s9
      $region28: #{meshed_decoder_forward.29} parent=23 // pred_fallthru
        _
    $region24: #{meshed_decoder_forward.29} parent=5 // pred_fallthru
      _
    %p137 = scmp.le.s32.totalorder 1, %s9
    %p138 = scmp.lt.s32.totalorder %s9, 3
    %p139 = pnand %p137, %p138
    %p140 = pneg %p139
    // Predicated region
    $region29: #{meshed_decoder_forward.29} parent=5 // pred_check
      _
    $region30: #{meshed_decoder_forward.29} parent=5 // pred_check_branch
      %142 = sbr.rel (%p139) target = $region32
    $region31: #{meshed_decoder_forward.29} parent=5 // pred_region
      %s143 = ssub.s32 %s9, 1
      %s144 = smul.u32 6, %s14
      %p145 = scmp.lt.s32.totalorder %s144, 11
      %s146 = scalar_select %p145, %s144, 11
      %s147 = smul.addr %s146, 8
      %s148 = scalar_lea.vmem %s0, %s147
      %p149 = pneg %p35
      %p150 = pneg %p32
      %p151 = pneg %p56
      %p152 = pneg %p53
      %p153 = pneg %p77
      %p154 = pneg %p74
      %p155 = pneg %p103
      %p156 = pneg %p100
      %s157 = smul.u32 6, %s14
      %p158 = scmp.lt.s32.totalorder %s157, 11
      %s159 = scalar_select %p158, %s157, 11
      %s160 = smul.addr %s159, 8
      %s161 = scalar_lea.vmem %s3, %s160
      %s162 = smul.u32 6, %s14
      %p163 = scmp.lt.s32.totalorder %s162, 11
      %s164 = scalar_select %p163, %s162, 11
      %s165 = smul.addr %s164, 8
      %s166 = scalar_lea.vmem %s0, %s165
      %s167 = smul.u32 6, %s14
      %s168 = smul.u32 6, %s14
      %p169 = scmp.lt.s32.totalorder %s168, 11
      %s170 = scalar_select %p169, %s168, 11
      %s171 = smul.addr %s170, 8
      %s172 = scalar_lea.vmem %s3, %s171
      %s173 = smul.u32 6, %s14
      %v174 = vld [vmem:[%s166] sm:$0xff]
      %v175 = vld [vmem:[%s166 + $0x8] sm:$0xff]
      %v176 = vld [vmem:[%s166 + $0x10] sm:$0xff]
      %v177 = vld [vmem:[%s166 + $0x18] sm:$0xff]
      %v178 = vld [vmem:[%s166 + $0x20] sm:$0xff]
      %v179 = vld [vmem:[%s166 + $0x28] sm:$0xff]
      %v180 = vld [vmem:[%s1] sm:$0xff]
      %v181 = vld [vmem:[%s1 + $0x8] sm:$0xff]
      %v182 = vld [vmem:[%s1 + $0x10] sm:$0xff]
      %v183 = vld [vmem:[%s1 + $0x18] sm:$0xff]
      %v184 = vld [vmem:[%s2] sm:$0x1]
      %v186 = vlaneseq
      %v187 = vshrl.u32 %v186, 7
      %v188 = vsub.s32 0, %v187
      %v189 = vrot.slane %v184, %v188
      %vm191 = vcmask 261120
      %v193 = vsel %vm191, %v174, 0
      %v196 = vsel %vm191, %v175, 0
      %v199 = vsel %vm191, %v176, 0
      %v202 = vsel %vm191, %v177, 0
      %v205 = vsel %vm191, %v178, 0
      %v208 = vsel %vm191, %v179, 0
      %210 = vmatprep.subr.mxu0 0.0
      %211 = vmatpush1.msra.mxu0 %v180
      %212 = vmatprep.subr.mxu0 0.0
      %213 = vmatpush1.msra.mxu0 %v181
      %214 = vmatprep.subr.mxu0 0.0
      %215 = vmatpush1.msra.mxu0 %v182
      %216 = vmatprep.subr.mxu0 0.0
      %217 = vmatpush1.msra.mxu0 %v183
      %218 = vmatprep.subr.mxu0 0.0
      %219 = vmatpush1.msra.mxu0 0.0
      %220 = vmatprep.subr.mxu0 0.0
      %221 = vmatpush1.msra.mxu0 0.0
      %222 = vmatprep.subr.mxu0 0.0
      %223 = vmatpush1.msra.mxu0 0.0
      %224 = vmatprep.subr.mxu0 0.0
      %225 = vmatpush1.msra.mxu0 0.0
      %226 = vmatprep.subr.mxu0 0.0
      %227 = vmatpush1.msra.mxu0 0.0
      %228 = vmatprep.subr.mxu0 0.0
      %229 = vmatpush1.msra.mxu0 0.0
      %230 = vmatprep.subr.mxu0 0.0
      %231 = vmatpush1.msra.mxu0 0.0
      %232 = vmatprep.subr.mxu0 0.0
      %233 = vmatpush1.msra.mxu0 0.0
      %234 = vmatprep.subr.mxu0 0.0
      %235 = vmatpush1.msra.mxu0 0.0
      %236 = vmatprep.subr.mxu0 0.0
      %237 = vmatpush1.msra.mxu0 0.0
      %238 = vmatprep.subr.mxu0 0.0
      %239 = vmatpush1.msra.mxu0 0.0
      %240 = vmatprep.subr.mxu0 0.0
      %241 = vmatpush1.msra.mxu0 0.0
      %242 = vmatprep.subr.mxu0 0.0
      %243 = vmatpush1.msra.mxu0 0.0
      %244 = vmatprep.subr.mxu0 0.0
      %245 = vmatpush1.msra.mxu0 0.0
      %246 = vmatprep.subr.mxu0 0.0
      %247 = vmatpush1.msra.mxu0 0.0
      %248 = vmatprep.subr.mxu0 0.0
      %249 = vmatpush1.msra.mxu0 0.0
      %250 = vmatprep.subr.mxu0 0.0
      %251 = vmatpush1.msra.mxu0 0.0
      %252 = vmatprep.subr.mxu0 0.0
      %253 = vmatpush1.msra.mxu0 0.0
      %254 = vmatprep.subr.mxu0 0.0
      %255 = vmatpush1.msra.mxu0 0.0
      %256 = vmatprep.subr.mxu0 0.0
      %257 = vmatpush1.msra.mxu0 0.0
      %258 = vmatprep.subr.mxu0 0.0
      %259 = vmatpush1.msra.mxu0 0.0
      %260 = vmatprep.subr.mxu0 0.0
      %261 = vmatpush1.msra.mxu0 0.0
      %262 = vmatprep.subr.mxu0 0.0
      %263 = vmatpush1.msra.mxu0 0.0
      %264 = vmatprep.subr.mxu0 0.0
      %265 = vmatpush1.msra.mxu0 0.0
      %266 = vmatprep.subr.mxu0 0.0
      %267 = vmatpush1.msra.mxu0 0.0
      %268 = vmatprep.subr.mxu0 0.0
      %269 = vmatpush1.msra.mxu0 0.0
      %270 = vmatprep.subr.mxu0 0.0
      %271 = vmatpush1.msra.mxu0 0.0
      %272 = vmatprep.subr.mxu0 0.0
      %273 = vmatpush1.msra.mxu0 0.0
      %274 = vmatprep.mubr.f32.mxu0 0.0
      %275 = vmatmul.mubr.f32.gmra.mrb[0].mxu0 %v193
      %v276 = vpop.f32.mrb[0].mxu0
      %v277 = vadd.f32 %v189, %v276
      %v278 = vpop.f32.mrb[0].mxu0
      %279 = vmatprep.mubr.f32.mxu0 0.0
      %280 = vmatmul.mubr.f32.gmra.mrb[0].mxu0 %v196
      %v281 = vpop.f32.mrb[0].mxu0
      %v282 = vadd.f32 %v189, %v281
      %v283 = vpop.f32.mrb[0].mxu0
      %284 = vmatprep.mubr.f32.mxu0 0.0
      %285 = vmatmul.mubr.f32.gmra.mrb[0].mxu0 %v199
      %v286 = vpop.f32.mrb[0].mxu0
      %v287 = vadd.f32 %v189, %v286
      %v288 = vpop.f32.mrb[0].mxu0
      %289 = vmatprep.mubr.f32.mxu0 0.0
      %290 = vmatmul.mubr.f32.gmra.mrb[0].mxu0 %v202
      %v291 = vpop.f32.mrb[0].mxu0
      %v292 = vadd.f32 %v189, %v291
      %v293 = vpop.f32.mrb[0].mxu0
      %294 = vmatprep.mubr.f32.mxu0 0.0
      %295 = vmatmul.mubr.f32.gmra.mrb[0].mxu0 %v205
      %v296 = vpop.f32.mrb[0].mxu0
      %v297 = vadd.f32 %v189, %v296
      %v298 = vpop.f32.mrb[0].mxu0
      %299 = vmatprep.mubr.f32.mxu0 0.0
      %300 = vmatmul.mubr.f32.gmra.mrb[0].mxu0 %v208
      %v301 = vpop.f32.mrb[0].mxu0
      %v302 = vadd.f32 %v189, %v301
      %v303 = vpop.f32.mrb[0].mxu0
      %304 = vdwg.mxu0
      %vm305 = vcmask 523264
      %306 = vst.msk [vmem:[%s172] sm:$0xff] %vm305, %v277
      %307 = vst.msk [vmem:[%s172 + $0x8] sm:$0xff] %vm305, %v282
      %308 = vst.msk [vmem:[%s172 + $0x10] sm:$0xff] %vm305, %v287
      %309 = vst.msk [vmem:[%s172 + $0x18] sm:$0xff] %vm305, %v292
      %310 = vst.msk [vmem:[%s172 + $0x20] sm:$0xff] %vm305, %v297
      %311 = vst.msk [vmem:[%s172 + $0x28] sm:$0xff] %vm305, %v302
      %s312 = smul.u32 6, %s14
      %p313 = scmp.lt.s32.totalorder %s312, 11
      %s314 = scalar_select %p313, %s312, 11
      %s315 = smul.addr %s314, 8
      %s316 = scalar_lea.vmem %s3, %s315
      // Predicated region
      $region33: #{meshed_decoder_forward.29} parent=31 // pred_check
        %p317 = pneg %p100
      $region34: #{meshed_decoder_forward.29} parent=31 // pred_check_branch
        %319 = sbr.rel (%p317) target = $region36
      $region35: #{meshed_decoder_forward.29} parent=31 // pred_region
        %s320 = smul.u32 6, %s14
      $region36: #{meshed_decoder_forward.29} parent=31 // pred_fallthru
        _
    $region32: #{meshed_decoder_forward.29} parent=5 // pred_fallthru
      _
    %p321 = scmp.le.s32.totalorder 2, %s9
    // Predicated region
    $region37: #{meshed_decoder_forward.29} parent=5 // pred_check
      %p322 = pneg %p321
    $region38: #{meshed_decoder_forward.29} parent=5 // pred_check_branch
      %324 = sbr.rel (%p322) target = $region40
    $region39: #{meshed_decoder_forward.29} parent=5 // pred_region
      %s325 = ssub.s32 %s9, 2
      // Predicated region
      $region41: #{meshed_decoder_forward.29} parent=39 // pred_check
        %p326 = pneg %p106
      $region42: #{meshed_decoder_forward.29} parent=39 // pred_check_branch
        %328 = sbr.rel (%p326) target = $region44
      $region43: #{meshed_decoder_forward.29} parent=39 // pred_region
        %s329 = smul.u32 6, %s15
        %p330 = scmp.lt.s32.totalorder %s329, 11
        %s331 = scalar_select %p330, %s329, 11
        %s332 = smul.addr %s331, 8
        %s333 = scalar_lea.vmem %s3, %s332
      $region44: #{meshed_decoder_forward.29} parent=39 // pred_fallthru
        _
    $region40: #{meshed_decoder_forward.29} parent=5 // pred_fallthru
      _
  $region6: #{meshed_decoder_forward.29} parent=0 // loop_footer
    %s13 = sadd.s32 1, %s9
  $region7: #{meshed_decoder_forward.29} parent=0 // loop_footer_branch
    %8 = sbr.rel target = $region3
  $region8: #{meshed_decoder_forward.29} parent=0 // loop_exit
    _

// kernel: meshed_decoder_forward.30
$region0: #{meshed_decoder_forward.30}
  #allocation0 [shape = 'u32[]', space=smem, size = 0x4, offset = 0x4, fixed_abs, tag = 'smem constant byte address 0x4 - core index']
  #allocation1 [shape = 'u32[144,128]{1,0:T(1,128)}', space=vmem, size = 0x12000, scoped, tag = 'internal scratch']
  %s0 = inlined_call_operand.vmem [shape: f32[2,8,32], index: 0, kind: input, shape index: {}]
  %s1 = inlined_call_operand.vmem [shape: f32[6,16,64], index: 1, kind: input, shape index: {}]
  %s2 = inlined_call_operand.vmem [shape: f32[2,1,16], index: 2, kind: input, shape index: {}]
  %s3 = inlined_call_operand.vmem [shape: f32[6,8,32], index: 3, kind: output, shape index: {}]
  %s4 = sld [smem:[#allocation0]]
  $region45: #{meshed_decoder_forward.30} parent=0
    _
  %s6 = ssub.s32 1, %s4
  %s7 = scalar_select 0, %s6, %s4
  loop: start=0, step=1, limit=8
  $region2: #{meshed_decoder_forward.30} parent=0 // loop_pre_header
    _
  $region3: #{meshed_decoder_forward.30} parent=0 // loop_header
    %s9 = sphi 0, %s13
    %p10 = scmp.ge.s32.totalorder %s9, 8
    %s43 = sphi 0, %s45
    %s46 = sphi 0, %s43
    %s47 = sphi 0, %s46
    %s63 = sphi 0, %s47
    %s69 = sphi 0, %s71
    %s72 = sphi 0, %s69
    %s73 = sphi 0, %s72
    %s89 = sphi 0, %s73
    %s119 = sphi 0, %s121
    %s122 = sphi 0, %s119
    %s123 = sphi 0, %s122
    %s139 = sphi 0, %s123
    %s145 = sphi 0, %s147
    %s148 = sphi 0, %s145
    %s149 = sphi 0, %s148
    %s165 = sphi 0, %s149
  $region4: #{meshed_decoder_forward.30} parent=0 // loop_header_branch
    %12 = sbr.rel (%p10) target = $region8
  $region5: #{meshed_decoder_forward.30} parent=0 // loop_body
    %s14 = ssub.s32 %s9, 1
    %s15 = ssub.s32 %s9, 2
    %s16 = sadd.s32 %s9, 1
    %p17 = scmp.lt.s32.totalorder %s9, 0
    %s18 = ssub.s32 0, %s9
    %s19 = scalar_select %p17, %s18, %s9
    %s20 = sand.u32 %s19, 1
    %s21 = ssub.s32 0, %s20
    %s22 = scalar_select %p17, %s21, %s20
    %p23 = scmp.ne.s32.totalorder %s22, 0
    %p24 = scmp.lt.s32.totalorder %s22, 0
    %p25 = pnand %p24, %p23
    %p26 = pneg %p25
    %s27 = sadd.s32 %s22, 2
    %s28 = scalar_select %p26, %s27, %s22
    %p29 = scmp.lt.s32.totalorder %s16, 0
    %s30 = ssub.s32 0, %s16
    %s31 = scalar_select %p29, %s30, %s16
    %s32 = sand.u32 %s31, 1
    %s33 = ssub.s32 0, %s32
    %s34 = scalar_select %p29, %s33, %s32
    %p35 = scmp.ne.s32.totalorder %s34, 0
    %p36 = scmp.lt.s32.totalorder %s34, 0
    %p37 = pnand %p36, %p35
    %p38 = pneg %p37
    %s39 = sadd.s32 %s34, 2
    %s40 = scalar_select %p38, %s39, %s34
    %s41 = ssub.s32 %s28, %s40
    %p42 = scmp.eq.s32.totalorder %s41, 0
    %s44 = sadd.s32 %s43, 1
    %s45 = scalar_select %p42, %s43, %s44
    %p48 = pneg %p42
    %p49 = scmp.eq.s32.totalorder %s9, 5
    %p50 = por %p48, %p49
    %p51 = scmp.ne.s32.totalorder %s43, %s46
    %p52 = scmp.eq.s32.totalorder %s9, 0
    %p53 = por %p51, %p52
    %p54 = scmp.ne.s32.totalorder %s43, %s46
    %p55 = scmp.eq.s32.totalorder %s14, 5
    %p56 = por %p54, %p55
    %p57 = scmp.ne.s32.totalorder %s46, %s47
    %p58 = scmp.eq.s32.totalorder %s14, 0
    %p59 = por %p57, %p58
    %p60 = scmp.ne.s32.totalorder %s46, %s47
    %p61 = scmp.eq.s32.totalorder %s15, 5
    %p62 = por %p60, %p61
    %p64 = scmp.ne.s32.totalorder %s47, %s63
    %p65 = scmp.eq.s32.totalorder %s15, 0
    %p66 = por %p64, %p65
    %s67 = ssub.s32 %s9, %s16
    %p68 = scmp.eq.s32.totalorder %s67, 0
    %s70 = sadd.s32 %s69, 1
    %s71 = scalar_select %p68, %s69, %s70
    %p74 = pneg %p68
    %p75 = scmp.eq.s32.totalorder %s9, 5
    %p76 = por %p74, %p75
    %p77 = scmp.ne.s32.totalorder %s69, %s72
    %p78 = scmp.eq.s32.totalorder %s9, 0
    %p79 = por %p77, %p78
    %p80 = scmp.ne.s32.totalorder %s69, %s72
    %p81 = scmp.eq.s32.totalorder %s14, 5
    %p82 = por %p80, %p81
    %p83 = scmp.ne.s32.totalorder %s72, %s73
    %p84 = scmp.eq.s32.totalorder %s14, 0
    %p85 = por %p83, %p84
    %p86 = scmp.ne.s32.totalorder %s72, %s73
    %p87 = scmp.eq.s32.totalorder %s15, 5
    %p88 = por %p86, %p87
    %p90 = scmp.ne.s32.totalorder %s73, %s89
    %p91 = scmp.eq.s32.totalorder %s15, 0
    %p92 = por %p90, %p91
    %p93 = scmp.lt.s32.totalorder %s9, 0
    %s94 = ssub.s32 0, %s9
    %s95 = scalar_select %p93, %s94, %s9
    %s96 = sand.u32 %s95, 1
    %s97 = ssub.s32 0, %s96
    %s98 = scalar_select %p93, %s97, %s96
    %p99 = scmp.ne.s32.totalorder %s98, 0
    %p100 = scmp.lt.s32.totalorder %s98, 0
    %p101 = pnand %p100, %p99
    %p102 = pneg %p101
    %s103 = sadd.s32 %s98, 2
    %s104 = scalar_select %p102, %s103, %s98
    %p105 = scmp.lt.s32.totalorder %s16, 0
    %s106 = ssub.s32 0, %s16
    %s107 = scalar_select %p105, %s106, %s16
    %s108 = sand.u32 %s107, 1
    %s109 = ssub.s32 0, %s108
    %s110 = scalar_select %p105, %s109, %s108
    %p111 = scmp.ne.s32.totalorder %s110, 0
    %p112 = scmp.lt.s32.totalorder %s110, 0
    %p113 = pnand %p112, %p111
    %p114 = pneg %p113
    %s115 = sadd.s32 %s110, 2
    %s116 = scalar_select %p114, %s115, %s110
    %s117 = ssub.s32 %s104, %s116
    %p118 = scmp.eq.s32.totalorder %s117, 0
    %s120 = sadd.s32 %s119, 1
    %s121 = scalar_select %p118, %s119, %s120
    %p124 = pneg %p118
    %p125 = scmp.eq.s32.totalorder %s9, 5
    %p126 = por %p124, %p125
    %p127 = scmp.ne.s32.totalorder %s119, %s122
    %p128 = scmp.eq.s32.totalorder %s9, 0
    %p129 = por %p127, %p128
    %p130 = scmp.ne.s32.totalorder %s119, %s122
    %p131 = scmp.eq.s32.totalorder %s14, 5
    %p132 = por %p130, %p131
    %p133 = scmp.ne.s32.totalorder %s122, %s123
    %p134 = scmp.eq.s32.totalorder %s14, 0
    %p135 = por %p133, %p134
    %p136 = scmp.ne.s32.totalorder %s122, %s123
    %p137 = scmp.eq.s32.totalorder %s15, 5
    %p138 = por %p136, %p137
    %p140 = scmp.ne.s32.totalorder %s123, %s139
    %p141 = scmp.eq.s32.totalorder %s15, 0
    %p142 = por %p140, %p141
    %s143 = ssub.s32 %s9, %s16
    %p144 = scmp.eq.s32.totalorder %s143, 0
    %s146 = sadd.s32 %s145, 1
    %s147 = scalar_select %p144, %s145, %s146
    %p150 = pneg %p144
    %p151 = scmp.eq.s32.totalorder %s9, 5
    %p152 = por %p150, %p151
    %p153 = scmp.ne.s32.totalorder %s145, %s148
    %p154 = scmp.eq.s32.totalorder %s9, 0
    %p155 = por %p153, %p154
    %p156 = scmp.ne.s32.totalorder %s145, %s148
    %p157 = scmp.eq.s32.totalorder %s14, 5
    %p158 = por %p156, %p157
    %p159 = scmp.ne.s32.totalorder %s148, %s149
    %p160 = scmp.eq.s32.totalorder %s14, 0
    %p161 = por %p159, %p160
    %p162 = scmp.ne.s32.totalorder %s148, %s149
    %p163 = scmp.eq.s32.totalorder %s15, 5
    %p164 = por %p162, %p163
    %p166 = scmp.ne.s32.totalorder %s149, %s165
    %p167 = scmp.eq.s32.totalorder %s15, 0
    %p168 = por %p166, %p167
    %p169 = scmp.le.s32.totalorder 1, %s9
    %p170 = scmp.lt.s32.totalorder %s9, 7
    %p171 = pnand %p169, %p170
    %p172 = pneg %p171
    // Predicated region
    $region9: #{meshed_decoder_forward.30} parent=5 // pred_check
      _
    $region10: #{meshed_decoder_forward.30} parent=5 // pred_check_branch
      %174 = sbr.rel (%p171) target = $region12
    $region11: #{meshed_decoder_forward.30} parent=5 // pred_region
      %s175 = ssub.s32 %s9, 1
    $region12: #{meshed_decoder_forward.30} parent=5 // pred_fallthru
      _
    %p176 = scmp.lt.s32.totalorder %s9, 6
    // Predicated region
    $region13: #{meshed_decoder_forward.30} parent=5 // pred_check
      %p177 = pneg %p176
    $region14: #{meshed_decoder_forward.30} parent=5 // pred_check_branch
      %179 = sbr.rel (%p177) target = $region16
    $region15: #{meshed_decoder_forward.30} parent=5 // pred_region
      // Predicated region
      $region17: #{meshed_decoder_forward.30} parent=15 // pred_check
        %p180 = pneg %p53
      $region18: #{meshed_decoder_forward.30} parent=15 // pred_check_branch
        %182 = sbr.rel (%p180) target = $region20
      $region19: #{meshed_decoder_forward.30} parent=15 // pred_region
        %p183 = scmp.lt.s32.totalorder %s9, 0
        %s184 = ssub.s32 0, %s9
        %s185 = scalar_select %p183, %s184, %s9
        %s186 = sand.u32 %s185, 1
        %s187 = ssub.s32 0, %s186
        %s188 = scalar_select %p183, %s187, %s186
        %p189 = scmp.ne.s32.totalorder %s188, 0
        %p190 = scmp.lt.s32.totalorder %s188, 0
        %p191 = pnand %p190, %p189
        %p192 = pneg %p191
        %s193 = sadd.s32 %s188, 2
        %s194 = scalar_select %p192, %s193, %s188
        %p195 = scmp.lt.s32.totalorder %s194, 1
        %s196 = scalar_select %p195, %s194, 1
        %s197 = smul.addr %s196, 8
        %s198 = scalar_lea.vmem %s0, %s197
        %p199 = scmp.lt.s32.totalorder %s9, 0
        %s200 = ssub.s32 0, %s9
        %s201 = scalar_select %p199, %s200, %s9
        %s202 = sand.u32 %s201, 1
        %s203 = ssub.s32 0, %s202
        %s204 = scalar_select %p199, %s203, %s202
        %p205 = scmp.ne.s32.totalorder %s204, 0
        %p206 = scmp.lt.s32.totalorder %s204, 0
        %p207 = pnand %p206, %p205
        %p208 = pneg %p207
        %s209 = sadd.s32 %s204, 2
        %s210 = scalar_select %p208, %s209, %s204
      $region20: #{meshed_decoder_forward.30} parent=15 // pred_fallthru
        _
      // Predicated region
      $region21: #{meshed_decoder_forward.30} parent=15 // pred_check
        %p211 = pneg %p79
      $region22: #{meshed_decoder_forward.30} parent=15 // pred_check_branch
        %213 = sbr.rel (%p211) target = $region24
      $region23: #{meshed_decoder_forward.30} parent=15 // pred_region
        %p214 = scmp.lt.s32.totalorder %s9, 5
        %s215 = scalar_select %p214, %s9, 5
        %s216 = smul.addr %s215, 2
        %s217 = smul.addr %s216, 8
        %s218 = scalar_lea.vmem %s1, %s217
      $region24: #{meshed_decoder_forward.30} parent=15 // pred_fallthru
        _
      // Predicated region
      $region25: #{meshed_decoder_forward.30} parent=15 // pred_check
        %p219 = pneg %p129
      $region26: #{meshed_decoder_forward.30} parent=15 // pred_check_branch
        %221 = sbr.rel (%p219) target = $region28
      $region27: #{meshed_decoder_forward.30} parent=15 // pred_region
        %p222 = scmp.lt.s32.totalorder %s9, 0
        %s223 = ssub.s32 0, %s9
        %s224 = scalar_select %p222, %s223, %s9
        %s225 = sand.u32 %s224, 1
        %s226 = ssub.s32 0, %s225
        %s227 = scalar_select %p222, %s226, %s225
        %p228 = scmp.ne.s32.totalorder %s227, 0
        %p229 = scmp.lt.s32.totalorder %s227, 0
        %p230 = pnand %p229, %p228
        %p231 = pneg %p230
        %s232 = sadd.s32 %s227, 2
        %s233 = scalar_select %p231, %s232, %s227
        %p234 = scmp.lt.s32.totalorder %s233, 1
        %s235 = scalar_select %p234, %s233, 1
        %s236 = scalar_lea.vmem %s2, %s235
        %p237 = scmp.lt.s32.totalorder %s9, 0
        %s238 = ssub.s32 0, %s9
        %s239 = scalar_select %p237, %s238, %s9
        %s240 = sand.u32 %s239, 1
        %s241 = ssub.s32 0, %s240
        %s242 = scalar_select %p237, %s241, %s240
        %p243 = scmp.ne.s32.totalorder %s242, 0
        %p244 = scmp.lt.s32.totalorder %s242, 0
        %p245 = pnand %p244, %p243
        %p246 = pneg %p245
        %s247 = sadd.s32 %s242, 2
        %s248 = scalar_select %p246, %s247, %s242
      $region28: #{meshed_decoder_forward.30} parent=15 // pred_fallthru
        _
    $region16: #{meshed_decoder_forward.30} parent=5 // pred_fallthru
      _
    %p249 = scmp.le.s32.totalorder 1, %s9
    %p250 = scmp.lt.s32.totalorder %s9, 7
    %p251 = pnand %p249, %p250
    %p252 = pneg %p251
    // Predicated region
    $region29: #{meshed_decoder_forward.30} parent=5 // pred_check
      _
    $region30: #{meshed_decoder_forward.30} parent=5 // pred_check_branch
      %254 = sbr.rel (%p251) target = $region32
    $region31: #{meshed_decoder_forward.30} parent=5 // pred_region
      %s255 = ssub.s32 %s9, 1
      %p256 = scmp.lt.s32.totalorder %s14, 0
      %s257 = ssub.s32 0, %s14
      %s258 = scalar_select %p256, %s257, %s14
      %s259 = sand.u32 %s258, 1
      %s260 = ssub.s32 0, %s259
      %s261 = scalar_select %p256, %s260, %s259
      %p262 = scmp.ne.s32.totalorder %s261, 0
      %p263 = scmp.lt.s32.totalorder %s261, 0
      %p264 = pnand %p263, %p262
      %p265 = pneg %p264
      %s266 = sadd.s32 %s261, 2
      %s267 = scalar_select %p265, %s266, %s261
      %p268 = scmp.lt.s32.totalorder %s267, 1
      %s269 = scalar_select %p268, %s267, 1
      %s270 = smul.addr %s269, 8
      %s271 = scalar_lea.vmem %s0, %s270
      %p272 = pneg %p59
      %p273 = pneg %p56
      %p274 = scmp.lt.s32.totalorder %s14, 5
      %s275 = scalar_select %p274, %s14, 5
      %s276 = smul.addr %s275, 2
      %s277 = smul.addr %s276, 8
      %s278 = scalar_lea.vmem %s1, %s277
      %p279 = pneg %p85
      %p280 = pneg %p82
      %p281 = scmp.lt.s32.totalorder %s14, 0
      %s282 = ssub.s32 0, %s14
      %s283 = scalar_select %p281, %s282, %s14
      %s284 = sand.u32 %s283, 1
      %s285 = ssub.s32 0, %s284
      %s286 = scalar_select %p281, %s285, %s284
      %p287 = scmp.ne.s32.totalorder %s286, 0
      %p288 = scmp.lt.s32.totalorder %s286, 0
      %p289 = pnand %p288, %p287
      %p290 = pneg %p289
      %s291 = sadd.s32 %s286, 2
      %s292 = scalar_select %p290, %s291, %s286
      %p293 = scmp.lt.s32.totalorder %s292, 1
      %s294 = scalar_select %p293, %s292, 1
      %s295 = scalar_lea.vmem %s2, %s294
      %p296 = pneg %p135
      %p297 = pneg %p132
      %p298 = pneg %p161
      %p299 = pneg %p158
      %p300 = scmp.lt.s32.totalorder %s14, 5
      %s301 = scalar_select %p300, %s14, 5
      %s302 = smul.addr %s301, 8
      %s303 = scalar_lea.vmem %s3, %s302
      %p304 = scmp.lt.s32.totalorder %s14, 0
      %s305 = ssub.s32 0, %s14
      %s306 = scalar_select %p304, %s305, %s14
      %s307 = sand.u32 %s306, 1
      %s308 = ssub.s32 0, %s307
      %s309 = scalar_select %p304, %s308, %s307
      %p310 = scmp.ne.s32.totalorder %s309, 0
      %p311 = scmp.lt.s32.totalorder %s309, 0
      %p312 = pnand %p311, %p310
      %p313 = pneg %p312
      %s314 = sadd.s32 %s309, 2
      %s315 = scalar_select %p313, %s314, %s309
      %p316 = scmp.lt.s32.totalorder %s315, 1
      %s317 = scalar_select %p316, %s315, 1
      %s318 = smul.addr %s317, 8
      %s319 = scalar_lea.vmem %s0, %s318
      %p320 = scmp.lt.s32.totalorder %s14, 0
      %s321 = ssub.s32 0, %s14
      %s322 = scalar_select %p320, %s321, %s14
      %s323 = sand.u32 %s322, 1
      %s324 = ssub.s32 0, %s323
      %s325 = scalar_select %p320, %s324, %s323
      %p326 = scmp.ne.s32.totalorder %s325, 0
      %p327 = scmp.lt.s32.totalorder %s325, 0
      %p328 = pnand %p327, %p326
      %p329 = pneg %p328
      %s330 = sadd.s32 %s325, 2
      %s331 = scalar_select %p329, %s330, %s325
      %p332 = scmp.lt.s32.totalorder %s14, 5
      %s333 = scalar_select %p332, %s14, 5
      %s334 = smul.addr %s333, 2
      %s335 = smul.addr %s334, 8
      %s336 = scalar_lea.vmem %s1, %s335
      %p337 = scmp.lt.s32.totalorder %s14, 0
      %s338 = ssub.s32 0, %s14
      %s339 = scalar_select %p337, %s338, %s14
      %s340 = sand.u32 %s339, 1
      %s341 = ssub.s32 0, %s340
      %s342 = scalar_select %p337, %s341, %s340
      %p343 = scmp.ne.s32.totalorder %s342, 0
      %p344 = scmp.lt.s32.totalorder %s342, 0
      %p345 = pnand %p344, %p343
      %p346 = pneg %p345
      %s347 = sadd.s32 %s342, 2
      %s348 = scalar_select %p346, %s347, %s342
      %p349 = scmp.lt.s32.totalorder %s348, 1
      %s350 = scalar_select %p349, %s348, 1
      %s351 = scalar_lea.vmem %s2, %s350
      %p352 = scmp.lt.s32.totalorder %s14, 0
      %s353 = ssub.s32 0, %s14
      %s354 = scalar_select %p352, %s353, %s14
      %s355 = sand.u32 %s354, 1
      %s356 = ssub.s32 0, %s355
      %s357 = scalar_select %p352, %s356, %s355
      %p358 = scmp.ne.s32.totalorder %s357, 0
      %p359 = scmp.lt.s32.totalorder %s357, 0
      %p360 = pnand %p359, %p358
      %p361 = pneg %p360
      %s362 = sadd.s32 %s357, 2
      %s363 = scalar_select %p361, %s362, %s357
      %p364 = scmp.lt.s32.totalorder %s14, 5
      %s365 = scalar_select %p364, %s14, 5
      %s366 = smul.addr %s365, 8
      %s367 = scalar_lea.vmem %s3, %s366
      %v368 = vld [vmem:[%s319] sm:$0xff]
      %370 = vrot.lane.b32.xlu0 %v368, 120
      %v371 = vpop.permute.xlu0 %370
      %372 = vrot.lane.b32.xlu0 %v368, 112
      %v373 = vpop.permute.xlu0 %372
      %374 = vrot.lane.b32.xlu0 %v368, 104
      %v375 = vpop.permute.xlu0 %374
      %v376 = vld [vmem:[%s336] sm:$0xff]
      %v377 = vld [vmem:[%s336 + $0x8] sm:$0xff]
      %380 = vrot.lane.b32.xlu0 %v376, 120
      %v381 = vpop.permute.xlu0 %380
      %382 = vrot.lane.b32.xlu0 %v377, 120
      %v383 = vpop.permute.xlu0 %382
      %384 = vrot.lane.b32.xlu0 %v376, 112
      %v385 = vpop.permute.xlu0 %384
      %386 = vrot.lane.b32.xlu0 %v377, 112
      %v387 = vpop.permute.xlu0 %386
      %388 = vrot.lane.b32.xlu0 %v376, 104
      %v389 = vpop.permute.xlu0 %388
      %390 = vrot.lane.b32.xlu0 %v377, 104
      %v391 = vpop.permute.xlu0 %390
      %v392 = vld [vmem:[%s351] sm:$0x1]
      %vm393 = vcmask 64512
      %v394 = vsel %vm393, %v368, 0
      %v396 = vsel %vm393, %v376, 0
      %v398 = vsel %vm393, %v377, 0
      %400 = vmatprep.subr.mxu0 0.0
      %401 = vmatpush1.xpose.msra.mxu0 %v396
      %402 = vmatprep.subr.mxu0 0.0
      %403 = vmatpush1.xpose.msra.mxu0 %v398
      %404 = vmatprep.subr.mxu0 0.0
      %405 = vmatpush1.xpose.msra.mxu0 0.0
      %406 = vmatprep.subr.mxu0 0.0
      %407 = vmatpush1.xpose.msra.mxu0 0.0
      %408 = vmatprep.subr.mxu0 0.0
      %409 = vmatpush1.xpose.msra.mxu0 0.0
      %410 = vmatprep.subr.mxu0 0.0
      %411 = vmatpush1.xpose.msra.mxu0 0.0
      %412 = vmatprep.subr.mxu0 0.0
      %413 = vmatpush1.xpose.msra.mxu0 0.0
      %414 = vmatprep.subr.mxu0 0.0
      %415 = vmatpush1.xpose.msra.mxu0 0.0
      %416 = vmatprep.subr.mxu0 0.0
      %417 = vmatpush1.xpose.msra.mxu0 0.0
      %418 = vmatprep.subr.mxu0 0.0
      %419 = vmatpush1.xpose.msra.mxu0 0.0
      %420 = vmatprep.subr.mxu0 0.0
      %421 = vmatpush1.xpose.msra.mxu0 0.0
      %422 = vmatprep.subr.mxu0 0.0
      %423 = vmatpush1.xpose.msra.mxu0 0.0
      %424 = vmatprep.subr.mxu0 0.0
      %425 = vmatpush1.xpose.msra.mxu0 0.0
      %426 = vmatprep.subr.mxu0 0.0
      %427 = vmatpush1.xpose.msra.mxu0 0.0
      %428 = vmatprep.subr.mxu0 0.0
      %429 = vmatpush1.xpose.msra.mxu0 0.0
      %430 = vmatprep.subr.mxu0 0.0
      %431 = vmatpush1.xpose.msra.mxu0 0.0
      %432 = vmatprep.subr.mxu0 0.0
      %433 = vmatpush1.xpose.msra.mxu0 0.0
      %434 = vmatprep.subr.mxu0 0.0
      %435 = vmatpush1.xpose.msra.mxu0 0.0
      %436 = vmatprep.subr.mxu0 0.0
      %437 = vmatpush1.xpose.msra.mxu0 0.0
      %438 = vmatprep.subr.mxu0 0.0
      %439 = vmatpush1.xpose.msra.mxu0 0.0
      %440 = vmatprep.subr.mxu0 0.0
      %441 = vmatpush1.xpose.msra.mxu0 0.0
      %442 = vmatprep.subr.mxu0 0.0
      %443 = vmatpush1.xpose.msra.mxu0 0.0
      %444 = vmatprep.subr.mxu0 0.0
      %445 = vmatpush1.xpose.msra.mxu0 0.0
      %446 = vmatprep.subr.mxu0 0.0
      %447 = vmatpush1.xpose.msra.mxu0 0.0
      %448 = vmatprep.subr.mxu0 0.0
      %449 = vmatpush1.xpose.msra.mxu0 0.0
      %450 = vmatprep.subr.mxu0 0.0
      %451 = vmatpush1.xpose.msra.mxu0 0.0
      %452 = vmatprep.subr.mxu0 0.0
      %453 = vmatpush1.xpose.msra.mxu0 0.0
      %454 = vmatprep.subr.mxu0 0.0
      %455 = vmatpush1.xpose.msra.mxu0 0.0
      %456 = vmatprep.subr.mxu0 0.0
      %457 = vmatpush1.xpose.msra.mxu0 0.0
      %458 = vmatprep.subr.mxu0 0.0
      %459 = vmatpush1.xpose.msra.mxu0 0.0
      %460 = vmatprep.subr.mxu0 0.0
      %461 = vmatpush1.xpose.msra.mxu0 0.0
      %462 = vmatprep.subr.mxu0 0.0
      %463 = vmatpush1.xpose.msra.mxu0 0.0
      %464 = vmatprep.mubr.f32.mxu0 0.0
      %465 = vmatmul.mubr.f32.gmra.mrb[0].mxu0 %v394
      %v466 = vpop.f32.mrb[0].mxu0
      %v467 = vadd.f32 0.0, %v466
      %v468 = vpop.f32.mrb[0].mxu0
      %469 = vdwg.mxu0
      %v470 = vsel %vm393, %v371, 0
      %v472 = vsel %vm393, %v381, 0
      %v474 = vsel %vm393, %v383, 0
      %476 = vmatprep.subr.mxu0 0.0
      %477 = vmatpush1.xpose.msra.mxu0 %v472
      %478 = vmatprep.subr.mxu0 0.0
      %479 = vmatpush1.xpose.msra.mxu0 %v474
      %480 = vmatprep.subr.mxu0 0.0
      %481 = vmatpush1.xpose.msra.mxu0 0.0
      %482 = vmatprep.subr.mxu0 0.0
      %483 = vmatpush1.xpose.msra.mxu0 0.0
      %484 = vmatprep.subr.mxu0 0.0
      %485 = vmatpush1.xpose.msra.mxu0 0.0
      %486 = vmatprep.subr.mxu0 0.0
      %487 = vmatpush1.xpose.msra.mxu0 0.0
      %488 = vmatprep.subr.mxu0 0.0
      %489 = vmatpush1.xpose.msra.mxu0 0.0
      %490 = vmatprep.subr.mxu0 0.0
      %491 = vmatpush1.xpose.msra.mxu0 0.0
      %492 = vmatprep.subr.mxu0 0.0
      %493 = vmatpush1.xpose.msra.mxu0 0.0
      %494 = vmatprep.subr.mxu0 0.0
      %495 = vmatpush1.xpose.msra.mxu0 0.0
      %496 = vmatprep.subr.mxu0 0.0
      %497 = vmatpush1.xpose.msra.mxu0 0.0
      %498 = vmatprep.subr.mxu0 0.0
      %499 = vmatpush1.xpose.msra.mxu0 0.0
      %500 = vmatprep.subr.mxu0 0.0
      %501 = vmatpush1.xpose.msra.mxu0 0.0
      %502 = vmatprep.subr.mxu0 0.0
      %503 = vmatpush1.xpose.msra.mxu0 0.0
      %504 = vmatprep.subr.mxu0 0.0
      %505 = vmatpush1.xpose.msra.mxu0 0.0
      %506 = vmatprep.subr.mxu0 0.0
      %507 = vmatpush1.xpose.msra.mxu0 0.0
      %508 = vmatprep.subr.mxu0 0.0
      %509 = vmatpush1.xpose.msra.mxu0 0.0
      %510 = vmatprep.subr.mxu0 0.0
      %511 = vmatpush1.xpose.msra.mxu0 0.0
      %512 = vmatprep.subr.mxu0 0.0
      %513 = vmatpush1.xpose.msra.mxu0 0.0
      %514 = vmatprep.subr.mxu0 0.0
      %515 = vmatpush1.xpose.msra.mxu0 0.0
      %516 = vmatprep.subr.mxu0 0.0
      %517 = vmatpush1.xpose.msra.mxu0 0.0
      %518 = vmatprep.subr.mxu0 0.0
      %519 = vmatpush1.xpose.msra.mxu0 0.0
      %520 = vmatprep.subr.mxu0 0.0
      %521 = vmatpush1.xpose.msra.mxu0 0.0
      %522 = vmatprep.subr.mxu0 0.0
      %523 = vmatpush1.xpose.msra.mxu0 0.0
      %524 = vmatprep.subr.mxu0 0.0
      %525 = vmatpush1.xpose.msra.mxu0 0.0
      %526 = vmatprep.subr.mxu0 0.0
      %527 = vmatpush1.xpose.msra.mxu0 0.0
      %528 = vmatprep.subr.mxu0 0.0
      %529 = vmatpush1.xpose.msra.mxu0 0.0
      %530 = vmatprep.subr.mxu0 0.0
      %531 = vmatpush1.xpose.msra.mxu0 0.0
      %532 = vmatprep.subr.mxu0 0.0
      %533 = vmatpush1.xpose.msra.mxu0 0.0
      %534 = vmatprep.subr.mxu0 0.0
      %535 = vmatpush1.xpose.msra.mxu0 0.0
      %536 = vmatprep.subr.mxu0 0.0
      %537 = vmatpush1.xpose.msra.mxu0 0.0
      %538 = vmatprep.subr.mxu0 0.0
      %539 = vmatpush1.xpose.msra.mxu0 0.0
      %540 = vmatprep.mubr.f32.mxu0 0.0
      %541 = vmatmul.mubr.f32.gmra.mrb[0].mxu0 %v470
      %v542 = vpop.f32.mrb[0].mxu0
      %v543 = vadd.f32 0.0, %v542
      %v544 = vpop.f32.mrb[0].mxu0
      %545 = vdwg.mxu0
      %v546 = vsel %vm393, %v373, 0
      %v548 = vsel %vm393, %v385, 0
      %v550 = vsel %vm393, %v387, 0
      %552 = vmatprep.subr.mxu0 0.0
      %553 = vmatpush1.xpose.msra.mxu0 %v548
      %554 = vmatprep.subr.mxu0 0.0
      %555 = vmatpush1.xpose.msra.mxu0 %v550
      %556 = vmatprep.subr.mxu0 0.0
      %557 = vmatpush1.xpose.msra.mxu0 0.0
      %558 = vmatprep.subr.mxu0 0.0
      %559 = vmatpush1.xpose.msra.mxu0 0.0
      %560 = vmatprep.subr.mxu0 0.0
      %561 = vmatpush1.xpose.msra.mxu0 0.0
      %562 = vmatprep.subr.mxu0 0.0
      %563 = vmatpush1.xpose.msra.mxu0 0.0
      %564 = vmatprep.subr.mxu0 0.0
      %565 = vmatpush1.xpose.msra.mxu0 0.0
      %566 = vmatprep.subr.mxu0 0.0
      %567 = vmatpush1.xpose.msra.mxu0 0.0
      %568 = vmatprep.subr.mxu0 0.0
      %569 = vmatpush1.xpose.msra.mxu0 0.0
      %570 = vmatprep.subr.mxu0 0.0
      %571 = vmatpush1.xpose.msra.mxu0 0.0
      %572 = vmatprep.subr.mxu0 0.0
      %573 = vmatpush1.xpose.msra.mxu0 0.0
      %574 = vmatprep.subr.mxu0 0.0
      %575 = vmatpush1.xpose.msra.mxu0 0.0
      %576 = vmatprep.subr.mxu0 0.0
      %577 = vmatpush1.xpose.msra.mxu0 0.0
      %578 = vmatprep.subr.mxu0 0.0
      %579 = vmatpush1.xpose.msra.mxu0 0.0
      %580 = vmatprep.subr.mxu0 0.0
      %581 = vmatpush1.xpose.msra.mxu0 0.0
      %582 = vmatprep.subr.mxu0 0.0
      %583 = vmatpush1.xpose.msra.mxu0 0.0
      %584 = vmatprep.subr.mxu0 0.0
      %585 = vmatpush1.xpose.msra.mxu0 0.0
      %586 = vmatprep.subr.mxu0 0.0
      %587 = vmatpush1.xpose.msra.mxu0 0.0
      %588 = vmatprep.subr.mxu0 0.0
      %589 = vmatpush1.xpose.msra.mxu0 0.0
      %590 = vmatprep.subr.mxu0 0.0
      %591 = vmatpush1.xpose.msra.mxu0 0.0
      %592 = vmatprep.subr.mxu0 0.0
      %593 = vmatpush1.xpose.msra.mxu0 0.0
      %594 = vmatprep.subr.mxu0 0.0
      %595 = vmatpush1.xpose.msra.mxu0 0.0
      %596 = vmatprep.subr.mxu0 0.0
      %597 = vmatpush1.xpose.msra.mxu0 0.0
      %598 = vmatprep.subr.mxu0 0.0
      %599 = vmatpush1.xpose.msra.mxu0 0.0
      %600 = vmatprep.subr.mxu0 0.0
      %601 = vmatpush1.xpose.msra.mxu0 0.0
      %602 = vmatprep.subr.mxu0 0.0
      %603 = vmatpush1.xpose.msra.mxu0 0.0
      %604 = vmatprep.subr.mxu0 0.0
      %605 = vmatpush1.xpose.msra.mxu0 0.0
      %606 = vmatprep.subr.mxu0 0.0
      %607 = vmatpush1.xpose.msra.mxu0 0.0
      %608 = vmatprep.subr.mxu0 0.0
      %609 = vmatpush1.xpose.msra.mxu0 0.0
      %610 = vmatprep.subr.mxu0 0.0
      %611 = vmatpush1.xpose.msra.mxu0 0.0
      %612 = vmatprep.subr.mxu0 0.0
      %613 = vmatpush1.xpose.msra.mxu0 0.0
      %614 = vmatprep.subr.mxu0 0.0
      %615 = vmatpush1.xpose.msra.mxu0 0.0
      %616 = vmatprep.mubr.f32.mxu0 0.0
      %617 = vmatmul.mubr.f32.gmra.mrb[0].mxu0 %v546
      %v618 = vpop.f32.mrb[0].mxu0
      %v619 = vadd.f32 0.0, %v618
      %v620 = vpop.f32.mrb[0].mxu0
      %621 = vdwg.mxu0
      %v622 = vsel %vm393, %v375, 0
      %v624 = vsel %vm393, %v389, 0
      %v626 = vsel %vm393, %v391, 0
      %628 = vmatprep.subr.mxu0 0.0
      %629 = vmatpush1.xpose.msra.mxu0 %v624
      %630 = vmatprep.subr.mxu0 0.0
      %631 = vmatpush1.xpose.msra.mxu0 %v626
      %632 = vmatprep.subr.mxu0 0.0
      %633 = vmatpush1.xpose.msra.mxu0 0.0
      %634 = vmatprep.subr.mxu0 0.0
      %635 = vmatpush1.xpose.msra.mxu0 0.0
      %636 = vmatprep.subr.mxu0 0.0
      %637 = vmatpush1.xpose.msra.mxu0 0.0
      %638 = vmatprep.subr.mxu0 0.0
      %639 = vmatpush1.xpose.msra.mxu0 0.0
      %640 = vmatprep.subr.mxu0 0.0
      %641 = vmatpush1.xpose.msra.mxu0 0.0
      %642 = vmatprep.subr.mxu0 0.0
      %643 = vmatpush1.xpose.msra.mxu0 0.0
      %644 = vmatprep.subr.mxu0 0.0
      %645 = vmatpush1.xpose.msra.mxu0 0.0
      %646 = vmatprep.subr.mxu0 0.0
      %647 = vmatpush1.xpose.msra.mxu0 0.0
      %648 = vmatprep.subr.mxu0 0.0
      %649 = vmatpush1.xpose.msra.mxu0 0.0
      %650 = vmatprep.subr.mxu0 0.0
      %651 = vmatpush1.xpose.msra.mxu0 0.0
      %652 = vmatprep.subr.mxu0 0.0
      %653 = vmatpush1.xpose.msra.mxu0 0.0
      %654 = vmatprep.subr.mxu0 0.0
      %655 = vmatpush1.xpose.msra.mxu0 0.0
      %656 = vmatprep.subr.mxu0 0.0
      %657 = vmatpush1.xpose.msra.mxu0 0.0
      %658 = vmatprep.subr.mxu0 0.0
      %659 = vmatpush1.xpose.msra.mxu0 0.0
      %660 = vmatprep.subr.mxu0 0.0
      %661 = vmatpush1.xpose.msra.mxu0 0.0
      %662 = vmatprep.subr.mxu0 0.0
      %663 = vmatpush1.xpose.msra.mxu0 0.0
      %664 = vmatprep.subr.mxu0 0.0
      %665 = vmatpush1.xpose.msra.mxu0 0.0
      %666 = vmatprep.subr.mxu0 0.0
      %667 = vmatpush1.xpose.msra.mxu0 0.0
      %668 = vmatprep.subr.mxu0 0.0
      %669 = vmatpush1.xpose.msra.mxu0 0.0
      %670 = vmatprep.subr.mxu0 0.0
      %671 = vmatpush1.xpose.msra.mxu0 0.0
      %672 = vmatprep.subr.mxu0 0.0
      %673 = vmatpush1.xpose.msra.mxu0 0.0
      %674 = vmatprep.subr.mxu0 0.0
      %675 = vmatpush1.xpose.msra.mxu0 0.0
      %676 = vmatprep.subr.mxu0 0.0
      %677 = vmatpush1.xpose.msra.mxu0 0.0
      %678 = vmatprep.subr.mxu0 0.0
      %679 = vmatpush1.xpose.msra.mxu0 0.0
      %680 = vmatprep.subr.mxu0 0.0
      %681 = vmatpush1.xpose.msra.mxu0 0.0
      %682 = vmatprep.subr.mxu0 0.0
      %683 = vmatpush1.xpose.msra.mxu0 0.0
      %684 = vmatprep.subr.mxu0 0.0
      %685 = vmatpush1.xpose.msra.mxu0 0.0
      %686 = vmatprep.subr.mxu0 0.0
      %687 = vmatpush1.xpose.msra.mxu0 0.0
      %688 = vmatprep.subr.mxu0 0.0
      %689 = vmatpush1.xpose.msra.mxu0 0.0
      %690 = vmatprep.subr.mxu0 0.0
      %691 = vmatpush1.xpose.msra.mxu0 0.0
      %692 = vmatprep.mubr.f32.mxu0 0.0
      %693 = vmatmul.mubr.f32.gmra.mrb[0].mxu0 %v622
      %v694 = vpop.f32.mrb[0].mxu0
      %v695 = vadd.f32 0.0, %v694
      %v696 = vpop.f32.mrb[0].mxu0
      %697 = vdwg.mxu0
      %v698 = vmul.f32 %v467, 0.35355338
      %v699 = vmul.f32 %v543, 0.35355338
      %v700 = vmul.f32 %v619, 0.35355338
      %v701 = vmul.f32 %v695, 0.35355338
      %v703 = vlaneseq
      %v704 = vshrl.u32 %v703, 7
      %v705 = vsub.s32 0, %v704
      %v706 = vrot.slane %v392, %v705
      %v708 = vadd.f32 %v698, %v706
      %v709 = vadd.f32 %v699, %v706
      %v710 = vadd.f32 %v700, %v706
      %v711 = vadd.f32 %v701, %v706
      %vm712 = vcmask 130048
      %v713 = vsel %vm712, %v708, -inf
      %714 = vmax.xlane.f32.xlu0 %v713
      %v715 = vpop.xlane.xlu0 %714
      %v716 = vsel %vm712, %v709, -inf
      %717 = vmax.xlane.f32.xlu0 %v716
      %v718 = vpop.xlane.xlu0 %717
      %v719 = vsel %vm712, %v710, -inf
      %720 = vmax.xlane.f32.xlu0 %v719
      %v721 = vpop.xlane.xlu0 %720
      %v722 = vsel %vm712, %v711, -inf
      %723 = vmax.xlane.f32.xlu0 %v722
      %v724 = vpop.xlane.xlu0 %723
      %v725 = vsub.f32 %v708, %v715
      %v726 = vsub.f32 %v709, %v718
      %v727 = vsub.f32 %v710, %v721
      %v728 = vsub.f32 %v711, %v724
      %v729 = vmul.f32 %v725, 1.442695
      %v730 = vpow.pop %v729
      %v731 = vmul.f32 %v726, 1.442695
      %v732 = vpow.pop %v731
      %v733 = vmul.f32 %v727, 1.442695
      %v734 = vpow.pop %v733
      %v735 = vmul.f32 %v728, 1.442695
      %v736 = vpow.pop %v735
      %v737 = vsel %vm712, %v730, 0.0
      %738 = vadd.xlane.f32.xlu0 %v737
      %v739 = vpop.xlane.xlu0 %738
      %v740 = vsel %vm712, %v732, 0.0
      %741 = vadd.xlane.f32.xlu0 %v740
      %v742 = vpop.xlane.xlu0 %741
      %v743 = vsel %vm712, %v734, 0.0
      %744 = vadd.xlane.f32.xlu0 %v743
      %v745 = vpop.xlane.xlu0 %744
      %v746 = vsel %vm712, %v736, 0.0
      %747 = vadd.xlane.f32.xlu0 %v746
      %v748 = vpop.xlane.xlu0 %747
      %v749 = vrcp.pop %v739
      %v750 = vrcp.pop %v742
      %v751 = vrcp.pop %v745
      %v752 = vrcp.pop %v748
      %v753 = vmul.f32 %v730, %v749
      %v754 = vmul.f32 %v732, %v750
      %v755 = vmul.f32 %v734, %v751
      %v756 = vmul.f32 %v736, %v752
      %757 = vrot.lane.b32.xlu0 %v376, 96
      %v758 = vpop.permute.xlu0 %757
      %759 = vrot.lane.b32.xlu0 %v377, 96
      %v760 = vpop.permute.xlu0 %759
      %v764 = vsel %vm712, %v753, 0
      %766 = vmatprep.subr.mxu0 0.0
      %767 = vmatpush1.msra.mxu0 %v758
      %768 = vmatprep.subr.mxu0 0.0
      %769 = vmatpush1.msra.mxu0 %v760
      %770 = vmatprep.subr.mxu0 0.0
      %771 = vmatpush1.msra.mxu0 0.0
      %772 = vmatprep.subr.mxu0 0.0
      %773 = vmatpush1.msra.mxu0 0.0
      %774 = vmatprep.subr.mxu0 0.0
      %775 = vmatpush1.msra.mxu0 0.0
      %776 = vmatprep.subr.mxu0 0.0
      %777 = vmatpush1.msra.mxu0 0.0
      %778 = vmatprep.subr.mxu0 0.0
      %779 = vmatpush1.msra.mxu0 0.0
      %780 = vmatprep.subr.mxu0 0.0
      %781 = vmatpush1.msra.mxu0 0.0
      %782 = vmatprep.subr.mxu0 0.0
      %783 = vmatpush1.msra.mxu0 0.0
      %784 = vmatprep.subr.mxu0 0.0
      %785 = vmatpush1.msra.mxu0 0.0
      %786 = vmatprep.subr.mxu0 0.0
      %787 = vmatpush1.msra.mxu0 0.0
      %788 = vmatprep.subr.mxu0 0.0
      %789 = vmatpush1.msra.mxu0 0.0
      %790 = vmatprep.subr.mxu0 0.0
      %791 = vmatpush1.msra.mxu0 0.0
      %792 = vmatprep.subr.mxu0 0.0
      %793 = vmatpush1.msra.mxu0 0.0
      %794 = vmatprep.subr.mxu0 0.0
      %795 = vmatpush1.msra.mxu0 0.0
      %796 = vmatprep.subr.mxu0 0.0
      %797 = vmatpush1.msra.mxu0 0.0
      %798 = vmatprep.subr.mxu0 0.0
      %799 = vmatpush1.msra.mxu0 0.0
      %800 = vmatprep.subr.mxu0 0.0
      %801 = vmatpush1.msra.mxu0 0.0
      %802 = vmatprep.subr.mxu0 0.0
      %803 = vmatpush1.msra.mxu0 0.0
      %804 = vmatprep.subr.mxu0 0.0
      %805 = vmatpush1.msra.mxu0 0.0
      %806 = vmatprep.subr.mxu0 0.0
      %807 = vmatpush1.msra.mxu0 0.0
      %808 = vmatprep.subr.mxu0 0.0
      %809 = vmatpush1.msra.mxu0 0.0
      %810 = vmatprep.subr.mxu0 0.0
      %811 = vmatpush1.msra.mxu0 0.0
      %812 = vmatprep.subr.mxu0 0.0
      %813 = vmatpush1.msra.mxu0 0.0
      %814 = vmatprep.subr.mxu0 0.0
      %815 = vmatpush1.msra.mxu0 0.0
      %816 = vmatprep.subr.mxu0 0.0
      %817 = vmatpush1.msra.mxu0 0.0
      %818 = vmatprep.subr.mxu0 0.0
      %819 = vmatpush1.msra.mxu0 0.0
      %820 = vmatprep.subr.mxu0 0.0
      %821 = vmatpush1.msra.mxu0 0.0
      %822 = vmatprep.subr.mxu0 0.0
      %823 = vmatpush1.msra.mxu0 0.0
      %824 = vmatprep.subr.mxu0 0.0
      %825 = vmatpush1.msra.mxu0 0.0
      %826 = vmatprep.subr.mxu0 0.0
      %827 = vmatpush1.msra.mxu0 0.0
      %828 = vmatprep.subr.mxu0 0.0
      %829 = vmatpush1.msra.mxu0 0.0
      %830 = vmatprep.mubr.f32.mxu0 0.0
      %831 = vmatmul.mubr.f32.gmra.mrb[0].mxu0 %v764
      %v832 = vpop.f32.mrb[0].mxu0
      %v833 = vadd.f32 0.0, %v832
      %v834 = vpop.f32.mrb[0].mxu0
      %835 = vdwg.mxu0
      %836 = vrot.lane.b32.xlu0 %v381, 96
      %v837 = vpop.permute.xlu0 %836
      %838 = vrot.lane.b32.xlu0 %v383, 96
      %v839 = vpop.permute.xlu0 %838
      %v843 = vsel %vm712, %v754, 0
      %845 = vmatprep.subr.mxu0 0.0
      %846 = vmatpush1.msra.mxu0 %v837
      %847 = vmatprep.subr.mxu0 0.0
      %848 = vmatpush1.msra.mxu0 %v839
      %849 = vmatprep.subr.mxu0 0.0
      %850 = vmatpush1.msra.mxu0 0.0
      %851 = vmatprep.subr.mxu0 0.0
      %852 = vmatpush1.msra.mxu0 0.0
      %853 = vmatprep.subr.mxu0 0.0
      %854 = vmatpush1.msra.mxu0 0.0
      %855 = vmatprep.subr.mxu0 0.0
      %856 = vmatpush1.msra.mxu0 0.0
      %857 = vmatprep.subr.mxu0 0.0
      %858 = vmatpush1.msra.mxu0 0.0
      %859 = vmatprep.subr.mxu0 0.0
      %860 = vmatpush1.msra.mxu0 0.0
      %861 = vmatprep.subr.mxu0 0.0
      %862 = vmatpush1.msra.mxu0 0.0
      %863 = vmatprep.subr.mxu0 0.0
      %864 = vmatpush1.msra.mxu0 0.0
      %865 = vmatprep.subr.mxu0 0.0
      %866 = vmatpush1.msra.mxu0 0.0
      %867 = vmatprep.subr.mxu0 0.0
      %868 = vmatpush1.msra.mxu0 0.0
      %869 = vmatprep.subr.mxu0 0.0
      %870 = vmatpush1.msra.mxu0 0.0
      %871 = vmatprep.subr.mxu0 0.0
      %872 = vmatpush1.msra.mxu0 0.0
      %873 = vmatprep.subr.mxu0 0.0
      %874 = vmatpush1.msra.mxu0 0.0
      %875 = vmatprep.subr.mxu0 0.0
      %876 = vmatpush1.msra.mxu0 0.0
      %877 = vmatprep.subr.mxu0 0.0
      %878 = vmatpush1.msra.mxu0 0.0
      %879 = vmatprep.subr.mxu0 0.0
      %880 = vmatpush1.msra.mxu0 0.0
      %881 = vmatprep.subr.mxu0 0.0
      %882 = vmatpush1.msra.mxu0 0.0
      %883 = vmatprep.subr.mxu0 0.0
      %884 = vmatpush1.msra.mxu0 0.0
      %885 = vmatprep.subr.mxu0 0.0
      %886 = vmatpush1.msra.mxu0 0.0
      %887 = vmatprep.subr.mxu0 0.0
      %888 = vmatpush1.msra.mxu0 0.0
      %889 = vmatprep.subr.mxu0 0.0
      %890 = vmatpush1.msra.mxu0 0.0
      %891 = vmatprep.subr.mxu0 0.0
      %892 = vmatpush1.msra.mxu0 0.0
      %893 = vmatprep.subr.mxu0 0.0
      %894 = vmatpush1.msra.mxu0 0.0
      %895 = vmatprep.subr.mxu0 0.0
      %896 = vmatpush1.msra.mxu0 0.0
      %897 = vmatprep.subr.mxu0 0.0
      %898 = vmatpush1.msra.mxu0 0.0
      %899 = vmatprep.subr.mxu0 0.0
      %900 = vmatpush1.msra.mxu0 0.0
      %901 = vmatprep.subr.mxu0 0.0
      %902 = vmatpush1.msra.mxu0 0.0
      %903 = vmatprep.subr.mxu0 0.0
      %904 = vmatpush1.msra.mxu0 0.0
      %905 = vmatprep.subr.mxu0 0.0
      %906 = vmatpush1.msra.mxu0 0.0
      %907 = vmatprep.subr.mxu0 0.0
      %908 = vmatpush1.msra.mxu0 0.0
      %909 = vmatprep.mubr.f32.mxu0 0.0
      %910 = vmatmul.mubr.f32.gmra.mrb[0].mxu0 %v843
      %v911 = vpop.f32.mrb[0].mxu0
      %v912 = vadd.f32 0.0, %v911
      %v913 = vpop.f32.mrb[0].mxu0
      %914 = vdwg.mxu0
      %915 = vrot.lane.b32.xlu0 %v385, 96
      %v916 = vpop.permute.xlu0 %915
      %917 = vrot.lane.b32.xlu0 %v387, 96
      %v918 = vpop.permute.xlu0 %917
      %v922 = vsel %vm712, %v755, 0
      %924 = vmatprep.subr.mxu0 0.0
      %925 = vmatpush1.msra.mxu0 %v916
      %926 = vmatprep.subr.mxu0 0.0
      %927 = vmatpush1.msra.mxu0 %v918
      %928 = vmatprep.subr.mxu0 0.0
      %929 = vmatpush1.msra.mxu0 0.0
      %930 = vmatprep.subr.mxu0 0.0
      %931 = vmatpush1.msra.mxu0 0.0
      %932 = vmatprep.subr.mxu0 0.0
      %933 = vmatpush1.msra.mxu0 0.0
      %934 = vmatprep.subr.mxu0 0.0
      %935 = vmatpush1.msra.mxu0 0.0
      %936 = vmatprep.subr.mxu0 0.0
      %937 = vmatpush1.msra.mxu0 0.0
      %938 = vmatprep.subr.mxu0 0.0
      %939 = vmatpush1.msra.mxu0 0.0
      %940 = vmatprep.subr.mxu0 0.0
      %941 = vmatpush1.msra.mxu0 0.0
      %942 = vmatprep.subr.mxu0 0.0
      %943 = vmatpush1.msra.mxu0 0.0
      %944 = vmatprep.subr.mxu0 0.0
      %945 = vmatpush1.msra.mxu0 0.0
      %946 = vmatprep.subr.mxu0 0.0
      %947 = vmatpush1.msra.mxu0 0.0
      %948 = vmatprep.subr.mxu0 0.0
      %949 = vmatpush1.msra.mxu0 0.0
      %950 = vmatprep.subr.mxu0 0.0
      %951 = vmatpush1.msra.mxu0 0.0
      %952 = vmatprep.subr.mxu0 0.0
      %953 = vmatpush1.msra.mxu0 0.0
      %954 = vmatprep.subr.mxu0 0.0
      %955 = vmatpush1.msra.mxu0 0.0
      %956 = vmatprep.subr.mxu0 0.0
      %957 = vmatpush1.msra.mxu0 0.0
      %958 = vmatprep.subr.mxu0 0.0
      %959 = vmatpush1.msra.mxu0 0.0
      %960 = vmatprep.subr.mxu0 0.0
      %961 = vmatpush1.msra.mxu0 0.0
      %962 = vmatprep.subr.mxu0 0.0
      %963 = vmatpush1.msra.mxu0 0.0
      %964 = vmatprep.subr.mxu0 0.0
      %965 = vmatpush1.msra.mxu0 0.0
      %966 = vmatprep.subr.mxu0 0.0
      %967 = vmatpush1.msra.mxu0 0.0
      %968 = vmatprep.subr.mxu0 0.0
      %969 = vmatpush1.msra.mxu0 0.0
      %970 = vmatprep.subr.mxu0 0.0
      %971 = vmatpush1.msra.mxu0 0.0
      %972 = vmatprep.subr.mxu0 0.0
      %973 = vmatpush1.msra.mxu0 0.0
      %974 = vmatprep.subr.mxu0 0.0
      %975 = vmatpush1.msra.mxu0 0.0
      %976 = vmatprep.subr.mxu0 0.0
      %977 = vmatpush1.msra.mxu0 0.0
      %978 = vmatprep.subr.mxu0 0.0
      %979 = vmatpush1.msra.mxu0 0.0
      %980 = vmatprep.subr.mxu0 0.0
      %981 = vmatpush1.msra.mxu0 0.0
      %982 = vmatprep.subr.mxu0 0.0
      %983 = vmatpush1.msra.mxu0 0.0
      %984 = vmatprep.subr.mxu0 0.0
      %985 = vmatpush1.msra.mxu0 0.0
      %986 = vmatprep.subr.mxu0 0.0
      %987 = vmatpush1.msra.mxu0 0.0
      %988 = vmatprep.mubr.f32.mxu0 0.0
      %989 = vmatmul.mubr.f32.gmra.mrb[0].mxu0 %v922
      %v990 = vpop.f32.mrb[0].mxu0
      %v991 = vadd.f32 0.0, %v990
      %v992 = vpop.f32.mrb[0].mxu0
      %993 = vdwg.mxu0
      %994 = vrot.lane.b32.xlu0 %v389, 96
      %v995 = vpop.permute.xlu0 %994
      %996 = vrot.lane.b32.xlu0 %v391, 96
      %v997 = vpop.permute.xlu0 %996
      %v1001 = vsel %vm712, %v756, 0
      %1003 = vmatprep.subr.mxu0 0.0
      %1004 = vmatpush1.msra.mxu0 %v995
      %1005 = vmatprep.subr.mxu0 0.0
      %1006 = vmatpush1.msra.mxu0 %v997
      %1007 = vmatprep.subr.mxu0 0.0
      %1008 = vmatpush1.msra.mxu0 0.0
      %1009 = vmatprep.subr.mxu0 0.0
      %1010 = vmatpush1.msra.mxu0 0.0
      %1011 = vmatprep.subr.mxu0 0.0
      %1012 = vmatpush1.msra.mxu0 0.0
      %1013 = vmatprep.subr.mxu0 0.0
      %1014 = vmatpush1.msra.mxu0 0.0
      %1015 = vmatprep.subr.mxu0 0.0
      %1016 = vmatpush1.msra.mxu0 0.0
      %1017 = vmatprep.subr.mxu0 0.0
      %1018 = vmatpush1.msra.mxu0 0.0
      %1019 = vmatprep.subr.mxu0 0.0
      %1020 = vmatpush1.msra.mxu0 0.0
      %1021 = vmatprep.subr.mxu0 0.0
      %1022 = vmatpush1.msra.mxu0 0.0
      %1023 = vmatprep.subr.mxu0 0.0
      %1024 = vmatpush1.msra.mxu0 0.0
      %1025 = vmatprep.subr.mxu0 0.0
      %1026 = vmatpush1.msra.mxu0 0.0
      %1027 = vmatprep.subr.mxu0 0.0
      %1028 = vmatpush1.msra.mxu0 0.0
      %1029 = vmatprep.subr.mxu0 0.0
      %1030 = vmatpush1.msra.mxu0 0.0
      %1031 = vmatprep.subr.mxu0 0.0
      %1032 = vmatpush1.msra.mxu0 0.0
      %1033 = vmatprep.subr.mxu0 0.0
      %1034 = vmatpush1.msra.mxu0 0.0
      %1035 = vmatprep.subr.mxu0 0.0
      %1036 = vmatpush1.msra.mxu0 0.0
      %1037 = vmatprep.subr.mxu0 0.0
      %1038 = vmatpush1.msra.mxu0 0.0
      %1039 = vmatprep.subr.mxu0 0.0
      %1040 = vmatpush1.msra.mxu0 0.0
      %1041 = vmatprep.subr.mxu0 0.0
      %1042 = vmatpush1.msra.mxu0 0.0
      %1043 = vmatprep.subr.mxu0 0.0
      %1044 = vmatpush1.msra.mxu0 0.0
      %1045 = vmatprep.subr.mxu0 0.0
      %1046 = vmatpush1.msra.mxu0 0.0
      %1047 = vmatprep.subr.mxu0 0.0
      %1048 = vmatpush1.msra.mxu0 0.0
      %1049 = vmatprep.subr.mxu0 0.0
      %1050 = vmatpush1.msra.mxu0 0.0
      %1051 = vmatprep.subr.mxu0 0.0
      %1052 = vmatpush1.msra.mxu0 0.0
      %1053 = vmatprep.subr.mxu0 0.0
      %1054 = vmatpush1.msra.mxu0 0.0
      %1055 = vmatprep.subr.mxu0 0.0
      %1056 = vmatpush1.msra.mxu0 0.0
      %1057 = vmatprep.subr.mxu0 0.0
      %1058 = vmatpush1.msra.mxu0 0.0
      %1059 = vmatprep.subr.mxu0 0.0
      %1060 = vmatpush1.msra.mxu0 0.0
      %1061 = vmatprep.subr.mxu0 0.0
      %1062 = vmatpush1.msra.mxu0 0.0
      %1063 = vmatprep.subr.mxu0 0.0
      %1064 = vmatpush1.msra.mxu0 0.0
      %1065 = vmatprep.subr.mxu0 0.0
      %1066 = vmatpush1.msra.mxu0 0.0
      %1067 = vmatprep.mubr.f32.mxu0 0.0
      %1068 = vmatmul.mubr.f32.gmra.mrb[0].mxu0 %v1001
      %v1069 = vpop.f32.mrb[0].mxu0
      %v1070 = vadd.f32 0.0, %v1069
      %v1071 = vpop.f32.mrb[0].mxu0
      %1072 = vdwg.mxu0
      %1074 = vrot.lane.b32.xlu0 %v912, 8
      %v1075 = vpop.permute.xlu0 %1074
      %1078 = vrot.lane.b32.xlu0 %v991, 16
      %v1079 = vpop.permute.xlu0 %1078
      %1082 = vrot.lane.b32.xlu0 %v1070, 24
      %v1083 = vpop.permute.xlu0 %1082
      %v1085 = vsel %vm393, %v833, %v1075
      %v1086 = vsel %vm712, %v1085, %v1079
      %vm1087 = vcmask 195584
      %v1088 = vsel %vm1087, %v1086, %v1083
      %vm1089 = vcmask 261120
      %1090 = vst.msk [vmem:[%s367] sm:$0xff] %vm1089, %v1088
      %p1091 = scmp.lt.s32.totalorder %s14, 5
      %s1092 = scalar_select %p1091, %s14, 5
      %s1093 = smul.addr %s1092, 8
      %s1094 = scalar_lea.vmem %s3, %s1093
      // Predicated region
      $region33: #{meshed_decoder_forward.30} parent=31 // pred_check
        %p1095 = pneg %p158
      $region34: #{meshed_decoder_forward.30} parent=31 // pred_check_branch
        %1097 = sbr.rel (%p1095) target = $region36
      $region35: #{meshed_decoder_forward.30} parent=31 // pred_region
        _
      $region36: #{meshed_decoder_forward.30} parent=31 // pred_fallthru
        _
    $region32: #{meshed_decoder_forward.30} parent=5 // pred_fallthru
      _
    %p1098 = scmp.le.s32.totalorder 2, %s9
    // Predicated region
    $region37: #{meshed_decoder_forward.30} parent=5 // pred_check
      %p1099 = pneg %p1098
    $region38: #{meshed_decoder_forward.30} parent=5 // pred_check_branch
      %1101 = sbr.rel (%p1099) target = $region40
    $region39: #{meshed_decoder_forward.30} parent=5 // pred_region
      %s1102 = ssub.s32 %s9, 2
      // Predicated region
      $region41: #{meshed_decoder_forward.30} parent=39 // pred_check
        %p1103 = pneg %p164
      $region42: #{meshed_decoder_forward.30} parent=39 // pred_check_branch
        %1105 = sbr.rel (%p1103) target = $region44
      $region43: #{meshed_decoder_forward.30} parent=39 // pred_region
        %p1106 = scmp.lt.s32.totalorder %s15, 5
        %s1107 = scalar_select %p1106, %s15, 5
        %s1108 = smul.addr %s1107, 8
        %s1109 = scalar_lea.vmem %s3, %s1108
      $region44: #{meshed_decoder_forward.30} parent=39 // pred_fallthru
        _
    $region40: #{meshed_decoder_forward.30} parent=5 // pred_fallthru
      _
  $region6: #{meshed_decoder_forward.30} parent=0 // loop_footer
    %s13 = sadd.s32 1, %s9
  $region7: #{meshed_decoder_forward.30} parent=0 // loop_footer_branch
    %8 = sbr.rel target = $region3
  $region8: #{meshed_decoder_forward.30} parent=0 // loop_exit
    _

// kernel: meshed_decoder_forward.31
$region0: #{meshed_decoder_forward.31}
  #allocation0 [shape = 'u32[]', space=smem, size = 0x4, offset = 0x4, fixed_abs, tag = 'smem constant byte address 0x4 - core index']
  #allocation1 [shape = 'u32[144,128]{1,0:T(1,128)}', space=vmem, size = 0x12000, scoped, tag = 'internal scratch']
  %s0 = inlined_call_operand.vmem [shape: f32[3,16,32], index: 0, kind: input, shape index: {}]
  %s1 = inlined_call_operand.vmem [shape: f32[16,32], index: 1, kind: input, shape index: {}]
  %s2 = inlined_call_operand.vmem [shape: f32[32,32], index: 2, kind: input, shape index: {}]
  %s3 = inlined_call_operand.vmem [shape: f32[1,32], index: 3, kind: input, shape index: {}]
  %s4 = inlined_call_operand.vmem [shape: f32[1,32], index: 4, kind: input, shape index: {}]
  %s5 = inlined_call_operand.vmem [shape: f32[1,32], index: 5, kind: input, shape index: {}]
  %s6 = inlined_call_operand.vmem [shape: f32[32,96], index: 6, kind: input, shape index: {}]
  %s7 = inlined_call_operand.vmem [shape: f32[3,32,32], index: 7, kind: input, shape index: {}]
  %s8 = inlined_call_operand.vmem [shape: f32[3,1,32], index: 8, kind: input, shape index: {}]
  %s9 = inlined_call_operand.vmem [shape: f32[16,1], index: 9, kind: input, shape index: {}]
  %s10 = inlined_call_operand.vmem [shape: f32[16,32], index: 10, kind: output, shape index: {}]
  %s11 = sld [smem:[#allocation0]]
  $region111: #{meshed_decoder_forward.31} parent=0
    _
  %s13 = ssub.s32 1, %s11
  %s14 = scalar_select 0, %s13, %s11
  $region1: #{meshed_decoder_forward.31} parent=0
    #allocation2 [shape = 'u8[24576]{0}', space=vmem, size = 0x6000, scoped, tag = 'input window, operand 0']
    loop: start=0, step=1, limit=4
    $region2: #{meshed_decoder_forward.31} parent=1 // loop_pre_header
      _
    $region3: #{meshed_decoder_forward.31} parent=1 // loop_header
      %s16 = sphi 0, %s20
      %p17 = scmp.ge.s32.totalorder %s16, 4
      %s26 = sphi 0, %s28
      %s29 = sphi 0, %s26
      %s30 = sphi 0, %s29
      %s46 = sphi 0, %s30
      %s52 = sphi 0, %s54
      %s55 = sphi 0, %s52
      %s56 = sphi 0, %s55
      %s72 = sphi 0, %s56
      %s76 = sphi 0, %s76
      %s78 = sphi 0, %s76
      %s79 = sphi 0, %s78
      %s93 = sphi 0, %s79
      %s97 = sphi 0, %s97
      %s99 = sphi 0, %s97
      %s100 = sphi 0, %s99
      %s114 = sphi 0, %s100
      %s118 = sphi 0, %s118
      %s120 = sphi 0, %s118
      %s121 = sphi 0, %s120
      %s135 = sphi 0, %s121
      %s139 = sphi 0, %s139
      %s141 = sphi 0, %s139
      %s142 = sphi 0, %s141
      %s156 = sphi 0, %s142
      %s160 = sphi 0, %s160
      %s162 = sphi 0, %s160
      %s163 = sphi 0, %s162
      %s177 = sphi 0, %s163
      %s181 = sphi 0, %s181
      %s183 = sphi 0, %s181
      %s184 = sphi 0, %s183
      %s198 = sphi 0, %s184
      %s202 = sphi 0, %s202
      %s204 = sphi 0, %s202
      %s205 = sphi 0, %s204
      %s219 = sphi 0, %s205
      %s225 = sphi 0, %s227
      %s228 = sphi 0, %s225
      %s229 = sphi 0, %s228
      %s245 = sphi 0, %s229
      %s251 = sphi 0, %s253
      %s254 = sphi 0, %s251
      %s255 = sphi 0, %s254
      %s271 = sphi 0, %s255
    $region4: #{meshed_decoder_forward.31} parent=1 // loop_header_branch
      %19 = sbr.rel (%p17) target = $region8
    $region5: #{meshed_decoder_forward.31} parent=1 // loop_body
      %s21 = ssub.s32 %s16, 1
      %s22 = ssub.s32 %s16, 2
      %s23 = sadd.s32 %s16, 1
      %s24 = ssub.s32 %s16, %s23
      %p25 = scmp.eq.s32.totalorder %s24, 0
      %s27 = sadd.s32 %s26, 1
      %s28 = scalar_select %p25, %s26, %s27
      %p31 = pneg %p25
      %p32 = scmp.eq.s32.totalorder %s16, 1
      %p33 = por %p31, %p32
      %p34 = scmp.ne.s32.totalorder %s26, %s29
      %p35 = scmp.eq.s32.totalorder %s16, 0
      %p36 = por %p34, %p35
      %p37 = scmp.ne.s32.totalorder %s26, %s29
      %p38 = scmp.eq.s32.totalorder %s21, 1
      %p39 = por %p37, %p38
      %p40 = scmp.ne.s32.totalorder %s29, %s30
      %p41 = scmp.eq.s32.totalorder %s21, 0
      %p42 = por %p40, %p41
      %p43 = scmp.ne.s32.totalorder %s29, %s30
      %p44 = scmp.eq.s32.totalorder %s22, 1
      %p45 = por %p43, %p44
      %p47 = scmp.ne.s32.totalorder %s30, %s46
      %p48 = scmp.eq.s32.totalorder %s22, 0
      %p49 = por %p47, %p48
      %s50 = ssub.s32 %s16, %s23
      %p51 = scmp.eq.s32.totalorder %s50, 0
      %s53 = sadd.s32 %s52, 1
      %s54 = scalar_select %p51, %s52, %s53
      %p57 = pneg %p51
      %p58 = scmp.eq.s32.totalorder %s16, 1
      %p59 = por %p57, %p58
      %p60 = scmp.ne.s32.totalorder %s52, %s55
      %p61 = scmp.eq.s32.totalorder %s16, 0
      %p62 = por %p60, %p61
      %p63 = scmp.ne.s32.totalorder %s52, %s55
      %p64 = scmp.eq.s32.totalorder %s21, 1
      %p65 = por %p63, %p64
      %p66 = scmp.ne.s32.totalorder %s55, %s56
      %p67 = scmp.eq.s32.totalorder %s21, 0
      %p68 = por %p66, %p67
      %p69 = scmp.ne.s32.totalorder %s55, %s56
      %p70 = scmp.eq.s32.totalorder %s22, 1
      %p71 = por %p69, %p70
      %p73 = scmp.ne.s32.totalorder %s56, %s72
      %p74 = scmp.eq.s32.totalorder %s22, 0
      %p75 = por %p73, %p74
      %s77 = sadd.s32 %s76, 1
      %p80 = scmp.eq.s32.totalorder %s16, 1
      %p81 = scmp.ne.s32.totalorder %s76, %s78
      %p82 = scmp.eq.s32.totalorder %s16, 0
      %p83 = por %p81, %p82
      %p84 = scmp.ne.s32.totalorder %s76, %s78
      %p85 = scmp.eq.s32.totalorder %s21, 1
      %p86 = por %p84, %p85
      %p87 = scmp.ne.s32.totalorder %s78, %s79
      %p88 = scmp.eq.s32.totalorder %s21, 0
      %p89 = por %p87, %p88
      %p90 = scmp.ne.s32.totalorder %s78, %s79
      %p91 = scmp.eq.s32.totalorder %s22, 1
      %p92 = por %p90, %p91
      %p94 = scmp.ne.s32.totalorder %s79, %s93
      %p95 = scmp.eq.s32.totalorder %s22, 0
      %p96 = por %p94, %p95
      %s98 = sadd.s32 %s97, 1
      %p101 = scmp.eq.s32.totalorder %s16, 1
      %p102 = scmp.ne.s32.totalorder %s97, %s99
      %p103 = scmp.eq.s32.totalorder %s16, 0
      %p104 = por %p102, %p103
      %p105 = scmp.ne.s32.totalorder %s97, %s99
      %p106 = scmp.eq.s32.totalorder %s21, 1
      %p107 = por %p105, %p106
      %p108 = scmp.ne.s32.totalorder %s99, %s100
      %p109 = scmp.eq.s32.totalorder %s21, 0
      %p110 = por %p108, %p109
      %p111 = scmp.ne.s32.totalorder %s99, %s100
      %p112 = scmp.eq.s32.totalorder %s22, 1
      %p113 = por %p111, %p112
      %p115 = scmp.ne.s32.totalorder %s100, %s114
      %p116 = scmp.eq.s32.totalorder %s22, 0
      %p117 = por %p115, %p116
      %s119 = sadd.s32 %s118, 1
      %p122 = scmp.eq.s32.totalorder %s16, 1
      %p123 = scmp.ne.s32.totalorder %s118, %s120
      %p124 = scmp.eq.s32.totalorder %s16, 0
      %p125 = por %p123, %p124
      %p126 = scmp.ne.s32.totalorder %s118, %s120
      %p127 = scmp.eq.s32.totalorder %s21, 1
      %p128 = por %p126, %p127
      %p129 = scmp.ne.s32.totalorder %s120, %s121
      %p130 = scmp.eq.s32.totalorder %s21, 0
      %p131 = por %p129, %p130
      %p132 = scmp.ne.s32.totalorder %s120, %s121
      %p133 = scmp.eq.s32.totalorder %s22, 1
      %p134 = por %p132, %p133
      %p136 = scmp.ne.s32.totalorder %s121, %s135
      %p137 = scmp.eq.s32.totalorder %s22, 0
      %p138 = por %p136, %p137
      %s140 = sadd.s32 %s139, 1
      %p143 = scmp.eq.s32.totalorder %s16, 1
      %p144 = scmp.ne.s32.totalorder %s139, %s141
      %p145 = scmp.eq.s32.totalorder %s16, 0
      %p146 = por %p144, %p145
      %p147 = scmp.ne.s32.totalorder %s139, %s141
      %p148 = scmp.eq.s32.totalorder %s21, 1
      %p149 = por %p147, %p148
      %p150 = scmp.ne.s32.totalorder %s141, %s142
      %p151 = scmp.eq.s32.totalorder %s21, 0
      %p152 = por %p150, %p151
      %p153 = scmp.ne.s32.totalorder %s141, %s142
      %p154 = scmp.eq.s32.totalorder %s22, 1
      %p155 = por %p153, %p154
      %p157 = scmp.ne.s32.totalorder %s142, %s156
      %p158 = scmp.eq.s32.totalorder %s22, 0
      %p159 = por %p157, %p158
      %s161 = sadd.s32 %s160, 1
      %p164 = scmp.eq.s32.totalorder %s16, 1
      %p165 = scmp.ne.s32.totalorder %s160, %s162
      %p166 = scmp.eq.s32.totalorder %s16, 0
      %p167 = por %p165, %p166
      %p168 = scmp.ne.s32.totalorder %s160, %s162
      %p169 = scmp.eq.s32.totalorder %s21, 1
      %p170 = por %p168, %p169
      %p171 = scmp.ne.s32.totalorder %s162, %s163
      %p172 = scmp.eq.s32.totalorder %s21, 0
      %p173 = por %p171, %p172
      %p174 = scmp.ne.s32.totalorder %s162, %s163
      %p175 = scmp.eq.s32.totalorder %s22, 1
      %p176 = por %p174, %p175
      %p178 = scmp.ne.s32.totalorder %s163, %s177
      %p179 = scmp.eq.s32.totalorder %s22, 0
      %p180 = por %p178, %p179
      %s182 = sadd.s32 %s181, 1
      %p185 = scmp.eq.s32.totalorder %s16, 1
      %p186 = scmp.ne.s32.totalorder %s181, %s183
      %p187 = scmp.eq.s32.totalorder %s16, 0
      %p188 = por %p186, %p187
      %p189 = scmp.ne.s32.totalorder %s181, %s183
      %p190 = scmp.eq.s32.totalorder %s21, 1
      %p191 = por %p189, %p190
      %p192 = scmp.ne.s32.totalorder %s183, %s184
      %p193 = scmp.eq.s32.totalorder %s21, 0
      %p194 = por %p192, %p193
      %p195 = scmp.ne.s32.totalorder %s183, %s184
      %p196 = scmp.eq.s32.totalorder %s22, 1
      %p197 = por %p195, %p196
      %p199 = scmp.ne.s32.totalorder %s184, %s198
      %p200 = scmp.eq.s32.totalorder %s22, 0
      %p201 = por %p199, %p200
      %s203 = sadd.s32 %s202, 1
      %p206 = scmp.eq.s32.totalorder %s16, 1
      %p207 = scmp.ne.s32.totalorder %s202, %s204
      %p208 = scmp.eq.s32.totalorder %s16, 0
      %p209 = por %p207, %p208
      %p210 = scmp.ne.s32.totalorder %s202, %s204
      %p211 = scmp.eq.s32.totalorder %s21, 1
      %p212 = por %p210, %p211
      %p213 = scmp.ne.s32.totalorder %s204, %s205
      %p214 = scmp.eq.s32.totalorder %s21, 0
      %p215 = por %p213, %p214
      %p216 = scmp.ne.s32.totalorder %s204, %s205
      %p217 = scmp.eq.s32.totalorder %s22, 1
      %p218 = por %p216, %p217
      %p220 = scmp.ne.s32.totalorder %s205, %s219
      %p221 = scmp.eq.s32.totalorder %s22, 0
      %p222 = por %p220, %p221
      %s223 = ssub.s32 %s16, %s23
      %p224 = scmp.eq.s32.totalorder %s223, 0
      %s226 = sadd.s32 %s225, 1
      %s227 = scalar_select %p224, %s225, %s226
      %p230 = pneg %p224
      %p231 = scmp.eq.s32.totalorder %s16, 1
      %p232 = por %p230, %p231
      %p233 = scmp.ne.s32.totalorder %s225, %s228
      %p234 = scmp.eq.s32.totalorder %s16, 0
      %p235 = por %p233, %p234
      %p236 = scmp.ne.s32.totalorder %s225, %s228
      %p237 = scmp.eq.s32.totalorder %s21, 1
      %p238 = por %p236, %p237
      %p239 = scmp.ne.s32.totalorder %s228, %s229
      %p240 = scmp.eq.s32.totalorder %s21, 0
      %p241 = por %p239, %p240
      %p242 = scmp.ne.s32.totalorder %s228, %s229
      %p243 = scmp.eq.s32.totalorder %s22, 1
      %p244 = por %p242, %p243
      %p246 = scmp.ne.s32.totalorder %s229, %s245
      %p247 = scmp.eq.s32.totalorder %s22, 0
      %p248 = por %p246, %p247
      %s249 = ssub.s32 %s16, %s23
      %p250 = scmp.eq.s32.totalorder %s249, 0
      %s252 = sadd.s32 %s251, 1
      %s253 = scalar_select %p250, %s251, %s252
      %p256 = pneg %p250
      %p257 = scmp.eq.s32.totalorder %s16, 1
      %p258 = por %p256, %p257
      %p259 = scmp.ne.s32.totalorder %s251, %s254
      %p260 = scmp.eq.s32.totalorder %s16, 0
      %p261 = por %p259, %p260
      %p262 = scmp.ne.s32.totalorder %s251, %s254
      %p263 = scmp.eq.s32.totalorder %s21, 1
      %p264 = por %p262, %p263
      %p265 = scmp.ne.s32.totalorder %s254, %s255
      %p266 = scmp.eq.s32.totalorder %s21, 0
      %p267 = por %p265, %p266
      %p268 = scmp.ne.s32.totalorder %s254, %s255
      %p269 = scmp.eq.s32.totalorder %s22, 1
      %p270 = por %p268, %p269
      %p272 = scmp.ne.s32.totalorder %s255, %s271
      %p273 = scmp.eq.s32.totalorder %s22, 0
      %p274 = por %p272, %p273
      %p275 = scmp.le.s32.totalorder 1, %s16
      %p276 = scmp.lt.s32.totalorder %s16, 3
      %p277 = pnand %p275, %p276
      %p278 = pneg %p277
      // Predicated region
      $region9: #{meshed_decoder_forward.31} parent=5 // pred_check
        _
      $region10: #{meshed_decoder_forward.31} parent=5 // pred_check_branch
        %280 = sbr.rel (%p277) target = $region12
      $region11: #{meshed_decoder_forward.31} parent=5 // pred_region
        %s281 = ssub.s32 %s16, 1
        // Predicated region
        $region13: #{meshed_decoder_forward.31} parent=11 // pred_check
          %p282 = pneg %p89
        $region14: #{meshed_decoder_forward.31} parent=11 // pred_check_branch
          %284 = sbr.rel (%p282) target = $region16
        $region15: #{meshed_decoder_forward.31} parent=11 // pred_region
          _
        $region16: #{meshed_decoder_forward.31} parent=11 // pred_fallthru
          _
        // Predicated region
        $region17: #{meshed_decoder_forward.31} parent=11 // pred_check
          %p285 = pneg %p110
        $region18: #{meshed_decoder_forward.31} parent=11 // pred_check_branch
          %287 = sbr.rel (%p285) target = $region20
        $region19: #{meshed_decoder_forward.31} parent=11 // pred_region
          _
        $region20: #{meshed_decoder_forward.31} parent=11 // pred_fallthru
          _
        // Predicated region
        $region21: #{meshed_decoder_forward.31} parent=11 // pred_check
          %p288 = pneg %p131
        $region22: #{meshed_decoder_forward.31} parent=11 // pred_check_branch
          %290 = sbr.rel (%p288) target = $region24
        $region23: #{meshed_decoder_forward.31} parent=11 // pred_region
          _
        $region24: #{meshed_decoder_forward.31} parent=11 // pred_fallthru
          _
        // Predicated region
        $region25: #{meshed_decoder_forward.31} parent=11 // pred_check
          %p291 = pneg %p152
        $region26: #{meshed_decoder_forward.31} parent=11 // pred_check_branch
          %293 = sbr.rel (%p291) target = $region28
        $region27: #{meshed_decoder_forward.31} parent=11 // pred_region
          _
        $region28: #{meshed_decoder_forward.31} parent=11 // pred_fallthru
          _
        // Predicated region
        $region29: #{meshed_decoder_forward.31} parent=11 // pred_check
          %p294 = pneg %p173
        $region30: #{meshed_decoder_forward.31} parent=11 // pred_check_branch
          %296 = sbr.rel (%p294) target = $region32
        $region31: #{meshed_decoder_forward.31} parent=11 // pred_region
          _
        $region32: #{meshed_decoder_forward.31} parent=11 // pred_fallthru
          _
        // Predicated region
        $region33: #{meshed_decoder_forward.31} parent=11 // pred_check
          %p297 = pneg %p194
        $region34: #{meshed_decoder_forward.31} parent=11 // pred_check_branch
          %299 = sbr.rel (%p297) target = $region36
        $region35: #{meshed_decoder_forward.31} parent=11 // pred_region
          _
        $region36: #{meshed_decoder_forward.31} parent=11 // pred_fallthru
          _
        // Predicated region
        $region37: #{meshed_decoder_forward.31} parent=11 // pred_check
          %p300 = pneg %p215
        $region38: #{meshed_decoder_forward.31} parent=11 // pred_check_branch
          %302 = sbr.rel (%p300) target = $region40
        $region39: #{meshed_decoder_forward.31} parent=11 // pred_region
          _
        $region40: #{meshed_decoder_forward.31} parent=11 // pred_fallthru
          _
      $region12: #{meshed_decoder_forward.31} parent=5 // pred_fallthru
        _
      %p303 = scmp.lt.s32.totalorder %s16, 2
      // Predicated region
      $region41: #{meshed_decoder_forward.31} parent=5 // pred_check
        %p304 = pneg %p303
      $region42: #{meshed_decoder_forward.31} parent=5 // pred_check_branch
        %306 = sbr.rel (%p304) target = $region44
      $region43: #{meshed_decoder_forward.31} parent=5 // pred_region
        // Predicated region
        $region45: #{meshed_decoder_forward.31} parent=43 // pred_check
          %p307 = pneg %p36
        $region46: #{meshed_decoder_forward.31} parent=43 // pred_check_branch
          %309 = sbr.rel (%p307) target = $region48
        $region47: #{meshed_decoder_forward.31} parent=43 // pred_region
          %s310 = sand.u32 %s26, 1
          %s311 = sand.u32 %s26, 1
          %s312 = smul.addr %s311, 24
          %s313 = scalar_lea.vmem [#allocation2], %s312
          %s314 = smul.addr %s16, 8
          %s315 = scalar_lea.vmem %s0, %s314
          // Predicated region
          $region49: #{meshed_decoder_forward.31} parent=47 // pred_check
            _
          $region50: #{meshed_decoder_forward.31} parent=47 // pred_check_branch
            %317 = sbr.rel (0) target = $region52
          $region51: #{meshed_decoder_forward.31} parent=47 // pred_region
            // Predicated region
            $region53: #{meshed_decoder_forward.31} parent=51 // pred_check
              _
            $region54: #{meshed_decoder_forward.31} parent=51 // pred_check_branch
              %319 = sbr.rel (0) target = $region56
            $region55: #{meshed_decoder_forward.31} parent=51 // pred_region
              // Predicated region
              $region68: #{meshed_decoder_forward.31} parent=55 // pred_check
                _
              $region69: #{meshed_decoder_forward.31} parent=55 // pred_check_branch
                %338 = sbr.rel (0) target = $region71
              $region70: #{meshed_decoder_forward.31} parent=55 // pred_region
                loop: start=0, step=1, limit=1
                $region72: #{meshed_decoder_forward.31} parent=70 // loop_pre_header
                  _
                $region73: #{meshed_decoder_forward.31} parent=70 // loop_header
                  %s340 = sphi 0, %s344
                  %p341 = scmp.ge.s32.totalorder %s340, 1
                  %s345 = sphi %s315, %s315
                  %s346 = sphi %s313, %s313
                $region74: #{meshed_decoder_forward.31} parent=70 // loop_header_branch
                  %343 = sbr.rel (%p341) target = $region78
                $region75: #{meshed_decoder_forward.31} parent=70 // loop_body
                  %v347 = vld [vmem:[%s345] sm:$0xff]
                  %348 = vst [vmem:[%s346] sm:$0xff] %v347
                  %v349 = vld [vmem:[%s345 + $0x10] sm:$0xff]
                  %350 = vst [vmem:[%s346 + $0x8] sm:$0xff] %v349
                  %v351 = vld [vmem:[%s345 + $0x20] sm:$0xff]
                  %352 = vst [vmem:[%s346 + $0x10] sm:$0xff] %v351
                $region76: #{meshed_decoder_forward.31} parent=70 // loop_footer
                  %s344 = sadd.s32 1, %s340
                $region77: #{meshed_decoder_forward.31} parent=70 // loop_footer_branch
                  %339 = sbr.rel target = $region73
                $region78: #{meshed_decoder_forward.31} parent=70 // loop_exit
                  _
              $region71: #{meshed_decoder_forward.31} parent=55 // pred_fallthru
                _
              // Predicated region
              $region79: #{meshed_decoder_forward.31} parent=55 // pred_check
                _
              $region80: #{meshed_decoder_forward.31} parent=55 // pred_check_branch
                %354 = sbr.rel target = $region82
              $region81: #{meshed_decoder_forward.31} parent=55 // pred_region
                _
              $region82: #{meshed_decoder_forward.31} parent=55 // pred_fallthru
                _
            $region56: #{meshed_decoder_forward.31} parent=51 // pred_fallthru
              _
            // Predicated region
            $region57: #{meshed_decoder_forward.31} parent=51 // pred_check
              _
            $region58: #{meshed_decoder_forward.31} parent=51 // pred_check_branch
              %321 = sbr.rel target = $region60
            $region59: #{meshed_decoder_forward.31} parent=51 // pred_region
              loop: start=0, step=1, limit=1
              $region61: #{meshed_decoder_forward.31} parent=59 // loop_pre_header
                _
              $region62: #{meshed_decoder_forward.31} parent=59 // loop_header
                %s324 = sphi 0, %s328
                %p325 = scmp.ge.s32.totalorder %s324, 1
                %s329 = sphi %s315, %s315
                %s330 = sphi %s313, %s313
              $region63: #{meshed_decoder_forward.31} parent=59 // loop_header_branch
                %327 = sbr.rel (%p325) target = $region67
              $region64: #{meshed_decoder_forward.31} parent=59 // loop_body
                %v331 = vld [vmem:[%s329] sm:$0xff]
                %332 = vst [vmem:[%s330] sm:$0xff] %v331
                %v333 = vld [vmem:[%s329 + $0x10] sm:$0xff]
                %334 = vst [vmem:[%s330 + $0x8] sm:$0xff] %v333
                %v335 = vld [vmem:[%s329 + $0x20] sm:$0xff]
                %336 = vst [vmem:[%s330 + $0x10] sm:$0xff] %v335
              $region65: #{meshed_decoder_forward.31} parent=59 // loop_footer
                %s328 = sadd.s32 1, %s324
              $region66: #{meshed_decoder_forward.31} parent=59 // loop_footer_branch
                %323 = sbr.rel target = $region62
              $region67: #{meshed_decoder_forward.31} parent=59 // loop_exit
                _
            $region60: #{meshed_decoder_forward.31} parent=51 // pred_fallthru
              _
          $region52: #{meshed_decoder_forward.31} parent=47 // pred_fallthru
            _
          %355 = vnop
        $region48: #{meshed_decoder_forward.31} parent=43 // pred_fallthru
          _
        // Predicated region
        $region83: #{meshed_decoder_forward.31} parent=43 // pred_check
          %p356 = pneg %p62
        $region84: #{meshed_decoder_forward.31} parent=43 // pred_check_branch
          %358 = sbr.rel (%p356) target = $region86
        $region85: #{meshed_decoder_forward.31} parent=43 // pred_region
          %p359 = scmp.lt.s32.totalorder %s16, 1
          %s360 = scalar_select %p359, %s16, 1
          %s361 = smul.addr %s360, 8
          %s362 = scalar_lea.vmem %s1, %s361
        $region86: #{meshed_decoder_forward.31} parent=43 // pred_fallthru
          _
        // Predicated region
        $region87: #{meshed_decoder_forward.31} parent=43 // pred_check
          %p363 = pneg %p235
        $region88: #{meshed_decoder_forward.31} parent=43 // pred_check_branch
          %365 = sbr.rel (%p363) target = $region90
        $region89: #{meshed_decoder_forward.31} parent=43 // pred_region
          %p366 = scmp.lt.s32.totalorder %s16, 1
          %s367 = scalar_select %p366, %s16, 1
          %s368 = smul.addr %s367, 8
          %s369 = scalar_lea.vmem %s9, %s368
        $region90: #{meshed_decoder_forward.31} parent=43 // pred_fallthru
          _
      $region44: #{meshed_decoder_forward.31} parent=5 // pred_fallthru
        _
      %p370 = scmp.le.s32.totalorder 1, %s16
      %p371 = scmp.lt.s32.totalorder %s16, 3
      %p372 = pnand %p370, %p371
      %p373 = pneg %p372
      // Predicated region
      $region91: #{meshed_decoder_forward.31} parent=5 // pred_check
        _
      $region92: #{meshed_decoder_forward.31} parent=5 // pred_check_branch
        %375 = sbr.rel (%p372) target = $region94
      $region93: #{meshed_decoder_forward.31} parent=5 // pred_region
        %s376 = ssub.s32 %s16, 1
        %s377 = sand.u32 %s29, 1
        %s378 = sand.u32 %s29, 1
        %s379 = smul.addr %s378, 24
        %s380 = scalar_lea.vmem [#allocation2], %s379
        // Predicated region
        $region95: #{meshed_decoder_forward.31} parent=93 // pred_check
          %p381 = pneg %p42
        $region96: #{meshed_decoder_forward.31} parent=93 // pred_check_branch
          %383 = sbr.rel (%p381) target = $region98
        $region97: #{meshed_decoder_forward.31} parent=93 // pred_region
          _
        $region98: #{meshed_decoder_forward.31} parent=93 // pred_fallthru
          _
        %s384 = sand.u32 %s29, 1
        %s385 = sand.u32 %s29, 1
        %s386 = smul.addr %s385, 24
        %s387 = scalar_lea.vmem [#allocation2], %s386
        %p388 = pneg %p42
        %p389 = pneg %p39
        %p390 = scmp.lt.s32.totalorder %s21, 1
        %s391 = scalar_select %p390, %s21, 1
        %s392 = smul.addr %s391, 8
        %s393 = scalar_lea.vmem %s1, %s392
        %p394 = pneg %p68
        %p395 = pneg %p65
        %p396 = pneg %p89
        %p397 = pneg %p86
        %p398 = pneg %p110
        %p399 = pneg %p107
        %p400 = pneg %p131
        %p401 = pneg %p128
        %p402 = pneg %p152
        %p403 = pneg %p149
        %p404 = pneg %p173
        %p405 = pneg %p170
        %p406 = pneg %p194
        %p407 = pneg %p191
        %p408 = pneg %p215
        %p409 = pneg %p212
        %p410 = scmp.lt.s32.totalorder %s21, 1
        %s411 = scalar_select %p410, %s21, 1
        %s412 = smul.addr %s411, 8
        %s413 = scalar_lea.vmem %s9, %s412
        %p414 = pneg %p241
        %p415 = pneg %p238
        %p416 = pneg %p267
        %p417 = pneg %p264
        %p418 = scmp.lt.s32.totalorder %s21, 1
        %s419 = scalar_select %p418, %s21, 1
        %s420 = smul.addr %s419, 8
        %s421 = scalar_lea.vmem %s10, %s420
        %p422 = scmp.lt.s32.totalorder %s21, 1
        %s423 = scalar_select %p422, %s21, 1
        %s424 = smul.addr %s423, 8
        %s425 = scalar_lea.vmem %s1, %s424
        %p426 = scmp.lt.s32.totalorder %s21, 1
        %s427 = scalar_select %p426, %s21, 1
        %s428 = smul.addr %s427, 8
        %s429 = scalar_lea.vmem %s9, %s428
        %p430 = scmp.lt.s32.totalorder %s21, 1
        %s431 = scalar_select %p430, %s21, 1
        %s432 = smul.addr %s431, 8
        %s433 = scalar_lea.vmem %s10, %s432
        %v434 = vld [vmem:[%s425] sm:$0xff]
        %v435 = vld [vmem:[%s429] sm:$0xff]
        %v436 = vld [vmem:[%s6] sm:$0xff]
        %v437 = vld [vmem:[%s6 + $0x8] sm:$0xff]
        %v438 = vld [vmem:[%s6 + $0x10] sm:$0xff]
        %v439 = vld [vmem:[%s6 + $0x18] sm:$0xff]
        %vm440 = vcmask 261120
        %v442 = vsel %vm440, %v434, 0
        %444 = vmatprep.subr.mxu0 0.0
        %445 = vmatpush1.msra.mxu0 %v436
        %446 = vmatprep.subr.mxu0 0.0
        %447 = vmatpush1.msra.mxu0 %v437
        %448 = vmatprep.subr.mxu0 0.0
        %449 = vmatpush1.msra.mxu0 %v438
        %450 = vmatprep.subr.mxu0 0.0
        %451 = vmatpush1.msra.mxu0 %v439
        %452 = vmatprep.subr.mxu0 0.0
        %453 = vmatpush1.msra.mxu0 0.0
        %454 = vmatprep.subr.mxu0 0.0
        %455 = vmatpush1.msra.mxu0 0.0
        %456 = vmatprep.subr.mxu0 0.0
        %457 = vmatpush1.msra.mxu0 0.0
        %458 = vmatprep.subr.mxu0 0.0
        %459 = vmatpush1.msra.mxu0 0.0
        %460 = vmatprep.subr.mxu0 0.0
        %461 = vmatpush1.msra.mxu0 0.0
        %462 = vmatprep.subr.mxu0 0.0
        %463 = vmatpush1.msra.mxu0 0.0
        %464 = vmatprep.subr.mxu0 0.0
        %465 = vmatpush1.msra.mxu0 0.0
        %466 = vmatprep.subr.mxu0 0.0
        %467 = vmatpush1.msra.mxu0 0.0
        %468 = vmatprep.subr.mxu0 0.0
        %469 = vmatpush1.msra.mxu0 0.0
        %470 = vmatprep.subr.mxu0 0.0
        %471 = vmatpush1.msra.mxu0 0.0
        %472 = vmatprep.subr.mxu0 0.0
        %473 = vmatpush1.msra.mxu0 0.0
        %474 = vmatprep.subr.mxu0 0.0
        %475 = vmatpush1.msra.mxu0 0.0
        %476 = vmatprep.subr.mxu0 0.0
        %477 = vmatpush1.msra.mxu0 0.0
        %478 = vmatprep.subr.mxu0 0.0
        %479 = vmatpush1.msra.mxu0 0.0
        %480 = vmatprep.subr.mxu0 0.0
        %481 = vmatpush1.msra.mxu0 0.0
        %482 = vmatprep.subr.mxu0 0.0
        %483 = vmatpush1.msra.mxu0 0.0
        %484 = vmatprep.subr.mxu0 0.0
        %485 = vmatpush1.msra.mxu0 0.0
        %486 = vmatprep.subr.mxu0 0.0
        %487 = vmatpush1.msra.mxu0 0.0
        %488 = vmatprep.subr.mxu0 0.0
        %489 = vmatpush1.msra.mxu0 0.0
        %490 = vmatprep.subr.mxu0 0.0
        %491 = vmatpush1.msra.mxu0 0.0
        %492 = vmatprep.subr.mxu0 0.0
        %493 = vmatpush1.msra.mxu0 0.0
        %494 = vmatprep.subr.mxu0 0.0
        %495 = vmatpush1.msra.mxu0 0.0
        %496 = vmatprep.subr.mxu0 0.0
        %497 = vmatpush1.msra.mxu0 0.0
        %498 = vmatprep.subr.mxu0 0.0
        %499 = vmatpush1.msra.mxu0 0.0
        %500 = vmatprep.subr.mxu0 0.0
        %501 = vmatpush1.msra.mxu0 0.0
        %502 = vmatprep.subr.mxu0 0.0
        %503 = vmatpush1.msra.mxu0 0.0
        %504 = vmatprep.subr.mxu0 0.0
        %505 = vmatpush1.msra.mxu0 0.0
        %506 = vmatprep.subr.mxu0 0.0
        %507 = vmatpush1.msra.mxu0 0.0
        %508 = vmatprep.mubr.f32.mxu0 0.0
        %509 = vmatmul.mubr.f32.gmra.mrb[0].mxu0 %v442
        %v510 = vpop.f32.mrb[0].mxu0
        %v511 = vadd.f32 0.0, %v510
        %v512 = vpop.f32.mrb[0].mxu0
        %513 = vdwg.mxu0
        %v514 = vld [vmem:[%s380] sm:$0xff]
        %v515 = vld [vmem:[%s2] sm:$0xff]
        %v516 = vld [vmem:[%s2 + $0x8] sm:$0xff]
        %v517 = vld [vmem:[%s2 + $0x10] sm:$0xff]
        %v518 = vld [vmem:[%s2 + $0x18] sm:$0xff]
        %v519 = vld [vmem:[%s3] sm:$0x1]
        %v521 = vlaneseq
        %v522 = vshrl.u32 %v521, 7
        %v523 = vsub.s32 0, %v522
        %v524 = vrot.slane %v519, %v523
        %v527 = vsel %vm440, %v514, 0
        %529 = vmatprep.subr.mxu0 0.0
        %530 = vmatpush1.msra.mxu0 %v515
        %531 = vmatprep.subr.mxu0 0.0
        %532 = vmatpush1.msra.mxu0 %v516
        %533 = vmatprep.subr.mxu0 0.0
        %534 = vmatpush1.msra.mxu0 %v517
        %535 = vmatprep.subr.mxu0 0.0
        %536 = vmatpush1.msra.mxu0 %v518
        %537 = vmatprep.subr.mxu0 0.0
        %538 = vmatpush1.msra.mxu0 0.0
        %539 = vmatprep.subr.mxu0 0.0
        %540 = vmatpush1.msra.mxu0 0.0
        %541 = vmatprep.subr.mxu0 0.0
        %542 = vmatpush1.msra.mxu0 0.0
        %543 = vmatprep.subr.mxu0 0.0
        %544 = vmatpush1.msra.mxu0 0.0
        %545 = vmatprep.subr.mxu0 0.0
        %546 = vmatpush1.msra.mxu0 0.0
        %547 = vmatprep.subr.mxu0 0.0
        %548 = vmatpush1.msra.mxu0 0.0
        %549 = vmatprep.subr.mxu0 0.0
        %550 = vmatpush1.msra.mxu0 0.0
        %551 = vmatprep.subr.mxu0 0.0
        %552 = vmatpush1.msra.mxu0 0.0
        %553 = vmatprep.subr.mxu0 0.0
        %554 = vmatpush1.msra.mxu0 0.0
        %555 = vmatprep.subr.mxu0 0.0
        %556 = vmatpush1.msra.mxu0 0.0
        %557 = vmatprep.subr.mxu0 0.0
        %558 = vmatpush1.msra.mxu0 0.0
        %559 = vmatprep.subr.mxu0 0.0
        %560 = vmatpush1.msra.mxu0 0.0
        %561 = vmatprep.subr.mxu0 0.0
        %562 = vmatpush1.msra.mxu0 0.0
        %563 = vmatprep.subr.mxu0 0.0
        %564 = vmatpush1.msra.mxu0 0.0
        %565 = vmatprep.subr.mxu0 0.0
        %566 = vmatpush1.msra.mxu0 0.0
        %567 = vmatprep.subr.mxu0 0.0
        %568 = vmatpush1.msra.mxu0 0.0
        %569 = vmatprep.subr.mxu0 0.0
        %570 = vmatpush1.msra.mxu0 0.0
        %571 = vmatprep.subr.mxu0 0.0
        %572 = vmatpush1.msra.mxu0 0.0
        %573 = vmatprep.subr.mxu0 0.0
        %574 = vmatpush1.msra.mxu0 0.0
        %575 = vmatprep.subr.mxu0 0.0
        %576 = vmatpush1.msra.mxu0 0.0
        %577 = vmatprep.subr.mxu0 0.0
        %578 = vmatpush1.msra.mxu0 0.0
        %579 = vmatprep.subr.mxu0 0.0
        %580 = vmatpush1.msra.mxu0 0.0
        %581 = vmatprep.subr.mxu0 0.0
        %582 = vmatpush1.msra.mxu0 0.0
        %583 = vmatprep.subr.mxu0 0.0
        %584 = vmatpush1.msra.mxu0 0.0
        %585 = vmatprep.subr.mxu0 0.0
        %586 = vmatpush1.msra.mxu0 0.0
        %587 = vmatprep.subr.mxu0 0.0
        %588 = vmatpush1.msra.mxu0 0.0
        %589 = vmatprep.subr.mxu0 0.0
        %590 = vmatpush1.msra.mxu0 0.0
        %591 = vmatprep.subr.mxu0 0.0
        %592 = vmatpush1.msra.mxu0 0.0
        %593 = vmatprep.mubr.f32.mxu0 0.0
        %594 = vmatmul.mubr.f32.gmra.mrb[0].mxu0 %v527
        %v595 = vpop.f32.mrb[0].mxu0
        %v596 = vadd.f32 %v524, %v595
        %v597 = vpop.f32.mrb[0].mxu0
        %598 = vdwg.mxu0
        %v599 = vadd.f32 %v596, %v434
        %v600 = vld [vmem:[%s4] sm:$0x1]
        %v601 = vld [vmem:[%s5] sm:$0x1]
        %v602 = vsel %vm440, %v599, 0.0
        %603 = vadd.xlane.f32.xlu0 %v602
        %v604 = vpop.xlane.xlu0 %603
        %v605 = vrcp.pop 32.0
        %v606 = vmul.f32 %v604, %v605
        %v607 = vsub.f32 %v599, %v606
        %v608 = vmul.f32 %v607, %v607
        %v609 = vsel %vm440, %v608, 0.0
        %610 = vadd.xlane.f32.xlu0 %v609
        %v611 = vpop.xlane.xlu0 %610
        %v612 = vmul.f32 %v611, %v605
        %v613 = vadd.f32 %v612, 1e-05
        %v614 = vrsqrt.pop %v613
        %v615 = vmul.f32 %v607, %v614
        %v617 = vlaneseq
        %v618 = vshrl.u32 %v617, 7
        %v619 = vsub.s32 0, %v618
        %v620 = vrot.slane %v600, %v619
        %v622 = vmul.f32 %v615, %v620
        %v624 = vlaneseq
        %v625 = vshrl.u32 %v624, 7
        %v626 = vsub.s32 0, %v625
        %v627 = vrot.slane %v601, %v626
        %v629 = vadd.f32 %v622, %v627
        %631 = vset.pattern.permute.xlu0 0
        %632 = vperm.xlu0 %631, %v435
        %v633 = vpop.permute.xlu0 %632
        %v635 = vmul.f32 %v629, %v633
        %v636 = vld [vmem:[%s7] sm:$0xff]
        %v637 = vld [vmem:[%s7 + $0x8] sm:$0xff]
        %v638 = vld [vmem:[%s7 + $0x10] sm:$0xff]
        %v639 = vld [vmem:[%s7 + $0x18] sm:$0xff]
        %v641 = vsel %vm440, %v635, 0
        %643 = vmatprep.subr.mxu0 0.0
        %644 = vmatpush1.msra.mxu0 %v636
        %645 = vmatprep.subr.mxu0 0.0
        %646 = vmatpush1.msra.mxu0 %v637
        %647 = vmatprep.subr.mxu0 0.0
        %648 = vmatpush1.msra.mxu0 %v638
        %649 = vmatprep.subr.mxu0 0.0
        %650 = vmatpush1.msra.mxu0 %v639
        %651 = vmatprep.subr.mxu0 0.0
        %652 = vmatpush1.msra.mxu0 0.0
        %653 = vmatprep.subr.mxu0 0.0
        %654 = vmatpush1.msra.mxu0 0.0
        %655 = vmatprep.subr.mxu0 0.0
        %656 = vmatpush1.msra.mxu0 0.0
        %657 = vmatprep.subr.mxu0 0.0
        %658 = vmatpush1.msra.mxu0 0.0
        %659 = vmatprep.subr.mxu0 0.0
        %660 = vmatpush1.msra.mxu0 0.0
        %661 = vmatprep.subr.mxu0 0.0
        %662 = vmatpush1.msra.mxu0 0.0
        %663 = vmatprep.subr.mxu0 0.0
        %664 = vmatpush1.msra.mxu0 0.0
        %665 = vmatprep.subr.mxu0 0.0
        %666 = vmatpush1.msra.mxu0 0.0
        %667 = vmatprep.subr.mxu0 0.0
        %668 = vmatpush1.msra.mxu0 0.0
        %669 = vmatprep.subr.mxu0 0.0
        %670 = vmatpush1.msra.mxu0 0.0
        %671 = vmatprep.subr.mxu0 0.0
        %672 = vmatpush1.msra.mxu0 0.0
        %673 = vmatprep.subr.mxu0 0.0
        %674 = vmatpush1.msra.mxu0 0.0
        %675 = vmatprep.subr.mxu0 0.0
        %676 = vmatpush1.msra.mxu0 0.0
        %677 = vmatprep.subr.mxu0 0.0
        %678 = vmatpush1.msra.mxu0 0.0
        %679 = vmatprep.subr.mxu0 0.0
        %680 = vmatpush1.msra.mxu0 0.0
        %681 = vmatprep.subr.mxu0 0.0
        %682 = vmatpush1.msra.mxu0 0.0
        %683 = vmatprep.subr.mxu0 0.0
        %684 = vmatpush1.msra.mxu0 0.0
        %685 = vmatprep.subr.mxu0 0.0
        %686 = vmatpush1.msra.mxu0 0.0
        %687 = vmatprep.subr.mxu0 0.0
        %688 = vmatpush1.msra.mxu0 0.0
        %689 = vmatprep.subr.mxu0 0.0
        %690 = vmatpush1.msra.mxu0 0.0
        %691 = vmatprep.subr.mxu0 0.0
        %692 = vmatpush1.msra.mxu0 0.0
        %693 = vmatprep.subr.mxu0 0.0
        %694 = vmatpush1.msra.mxu0 0.0
        %695 = vmatprep.subr.mxu0 0.0
        %696 = vmatpush1.msra.mxu0 0.0
        %697 = vmatprep.subr.mxu0 0.0
        %698 = vmatpush1.msra.mxu0 0.0
        %699 = vmatprep.subr.mxu0 0.0
        %700 = vmatpush1.msra.mxu0 0.0
        %701 = vmatprep.subr.mxu0 0.0
        %702 = vmatpush1.msra.mxu0 0.0
        %703 = vmatprep.subr.mxu0 0.0
        %704 = vmatpush1.msra.mxu0 0.0
        %705 = vmatprep.subr.mxu0 0.0
        %706 = vmatpush1.msra.mxu0 0.0
        %707 = vmatprep.mubr.f32.mxu0 0.0
        %708 = vmatmul.mubr.f32.gmra.mrb[0].mxu0 %v641
        %v709 = vpop.f32.mrb[0].mxu0
        %v710 = vadd.f32 0.0, %v709
        %v711 = vpop.f32.mrb[0].mxu0
        %712 = vdwg.mxu0
        %v713 = vadd.f32 %v511, %v710
        %v714 = vld [vmem:[%s8] sm:$0x1]
        %v716 = vlaneseq
        %v717 = vshrl.u32 %v716, 7
        %v718 = vsub.s32 0, %v717
        %v719 = vrot.slane %v714, %v718
        %v721 = vadd.f32 %v713, %v719
        %v722 = vxor.u32 %v721, 2147483648
        %v723 = vmul.f32 %v722, 1.442695
        %v724 = vpow.pop %v723
        %v725 = vadd.f32 %v724, 1.0
        %v726 = vrcp.pop %v725
        %v727 = vmul.f32 1.0, %v726
        %v728 = vmul.f32 %v635, %v727
        %v729 = vadd.f32 %v728, 0.0
        %s730 = scalar_lea.vmem %s380, 8 [#allocation2]
        %v731 = vld [vmem:[%s730] sm:$0xff]
        %v733 = vsel %vm440, %v731, 0
        %735 = vmatprep.subr.mxu0 0.0
        %736 = vmatpush1.msra.mxu0 %v515
        %737 = vmatprep.subr.mxu0 0.0
        %738 = vmatpush1.msra.mxu0 %v516
        %739 = vmatprep.subr.mxu0 0.0
        %740 = vmatpush1.msra.mxu0 %v517
        %741 = vmatprep.subr.mxu0 0.0
        %742 = vmatpush1.msra.mxu0 %v518
        %743 = vmatprep.subr.mxu0 0.0
        %744 = vmatpush1.msra.mxu0 0.0
        %745 = vmatprep.subr.mxu0 0.0
        %746 = vmatpush1.msra.mxu0 0.0
        %747 = vmatprep.subr.mxu0 0.0
        %748 = vmatpush1.msra.mxu0 0.0
        %749 = vmatprep.subr.mxu0 0.0
        %750 = vmatpush1.msra.mxu0 0.0
        %751 = vmatprep.subr.mxu0 0.0
        %752 = vmatpush1.msra.mxu0 0.0
        %753 = vmatprep.subr.mxu0 0.0
        %754 = vmatpush1.msra.mxu0 0.0
        %755 = vmatprep.subr.mxu0 0.0
        %756 = vmatpush1.msra.mxu0 0.0
        %757 = vmatprep.subr.mxu0 0.0
        %758 = vmatpush1.msra.mxu0 0.0
        %759 = vmatprep.subr.mxu0 0.0
        %760 = vmatpush1.msra.mxu0 0.0
        %761 = vmatprep.subr.mxu0 0.0
        %762 = vmatpush1.msra.mxu0 0.0
        %763 = vmatprep.subr.mxu0 0.0
        %764 = vmatpush1.msra.mxu0 0.0
        %765 = vmatprep.subr.mxu0 0.0
        %766 = vmatpush1.msra.mxu0 0.0
        %767 = vmatprep.subr.mxu0 0.0
        %768 = vmatpush1.msra.mxu0 0.0
        %769 = vmatprep.subr.mxu0 0.0
        %770 = vmatpush1.msra.mxu0 0.0
        %771 = vmatprep.subr.mxu0 0.0
        %772 = vmatpush1.msra.mxu0 0.0
        %773 = vmatprep.subr.mxu0 0.0
        %774 = vmatpush1.msra.mxu0 0.0
        %775 = vmatprep.subr.mxu0 0.0
        %776 = vmatpush1.msra.mxu0 0.0
        %777 = vmatprep.subr.mxu0 0.0
        %778 = vmatpush1.msra.mxu0 0.0
        %779 = vmatprep.subr.mxu0 0.0
        %780 = vmatpush1.msra.mxu0 0.0
        %781 = vmatprep.subr.mxu0 0.0
        %782 = vmatpush1.msra.mxu0 0.0
        %783 = vmatprep.subr.mxu0 0.0
        %784 = vmatpush1.msra.mxu0 0.0
        %785 = vmatprep.subr.mxu0 0.0
        %786 = vmatpush1.msra.mxu0 0.0
        %787 = vmatprep.subr.mxu0 0.0
        %788 = vmatpush1.msra.mxu0 0.0
        %789 = vmatprep.subr.mxu0 0.0
        %790 = vmatpush1.msra.mxu0 0.0
        %791 = vmatprep.subr.mxu0 0.0
        %792 = vmatpush1.msra.mxu0 0.0
        %793 = vmatprep.subr.mxu0 0.0
        %794 = vmatpush1.msra.mxu0 0.0
        %795 = vmatprep.subr.mxu0 0.0
        %796 = vmatpush1.msra.mxu0 0.0
        %797 = vmatprep.subr.mxu0 0.0
        %798 = vmatpush1.msra.mxu0 0.0
        %799 = vmatprep.mubr.f32.mxu0 0.0
        %800 = vmatmul.mubr.f32.gmra.mrb[0].mxu0 %v733
        %v801 = vpop.f32.mrb[0].mxu0
        %v802 = vadd.f32 %v524, %v801
        %v803 = vpop.f32.mrb[0].mxu0
        %804 = vdwg.mxu0
        %v805 = vadd.f32 %v802, %v434
        %v806 = vsel %vm440, %v805, 0.0
        %807 = vadd.xlane.f32.xlu0 %v806
        %v808 = vpop.xlane.xlu0 %807
        %v809 = vmul.f32 %v808, %v605
        %v810 = vsub.f32 %v805, %v809
        %v811 = vmul.f32 %v810, %v810
        %v812 = vsel %vm440, %v811, 0.0
        %813 = vadd.xlane.f32.xlu0 %v812
        %v814 = vpop.xlane.xlu0 %813
        %v815 = vmul.f32 %v814, %v605
        %v816 = vadd.f32 %v815, 1e-05
        %v817 = vrsqrt.pop %v816
        %v818 = vmul.f32 %v810, %v817
        %v819 = vmul.f32 %v818, %v620
        %v820 = vadd.f32 %v819, %v627
        %v821 = vmul.f32 %v820, %v633
        %s822 = scalar_lea.vmem %s7, 32
        %v823 = vld [vmem:[%s822] sm:$0xff]
        %v824 = vld [vmem:[%s822 + $0x8] sm:$0xff]
        %v825 = vld [vmem:[%s822 + $0x10] sm:$0xff]
        %v826 = vld [vmem:[%s822 + $0x18] sm:$0xff]
        %v828 = vsel %vm440, %v821, 0
        %830 = vmatprep.subr.mxu0 0.0
        %831 = vmatpush1.msra.mxu0 %v823
        %832 = vmatprep.subr.mxu0 0.0
        %833 = vmatpush1.msra.mxu0 %v824
        %834 = vmatprep.subr.mxu0 0.0
        %835 = vmatpush1.msra.mxu0 %v825
        %836 = vmatprep.subr.mxu0 0.0
        %837 = vmatpush1.msra.mxu0 %v826
        %838 = vmatprep.subr.mxu0 0.0
        %839 = vmatpush1.msra.mxu0 0.0
        %840 = vmatprep.subr.mxu0 0.0
        %841 = vmatpush1.msra.mxu0 0.0
        %842 = vmatprep.subr.mxu0 0.0
        %843 = vmatpush1.msra.mxu0 0.0
        %844 = vmatprep.subr.mxu0 0.0
        %845 = vmatpush1.msra.mxu0 0.0
        %846 = vmatprep.subr.mxu0 0.0
        %847 = vmatpush1.msra.mxu0 0.0
        %848 = vmatprep.subr.mxu0 0.0
        %849 = vmatpush1.msra.mxu0 0.0
        %850 = vmatprep.subr.mxu0 0.0
        %851 = vmatpush1.msra.mxu0 0.0
        %852 = vmatprep.subr.mxu0 0.0
        %853 = vmatpush1.msra.mxu0 0.0
        %854 = vmatprep.subr.mxu0 0.0
        %855 = vmatpush1.msra.mxu0 0.0
        %856 = vmatprep.subr.mxu0 0.0
        %857 = vmatpush1.msra.mxu0 0.0
        %858 = vmatprep.subr.mxu0 0.0
        %859 = vmatpush1.msra.mxu0 0.0
        %860 = vmatprep.subr.mxu0 0.0
        %861 = vmatpush1.msra.mxu0 0.0
        %862 = vmatprep.subr.mxu0 0.0
        %863 = vmatpush1.msra.mxu0 0.0
        %864 = vmatprep.subr.mxu0 0.0
        %865 = vmatpush1.msra.mxu0 0.0
        %866 = vmatprep.subr.mxu0 0.0
        %867 = vmatpush1.msra.mxu0 0.0
        %868 = vmatprep.subr.mxu0 0.0
        %869 = vmatpush1.msra.mxu0 0.0
        %870 = vmatprep.subr.mxu0 0.0
        %871 = vmatpush1.msra.mxu0 0.0
        %872 = vmatprep.subr.mxu0 0.0
        %873 = vmatpush1.msra.mxu0 0.0
        %874 = vmatprep.subr.mxu0 0.0
        %875 = vmatpush1.msra.mxu0 0.0
        %876 = vmatprep.subr.mxu0 0.0
        %877 = vmatpush1.msra.mxu0 0.0
        %878 = vmatprep.subr.mxu0 0.0
        %879 = vmatpush1.msra.mxu0 0.0
        %880 = vmatprep.subr.mxu0 0.0
        %881 = vmatpush1.msra.mxu0 0.0
        %882 = vmatprep.subr.mxu0 0.0
        %883 = vmatpush1.msra.mxu0 0.0
        %884 = vmatprep.subr.mxu0 0.0
        %885 = vmatpush1.msra.mxu0 0.0
        %886 = vmatprep.subr.mxu0 0.0
        %887 = vmatpush1.msra.mxu0 0.0
        %888 = vmatprep.subr.mxu0 0.0
        %889 = vmatpush1.msra.mxu0 0.0
        %890 = vmatprep.subr.mxu0 0.0
        %891 = vmatpush1.msra.mxu0 0.0
        %892 = vmatprep.subr.mxu0 0.0
        %893 = vmatpush1.msra.mxu0 0.0
        %894 = vmatprep.mubr.f32.mxu0 0.0
        %895 = vmatmul.mubr.f32.gmra.mrb[0].mxu0 %v828
        %v896 = vpop.f32.mrb[0].mxu0
        %v897 = vadd.f32 0.0, %v896
        %v898 = vpop.f32.mrb[0].mxu0
        %899 = vdwg.mxu0
        %901 = vrot.lane.b32.xlu0 %v897, 32
        %v902 = vpop.permute.xlu0 %901
        %v904 = vadd.f32 %v511, %v902
        %s905 = scalar_lea.vmem %s8, 1
        %v906 = vld [vmem:[%s905] sm:$0x1]
        %v908 = vlaneseq
        %v909 = vshrl.u32 %v908, 7
        %v910 = vsub.s32 0, %v909
        %v911 = vrot.slane %v906, %v910
        %912 = vrot.lane.b32.xlu0 %v911, 32
        %v913 = vpop.permute.xlu0 %912
        %v915 = vadd.f32 %v904, %v913
        %v916 = vxor.u32 %v915, 2147483648
        %v917 = vmul.f32 %v916, 1.442695
        %v918 = vpow.pop %v917
        %v919 = vadd.f32 %v918, 1.0
        %v920 = vrcp.pop %v919
        %v921 = vmul.f32 1.0, %v920
        %923 = vrot.lane.b32.xlu0 %v921, 96
        %v924 = vpop.permute.xlu0 %923
        %v926 = vmul.f32 %v821, %v924
        %v927 = vadd.f32 %v729, %v926
        %s928 = scalar_lea.vmem %s380, 16 [#allocation2]
        %v929 = vld [vmem:[%s928] sm:$0xff]
        %v931 = vsel %vm440, %v929, 0
        %933 = vmatprep.subr.mxu0 0.0
        %934 = vmatpush1.msra.mxu0 %v515
        %935 = vmatprep.subr.mxu0 0.0
        %936 = vmatpush1.msra.mxu0 %v516
        %937 = vmatprep.subr.mxu0 0.0
        %938 = vmatpush1.msra.mxu0 %v517
        %939 = vmatprep.subr.mxu0 0.0
        %940 = vmatpush1.msra.mxu0 %v518
        %941 = vmatprep.subr.mxu0 0.0
        %942 = vmatpush1.msra.mxu0 0.0
        %943 = vmatprep.subr.mxu0 0.0
        %944 = vmatpush1.msra.mxu0 0.0
        %945 = vmatprep.subr.mxu0 0.0
        %946 = vmatpush1.msra.mxu0 0.0
        %947 = vmatprep.subr.mxu0 0.0
        %948 = vmatpush1.msra.mxu0 0.0
        %949 = vmatprep.subr.mxu0 0.0
        %950 = vmatpush1.msra.mxu0 0.0
        %951 = vmatprep.subr.mxu0 0.0
        %952 = vmatpush1.msra.mxu0 0.0
        %953 = vmatprep.subr.mxu0 0.0
        %954 = vmatpush1.msra.mxu0 0.0
        %955 = vmatprep.subr.mxu0 0.0
        %956 = vmatpush1.msra.mxu0 0.0
        %957 = vmatprep.subr.mxu0 0.0
        %958 = vmatpush1.msra.mxu0 0.0
        %959 = vmatprep.subr.mxu0 0.0
        %960 = vmatpush1.msra.mxu0 0.0
        %961 = vmatprep.subr.mxu0 0.0
        %962 = vmatpush1.msra.mxu0 0.0
        %963 = vmatprep.subr.mxu0 0.0
        %964 = vmatpush1.msra.mxu0 0.0
        %965 = vmatprep.subr.mxu0 0.0
        %966 = vmatpush1.msra.mxu0 0.0
        %967 = vmatprep.subr.mxu0 0.0
        %968 = vmatpush1.msra.mxu0 0.0
        %969 = vmatprep.subr.mxu0 0.0
        %970 = vmatpush1.msra.mxu0 0.0
        %971 = vmatprep.subr.mxu0 0.0
        %972 = vmatpush1.msra.mxu0 0.0
        %973 = vmatprep.subr.mxu0 0.0
        %974 = vmatpush1.msra.mxu0 0.0
        %975 = vmatprep.subr.mxu0 0.0
        %976 = vmatpush1.msra.mxu0 0.0
        %977 = vmatprep.subr.mxu0 0.0
        %978 = vmatpush1.msra.mxu0 0.0
        %979 = vmatprep.subr.mxu0 0.0
        %980 = vmatpush1.msra.mxu0 0.0
        %981 = vmatprep.subr.mxu0 0.0
        %982 = vmatpush1.msra.mxu0 0.0
        %983 = vmatprep.subr.mxu0 0.0
        %984 = vmatpush1.msra.mxu0 0.0
        %985 = vmatprep.subr.mxu0 0.0
        %986 = vmatpush1.msra.mxu0 0.0
        %987 = vmatprep.subr.mxu0 0.0
        %988 = vmatpush1.msra.mxu0 0.0
        %989 = vmatprep.subr.mxu0 0.0
        %990 = vmatpush1.msra.mxu0 0.0
        %991 = vmatprep.subr.mxu0 0.0
        %992 = vmatpush1.msra.mxu0 0.0
        %993 = vmatprep.subr.mxu0 0.0
        %994 = vmatpush1.msra.mxu0 0.0
        %995 = vmatprep.subr.mxu0 0.0
        %996 = vmatpush1.msra.mxu0 0.0
        %997 = vmatprep.mubr.f32.mxu0 0.0
        %998 = vmatmul.mubr.f32.gmra.mrb[0].mxu0 %v931
        %v999 = vpop.f32.mrb[0].mxu0
        %v1000 = vadd.f32 %v524, %v999
        %v1001 = vpop.f32.mrb[0].mxu0
        %1002 = vdwg.mxu0
        %v1003 = vadd.f32 %v1000, %v434
        %v1004 = vsel %vm440, %v1003, 0.0
        %1005 = vadd.xlane.f32.xlu0 %v1004
        %v1006 = vpop.xlane.xlu0 %1005
        %v1007 = vmul.f32 %v1006, %v605
        %v1008 = vsub.f32 %v1003, %v1007
        %v1009 = vmul.f32 %v1008, %v1008
        %v1010 = vsel %vm440, %v1009, 0.0
        %1011 = vadd.xlane.f32.xlu0 %v1010
        %v1012 = vpop.xlane.xlu0 %1011
        %v1013 = vmul.f32 %v1012, %v605
        %v1014 = vadd.f32 %v1013, 1e-05
        %v1015 = vrsqrt.pop %v1014
        %v1016 = vmul.f32 %v1008, %v1015
        %v1017 = vmul.f32 %v1016, %v620
        %v1018 = vadd.f32 %v1017, %v627
        %v1019 = vmul.f32 %v1018, %v633
        %s1020 = scalar_lea.vmem %s7, 64
        %v1021 = vld [vmem:[%s1020] sm:$0xff]
        %v1022 = vld [vmem:[%s1020 + $0x8] sm:$0xff]
        %v1023 = vld [vmem:[%s1020 + $0x10] sm:$0xff]
        %v1024 = vld [vmem:[%s1020 + $0x18] sm:$0xff]
        %v1026 = vsel %vm440, %v1019, 0
        %1028 = vmatprep.subr.mxu0 0.0
        %1029 = vmatpush1.msra.mxu0 %v1021
        %1030 = vmatprep.subr.mxu0 0.0
        %1031 = vmatpush1.msra.mxu0 %v1022
        %1032 = vmatprep.subr.mxu0 0.0
        %1033 = vmatpush1.msra.mxu0 %v1023
        %1034 = vmatprep.subr.mxu0 0.0
        %1035 = vmatpush1.msra.mxu0 %v1024
        %1036 = vmatprep.subr.mxu0 0.0
        %1037 = vmatpush1.msra.mxu0 0.0
        %1038 = vmatprep.subr.mxu0 0.0
        %1039 = vmatpush1.msra.mxu0 0.0
        %1040 = vmatprep.subr.mxu0 0.0
        %1041 = vmatpush1.msra.mxu0 0.0
        %1042 = vmatprep.subr.mxu0 0.0
        %1043 = vmatpush1.msra.mxu0 0.0
        %1044 = vmatprep.subr.mxu0 0.0
        %1045 = vmatpush1.msra.mxu0 0.0
        %1046 = vmatprep.subr.mxu0 0.0
        %1047 = vmatpush1.msra.mxu0 0.0
        %1048 = vmatprep.subr.mxu0 0.0
        %1049 = vmatpush1.msra.mxu0 0.0
        %1050 = vmatprep.subr.mxu0 0.0
        %1051 = vmatpush1.msra.mxu0 0.0
        %1052 = vmatprep.subr.mxu0 0.0
        %1053 = vmatpush1.msra.mxu0 0.0
        %1054 = vmatprep.subr.mxu0 0.0
        %1055 = vmatpush1.msra.mxu0 0.0
        %1056 = vmatprep.subr.mxu0 0.0
        %1057 = vmatpush1.msra.mxu0 0.0
        %1058 = vmatprep.subr.mxu0 0.0
        %1059 = vmatpush1.msra.mxu0 0.0
        %1060 = vmatprep.subr.mxu0 0.0
        %1061 = vmatpush1.msra.mxu0 0.0
        %1062 = vmatprep.subr.mxu0 0.0
        %1063 = vmatpush1.msra.mxu0 0.0
        %1064 = vmatprep.subr.mxu0 0.0
        %1065 = vmatpush1.msra.mxu0 0.0
        %1066 = vmatprep.subr.mxu0 0.0
        %1067 = vmatpush1.msra.mxu0 0.0
        %1068 = vmatprep.subr.mxu0 0.0
        %1069 = vmatpush1.msra.mxu0 0.0
        %1070 = vmatprep.subr.mxu0 0.0
        %1071 = vmatpush1.msra.mxu0 0.0
        %1072 = vmatprep.subr.mxu0 0.0
        %1073 = vmatpush1.msra.mxu0 0.0
        %1074 = vmatprep.subr.mxu0 0.0
        %1075 = vmatpush1.msra.mxu0 0.0
        %1076 = vmatprep.subr.mxu0 0.0
        %1077 = vmatpush1.msra.mxu0 0.0
        %1078 = vmatprep.subr.mxu0 0.0
        %1079 = vmatpush1.msra.mxu0 0.0
        %1080 = vmatprep.subr.mxu0 0.0
        %1081 = vmatpush1.msra.mxu0 0.0
        %1082 = vmatprep.subr.mxu0 0.0
        %1083 = vmatpush1.msra.mxu0 0.0
        %1084 = vmatprep.subr.mxu0 0.0
        %1085 = vmatpush1.msra.mxu0 0.0
        %1086 = vmatprep.subr.mxu0 0.0
        %1087 = vmatpush1.msra.mxu0 0.0
        %1088 = vmatprep.subr.mxu0 0.0
        %1089 = vmatpush1.msra.mxu0 0.0
        %1090 = vmatprep.subr.mxu0 0.0
        %1091 = vmatpush1.msra.mxu0 0.0
        %1092 = vmatprep.mubr.f32.mxu0 0.0
        %1093 = vmatmul.mubr.f32.gmra.mrb[0].mxu0 %v1026
        %v1094 = vpop.f32.mrb[0].mxu0
        %v1095 = vadd.f32 0.0, %v1094
        %v1096 = vpop.f32.mrb[0].mxu0
        %1097 = vdwg.mxu0
        %1099 = vrot.lane.b32.xlu0 %v1095, 64
        %v1100 = vpop.permute.xlu0 %1099
        %v1102 = vadd.f32 %v511, %v1100
        %s1103 = scalar_lea.vmem %s8, 2
        %v1104 = vld [vmem:[%s1103] sm:$0x1]
        %v1106 = vlaneseq
        %v1107 = vshrl.u32 %v1106, 7
        %v1108 = vsub.s32 0, %v1107
        %v1109 = vrot.slane %v1104, %v1108
        %1110 = vrot.lane.b32.xlu0 %v1109, 64
        %v1111 = vpop.permute.xlu0 %1110
        %v1113 = vadd.f32 %v1102, %v1111
        %v1114 = vxor.u32 %v1113, 2147483648
        %v1115 = vmul.f32 %v1114, 1.442695
        %v1116 = vpow.pop %v1115
        %v1117 = vadd.f32 %v1116, 1.0
        %v1118 = vrcp.pop %v1117
        %v1119 = vmul.f32 1.0, %v1118
        %1121 = vrot.lane.b32.xlu0 %v1119, 64
        %v1122 = vpop.permute.xlu0 %1121
        %v1124 = vmul.f32 %v1019, %v1122
        %v1125 = vadd.f32 %v927, %v1124
        %v1126 = vmul.f32 %v1125, 0.57735026
        %v1127 = vmul.f32 %v1126, %v633
        %1128 = vst.msk [vmem:[%s433] sm:$0xff] %vm440, %v1127
        %p1129 = scmp.lt.s32.totalorder %s21, 1
        %s1130 = scalar_select %p1129, %s21, 1
        %s1131 = smul.addr %s1130, 8
        %s1132 = scalar_lea.vmem %s10, %s1131
        // Predicated region
        $region99: #{meshed_decoder_forward.31} parent=93 // pred_check
          %p1133 = pneg %p264
        $region100: #{meshed_decoder_forward.31} parent=93 // pred_check_branch
          %1135 = sbr.rel (%p1133) target = $region102
        $region101: #{meshed_decoder_forward.31} parent=93 // pred_region
          _
        $region102: #{meshed_decoder_forward.31} parent=93 // pred_fallthru
          _
      $region94: #{meshed_decoder_forward.31} parent=5 // pred_fallthru
        _
      %p1136 = scmp.le.s32.totalorder 2, %s16
      // Predicated region
      $region103: #{meshed_decoder_forward.31} parent=5 // pred_check
        %p1137 = pneg %p1136
      $region104: #{meshed_decoder_forward.31} parent=5 // pred_check_branch
        %1139 = sbr.rel (%p1137) target = $region106
      $region105: #{meshed_decoder_forward.31} parent=5 // pred_region
        %s1140 = ssub.s32 %s16, 2
        // Predicated region
        $region107: #{meshed_decoder_forward.31} parent=105 // pred_check
          %p1141 = pneg %p270
        $region108: #{meshed_decoder_forward.31} parent=105 // pred_check_branch
          %1143 = sbr.rel (%p1141) target = $region110
        $region109: #{meshed_decoder_forward.31} parent=105 // pred_region
          %p1144 = scmp.lt.s32.totalorder %s22, 1
          %s1145 = scalar_select %p1144, %s22, 1
          %s1146 = smul.addr %s1145, 8
          %s1147 = scalar_lea.vmem %s10, %s1146
        $region110: #{meshed_decoder_forward.31} parent=105 // pred_fallthru
          _
      $region106: #{meshed_decoder_forward.31} parent=5 // pred_fallthru
        _
    $region6: #{meshed_decoder_forward.31} parent=1 // loop_footer
      %s20 = sadd.s32 1, %s16
    $region7: #{meshed_decoder_forward.31} parent=1 // loop_footer_branch
      %15 = sbr.rel target = $region3
    $region8: #{meshed_decoder_forward.31} parent=1 // loop_exit
      _

// kernel: meshed_decoder_forward.32
$region0: #{meshed_decoder_forward.32}
  #allocation0 [shape = 'u32[]', space=smem, size = 0x4, offset = 0x4, fixed_abs, tag = 'smem constant byte address 0x4 - core index']
  #allocation1 [shape = 'u32[144,128]{1,0:T(1,128)}', space=vmem, size = 0x12000, scoped, tag = 'internal scratch']
  %s0 = inlined_call_operand.vmem [shape: f32[16,32], index: 0, kind: input, shape index: {}]
  %s1 = inlined_call_operand.vmem [shape: f32[32,64], index: 1, kind: input, shape index: {}]
  %s2 = inlined_call_operand.vmem [shape: f32[1,64], index: 2, kind: input, shape index: {}]
  %s3 = inlined_call_operand.vmem [shape: f32[64,32], index: 3, kind: input, shape index: {}]
  %s4 = inlined_call_operand.vmem [shape: f32[1,32], index: 4, kind: input, shape index: {}]
  %s5 = inlined_call_operand.vmem [shape: f32[1,32], index: 5, kind: input, shape index: {}]
  %s6 = inlined_call_operand.vmem [shape: f32[1,32], index: 6, kind: input, shape index: {}]
  %s7 = inlined_call_operand.vmem [shape: f32[16,1], index: 7, kind: input, shape index: {}]
  %s8 = inlined_call_operand.vmem [shape: f32[16,32], index: 8, kind: output, shape index: {}]
  %s9 = sld [smem:[#allocation0]]
  $region65: #{meshed_decoder_forward.32} parent=0
    _
  %s11 = ssub.s32 1, %s9
  %s12 = scalar_select 0, %s11, %s9
  loop: start=0, step=1, limit=4
  $region2: #{meshed_decoder_forward.32} parent=0 // loop_pre_header
    _
  $region3: #{meshed_decoder_forward.32} parent=0 // loop_header
    %s14 = sphi 0, %s18
    %p15 = scmp.ge.s32.totalorder %s14, 4
    %s24 = sphi 0, %s26
    %s27 = sphi 0, %s24
    %s28 = sphi 0, %s27
    %s44 = sphi 0, %s28
    %s48 = sphi 0, %s48
    %s50 = sphi 0, %s48
    %s51 = sphi 0, %s50
    %s65 = sphi 0, %s51
    %s69 = sphi 0, %s69
    %s71 = sphi 0, %s69
    %s72 = sphi 0, %s71
    %s86 = sphi 0, %s72
    %s90 = sphi 0, %s90
    %s92 = sphi 0, %s90
    %s93 = sphi 0, %s92
    %s107 = sphi 0, %s93
    %s111 = sphi 0, %s111
    %s113 = sphi 0, %s111
    %s114 = sphi 0, %s113
    %s128 = sphi 0, %s114
    %s132 = sphi 0, %s132
    %s134 = sphi 0, %s132
    %s135 = sphi 0, %s134
    %s149 = sphi 0, %s135
    %s153 = sphi 0, %s153
    %s155 = sphi 0, %s153
    %s156 = sphi 0, %s155
    %s170 = sphi 0, %s156
    %s176 = sphi 0, %s178
    %s179 = sphi 0, %s176
    %s180 = sphi 0, %s179
    %s196 = sphi 0, %s180
    %s202 = sphi 0, %s204
    %s205 = sphi 0, %s202
    %s206 = sphi 0, %s205
    %s222 = sphi 0, %s206
  $region4: #{meshed_decoder_forward.32} parent=0 // loop_header_branch
    %17 = sbr.rel (%p15) target = $region8
  $region5: #{meshed_decoder_forward.32} parent=0 // loop_body
    %s19 = ssub.s32 %s14, 1
    %s20 = ssub.s32 %s14, 2
    %s21 = sadd.s32 %s14, 1
    %s22 = ssub.s32 %s14, %s21
    %p23 = scmp.eq.s32.totalorder %s22, 0
    %s25 = sadd.s32 %s24, 1
    %s26 = scalar_select %p23, %s24, %s25
    %p29 = pneg %p23
    %p30 = scmp.eq.s32.totalorder %s14, 1
    %p31 = por %p29, %p30
    %p32 = scmp.ne.s32.totalorder %s24, %s27
    %p33 = scmp.eq.s32.totalorder %s14, 0
    %p34 = por %p32, %p33
    %p35 = scmp.ne.s32.totalorder %s24, %s27
    %p36 = scmp.eq.s32.totalorder %s19, 1
    %p37 = por %p35, %p36
    %p38 = scmp.ne.s32.totalorder %s27, %s28
    %p39 = scmp.eq.s32.totalorder %s19, 0
    %p40 = por %p38, %p39
    %p41 = scmp.ne.s32.totalorder %s27, %s28
    %p42 = scmp.eq.s32.totalorder %s20, 1
    %p43 = por %p41, %p42
    %p45 = scmp.ne.s32.totalorder %s28, %s44
    %p46 = scmp.eq.s32.totalorder %s20, 0
    %p47 = por %p45, %p46
    %s49 = sadd.s32 %s48, 1
    %p52 = scmp.eq.s32.totalorder %s14, 1
    %p53 = scmp.ne.s32.totalorder %s48, %s50
    %p54 = scmp.eq.s32.totalorder %s14, 0
    %p55 = por %p53, %p54
    %p56 = scmp.ne.s32.totalorder %s48, %s50
    %p57 = scmp.eq.s32.totalorder %s19, 1
    %p58 = por %p56, %p57
    %p59 = scmp.ne.s32.totalorder %s50, %s51
    %p60 = scmp.eq.s32.totalorder %s19, 0
    %p61 = por %p59, %p60
    %p62 = scmp.ne.s32.totalorder %s50, %s51
    %p63 = scmp.eq.s32.totalorder %s20, 1
    %p64 = por %p62, %p63
    %p66 = scmp.ne.s32.totalorder %s51, %s65
    %p67 = scmp.eq.s32.totalorder %s20, 0
    %p68 = por %p66, %p67
    %s70 = sadd.s32 %s69, 1
    %p73 = scmp.eq.s32.totalorder %s14, 1
    %p74 = scmp.ne.s32.totalorder %s69, %s71
    %p75 = scmp.eq.s32.totalorder %s14, 0
    %p76 = por %p74, %p75
    %p77 = scmp.ne.s32.totalorder %s69, %s71
    %p78 = scmp.eq.s32.totalorder %s19, 1
    %p79 = por %p77, %p78
    %p80 = scmp.ne.s32.totalorder %s71, %s72
    %p81 = scmp.eq.s32.totalorder %s19, 0
    %p82 = por %p80, %p81
    %p83 = scmp.ne.s32.totalorder %s71, %s72
    %p84 = scmp.eq.s32.totalorder %s20, 1
    %p85 = por %p83, %p84
    %p87 = scmp.ne.s32.totalorder %s72, %s86
    %p88 = scmp.eq.s32.totalorder %s20, 0
    %p89 = por %p87, %p88
    %s91 = sadd.s32 %s90, 1
    %p94 = scmp.eq.s32.totalorder %s14, 1
    %p95 = scmp.ne.s32.totalorder %s90, %s92
    %p96 = scmp.eq.s32.totalorder %s14, 0
    %p97 = por %p95, %p96
    %p98 = scmp.ne.s32.totalorder %s90, %s92
    %p99 = scmp.eq.s32.totalorder %s19, 1
    %p100 = por %p98, %p99
    %p101 = scmp.ne.s32.totalorder %s92, %s93
    %p102 = scmp.eq.s32.totalorder %s19, 0
    %p103 = por %p101, %p102
    %p104 = scmp.ne.s32.totalorder %s92, %s93
    %p105 = scmp.eq.s32.totalorder %s20, 1
    %p106 = por %p104, %p105
    %p108 = scmp.ne.s32.totalorder %s93, %s107
    %p109 = scmp.eq.s32.totalorder %s20, 0
    %p110 = por %p108, %p109
    %s112 = sadd.s32 %s111, 1
    %p115 = scmp.eq.s32.totalorder %s14, 1
    %p116 = scmp.ne.s32.totalorder %s111, %s113
    %p117 = scmp.eq.s32.totalorder %s14, 0
    %p118 = por %p116, %p117
    %p119 = scmp.ne.s32.totalorder %s111, %s113
    %p120 = scmp.eq.s32.totalorder %s19, 1
    %p121 = por %p119, %p120
    %p122 = scmp.ne.s32.totalorder %s113, %s114
    %p123 = scmp.eq.s32.totalorder %s19, 0
    %p124 = por %p122, %p123
    %p125 = scmp.ne.s32.totalorder %s113, %s114
    %p126 = scmp.eq.s32.totalorder %s20, 1
    %p127 = por %p125, %p126
    %p129 = scmp.ne.s32.totalorder %s114, %s128
    %p130 = scmp.eq.s32.totalorder %s20, 0
    %p131 = por %p129, %p130
    %s133 = sadd.s32 %s132, 1
    %p136 = scmp.eq.s32.totalorder %s14, 1
    %p137 = scmp.ne.s32.totalorder %s132, %s134
    %p138 = scmp.eq.s32.totalorder %s14, 0
    %p139 = por %p137, %p138
    %p140 = scmp.ne.s32.totalorder %s132, %s134
    %p141 = scmp.eq.s32.totalorder %s19, 1
    %p142 = por %p140, %p141
    %p143 = scmp.ne.s32.totalorder %s134, %s135
    %p144 = scmp.eq.s32.totalorder %s19, 0
    %p145 = por %p143, %p144
    %p146 = scmp.ne.s32.totalorder %s134, %s135
    %p147 = scmp.eq.s32.totalorder %s20, 1
    %p148 = por %p146, %p147
    %p150 = scmp.ne.s32.totalorder %s135, %s149
    %p151 = scmp.eq.s32.totalorder %s20, 0
    %p152 = por %p150, %p151
    %s154 = sadd.s32 %s153, 1
    %p157 = scmp.eq.s32.totalorder %s14, 1
    %p158 = scmp.ne.s32.totalorder %s153, %s155
    %p159 = scmp.eq.s32.totalorder %s14, 0
    %p160 = por %p158, %p159
    %p161 = scmp.ne.s32.totalorder %s153, %s155
    %p162 = scmp.eq.s32.totalorder %s19, 1
    %p163 = por %p161, %p162
    %p164 = scmp.ne.s32.totalorder %s155, %s156
    %p165 = scmp.eq.s32.totalorder %s19, 0
    %p166 = por %p164, %p165
    %p167 = scmp.ne.s32.totalorder %s155, %s156
    %p168 = scmp.eq.s32.totalorder %s20, 1
    %p169 = por %p167, %p168
    %p171 = scmp.ne.s32.totalorder %s156, %s170
    %p172 = scmp.eq.s32.totalorder %s20, 0
    %p173 = por %p171, %p172
    %s174 = ssub.s32 %s14, %s21
    %p175 = scmp.eq.s32.totalorder %s174, 0
    %s177 = sadd.s32 %s176, 1
    %s178 = scalar_select %p175, %s176, %s177
    %p181 = pneg %p175
    %p182 = scmp.eq.s32.totalorder %s14, 1
    %p183 = por %p181, %p182
    %p184 = scmp.ne.s32.totalorder %s176, %s179
    %p185 = scmp.eq.s32.totalorder %s14, 0
    %p186 = por %p184, %p185
    %p187 = scmp.ne.s32.totalorder %s176, %s179
    %p188 = scmp.eq.s32.totalorder %s19, 1
    %p189 = por %p187, %p188
    %p190 = scmp.ne.s32.totalorder %s179, %s180
    %p191 = scmp.eq.s32.totalorder %s19, 0
    %p192 = por %p190, %p191
    %p193 = scmp.ne.s32.totalorder %s179, %s180
    %p194 = scmp.eq.s32.totalorder %s20, 1
    %p195 = por %p193, %p194
    %p197 = scmp.ne.s32.totalorder %s180, %s196
    %p198 = scmp.eq.s32.totalorder %s20, 0
    %p199 = por %p197, %p198
    %s200 = ssub.s32 %s14, %s21
    %p201 = scmp.eq.s32.totalorder %s200, 0
    %s203 = sadd.s32 %s202, 1
    %s204 = scalar_select %p201, %s202, %s203
    %p207 = pneg %p201
    %p208 = scmp.eq.s32.totalorder %s14, 1
    %p209 = por %p207, %p208
    %p210 = scmp.ne.s32.totalorder %s202, %s205
    %p211 = scmp.eq.s32.totalorder %s14, 0
    %p212 = por %p210, %p211
    %p213 = scmp.ne.s32.totalorder %s202, %s205
    %p214 = scmp.eq.s32.totalorder %s19, 1
    %p215 = por %p213, %p214
    %p216 = scmp.ne.s32.totalorder %s205, %s206
    %p217 = scmp.eq.s32.totalorder %s19, 0
    %p218 = por %p216, %p217
    %p219 = scmp.ne.s32.totalorder %s205, %s206
    %p220 = scmp.eq.s32.totalorder %s20, 1
    %p221 = por %p219, %p220
    %p223 = scmp.ne.s32.totalorder %s206, %s222
    %p224 = scmp.eq.s32.totalorder %s20, 0
    %p225 = por %p223, %p224
    %p226 = scmp.le.s32.totalorder 1, %s14
    %p227 = scmp.lt.s32.totalorder %s14, 3
    %p228 = pnand %p226, %p227
    %p229 = pneg %p228
    // Predicated region
    $region9: #{meshed_decoder_forward.32} parent=5 // pred_check
      _
    $region10: #{meshed_decoder_forward.32} parent=5 // pred_check_branch
      %231 = sbr.rel (%p228) target = $region12
    $region11: #{meshed_decoder_forward.32} parent=5 // pred_region
      %s232 = ssub.s32 %s14, 1
      // Predicated region
      $region13: #{meshed_decoder_forward.32} parent=11 // pred_check
        %p233 = pneg %p61
      $region14: #{meshed_decoder_forward.32} parent=11 // pred_check_branch
        %235 = sbr.rel (%p233) target = $region16
      $region15: #{meshed_decoder_forward.32} parent=11 // pred_region
        _
      $region16: #{meshed_decoder_forward.32} parent=11 // pred_fallthru
        _
      // Predicated region
      $region17: #{meshed_decoder_forward.32} parent=11 // pred_check
        %p236 = pneg %p82
      $region18: #{meshed_decoder_forward.32} parent=11 // pred_check_branch
        %238 = sbr.rel (%p236) target = $region20
      $region19: #{meshed_decoder_forward.32} parent=11 // pred_region
        _
      $region20: #{meshed_decoder_forward.32} parent=11 // pred_fallthru
        _
      // Predicated region
      $region21: #{meshed_decoder_forward.32} parent=11 // pred_check
        %p239 = pneg %p103
      $region22: #{meshed_decoder_forward.32} parent=11 // pred_check_branch
        %241 = sbr.rel (%p239) target = $region24
      $region23: #{meshed_decoder_forward.32} parent=11 // pred_region
        _
      $region24: #{meshed_decoder_forward.32} parent=11 // pred_fallthru
        _
      // Predicated region
      $region25: #{meshed_decoder_forward.32} parent=11 // pred_check
        %p242 = pneg %p124
      $region26: #{meshed_decoder_forward.32} parent=11 // pred_check_branch
        %244 = sbr.rel (%p242) target = $region28
      $region27: #{meshed_decoder_forward.32} parent=11 // pred_region
        _
      $region28: #{meshed_decoder_forward.32} parent=11 // pred_fallthru
        _
      // Predicated region
      $region29: #{meshed_decoder_forward.32} parent=11 // pred_check
        %p245 = pneg %p145
      $region30: #{meshed_decoder_forward.32} parent=11 // pred_check_branch
        %247 = sbr.rel (%p245) target = $region32
      $region31: #{meshed_decoder_forward.32} parent=11 // pred_region
        _
      $region32: #{meshed_decoder_forward.32} parent=11 // pred_fallthru
        _
      // Predicated region
      $region33: #{meshed_decoder_forward.32} parent=11 // pred_check
        %p248 = pneg %p166
      $region34: #{meshed_decoder_forward.32} parent=11 // pred_check_branch
        %250 = sbr.rel (%p248) target = $region36
      $region35: #{meshed_decoder_forward.32} parent=11 // pred_region
        _
      $region36: #{meshed_decoder_forward.32} parent=11 // pred_fallthru
        _
    $region12: #{meshed_decoder_forward.32} parent=5 // pred_fallthru
      _
    %p251 = scmp.lt.s32.totalorder %s14, 2
    // Predicated region
    $region37: #{meshed_decoder_forward.32} parent=5 // pred_check
      %p252 = pneg %p251
    $region38: #{meshed_decoder_forward.32} parent=5 // pred_check_branch
      %254 = sbr.rel (%p252) target = $region40
    $region39: #{meshed_decoder_forward.32} parent=5 // pred_region
      // Predicated region
      $region41: #{meshed_decoder_forward.32} parent=39 // pred_check
        %p255 = pneg %p34
      $region42: #{meshed_decoder_forward.32} parent=39 // pred_check_branch
        %257 = sbr.rel (%p255) target = $region44
      $region43: #{meshed_decoder_forward.32} parent=39 // pred_region
        %p258 = scmp.lt.s32.totalorder %s14, 1
        %s259 = scalar_select %p258, %s14, 1
        %s260 = smul.addr %s259, 8
        %s261 = scalar_lea.vmem %s0, %s260
      $region44: #{meshed_decoder_forward.32} parent=39 // pred_fallthru
        _
      // Predicated region
      $region45: #{meshed_decoder_forward.32} parent=39 // pred_check
        %p262 = pneg %p186
      $region46: #{meshed_decoder_forward.32} parent=39 // pred_check_branch
        %264 = sbr.rel (%p262) target = $region48
      $region47: #{meshed_decoder_forward.32} parent=39 // pred_region
        %p265 = scmp.lt.s32.totalorder %s14, 1
        %s266 = scalar_select %p265, %s14, 1
        %s267 = smul.addr %s266, 8
        %s268 = scalar_lea.vmem %s7, %s267
      $region48: #{meshed_decoder_forward.32} parent=39 // pred_fallthru
        _
    $region40: #{meshed_decoder_forward.32} parent=5 // pred_fallthru
      _
    %p269 = scmp.le.s32.totalorder 1, %s14
    %p270 = scmp.lt.s32.totalorder %s14, 3
    %p271 = pnand %p269, %p270
    %p272 = pneg %p271
    // Predicated region
    $region49: #{meshed_decoder_forward.32} parent=5 // pred_check
      _
    $region50: #{meshed_decoder_forward.32} parent=5 // pred_check_branch
      %274 = sbr.rel (%p271) target = $region52
    $region51: #{meshed_decoder_forward.32} parent=5 // pred_region
      %s275 = ssub.s32 %s14, 1
      %p276 = scmp.lt.s32.totalorder %s19, 1
      %s277 = scalar_select %p276, %s19, 1
      %s278 = smul.addr %s277, 8
      %s279 = scalar_lea.vmem %s0, %s278
      %p280 = pneg %p40
      %p281 = pneg %p37
      %p282 = pneg %p61
      %p283 = pneg %p58
      %p284 = pneg %p82
      %p285 = pneg %p79
      %p286 = pneg %p103
      %p287 = pneg %p100
      %p288 = pneg %p124
      %p289 = pneg %p121
      %p290 = pneg %p145
      %p291 = pneg %p142
      %p292 = pneg %p166
      %p293 = pneg %p163
      %p294 = scmp.lt.s32.totalorder %s19, 1
      %s295 = scalar_select %p294, %s19, 1
      %s296 = smul.addr %s295, 8
      %s297 = scalar_lea.vmem %s7, %s296
      %p298 = pneg %p192
      %p299 = pneg %p189
      %p300 = pneg %p218
      %p301 = pneg %p215
      %p302 = scmp.lt.s32.totalorder %s19, 1
      %s303 = scalar_select %p302, %s19, 1
      %s304 = smul.addr %s303, 8
      %s305 = scalar_lea.vmem %s8, %s304
      %p306 = scmp.lt.s32.totalorder %s19, 1
      %s307 = scalar_select %p306, %s19, 1
      %s308 = smul.addr %s307, 8
      %s309 = scalar_lea.vmem %s0, %s308
      %p310 = scmp.lt.s32.totalorder %s19, 1
      %s311 = scalar_select %p310, %s19, 1
      %s312 = smul.addr %s311, 8
      %s313 = scalar_lea.vmem %s7, %s312
      %p314 = scmp.lt.s32.totalorder %s19, 1
      %s315 = scalar_select %p314, %s19, 1
      %s316 = smul.addr %s315, 8
      %s317 = scalar_lea.vmem %s8, %s316
      %v318 = vld [vmem:[%s309] sm:$0xff]
      %v319 = vld [vmem:[%s1] sm:$0xff]
      %v320 = vld [vmem:[%s1 + $0x8] sm:$0xff]
      %v321 = vld [vmem:[%s1 + $0x10] sm:$0xff]
      %v322 = vld [vmem:[%s1 + $0x18] sm:$0xff]
      %v323 = vld [vmem:[%s2] sm:$0x1]
      %v325 = vlaneseq
      %v326 = vshrl.u32 %v325, 7
      %v327 = vsub.s32 0, %v326
      %v328 = vrot.slane %v323, %v327
      %vm330 = vcmask 261120
      %v332 = vsel %vm330, %v318, 0
      %334 = vmatprep.subr.mxu0 0.0
      %335 = vmatpush1.msra.mxu0 %v319
      %336 = vmatprep.subr.mxu0 0.0
      %337 = vmatpush1.msra.mxu0 %v320
      %338 = vmatprep.subr.mxu0 0.0
      %339 = vmatpush1.msra.mxu0 %v321
      %340 = vmatprep.subr.mxu0 0.0
      %341 = vmatpush1.msra.mxu0 %v322
      %342 = vmatprep.subr.mxu0 0.0
      %343 = vmatpush1.msra.mxu0 0.0
      %344 = vmatprep.subr.mxu0 0.0
      %345 = vmatpush1.msra.mxu0 0.0
      %346 = vmatprep.subr.mxu0 0.0
      %347 = vmatpush1.msra.mxu0 0.0
      %348 = vmatprep.subr.mxu0 0.0
      %349 = vmatpush1.msra.mxu0 0.0
      %350 = vmatprep.subr.mxu0 0.0
      %351 = vmatpush1.msra.mxu0 0.0
      %352 = vmatprep.subr.mxu0 0.0
      %353 = vmatpush1.msra.mxu0 0.0
      %354 = vmatprep.subr.mxu0 0.0
      %355 = vmatpush1.msra.mxu0 0.0
      %356 = vmatprep.subr.mxu0 0.0
      %357 = vmatpush1.msra.mxu0 0.0
      %358 = vmatprep.subr.mxu0 0.0
      %359 = vmatpush1.msra.mxu0 0.0
      %360 = vmatprep.subr.mxu0 0.0
      %361 = vmatpush1.msra.mxu0 0.0
      %362 = vmatprep.subr.mxu0 0.0
      %363 = vmatpush1.msra.mxu0 0.0
      %364 = vmatprep.subr.mxu0 0.0
      %365 = vmatpush1.msra.mxu0 0.0
      %366 = vmatprep.subr.mxu0 0.0
      %367 = vmatpush1.msra.mxu0 0.0
      %368 = vmatprep.subr.mxu0 0.0
      %369 = vmatpush1.msra.mxu0 0.0
      %370 = vmatprep.subr.mxu0 0.0
      %371 = vmatpush1.msra.mxu0 0.0
      %372 = vmatprep.subr.mxu0 0.0
      %373 = vmatpush1.msra.mxu0 0.0
      %374 = vmatprep.subr.mxu0 0.0
      %375 = vmatpush1.msra.mxu0 0.0
      %376 = vmatprep.subr.mxu0 0.0
      %377 = vmatpush1.msra.mxu0 0.0
      %378 = vmatprep.subr.mxu0 0.0
      %379 = vmatpush1.msra.mxu0 0.0
      %380 = vmatprep.subr.mxu0 0.0
      %381 = vmatpush1.msra.mxu0 0.0
      %382 = vmatprep.subr.mxu0 0.0
      %383 = vmatpush1.msra.mxu0 0.0
      %384 = vmatprep.subr.mxu0 0.0
      %385 = vmatpush1.msra.mxu0 0.0
      %386 = vmatprep.subr.mxu0 0.0
      %387 = vmatpush1.msra.mxu0 0.0
      %388 = vmatprep.subr.mxu0 0.0
      %389 = vmatpush1.msra.mxu0 0.0
      %390 = vmatprep.subr.mxu0 0.0
      %391 = vmatpush1.msra.mxu0 0.0
      %392 = vmatprep.subr.mxu0 0.0
      %393 = vmatpush1.msra.mxu0 0.0
      %394 = vmatprep.subr.mxu0 0.0
      %395 = vmatpush1.msra.mxu0 0.0
      %396 = vmatprep.subr.mxu0 0.0
      %397 = vmatpush1.msra.mxu0 0.0
      %398 = vmatprep.mubr.f32.mxu0 0.0
      %399 = vmatmul.mubr.f32.gmra.mrb[0].mxu0 %v332
      %v400 = vpop.f32.mrb[0].mxu0
      %v401 = vadd.f32 %v328, %v400
      %v402 = vpop.f32.mrb[0].mxu0
      %403 = vdwg.mxu0
      %v404 = vmax.f32 %v401, 0.0
      %v405 = vld [vmem:[%s3] sm:$0xff]
      %v406 = vld [vmem:[%s3 + $0x8] sm:$0xff]
      %v407 = vld [vmem:[%s3 + $0x10] sm:$0xff]
      %v408 = vld [vmem:[%s3 + $0x18] sm:$0xff]
      %v409 = vld [vmem:[%s3 + $0x20] sm:$0xff]
      %v410 = vld [vmem:[%s3 + $0x28] sm:$0xff]
      %v411 = vld [vmem:[%s3 + $0x30] sm:$0xff]
      %v412 = vld [vmem:[%s3 + $0x38] sm:$0xff]
      %v413 = vld [vmem:[%s4] sm:$0x1]
      %v415 = vlaneseq
      %v416 = vshrl.u32 %v415, 7
      %v417 = vsub.s32 0, %v416
      %v418 = vrot.slane %v413, %v417
      %vm420 = vcmask 523264
      %v422 = vsel %vm420, %v404, 0
      %424 = vmatprep.subr.mxu0 0.0
      %425 = vmatpush1.msra.mxu0 %v405
      %426 = vmatprep.subr.mxu0 0.0
      %427 = vmatpush1.msra.mxu0 %v406
      %428 = vmatprep.subr.mxu0 0.0
      %429 = vmatpush1.msra.mxu0 %v407
      %430 = vmatprep.subr.mxu0 0.0
      %431 = vmatpush1.msra.mxu0 %v408
      %432 = vmatprep.subr.mxu0 0.0
      %433 = vmatpush1.msra.mxu0 %v409
      %434 = vmatprep.subr.mxu0 0.0
      %435 = vmatpush1.msra.mxu0 %v410
      %436 = vmatprep.subr.mxu0 0.0
      %437 = vmatpush1.msra.mxu0 %v411
      %438 = vmatprep.subr.mxu0 0.0
      %439 = vmatpush1.msra.mxu0 %v412
      %440 = vmatprep.subr.mxu0 0.0
      %441 = vmatpush1.msra.mxu0 0.0
      %442 = vmatprep.subr.mxu0 0.0
      %443 = vmatpush1.msra.mxu0 0.0
      %444 = vmatprep.subr.mxu0 0.0
      %445 = vmatpush1.msra.mxu0 0.0
      %446 = vmatprep.subr.mxu0 0.0
      %447 = vmatpush1.msra.mxu0 0.0
      %448 = vmatprep.subr.mxu0 0.0
      %449 = vmatpush1.msra.mxu0 0.0
      %450 = vmatprep.subr.mxu0 0.0
      %451 = vmatpush1.msra.mxu0 0.0
      %452 = vmatprep.subr.mxu0 0.0
      %453 = vmatpush1.msra.mxu0 0.0
      %454 = vmatprep.subr.mxu0 0.0
      %455 = vmatpush1.msra.mxu0 0.0
      %456 = vmatprep.subr.mxu0 0.0
      %457 = vmatpush1.msra.mxu0 0.0
      %458 = vmatprep.subr.mxu0 0.0
      %459 = vmatpush1.msra.mxu0 0.0
      %460 = vmatprep.subr.mxu0 0.0
      %461 = vmatpush1.msra.mxu0 0.0
      %462 = vmatprep.subr.mxu0 0.0
      %463 = vmatpush1.msra.mxu0 0.0
      %464 = vmatprep.subr.mxu0 0.0
      %465 = vmatpush1.msra.mxu0 0.0
      %466 = vmatprep.subr.mxu0 0.0
      %467 = vmatpush1.msra.mxu0 0.0
      %468 = vmatprep.subr.mxu0 0.0
      %469 = vmatpush1.msra.mxu0 0.0
      %470 = vmatprep.subr.mxu0 0.0
      %471 = vmatpush1.msra.mxu0 0.0
      %472 = vmatprep.subr.mxu0 0.0
      %473 = vmatpush1.msra.mxu0 0.0
      %474 = vmatprep.subr.mxu0 0.0
      %475 = vmatpush1.msra.mxu0 0.0
      %476 = vmatprep.subr.mxu0 0.0
      %477 = vmatpush1.msra.mxu0 0.0
      %478 = vmatprep.subr.mxu0 0.0
      %479 = vmatpush1.msra.mxu0 0.0
      %480 = vmatprep.subr.mxu0 0.0
      %481 = vmatpush1.msra.mxu0 0.0
      %482 = vmatprep.subr.mxu0 0.0
      %483 = vmatpush1.msra.mxu0 0.0
      %484 = vmatprep.subr.mxu0 0.0
      %485 = vmatpush1.msra.mxu0 0.0
      %486 = vmatprep.subr.mxu0 0.0
      %487 = vmatpush1.msra.mxu0 0.0
      %488 = vmatprep.mubr.f32.mxu0 0.0
      %489 = vmatmul.mubr.f32.gmra.mrb[0].mxu0 %v422
      %v490 = vpop.f32.mrb[0].mxu0
      %v491 = vadd.f32 %v418, %v490
      %v492 = vpop.f32.mrb[0].mxu0
      %493 = vdwg.mxu0
      %v494 = vadd.f32 %v491, %v318
      %v495 = vld [vmem:[%s5] sm:$0x1]
      %v496 = vld [vmem:[%s6] sm:$0x1]
      %v497 = vsel %vm330, %v494, 0.0
      %498 = vadd.xlane.f32.xlu0 %v497
      %v499 = vpop.xlane.xlu0 %498
      %v500 = vrcp.pop 32.0
      %v501 = vmul.f32 %v499, %v500
      %v502 = vsub.f32 %v494, %v501
      %v503 = vmul.f32 %v502, %v502
      %v504 = vsel %vm330, %v503, 0.0
      %505 = vadd.xlane.f32.xlu0 %v504
      %v506 = vpop.xlane.xlu0 %505
      %v507 = vmul.f32 %v506, %v500
      %v508 = vadd.f32 %v507, 1e-05
      %v509 = vrsqrt.pop %v508
      %v510 = vmul.f32 %v502, %v509
      %v512 = vlaneseq
      %v513 = vshrl.u32 %v512, 7
      %v514 = vsub.s32 0, %v513
      %v515 = vrot.slane %v495, %v514
      %v517 = vmul.f32 %v510, %v515
      %v519 = vlaneseq
      %v520 = vshrl.u32 %v519, 7
      %v521 = vsub.s32 0, %v520
      %v522 = vrot.slane %v496, %v521
      %v524 = vadd.f32 %v517, %v522
      %v525 = vld [vmem:[%s313] sm:$0xff]
      %527 = vset.pattern.permute.xlu0 0
      %528 = vperm.xlu0 %527, %v525
      %v529 = vpop.permute.xlu0 %528
      %v531 = vmul.f32 %v524, %v529
      %532 = vst.msk [vmem:[%s317] sm:$0xff] %vm330, %v531
      %p533 = scmp.lt.s32.totalorder %s19, 1
      %s534 = scalar_select %p533, %s19, 1
      %s535 = smul.addr %s534, 8
      %s536 = scalar_lea.vmem %s8, %s535
      // Predicated region
      $region53: #{meshed_decoder_forward.32} parent=51 // pred_check
        %p537 = pneg %p215
      $region54: #{meshed_decoder_forward.32} parent=51 // pred_check_branch
        %539 = sbr.rel (%p537) target = $region56
      $region55: #{meshed_decoder_forward.32} parent=51 // pred_region
        _
      $region56: #{meshed_decoder_forward.32} parent=51 // pred_fallthru
        _
    $region52: #{meshed_decoder_forward.32} parent=5 // pred_fallthru
      _
    %p540 = scmp.le.s32.totalorder 2, %s14
    // Predicated region
    $region57: #{meshed_decoder_forward.32} parent=5 // pred_check
      %p541 = pneg %p540
    $region58: #{meshed_decoder_forward.32} parent=5 // pred_check_branch
      %543 = sbr.rel (%p541) target = $region60
    $region59: #{meshed_decoder_forward.32} parent=5 // pred_region
      %s544 = ssub.s32 %s14, 2
      // Predicated region
      $region61: #{meshed_decoder_forward.32} parent=59 // pred_check
        %p545 = pneg %p221
      $region62: #{meshed_decoder_forward.32} parent=59 // pred_check_branch
        %547 = sbr.rel (%p545) target = $region64
      $region63: #{meshed_decoder_forward.32} parent=59 // pred_region
        %p548 = scmp.lt.s32.totalorder %s20, 1
        %s549 = scalar_select %p548, %s20, 1
        %s550 = smul.addr %s549, 8
        %s551 = scalar_lea.vmem %s8, %s550
      $region64: #{meshed_decoder_forward.32} parent=59 // pred_fallthru
        _
    $region60: #{meshed_decoder_forward.32} parent=5 // pred_fallthru
      _
  $region6: #{meshed_decoder_forward.32} parent=0 // loop_footer
    %s18 = sadd.s32 1, %s14
  $region7: #{meshed_decoder_forward.32} parent=0 // loop_footer_branch
    %13 = sbr.rel target = $region3
  $region8: #{meshed_decoder_forward.32} parent=0 // loop_exit
    _

// kernel: meshed_decoder_forward.49
$region0: #{meshed_decoder_forward.49}
  #allocation0 [shape = 'u32[]', space=smem, size = 0x4, offset = 0x4, fixed_abs, tag = 'smem constant byte address 0x4 - core index']
  #allocation1 [shape = 'u32[144,128]{1,0:T(1,128)}', space=vmem, size = 0x12000, scoped, tag = 'internal scratch']
  %s0 = inlined_call_operand.vmem [shape: f32[16,32], index: 0, kind: input, shape index: {}]
  %s1 = inlined_call_operand.vmem [shape: f32[32,50], index: 1, kind: input, shape index: {}]
  %s2 = inlined_call_operand.hbm [shape: f32[16,50], index: 2, kind: output, shape index: {}]
  %s3 = sld [smem:[#allocation0]]
  $region41: #{meshed_decoder_forward.49} parent=0
    _
  %s5 = ssub.s32 1, %s3
  %s6 = scalar_select 0, %s5, %s3
  $region1: #{meshed_decoder_forward.49} parent=0
    #allocation2 [shape = 'u8[8192]{0}', space=vmem, size = 0x2000, scoped, tag = 'output window, operand 0']
    #allocation3 [shape = 's32[2]{0}', space=sflag, size = 0x8, scoped, tag = 'scoped memory for meshed_decoder_forward.49']
    %7 = vsyncpa [#allocation3], 0
    %s8 = scalar_lea.sflag [#allocation3], 1
    %9 = vsyncpa %s8, 0
    loop: start=0, step=1, limit=4
    $region2: #{meshed_decoder_forward.49} parent=1 // loop_pre_header
      _
    $region3: #{meshed_decoder_forward.49} parent=1 // loop_header
      %s11 = sphi 0, %s15
      %p12 = scmp.ge.s32.totalorder %s11, 4
      %s21 = sphi 0, %s23
      %s24 = sphi 0, %s21
      %s25 = sphi 0, %s24
      %s41 = sphi 0, %s25
      %s45 = sphi 0, %s45
      %s47 = sphi 0, %s45
      %s48 = sphi 0, %s47
      %s62 = sphi 0, %s48
      %s68 = sphi 0, %s70
      %s71 = sphi 0, %s68
      %s72 = sphi 0, %s71
      %s88 = sphi 0, %s72
    $region4: #{meshed_decoder_forward.49} parent=1 // loop_header_branch
      %14 = sbr.rel (%p12) target = $region8
    $region5: #{meshed_decoder_forward.49} parent=1 // loop_body
      %s16 = ssub.s32 %s11, 1
      %s17 = ssub.s32 %s11, 2
      %s18 = sadd.s32 %s11, 1
      %s19 = ssub.s32 %s11, %s18
      %p20 = scmp.eq.s32.totalorder %s19, 0
      %s22 = sadd.s32 %s21, 1
      %s23 = scalar_select %p20, %s21, %s22
      %p26 = pneg %p20
      %p27 = scmp.eq.s32.totalorder %s11, 1
      %p28 = por %p26, %p27
      %p29 = scmp.ne.s32.totalorder %s21, %s24
      %p30 = scmp.eq.s32.totalorder %s11, 0
      %p31 = por %p29, %p30
      %p32 = scmp.ne.s32.totalorder %s21, %s24
      %p33 = scmp.eq.s32.totalorder %s16, 1
      %p34 = por %p32, %p33
      %p35 = scmp.ne.s32.totalorder %s24, %s25
      %p36 = scmp.eq.s32.totalorder %s16, 0
      %p37 = por %p35, %p36
      %p38 = scmp.ne.s32.totalorder %s24, %s25
      %p39 = scmp.eq.s32.totalorder %s17, 1
      %p40 = por %p38, %p39
      %p42 = scmp.ne.s32.totalorder %s25, %s41
      %p43 = scmp.eq.s32.totalorder %s17, 0
      %p44 = por %p42, %p43
      %s46 = sadd.s32 %s45, 1
      %p49 = scmp.eq.s32.totalorder %s11, 1
      %p50 = scmp.ne.s32.totalorder %s45, %s47
      %p51 = scmp.eq.s32.totalorder %s11, 0
      %p52 = por %p50, %p51
      %p53 = scmp.ne.s32.totalorder %s45, %s47
      %p54 = scmp.eq.s32.totalorder %s16, 1
      %p55 = por %p53, %p54
      %p56 = scmp.ne.s32.totalorder %s47, %s48
      %p57 = scmp.eq.s32.totalorder %s16, 0
      %p58 = por %p56, %p57
      %p59 = scmp.ne.s32.totalorder %s47, %s48
      %p60 = scmp.eq.s32.totalorder %s17, 1
      %p61 = por %p59, %p60
      %p63 = scmp.ne.s32.totalorder %s48, %s62
      %p64 = scmp.eq.s32.totalorder %s17, 0
      %p65 = por %p63, %p64
      %s66 = ssub.s32 %s11, %s18
      %p67 = scmp.eq.s32.totalorder %s66, 0
      %s69 = sadd.s32 %s68, 1
      %s70 = scalar_select %p67, %s68, %s69
      %p73 = pneg %p67
      %p74 = scmp.eq.s32.totalorder %s11, 1
      %p75 = por %p73, %p74
      %p76 = scmp.ne.s32.totalorder %s68, %s71
      %p77 = scmp.eq.s32.totalorder %s11, 0
      %p78 = por %p76, %p77
      %p79 = scmp.ne.s32.totalorder %s68, %s71
      %p80 = scmp.eq.s32.totalorder %s16, 1
      %p81 = por %p79, %p80
      %p82 = scmp.ne.s32.totalorder %s71, %s72
      %p83 = scmp.eq.s32.totalorder %s16, 0
      %p84 = por %p82, %p83
      %p85 = scmp.ne.s32.totalorder %s71, %s72
      %p86 = scmp.eq.s32.totalorder %s17, 1
      %p87 = por %p85, %p86
      %p89 = scmp.ne.s32.totalorder %s72, %s88
      %p90 = scmp.eq.s32.totalorder %s17, 0
      %p91 = por %p89, %p90
      %p92 = scmp.le.s32.totalorder 1, %s11
      %p93 = scmp.lt.s32.totalorder %s11, 3
      %p94 = pnand %p92, %p93
      %p95 = pneg %p94
      // Predicated region
      $region9: #{meshed_decoder_forward.49} parent=5 // pred_check
        _
      $region10: #{meshed_decoder_forward.49} parent=5 // pred_check_branch
        %97 = sbr.rel (%p94) target = $region12
      $region11: #{meshed_decoder_forward.49} parent=5 // pred_region
        %s98 = ssub.s32 %s11, 1
        // Predicated region
        $region13: #{meshed_decoder_forward.49} parent=11 // pred_check
          %p99 = pneg %p58
        $region14: #{meshed_decoder_forward.49} parent=11 // pred_check_branch
          %101 = sbr.rel (%p99) target = $region16
        $region15: #{meshed_decoder_forward.49} parent=11 // pred_region
          _
        $region16: #{meshed_decoder_forward.49} parent=11 // pred_fallthru
          _
      $region12: #{meshed_decoder_forward.49} parent=5 // pred_fallthru
        _
      %p102 = scmp.lt.s32.totalorder %s11, 2
      // Predicated region
      $region17: #{meshed_decoder_forward.49} parent=5 // pred_check
        %p103 = pneg %p102
      $region18: #{meshed_decoder_forward.49} parent=5 // pred_check_branch
        %105 = sbr.rel (%p103) target = $region20
      $region19: #{meshed_decoder_forward.49} parent=5 // pred_region
        // Predicated region
        $region21: #{meshed_decoder_forward.49} parent=19 // pred_check
          %p106 = pneg %p31
        $region22: #{meshed_decoder_forward.49} parent=19 // pred_check_branch
          %108 = sbr.rel (%p106) target = $region24
        $region23: #{meshed_decoder_forward.49} parent=19 // pred_region
          %p109 = scmp.lt.s32.totalorder %s11, 1
          %s110 = scalar_select %p109, %s11, 1
          %s111 = smul.addr %s110, 8
          %s112 = scalar_lea.vmem %s0, %s111
        $region24: #{meshed_decoder_forward.49} parent=19 // pred_fallthru
          _
      $region20: #{meshed_decoder_forward.49} parent=5 // pred_fallthru
        _
      %p113 = scmp.le.s32.totalorder 1, %s11
      %p114 = scmp.lt.s32.totalorder %s11, 3
      %p115 = pnand %p113, %p114
      %p116 = pneg %p115
      // Predicated region
      $region25: #{meshed_decoder_forward.49} parent=5 // pred_check
        _
      $region26: #{meshed_decoder_forward.49} parent=5 // pred_check_branch
        %118 = sbr.rel (%p115) target = $region28
      $region27: #{meshed_decoder_forward.49} parent=5 // pred_region
        %s119 = ssub.s32 %s11, 1
        %p120 = scmp.lt.s32.totalorder %s16, 1
        %s121 = scalar_select %p120, %s16, 1
        %s122 = smul.addr %s121, 8
        %s123 = scalar_lea.vmem %s0, %s122
        %p124 = pneg %p37
        %p125 = pneg %p34
        %p126 = pneg %p58
        %p127 = pneg %p55
        %p128 = pneg %p84
        %p129 = pneg %p81
        %s130 = sand.u32 %s71, 1
        %s131 = scalar_lea.sflag [#allocation3], %s130
        %s132 = sand.u32 %s71, 1
        %s133 = smul.addr %s132, 8
        %s134 = scalar_lea.vmem [#allocation2], %s133
        %p135 = scmp.lt.s32.totalorder %s16, 1
        %s136 = scalar_select %p135, %s16, 1
        %s137 = smul.addr %s136, 8
        %s138 = scalar_lea.vmem %s0, %s137
        %v139 = vld [vmem:[%s138] sm:$0xff]
        %v140 = vld [vmem:[%s1] sm:$0xff]
        %v141 = vld [vmem:[%s1 + $0x8] sm:$0xff]
        %v142 = vld [vmem:[%s1 + $0x10] sm:$0xff]
        %v143 = vld [vmem:[%s1 + $0x18] sm:$0xff]
        %vm144 = vcmask 261120
        %v146 = vsel %vm144, %v139, 0
        %148 = vmatprep.subr.mxu0 0.0
        %149 = vmatpush1.msra.mxu0 %v140
        %150 = vmatprep.subr.mxu0 0.0
        %151 = vmatpush1.msra.mxu0 %v141
        %152 = vmatprep.subr.mxu0 0.0
        %153 = vmatpush1.msra.mxu0 %v142
        %154 = vmatprep.subr.mxu0 0.0
        %155 = vmatpush1.msra.mxu0 %v143
        %156 = vmatprep.subr.mxu0 0.0
        %157 = vmatpush1.msra.mxu0 0.0
        %158 = vmatprep.subr.mxu0 0.0
        %159 = vmatpush1.msra.mxu0 0.0
        %160 = vmatprep.subr.mxu0 0.0
        %161 = vmatpush1.msra.mxu0 0.0
        %162 = vmatprep.subr.mxu0 0.0
        %163 = vmatpush1.msra.mxu0 0.0
        %164 = vmatprep.subr.mxu0 0.0
        %165 = vmatpush1.msra.mxu0 0.0
        %166 = vmatprep.subr.mxu0 0.0
        %167 = vmatpush1.msra.mxu0 0.0
        %168 = vmatprep.subr.mxu0 0.0
        %169 = vmatpush1.msra.mxu0 0.0
        %170 = vmatprep.subr.mxu0 0.0
        %171 = vmatpush1.msra.mxu0 0.0
        %172 = vmatprep.subr.mxu0 0.0
        %173 = vmatpush1.msra.mxu0 0.0
        %174 = vmatprep.subr.mxu0 0.0
        %175 = vmatpush1.msra.mxu0 0.0
        %176 = vmatprep.subr.mxu0 0.0
        %177 = vmatpush1.msra.mxu0 0.0
        %178 = vmatprep.subr.mxu0 0.0
        %179 = vmatpush1.msra.mxu0 0.0
        %180 = vmatprep.subr.mxu0 0.0
        %181 = vmatpush1.msra.mxu0 0.0
        %182 = vmatprep.subr.mxu0 0.0
        %183 = vmatpush1.msra.mxu0 0.0
        %184 = vmatprep.subr.mxu0 0.0
        %185 = vmatpush1.msra.mxu0 0.0
        %186 = vmatprep.subr.mxu0 0.0
        %187 = vmatpush1.msra.mxu0 0.0
        %188 = vmatprep.subr.mxu0 0.0
        %189 = vmatpush1.msra.mxu0 0.0
        %190 = vmatprep.subr.mxu0 0.0
        %191 = vmatpush1.msra.mxu0 0.0
        %192 = vmatprep.subr.mxu0 0.0
        %193 = vmatpush1.msra.mxu0 0.0
        %194 = vmatprep.subr.mxu0 0.0
        %195 = vmatpush1.msra.mxu0 0.0
        %196 = vmatprep.subr.mxu0 0.0
        %197 = vmatpush1.msra.mxu0 0.0
        %198 = vmatprep.subr.mxu0 0.0
        %199 = vmatpush1.msra.mxu0 0.0
        %200 = vmatprep.subr.mxu0 0.0
        %201 = vmatpush1.msra.mxu0 0.0
        %202 = vmatprep.subr.mxu0 0.0
        %203 = vmatpush1.msra.mxu0 0.0
        %204 = vmatprep.subr.mxu0 0.0
        %205 = vmatpush1.msra.mxu0 0.0
        %206 = vmatprep.subr.mxu0 0.0
        %207 = vmatpush1.msra.mxu0 0.0
        %208 = vmatprep.subr.mxu0 0.0
        %209 = vmatpush1.msra.mxu0 0.0
        %210 = vmatprep.subr.mxu0 0.0
        %211 = vmatpush1.msra.mxu0 0.0
        %212 = vmatprep.mubr.f32.mxu0 0.0
        %213 = vmatmul.mubr.f32.gmra.mrb[0].mxu0 %v146
        %v214 = vpop.f32.mrb[0].mxu0
        %v215 = vadd.f32 0.0, %v214
        %v216 = vpop.f32.mrb[0].mxu0
        %217 = vdwg.mxu0
        %vm218 = vcmask 408576
        %v219 = vsel %vm218, %v215, -inf
        %220 = vmax.xlane.f32.xlu0 %v219
        %v221 = vpop.xlane.xlu0 %220
        %v222 = vsub.f32 %v215, %v221
        %v223 = vmul.f32 %v222, 1.442695
        %v224 = vpow.pop %v223
        %v225 = vsel %vm218, %v224, 0.0
        %226 = vadd.xlane.f32.xlu0 %v225
        %v227 = vpop.xlane.xlu0 %226
        %v228 = vlog2.pop %v227
        %v229 = vmul.f32 %v228, 0.6931472
        %v230 = vsub.f32 %v222, %v229
        %231 = vst.msk [vmem:[%s134] sm:$0xff] %vm218, %v230
        %s232 = sand.u32 %s71, 1
        %s233 = scalar_lea.sflag [#allocation3], %s232
        %s234 = sand.u32 %s71, 1
        %s235 = smul.addr %s234, 8
        %s236 = scalar_lea.vmem [#allocation2], %s235
        // Predicated region
        $region29: #{meshed_decoder_forward.49} parent=27 // pred_check
          %p237 = pneg %p81
        $region30: #{meshed_decoder_forward.49} parent=27 // pred_check_branch
          %239 = sbr.rel (%p237) target = $region32
        $region31: #{meshed_decoder_forward.49} parent=27 // pred_region
          %s241 = ssub.s32 128, 128
          %242 = vsyncadd %s233, %s241
          %s243 = smul.addr %s16, 128
          %s244 = scalar_lea.hbm %s2, %s243
          %s246 = sshll.u32 %s236, 4
          %s247 = int_to_ptr.vmem [resolvable:$true] %s246
          %249 = dma.vmem_to_hbm [thread:$0]  %s247, 128, %s244, %s233
        $region32: #{meshed_decoder_forward.49} parent=27 // pred_fallthru
          _
      $region28: #{meshed_decoder_forward.49} parent=5 // pred_fallthru
        _
      %p250 = scmp.le.s32.totalorder 2, %s11
      // Predicated region
      $region33: #{meshed_decoder_forward.49} parent=5 // pred_check
        %p251 = pneg %p250
      $region34: #{meshed_decoder_forward.49} parent=5 // pred_check_branch
        %253 = sbr.rel (%p251) target = $region36
      $region35: #{meshed_decoder_forward.49} parent=5 // pred_region
        %s254 = ssub.s32 %s11, 2
        // Predicated region
        $region37: #{meshed_decoder_forward.49} parent=35 // pred_check
          %p255 = pneg %p87
        $region38: #{meshed_decoder_forward.49} parent=35 // pred_check_branch
          %257 = sbr.rel (%p255) target = $region40
        $region39: #{meshed_decoder_forward.49} parent=35 // pred_region
          %s258 = sand.u32 %s72, 1
          %s259 = scalar_lea.sflag [#allocation3], %s258
          %s260 = sand.u32 %s72, 1
          %s261 = smul.addr %s260, 8
          %s262 = scalar_lea.vmem [#allocation2], %s261
          %263 = dma.done %s259, 128
        $region40: #{meshed_decoder_forward.49} parent=35 // pred_fallthru
          _
      $region36: #{meshed_decoder_forward.49} parent=5 // pred_fallthru
        _
    $region6: #{meshed_decoder_forward.49} parent=1 // loop_footer
      %s15 = sadd.s32 1, %s11
    $region7: #{meshed_decoder_forward.49} parent=1 // loop_footer_branch
      %10 = sbr.rel target = $region3
    $region8: #{meshed_decoder_forward.49} parent=1 // loop_exit
      _
    %264 = vsyncpa [#allocation3], 1
    %s265 = scalar_lea.sflag [#allocation3], 1
    %266 = vsyncpa %s265, 1

</llo_original>
